<compile_context>
chip_gen: v5e
topology: v5e:2x2
jax: 0.10.0
libtpu: 0.0.40
codegen_flags: <defaults>
</compile_context>

<pallas_src>
import functools
import math

import numpy as np

import jax
import jax.numpy as jnp
from jax.experimental import pallas as pl
from jax.experimental.pallas import tpu as pltpu

LEAKY_SLOPE = 0.01   # nn.LeakyReLU() default
BN_EPS = 1e-5        # nn.BatchNorm1d() default

_VMEM = pl.BlockSpec(memory_space=pltpu.MemorySpace.VMEM)


# ----------------------------- fused Pallas kernel ---------------------------

def _make_fused_kernel(n_conv, n_mlp, chunk=512):
    """Whole-network kernel.  Per conv layer the refs are
    (A, bias_flat, R, R^T, gamma, beta); per MLP layer (W^T, bias)."""

    def kernel(*refs):
        x_ref = refs[0]
        conv_refs = refs[1:1 + 6 * n_conv]
        mlp_refs = refs[1 + 6 * n_conv:1 + 6 * n_conv + 2 * n_mlp]
        o_ref = refs[-1]

        h = x_ref[...]                      # (B, L*C_in), (l, c)-ordered flat layout
        rows = h.shape[0]                   # static python int (== batch size)

        # ---- CNN: Conv1d (dense operator) + BatchNorm1d + LeakyReLU ----------
        for i in range(n_conv):
            a_ref, bflat_ref, r_ref, rt_ref, g_ref, be_ref = conv_refs[6 * i:6 * i + 6]
            j_dim, m_dim = a_ref.shape      # (L_in*C_in, L_out*C_out)
            c_out = g_ref.shape[1]
            l_out = m_dim // c_out

            # Conv1d (stride, padding and im2col all folded into A) on the MXU.
            # Chunk the contraction dim so no single operand tile exceeds ~2 MB.
            y = jnp.zeros((rows, m_dim), jnp.float32)
            for j0 in range(0, j_dim, chunk):
                j1 = min(j0 + chunk, j_dim)
                y = y + jnp.dot(h[:, j0:j1], a_ref[j0:j1, :],
                                preferred_element_type=jnp.float32)
            y = y + bflat_ref[...]          # conv bias, tiled to the flat layout

            # BatchNorm1d, training mode: per-channel stats over the B*L_out
            # samples, one-pass (sum, sum-of-squares), biased variance.
            inv_n = 1.0 / float(rows * l_out)
            col_sum = jnp.sum(y, axis=0, keepdims=True)          # (1, L*C)
            col_sqs = jnp.sum(y * y, axis=0, keepdims=True)      # (1, L*C)
            mean = jnp.dot(col_sum, r_ref[...],
                           preferred_element_type=jnp.float32) * inv_n   # (1, C)
            meansq = jnp.dot(col_sqs, r_ref[...],
                             preferred_element_type=jnp.float32) * inv_n  # (1, C)
            var = meansq - mean * mean
            scale = g_ref[...] * jax.lax.rsqrt(var + BN_EPS)     # (1, C)
            shift = be_ref[...] - mean * scale                   # (1, C)
            # broadcast per-channel affine back to the flat (l, c) layout
            y = (y * jnp.dot(scale, rt_ref[...], preferred_element_type=jnp.float32)
                 + jnp.dot(shift, rt_ref[...], preferred_element_type=jnp.float32))

            # LeakyReLU
            h = jnp.maximum(y, LEAKY_SLOPE * y)

        # ---- MLP: Linear + LeakyReLU (incl. the final layer, per the spec) ---
        for j in range(n_mlp):
            w_ref, b_ref = mlp_refs[2 * j:2 * j + 2]
            y = jnp.dot(h, w_ref[...], preferred_element_type=jnp.float32) + b_ref[...]
            h = jnp.maximum(y, LEAKY_SLOPE * y)

        o_ref[...] = h                       # (B, 128) lane-dense output tile

    return kernel


# ------------------------------ parameter packing ----------------------------

def init_params(key, in_channels, seq_len, output_dim, ratios, channels, size_mlp):
    """Raw parameters in the PyTorch layout declared by CNN_MLP.__init__."""
    params = {"conv": [], "mlp": []}
    c_in = in_channels
    for i, ratio in enumerate(ratios):
        k = 2 * ratio + 1
        c_out = channels[i]
        key, k1, k2 = jax.random.split(key, 3)
        bound = 1.0 / math.sqrt(c_in * k)
        w = jax.random.uniform(k1, (c_out, c_in, k), jnp.float32, -bound, bound)
        b = jax.random.uniform(k2, (c_out,), jnp.float32, -bound, bound)
        gamma = jnp.ones((c_out,), jnp.float32)    # BatchNorm1d default weight
        beta = jnp.zeros((c_out,), jnp.float32)    # BatchNorm1d default bias
        params["conv"].append((w, b, gamma, beta))
        c_in = c_out

    ratio_global = 1
    for r in ratios:
        ratio_global *= r
    mlp_in = int(channels[-1] * seq_len / ratio_global)
    for d in list(size_mlp) + [output_dim]:
        key, k1, k2 = jax.random.split(key, 3)
        bound = 1.0 / math.sqrt(mlp_in)
        w = jax.random.uniform(k1, (d, mlp_in), jnp.float32, -bound, bound)
        b = jax.random.uniform(k2, (d,), jnp.float32, -bound, bound)
        params["mlp"].append((w, b))
        mlp_in = d
    return params


def pack_params(raw, ratios, in_channels, seq_len):
    """One-time host-side re-layout of the weights into kernel operands."""
    packed = []
    c_in, l_in = in_channels, seq_len

    for (w, b, gamma, beta), s in zip(raw["conv"], ratios):
        k = 2 * s + 1
        c_out = w.shape[0]
        l_out = (l_in + 2 * s - k) // s + 1
        w_np = np.asarray(w, np.float32)                   # (C_out, C_in, K)

        # Dense conv operator: A[j*C_in + c, l*C_out + o] = W[o, c, k]
        # where j = l*stride + k - pad (zero rows realise the zero padding).
        a_mat = np.zeros((l_in * c_in, l_out * c_out), np.float32)
        for l in range(l_out):
            for kk in range(k):
                j = l * s + kk - s
                if 0 <= j < l_in:
                    a_mat[j * c_in:(j + 1) * c_in,
                          l * c_out:(l + 1) * c_out] = w_np[:, :, kk].T

        # Per-channel reduce / broadcast matrices for BN in the flat layout.
        r_mat = np.tile(np.eye(c_out, dtype=np.float32), (l_out, 1))   # (L*C, C)
        bias_flat = np.tile(np.asarray(b, np.float32), l_out)[None, :]  # (1, L*C)

        packed += [jnp.asarray(a_mat), jnp.asarray(bias_flat),
                   jnp.asarray(r_mat), jnp.asarray(np.ascontiguousarray(r_mat.T)),
                   jnp.asarray(gamma)[None, :], jnp.asarray(beta)[None, :]]
        c_in, l_in = c_out, l_out

    l_f, c_last = l_in, c_in
    n_mlp = len(raw["mlp"])
    for idx, (w, b) in enumerate(raw["mlp"]):
        w_np = np.asarray(w, np.float32)                   # (F_out, F_in)
        wt = np.ascontiguousarray(w_np.T)                  # (F_in, F_out)
        if idx == 0:
            # Fold the nn.Flatten channel-major order into the first Linear:
            # our flat index q = l*C + c  <->  torch flat index p = c*L_f + l.
            q = np.arange(wt.shape[0])
            p = (q % c_last) * l_f + (q // c_last)
            wt = wt[p]
        b_np = np.asarray(b, np.float32)[None, :]
        if idx == n_mlp - 1:
            # Pad the final layer to 128 lanes -> unmasked, lane-dense HBM store.
            out_pad = int(np.ceil(w_np.shape[0] / 128.0) * 128)
            wt = np.concatenate(
                [wt, np.zeros((wt.shape[0], out_pad - wt.shape[1]), np.float32)], axis=1)
            b_np = np.concatenate(
                [b_np, np.zeros((1, out_pad - b_np.shape[1]), np.float32)], axis=1)
        packed += [jnp.asarray(wt), jnp.asarray(b_np)]

    return tuple(packed)


# --------------------------------- forward -----------------------------------

def cnn_mlp_forward(x_ncl, packed, *, n_conv, n_mlp, output_dim):
    b = x_ncl.shape[0]
    # NCL -> channels-last -> flat (l, c) layout expected by the conv operators.
    h0 = jnp.transpose(x_ncl, (0, 2, 1)).reshape(b, -1)      # (B, L*C_in)
    out_pad = packed[-1].shape[1]

    out = pl.pallas_call(
        _make_fused_kernel(n_conv, n_mlp),
        out_shape=jax.ShapeDtypeStruct((b, out_pad), jnp.float32),
        in_specs=[_VMEM] * (1 + len(packed)),
        out_specs=_VMEM,
        compiler_params=pltpu.CompilerParams(vmem_limit_bytes=48 * 1024 * 1024),
    )(h0, *packed)
    return out[:, :output_dim]


# ----------------------- plain-JAX reference (for checking) ------------------

def reference_forward(x_ncl, raw, ratios):
    h = x_ncl
    for (w, b, gamma, beta), s in zip(raw["conv"], ratios):
        k = 2 * s + 1
        _, _, l_in = h.shape
        l_out = (l_in + 2 * s - k) // s + 1
        hp = jnp.pad(h, ((0, 0), (0, 0), (s, s)))
        idx = jnp.arange(l_out)[:, None] * s + jnp.arange(k)[None, :]
        patches = hp[:, :, idx]                               # (B, C_in, L_out, K)
        y = jnp.einsum('bclk,ock->bol', patches, w) + b[None, :, None]
        mu = jnp.mean(y, axis=(0, 2), keepdims=True)
        var = jnp.mean((y - mu) ** 2, axis=(0, 2), keepdims=True)
        y = (y - mu) * jax.lax.rsqrt(var + BN_EPS) * gamma[None, :, None] + beta[None, :, None]
        h = jnp.where(y >= 0, y, LEAKY_SLOPE * y)
    flat = h.reshape(h.shape[0], -1)
    for (w, b) in raw["mlp"]:
        y = flat @ w.T + b[None, :]
        flat = jnp.where(y >= 0, y, LEAKY_SLOPE * y)
    return flat


# ----------------------------------- main -------------------------------------

if __name__ == "__main__":
    B, C_IN, L = 2, 4, 256
    OUTPUT_DIM = 3
    RATIOS = [4, 4, 4, 4]           # L must be divisible by prod(ratios) = 256
    CHANNELS = [16, 32, 64, 128]
    SIZE_MLP = [128, 64, 32]

    prod = 1
    for r in RATIOS:
        prod *= r
    assert L % prod == 0

    key = jax.random.PRNGKey(0)
    key, kx = jax.random.split(key)
    x = jax.random.normal(kx, (B, C_IN, L), jnp.float32)     # NCL, like Conv1d input

    raw = init_params(key, C_IN, L, OUTPUT_DIM, RATIOS, CHANNELS, SIZE_MLP)
    packed = pack_params(raw, RATIOS, C_IN, L)

    fwd = jax.jit(functools.partial(
        cnn_mlp_forward,
        n_conv=len(RATIOS), n_mlp=len(SIZE_MLP) + 1, output_dim=OUTPUT_DIM))

    theta = jax.block_until_ready(fwd(x, packed))
    assert theta.shape == (B, OUTPUT_DIM), theta.shape
    assert bool(jnp.all(jnp.isfinite(theta)))

    # Check against a plain-JAX re-implementation of the PyTorch module.
    ref = jax.block_until_ready(reference_forward(x, raw, RATIOS))
    assert jnp.allclose(theta, ref, rtol=2e-3, atol=2e-3)

    print("KERNEL_OK")
</pallas_src>

<mosaic_0001>
module attributes {stable_mosaic.version = 11 : i64} {
  func.func @kernel(%arg0: memref<2x1024xf32, #tpu.memory_space<vmem>>, %arg1: memref<1024x1024xf32, #tpu.memory_space<vmem>>, %arg2: memref<1x1024xf32, #tpu.memory_space<vmem>>, %arg3: memref<1024x16xf32, #tpu.memory_space<vmem>>, %arg4: memref<16x1024xf32, #tpu.memory_space<vmem>>, %arg5: memref<1x16xf32, #tpu.memory_space<vmem>>, %arg6: memref<1x16xf32, #tpu.memory_space<vmem>>, %arg7: memref<1024x512xf32, #tpu.memory_space<vmem>>, %arg8: memref<1x512xf32, #tpu.memory_space<vmem>>, %arg9: memref<512x32xf32, #tpu.memory_space<vmem>>, %arg10: memref<32x512xf32, #tpu.memory_space<vmem>>, %arg11: memref<1x32xf32, #tpu.memory_space<vmem>>, %arg12: memref<1x32xf32, #tpu.memory_space<vmem>>, %arg13: memref<512x256xf32, #tpu.memory_space<vmem>>, %arg14: memref<1x256xf32, #tpu.memory_space<vmem>>, %arg15: memref<256x64xf32, #tpu.memory_space<vmem>>, %arg16: memref<64x256xf32, #tpu.memory_space<vmem>>, %arg17: memref<1x64xf32, #tpu.memory_space<vmem>>, %arg18: memref<1x64xf32, #tpu.memory_space<vmem>>, %arg19: memref<256x128xf32, #tpu.memory_space<vmem>>, %arg20: memref<1x128xf32, #tpu.memory_space<vmem>>, %arg21: memref<128x128xf32, #tpu.memory_space<vmem>>, %arg22: memref<128x128xf32, #tpu.memory_space<vmem>>, %arg23: memref<1x128xf32, #tpu.memory_space<vmem>>, %arg24: memref<1x128xf32, #tpu.memory_space<vmem>>, %arg25: memref<128x128xf32, #tpu.memory_space<vmem>>, %arg26: memref<1x128xf32, #tpu.memory_space<vmem>>, %arg27: memref<128x64xf32, #tpu.memory_space<vmem>>, %arg28: memref<1x64xf32, #tpu.memory_space<vmem>>, %arg29: memref<64x32xf32, #tpu.memory_space<vmem>>, %arg30: memref<1x32xf32, #tpu.memory_space<vmem>>, %arg31: memref<32x128xf32, #tpu.memory_space<vmem>>, %arg32: memref<1x128xf32, #tpu.memory_space<vmem>>, %arg33: memref<2x128xf32, #tpu.memory_space<vmem>>) attributes {dimension_semantics = [], scalar_prefetch = 0 : i64, scratch_operands = 0 : i64, tpu.core_type = #tpu.core_type<tc>} {
    %c0 = arith.constant 0 : index
    %c0_0 = arith.constant 0 : index
    %0 = vector.load %arg0[%c0, %c0_0] : memref<2x1024xf32, #tpu.memory_space<vmem>>, vector<2x1024xf32>
    %cst = arith.constant 0.000000e+00 : f32
    %1 = vector.broadcast %cst : f32 to vector<2x1024xf32>
    %2 = vector.extract_strided_slice %0 {offsets = [0, 0], sizes = [2, 512], strides = [1, 1]} : vector<2x1024xf32> to vector<2x512xf32>
    %c0_1 = arith.constant 0 : index
    %c0_2 = arith.constant 0 : index
    %3 = vector.load %arg1[%c0_1, %c0_2] : memref<1024x1024xf32, #tpu.memory_space<vmem>>, vector<512x1024xf32>
    %cst_3 = arith.constant dense<0.000000e+00> : vector<2x1024xf32>
    %4 = tpu.matmul %2, %3, %cst_3 {dimension_numbers = #tpu.dot_dimension_numbers<[1], [0], [0], [1], [0, 0, 1, 1], [], []>} : vector<2x512xf32>, vector<512x1024xf32>, vector<2x1024xf32> -> vector<2x1024xf32>
    %5 = arith.addf %1, %4 : vector<2x1024xf32>
    %6 = vector.extract_strided_slice %0 {offsets = [0, 512], sizes = [2, 512], strides = [1, 1]} : vector<2x1024xf32> to vector<2x512xf32>
    %c512 = arith.constant 512 : index
    %c0_4 = arith.constant 0 : index
    %7 = vector.load %arg1[%c512, %c0_4] : memref<1024x1024xf32, #tpu.memory_space<vmem>>, vector<512x1024xf32>
    %cst_5 = arith.constant dense<0.000000e+00> : vector<2x1024xf32>
    %8 = tpu.matmul %6, %7, %cst_5 {dimension_numbers = #tpu.dot_dimension_numbers<[1], [0], [0], [1], [0, 0, 1, 1], [], []>} : vector<2x512xf32>, vector<512x1024xf32>, vector<2x1024xf32> -> vector<2x1024xf32>
    %9 = arith.addf %5, %8 : vector<2x1024xf32>
    %c0_6 = arith.constant 0 : index
    %c0_7 = arith.constant 0 : index
    %10 = vector.load %arg2[%c0_6, %c0_7] : memref<1x1024xf32, #tpu.memory_space<vmem>>, vector<1x1024xf32>
    %11 = vector.broadcast %10 : vector<1x1024xf32> to vector<2x1024xf32>
    %12 = arith.addf %9, %11 : vector<2x1024xf32>
    %cst_8 = arith.constant dense<0.000000e+00> : vector<1024xf32>
    %13 = vector.multi_reduction <add>, %12, %cst_8 [0] : vector<2x1024xf32> to vector<1024xf32>
    %14 = vector.shape_cast %13 : vector<1024xf32> to vector<1x1024xf32>
    %15 = arith.mulf %12, %12 : vector<2x1024xf32>
    %cst_9 = arith.constant dense<0.000000e+00> : vector<1024xf32>
    %16 = vector.multi_reduction <add>, %15, %cst_9 [0] : vector<2x1024xf32> to vector<1024xf32>
    %17 = vector.shape_cast %16 : vector<1024xf32> to vector<1x1024xf32>
    %c0_10 = arith.constant 0 : index
    %c0_11 = arith.constant 0 : index
    %18 = vector.load %arg3[%c0_10, %c0_11] : memref<1024x16xf32, #tpu.memory_space<vmem>>, vector<1024x16xf32>
    %cst_12 = arith.constant dense<0.000000e+00> : vector<1x16xf32>
    %19 = tpu.matmul %14, %18, %cst_12 {dimension_numbers = #tpu.dot_dimension_numbers<[1], [0], [0], [1], [0, 0, 1, 1], [], []>} : vector<1x1024xf32>, vector<1024x16xf32>, vector<1x16xf32> -> vector<1x16xf32>
    %cst_13 = arith.constant 7.812500e-03 : f32
    %20 = vector.broadcast %cst_13 : f32 to vector<1x16xf32>
    %21 = arith.mulf %19, %20 : vector<1x16xf32>
    %c0_14 = arith.constant 0 : index
    %c0_15 = arith.constant 0 : index
    %22 = vector.load %arg3[%c0_14, %c0_15] : memref<1024x16xf32, #tpu.memory_space<vmem>>, vector<1024x16xf32>
    %cst_16 = arith.constant dense<0.000000e+00> : vector<1x16xf32>
    %23 = tpu.matmul %17, %22, %cst_16 {dimension_numbers = #tpu.dot_dimension_numbers<[1], [0], [0], [1], [0, 0, 1, 1], [], []>} : vector<1x1024xf32>, vector<1024x16xf32>, vector<1x16xf32> -> vector<1x16xf32>
    %cst_17 = arith.constant 7.812500e-03 : f32
    %24 = vector.broadcast %cst_17 : f32 to vector<1x16xf32>
    %25 = arith.mulf %23, %24 : vector<1x16xf32>
    %26 = arith.mulf %21, %21 : vector<1x16xf32>
    %27 = arith.subf %25, %26 : vector<1x16xf32>
    %c0_18 = arith.constant 0 : index
    %c0_19 = arith.constant 0 : index
    %28 = vector.load %arg5[%c0_18, %c0_19] : memref<1x16xf32, #tpu.memory_space<vmem>>, vector<1x16xf32>
    %cst_20 = arith.constant 9.99999974E-6 : f32
    %29 = vector.broadcast %cst_20 : f32 to vector<1x16xf32>
    %30 = arith.addf %27, %29 : vector<1x16xf32>
    %31 = math.rsqrt %30 : vector<1x16xf32>
    %32 = arith.mulf %28, %31 : vector<1x16xf32>
    %c0_21 = arith.constant 0 : index
    %c0_22 = arith.constant 0 : index
    %33 = vector.load %arg6[%c0_21, %c0_22] : memref<1x16xf32, #tpu.memory_space<vmem>>, vector<1x16xf32>
    %34 = arith.mulf %21, %32 : vector<1x16xf32>
    %35 = arith.subf %33, %34 : vector<1x16xf32>
    %c0_23 = arith.constant 0 : index
    %c0_24 = arith.constant 0 : index
    %36 = vector.load %arg4[%c0_23, %c0_24] : memref<16x1024xf32, #tpu.memory_space<vmem>>, vector<16x1024xf32>
    %cst_25 = arith.constant dense<0.000000e+00> : vector<1x1024xf32>
    %37 = tpu.matmul %32, %36, %cst_25 {dimension_numbers = #tpu.dot_dimension_numbers<[1], [0], [0], [1], [0, 0, 1, 1], [], []>} : vector<1x16xf32>, vector<16x1024xf32>, vector<1x1024xf32> -> vector<1x1024xf32>
    %38 = vector.broadcast %37 : vector<1x1024xf32> to vector<2x1024xf32>
    %39 = arith.mulf %12, %38 : vector<2x1024xf32>
    %c0_26 = arith.constant 0 : index
    %c0_27 = arith.constant 0 : index
    %40 = vector.load %arg4[%c0_26, %c0_27] : memref<16x1024xf32, #tpu.memory_space<vmem>>, vector<16x1024xf32>
    %cst_28 = arith.constant dense<0.000000e+00> : vector<1x1024xf32>
    %41 = tpu.matmul %35, %40, %cst_28 {dimension_numbers = #tpu.dot_dimension_numbers<[1], [0], [0], [1], [0, 0, 1, 1], [], []>} : vector<1x16xf32>, vector<16x1024xf32>, vector<1x1024xf32> -> vector<1x1024xf32>
    %42 = vector.broadcast %41 : vector<1x1024xf32> to vector<2x1024xf32>
    %43 = arith.addf %39, %42 : vector<2x1024xf32>
    %cst_29 = arith.constant 0.00999999977 : f32
    %44 = vector.broadcast %cst_29 : f32 to vector<2x1024xf32>
    %45 = arith.mulf %44, %43 : vector<2x1024xf32>
    %46 = arith.maximumf %43, %45 : vector<2x1024xf32>
    %cst_30 = arith.constant 0.000000e+00 : f32
    %47 = vector.broadcast %cst_30 : f32 to vector<2x512xf32>
    %48 = vector.extract_strided_slice %46 {offsets = [0, 0], sizes = [2, 512], strides = [1, 1]} : vector<2x1024xf32> to vector<2x512xf32>
    %c0_31 = arith.constant 0 : index
    %c0_32 = arith.constant 0 : index
    %49 = vector.load %arg7[%c0_31, %c0_32] : memref<1024x512xf32, #tpu.memory_space<vmem>>, vector<512x512xf32>
    %cst_33 = arith.constant dense<0.000000e+00> : vector<2x512xf32>
    %50 = tpu.matmul %48, %49, %cst_33 {dimension_numbers = #tpu.dot_dimension_numbers<[1], [0], [0], [1], [0, 0, 1, 1], [], []>} : vector<2x512xf32>, vector<512x512xf32>, vector<2x512xf32> -> vector<2x512xf32>
    %51 = arith.addf %47, %50 : vector<2x512xf32>
    %52 = vector.extract_strided_slice %46 {offsets = [0, 512], sizes = [2, 512], strides = [1, 1]} : vector<2x1024xf32> to vector<2x512xf32>
    %c512_34 = arith.constant 512 : index
    %c0_35 = arith.constant 0 : index
    %53 = vector.load %arg7[%c512_34, %c0_35] : memref<1024x512xf32, #tpu.memory_space<vmem>>, vector<512x512xf32>
    %cst_36 = arith.constant dense<0.000000e+00> : vector<2x512xf32>
    %54 = tpu.matmul %52, %53, %cst_36 {dimension_numbers = #tpu.dot_dimension_numbers<[1], [0], [0], [1], [0, 0, 1, 1], [], []>} : vector<2x512xf32>, vector<512x512xf32>, vector<2x512xf32> -> vector<2x512xf32>
    %55 = arith.addf %51, %54 : vector<2x512xf32>
    %c0_37 = arith.constant 0 : index
    %c0_38 = arith.constant 0 : index
    %56 = vector.load %arg8[%c0_37, %c0_38] : memref<1x512xf32, #tpu.memory_space<vmem>>, vector<1x512xf32>
    %57 = vector.broadcast %56 : vector<1x512xf32> to vector<2x512xf32>
    %58 = arith.addf %55, %57 : vector<2x512xf32>
    %cst_39 = arith.constant dense<0.000000e+00> : vector<512xf32>
    %59 = vector.multi_reduction <add>, %58, %cst_39 [0] : vector<2x512xf32> to vector<512xf32>
    %60 = vector.shape_cast %59 : vector<512xf32> to vector<1x512xf32>
    %61 = arith.mulf %58, %58 : vector<2x512xf32>
    %cst_40 = arith.constant dense<0.000000e+00> : vector<512xf32>
    %62 = vector.multi_reduction <add>, %61, %cst_40 [0] : vector<2x512xf32> to vector<512xf32>
    %63 = vector.shape_cast %62 : vector<512xf32> to vector<1x512xf32>
    %c0_41 = arith.constant 0 : index
    %c0_42 = arith.constant 0 : index
    %64 = vector.load %arg9[%c0_41, %c0_42] : memref<512x32xf32, #tpu.memory_space<vmem>>, vector<512x32xf32>
    %cst_43 = arith.constant dense<0.000000e+00> : vector<1x32xf32>
    %65 = tpu.matmul %60, %64, %cst_43 {dimension_numbers = #tpu.dot_dimension_numbers<[1], [0], [0], [1], [0, 0, 1, 1], [], []>} : vector<1x512xf32>, vector<512x32xf32>, vector<1x32xf32> -> vector<1x32xf32>
    %cst_44 = arith.constant 3.125000e-02 : f32
    %66 = vector.broadcast %cst_44 : f32 to vector<1x32xf32>
    %67 = arith.mulf %65, %66 : vector<1x32xf32>
    %c0_45 = arith.constant 0 : index
    %c0_46 = arith.constant 0 : index
    %68 = vector.load %arg9[%c0_45, %c0_46] : memref<512x32xf32, #tpu.memory_space<vmem>>, vector<512x32xf32>
    %cst_47 = arith.constant dense<0.000000e+00> : vector<1x32xf32>
    %69 = tpu.matmul %63, %68, %cst_47 {dimension_numbers = #tpu.dot_dimension_numbers<[1], [0], [0], [1], [0, 0, 1, 1], [], []>} : vector<1x512xf32>, vector<512x32xf32>, vector<1x32xf32> -> vector<1x32xf32>
    %cst_48 = arith.constant 3.125000e-02 : f32
    %70 = vector.broadcast %cst_48 : f32 to vector<1x32xf32>
    %71 = arith.mulf %69, %70 : vector<1x32xf32>
    %72 = arith.mulf %67, %67 : vector<1x32xf32>
    %73 = arith.subf %71, %72 : vector<1x32xf32>
    %c0_49 = arith.constant 0 : index
    %c0_50 = arith.constant 0 : index
    %74 = vector.load %arg11[%c0_49, %c0_50] : memref<1x32xf32, #tpu.memory_space<vmem>>, vector<1x32xf32>
    %cst_51 = arith.constant 9.99999974E-6 : f32
    %75 = vector.broadcast %cst_51 : f32 to vector<1x32xf32>
    %76 = arith.addf %73, %75 : vector<1x32xf32>
    %77 = math.rsqrt %76 : vector<1x32xf32>
    %78 = arith.mulf %74, %77 : vector<1x32xf32>
    %c0_52 = arith.constant 0 : index
    %c0_53 = arith.constant 0 : index
    %79 = vector.load %arg12[%c0_52, %c0_53] : memref<1x32xf32, #tpu.memory_space<vmem>>, vector<1x32xf32>
    %80 = arith.mulf %67, %78 : vector<1x32xf32>
    %81 = arith.subf %79, %80 : vector<1x32xf32>
    %c0_54 = arith.constant 0 : index
    %c0_55 = arith.constant 0 : index
    %82 = vector.load %arg10[%c0_54, %c0_55] : memref<32x512xf32, #tpu.memory_space<vmem>>, vector<32x512xf32>
    %cst_56 = arith.constant dense<0.000000e+00> : vector<1x512xf32>
    %83 = tpu.matmul %78, %82, %cst_56 {dimension_numbers = #tpu.dot_dimension_numbers<[1], [0], [0], [1], [0, 0, 1, 1], [], []>} : vector<1x32xf32>, vector<32x512xf32>, vector<1x512xf32> -> vector<1x512xf32>
    %84 = vector.broadcast %83 : vector<1x512xf32> to vector<2x512xf32>
    %85 = arith.mulf %58, %84 : vector<2x512xf32>
    %c0_57 = arith.constant 0 : index
    %c0_58 = arith.constant 0 : index
    %86 = vector.load %arg10[%c0_57, %c0_58] : memref<32x512xf32, #tpu.memory_space<vmem>>, vector<32x512xf32>
    %cst_59 = arith.constant dense<0.000000e+00> : vector<1x512xf32>
    %87 = tpu.matmul %81, %86, %cst_59 {dimension_numbers = #tpu.dot_dimension_numbers<[1], [0], [0], [1], [0, 0, 1, 1], [], []>} : vector<1x32xf32>, vector<32x512xf32>, vector<1x512xf32> -> vector<1x512xf32>
    %88 = vector.broadcast %87 : vector<1x512xf32> to vector<2x512xf32>
    %89 = arith.addf %85, %88 : vector<2x512xf32>
    %cst_60 = arith.constant 0.00999999977 : f32
    %90 = vector.broadcast %cst_60 : f32 to vector<2x512xf32>
    %91 = arith.mulf %90, %89 : vector<2x512xf32>
    %92 = arith.maximumf %89, %91 : vector<2x512xf32>
    %cst_61 = arith.constant 0.000000e+00 : f32
    %93 = vector.broadcast %cst_61 : f32 to vector<2x256xf32>
    %c0_62 = arith.constant 0 : index
    %c0_63 = arith.constant 0 : index
    %94 = vector.load %arg13[%c0_62, %c0_63] : memref<512x256xf32, #tpu.memory_space<vmem>>, vector<512x256xf32>
    %cst_64 = arith.constant dense<0.000000e+00> : vector<2x256xf32>
    %95 = tpu.matmul %92, %94, %cst_64 {dimension_numbers = #tpu.dot_dimension_numbers<[1], [0], [0], [1], [0, 0, 1, 1], [], []>} : vector<2x512xf32>, vector<512x256xf32>, vector<2x256xf32> -> vector<2x256xf32>
    %96 = arith.addf %93, %95 : vector<2x256xf32>
    %c0_65 = arith.constant 0 : index
    %c0_66 = arith.constant 0 : index
    %97 = vector.load %arg14[%c0_65, %c0_66] : memref<1x256xf32, #tpu.memory_space<vmem>>, vector<1x256xf32>
    %98 = vector.broadcast %97 : vector<1x256xf32> to vector<2x256xf32>
    %99 = arith.addf %96, %98 : vector<2x256xf32>
    %cst_67 = arith.constant dense<0.000000e+00> : vector<256xf32>
    %100 = vector.multi_reduction <add>, %99, %cst_67 [0] : vector<2x256xf32> to vector<256xf32>
    %101 = vector.shape_cast %100 : vector<256xf32> to vector<1x256xf32>
    %102 = arith.mulf %99, %99 : vector<2x256xf32>
    %cst_68 = arith.constant dense<0.000000e+00> : vector<256xf32>
    %103 = vector.multi_reduction <add>, %102, %cst_68 [0] : vector<2x256xf32> to vector<256xf32>
    %104 = vector.shape_cast %103 : vector<256xf32> to vector<1x256xf32>
    %c0_69 = arith.constant 0 : index
    %c0_70 = arith.constant 0 : index
    %105 = vector.load %arg15[%c0_69, %c0_70] : memref<256x64xf32, #tpu.memory_space<vmem>>, vector<256x64xf32>
    %cst_71 = arith.constant dense<0.000000e+00> : vector<1x64xf32>
    %106 = tpu.matmul %101, %105, %cst_71 {dimension_numbers = #tpu.dot_dimension_numbers<[1], [0], [0], [1], [0, 0, 1, 1], [], []>} : vector<1x256xf32>, vector<256x64xf32>, vector<1x64xf32> -> vector<1x64xf32>
    %cst_72 = arith.constant 1.250000e-01 : f32
    %107 = vector.broadcast %cst_72 : f32 to vector<1x64xf32>
    %108 = arith.mulf %106, %107 : vector<1x64xf32>
    %c0_73 = arith.constant 0 : index
    %c0_74 = arith.constant 0 : index
    %109 = vector.load %arg15[%c0_73, %c0_74] : memref<256x64xf32, #tpu.memory_space<vmem>>, vector<256x64xf32>
    %cst_75 = arith.constant dense<0.000000e+00> : vector<1x64xf32>
    %110 = tpu.matmul %104, %109, %cst_75 {dimension_numbers = #tpu.dot_dimension_numbers<[1], [0], [0], [1], [0, 0, 1, 1], [], []>} : vector<1x256xf32>, vector<256x64xf32>, vector<1x64xf32> -> vector<1x64xf32>
    %cst_76 = arith.constant 1.250000e-01 : f32
    %111 = vector.broadcast %cst_76 : f32 to vector<1x64xf32>
    %112 = arith.mulf %110, %111 : vector<1x64xf32>
    %113 = arith.mulf %108, %108 : vector<1x64xf32>
    %114 = arith.subf %112, %113 : vector<1x64xf32>
    %c0_77 = arith.constant 0 : index
    %c0_78 = arith.constant 0 : index
    %115 = vector.load %arg17[%c0_77, %c0_78] : memref<1x64xf32, #tpu.memory_space<vmem>>, vector<1x64xf32>
    %cst_79 = arith.constant 9.99999974E-6 : f32
    %116 = vector.broadcast %cst_79 : f32 to vector<1x64xf32>
    %117 = arith.addf %114, %116 : vector<1x64xf32>
    %118 = math.rsqrt %117 : vector<1x64xf32>
    %119 = arith.mulf %115, %118 : vector<1x64xf32>
    %c0_80 = arith.constant 0 : index
    %c0_81 = arith.constant 0 : index
    %120 = vector.load %arg18[%c0_80, %c0_81] : memref<1x64xf32, #tpu.memory_space<vmem>>, vector<1x64xf32>
    %121 = arith.mulf %108, %119 : vector<1x64xf32>
    %122 = arith.subf %120, %121 : vector<1x64xf32>
    %c0_82 = arith.constant 0 : index
    %c0_83 = arith.constant 0 : index
    %123 = vector.load %arg16[%c0_82, %c0_83] : memref<64x256xf32, #tpu.memory_space<vmem>>, vector<64x256xf32>
    %cst_84 = arith.constant dense<0.000000e+00> : vector<1x256xf32>
    %124 = tpu.matmul %119, %123, %cst_84 {dimension_numbers = #tpu.dot_dimension_numbers<[1], [0], [0], [1], [0, 0, 1, 1], [], []>} : vector<1x64xf32>, vector<64x256xf32>, vector<1x256xf32> -> vector<1x256xf32>
    %125 = vector.broadcast %124 : vector<1x256xf32> to vector<2x256xf32>
    %126 = arith.mulf %99, %125 : vector<2x256xf32>
    %c0_85 = arith.constant 0 : index
    %c0_86 = arith.constant 0 : index
    %127 = vector.load %arg16[%c0_85, %c0_86] : memref<64x256xf32, #tpu.memory_space<vmem>>, vector<64x256xf32>
    %cst_87 = arith.constant dense<0.000000e+00> : vector<1x256xf32>
    %128 = tpu.matmul %122, %127, %cst_87 {dimension_numbers = #tpu.dot_dimension_numbers<[1], [0], [0], [1], [0, 0, 1, 1], [], []>} : vector<1x64xf32>, vector<64x256xf32>, vector<1x256xf32> -> vector<1x256xf32>
    %129 = vector.broadcast %128 : vector<1x256xf32> to vector<2x256xf32>
    %130 = arith.addf %126, %129 : vector<2x256xf32>
    %cst_88 = arith.constant 0.00999999977 : f32
    %131 = vector.broadcast %cst_88 : f32 to vector<2x256xf32>
    %132 = arith.mulf %131, %130 : vector<2x256xf32>
    %133 = arith.maximumf %130, %132 : vector<2x256xf32>
    %cst_89 = arith.constant 0.000000e+00 : f32
    %134 = vector.broadcast %cst_89 : f32 to vector<2x128xf32>
    %c0_90 = arith.constant 0 : index
    %c0_91 = arith.constant 0 : index
    %135 = vector.load %arg19[%c0_90, %c0_91] : memref<256x128xf32, #tpu.memory_space<vmem>>, vector<256x128xf32>
    %cst_92 = arith.constant dense<0.000000e+00> : vector<2x128xf32>
    %136 = tpu.matmul %133, %135, %cst_92 {dimension_numbers = #tpu.dot_dimension_numbers<[1], [0], [0], [1], [0, 0, 1, 1], [], []>} : vector<2x256xf32>, vector<256x128xf32>, vector<2x128xf32> -> vector<2x128xf32>
    %137 = arith.addf %134, %136 : vector<2x128xf32>
    %c0_93 = arith.constant 0 : index
    %c0_94 = arith.constant 0 : index
    %138 = vector.load %arg20[%c0_93, %c0_94] : memref<1x128xf32, #tpu.memory_space<vmem>>, vector<1x128xf32>
    %139 = vector.broadcast %138 : vector<1x128xf32> to vector<2x128xf32>
    %140 = arith.addf %137, %139 : vector<2x128xf32>
    %cst_95 = arith.constant dense<0.000000e+00> : vector<128xf32>
    %141 = vector.multi_reduction <add>, %140, %cst_95 [0] : vector<2x128xf32> to vector<128xf32>
    %142 = vector.shape_cast %141 : vector<128xf32> to vector<1x128xf32>
    %143 = arith.mulf %140, %140 : vector<2x128xf32>
    %cst_96 = arith.constant dense<0.000000e+00> : vector<128xf32>
    %144 = vector.multi_reduction <add>, %143, %cst_96 [0] : vector<2x128xf32> to vector<128xf32>
    %145 = vector.shape_cast %144 : vector<128xf32> to vector<1x128xf32>
    %c0_97 = arith.constant 0 : index
    %c0_98 = arith.constant 0 : index
    %146 = vector.load %arg21[%c0_97, %c0_98] : memref<128x128xf32, #tpu.memory_space<vmem>>, vector<128x128xf32>
    %cst_99 = arith.constant dense<0.000000e+00> : vector<1x128xf32>
    %147 = tpu.matmul %142, %146, %cst_99 {dimension_numbers = #tpu.dot_dimension_numbers<[1], [0], [0], [1], [0, 0, 1, 1], [], []>} : vector<1x128xf32>, vector<128x128xf32>, vector<1x128xf32> -> vector<1x128xf32>
    %cst_100 = arith.constant 5.000000e-01 : f32
    %148 = vector.broadcast %cst_100 : f32 to vector<1x128xf32>
    %149 = arith.mulf %147, %148 : vector<1x128xf32>
    %c0_101 = arith.constant 0 : index
    %c0_102 = arith.constant 0 : index
    %150 = vector.load %arg21[%c0_101, %c0_102] : memref<128x128xf32, #tpu.memory_space<vmem>>, vector<128x128xf32>
    %cst_103 = arith.constant dense<0.000000e+00> : vector<1x128xf32>
    %151 = tpu.matmul %145, %150, %cst_103 {dimension_numbers = #tpu.dot_dimension_numbers<[1], [0], [0], [1], [0, 0, 1, 1], [], []>} : vector<1x128xf32>, vector<128x128xf32>, vector<1x128xf32> -> vector<1x128xf32>
    %cst_104 = arith.constant 5.000000e-01 : f32
    %152 = vector.broadcast %cst_104 : f32 to vector<1x128xf32>
    %153 = arith.mulf %151, %152 : vector<1x128xf32>
    %154 = arith.mulf %149, %149 : vector<1x128xf32>
    %155 = arith.subf %153, %154 : vector<1x128xf32>
    %c0_105 = arith.constant 0 : index
    %c0_106 = arith.constant 0 : index
    %156 = vector.load %arg23[%c0_105, %c0_106] : memref<1x128xf32, #tpu.memory_space<vmem>>, vector<1x128xf32>
    %cst_107 = arith.constant 9.99999974E-6 : f32
    %157 = vector.broadcast %cst_107 : f32 to vector<1x128xf32>
    %158 = arith.addf %155, %157 : vector<1x128xf32>
    %159 = math.rsqrt %158 : vector<1x128xf32>
    %160 = arith.mulf %156, %159 : vector<1x128xf32>
    %c0_108 = arith.constant 0 : index
    %c0_109 = arith.constant 0 : index
    %161 = vector.load %arg24[%c0_108, %c0_109] : memref<1x128xf32, #tpu.memory_space<vmem>>, vector<1x128xf32>
    %162 = arith.mulf %149, %160 : vector<1x128xf32>
    %163 = arith.subf %161, %162 : vector<1x128xf32>
    %c0_110 = arith.constant 0 : index
    %c0_111 = arith.constant 0 : index
    %164 = vector.load %arg22[%c0_110, %c0_111] : memref<128x128xf32, #tpu.memory_space<vmem>>, vector<128x128xf32>
    %cst_112 = arith.constant dense<0.000000e+00> : vector<1x128xf32>
    %165 = tpu.matmul %160, %164, %cst_112 {dimension_numbers = #tpu.dot_dimension_numbers<[1], [0], [0], [1], [0, 0, 1, 1], [], []>} : vector<1x128xf32>, vector<128x128xf32>, vector<1x128xf32> -> vector<1x128xf32>
    %166 = vector.broadcast %165 : vector<1x128xf32> to vector<2x128xf32>
    %167 = arith.mulf %140, %166 : vector<2x128xf32>
    %c0_113 = arith.constant 0 : index
    %c0_114 = arith.constant 0 : index
    %168 = vector.load %arg22[%c0_113, %c0_114] : memref<128x128xf32, #tpu.memory_space<vmem>>, vector<128x128xf32>
    %cst_115 = arith.constant dense<0.000000e+00> : vector<1x128xf32>
    %169 = tpu.matmul %163, %168, %cst_115 {dimension_numbers = #tpu.dot_dimension_numbers<[1], [0], [0], [1], [0, 0, 1, 1], [], []>} : vector<1x128xf32>, vector<128x128xf32>, vector<1x128xf32> -> vector<1x128xf32>
    %170 = vector.broadcast %169 : vector<1x128xf32> to vector<2x128xf32>
    %171 = arith.addf %167, %170 : vector<2x128xf32>
    %cst_116 = arith.constant 0.00999999977 : f32
    %172 = vector.broadcast %cst_116 : f32 to vector<2x128xf32>
    %173 = arith.mulf %172, %171 : vector<2x128xf32>
    %174 = arith.maximumf %171, %173 : vector<2x128xf32>
    %c0_117 = arith.constant 0 : index
    %c0_118 = arith.constant 0 : index
    %175 = vector.load %arg25[%c0_117, %c0_118] : memref<128x128xf32, #tpu.memory_space<vmem>>, vector<128x128xf32>
    %cst_119 = arith.constant dense<0.000000e+00> : vector<2x128xf32>
    %176 = tpu.matmul %174, %175, %cst_119 {dimension_numbers = #tpu.dot_dimension_numbers<[1], [0], [0], [1], [0, 0, 1, 1], [], []>} : vector<2x128xf32>, vector<128x128xf32>, vector<2x128xf32> -> vector<2x128xf32>
    %c0_120 = arith.constant 0 : index
    %c0_121 = arith.constant 0 : index
    %177 = vector.load %arg26[%c0_120, %c0_121] : memref<1x128xf32, #tpu.memory_space<vmem>>, vector<1x128xf32>
    %178 = vector.broadcast %177 : vector<1x128xf32> to vector<2x128xf32>
    %179 = arith.addf %176, %178 : vector<2x128xf32>
    %cst_122 = arith.constant 0.00999999977 : f32
    %180 = vector.broadcast %cst_122 : f32 to vector<2x128xf32>
    %181 = arith.mulf %180, %179 : vector<2x128xf32>
    %182 = arith.maximumf %179, %181 : vector<2x128xf32>
    %c0_123 = arith.constant 0 : index
    %c0_124 = arith.constant 0 : index
    %183 = vector.load %arg27[%c0_123, %c0_124] : memref<128x64xf32, #tpu.memory_space<vmem>>, vector<128x64xf32>
    %cst_125 = arith.constant dense<0.000000e+00> : vector<2x64xf32>
    %184 = tpu.matmul %182, %183, %cst_125 {dimension_numbers = #tpu.dot_dimension_numbers<[1], [0], [0], [1], [0, 0, 1, 1], [], []>} : vector<2x128xf32>, vector<128x64xf32>, vector<2x64xf32> -> vector<2x64xf32>
    %c0_126 = arith.constant 0 : index
    %c0_127 = arith.constant 0 : index
    %185 = vector.load %arg28[%c0_126, %c0_127] : memref<1x64xf32, #tpu.memory_space<vmem>>, vector<1x64xf32>
    %186 = vector.broadcast %185 : vector<1x64xf32> to vector<2x64xf32>
    %187 = arith.addf %184, %186 : vector<2x64xf32>
    %cst_128 = arith.constant 0.00999999977 : f32
    %188 = vector.broadcast %cst_128 : f32 to vector<2x64xf32>
    %189 = arith.mulf %188, %187 : vector<2x64xf32>
    %190 = arith.maximumf %187, %189 : vector<2x64xf32>
    %c0_129 = arith.constant 0 : index
    %c0_130 = arith.constant 0 : index
    %191 = vector.load %arg29[%c0_129, %c0_130] : memref<64x32xf32, #tpu.memory_space<vmem>>, vector<64x32xf32>
    %cst_131 = arith.constant dense<0.000000e+00> : vector<2x32xf32>
    %192 = tpu.matmul %190, %191, %cst_131 {dimension_numbers = #tpu.dot_dimension_numbers<[1], [0], [0], [1], [0, 0, 1, 1], [], []>} : vector<2x64xf32>, vector<64x32xf32>, vector<2x32xf32> -> vector<2x32xf32>
    %c0_132 = arith.constant 0 : index
    %c0_133 = arith.constant 0 : index
    %193 = vector.load %arg30[%c0_132, %c0_133] : memref<1x32xf32, #tpu.memory_space<vmem>>, vector<1x32xf32>
    %194 = vector.broadcast %193 : vector<1x32xf32> to vector<2x32xf32>
    %195 = arith.addf %192, %194 : vector<2x32xf32>
    %cst_134 = arith.constant 0.00999999977 : f32
    %196 = vector.broadcast %cst_134 : f32 to vector<2x32xf32>
    %197 = arith.mulf %196, %195 : vector<2x32xf32>
    %198 = arith.maximumf %195, %197 : vector<2x32xf32>
    %c0_135 = arith.constant 0 : index
    %c0_136 = arith.constant 0 : index
    %199 = vector.load %arg31[%c0_135, %c0_136] : memref<32x128xf32, #tpu.memory_space<vmem>>, vector<32x128xf32>
    %cst_137 = arith.constant dense<0.000000e+00> : vector<2x128xf32>
    %200 = tpu.matmul %198, %199, %cst_137 {dimension_numbers = #tpu.dot_dimension_numbers<[1], [0], [0], [1], [0, 0, 1, 1], [], []>} : vector<2x32xf32>, vector<32x128xf32>, vector<2x128xf32> -> vector<2x128xf32>
    %c0_138 = arith.constant 0 : index
    %c0_139 = arith.constant 0 : index
    %201 = vector.load %arg32[%c0_138, %c0_139] : memref<1x128xf32, #tpu.memory_space<vmem>>, vector<1x128xf32>
    %202 = vector.broadcast %201 : vector<1x128xf32> to vector<2x128xf32>
    %203 = arith.addf %200, %202 : vector<2x128xf32>
    %cst_140 = arith.constant 0.00999999977 : f32
    %204 = vector.broadcast %cst_140 : f32 to vector<2x128xf32>
    %205 = arith.mulf %204, %203 : vector<2x128xf32>
    %206 = arith.maximumf %203, %205 : vector<2x128xf32>
    %c0_141 = arith.constant 0 : index
    %c0_142 = arith.constant 0 : index
    %207 = vector.load %arg33[%c0_141, %c0_142] : memref<2x128xf32, #tpu.memory_space<vmem>>, vector<2x128xf32>
    tpu.vector_store %arg33[%c0_141, %c0_142], %206 {strides = array<i32>} : memref<2x128xf32, #tpu.memory_space<vmem>>, vector<2x128xf32>,
    return
  }
}

</mosaic_0001>

<llo_original>
// kernel: cnn_mlp_forward.1
$region0: #{cnn_mlp_forward.1}
  #allocation0 [shape = 'u32[]', space=smem, size = 0x4, offset = 0x4, fixed_abs, tag = 'smem constant byte address 0x4 - core index']
  #allocation1 [shape = 'u32[72,128]{1,0:T(1,128)}', space=vmem, size = 0x9000, scoped, tag = 'internal scratch']
  %s0 = inlined_call_operand.smem [shape: u32[34], index: -1, kind: input, shape index: {}]
  %s1 = sld [smem:[%s0]]
  %s2 = scalar_lea.smem %s0, 1
  %s3 = sld [smem:[%s2]]
  %s4 = scalar_lea.smem %s0, 2
  %s5 = sld [smem:[%s4]]
  %s6 = scalar_lea.smem %s0, 3
  %s7 = sld [smem:[%s6]]
  %s8 = scalar_lea.smem %s0, 4
  %s9 = sld [smem:[%s8]]
  %s10 = scalar_lea.smem %s0, 5
  %s11 = sld [smem:[%s10]]
  %s12 = scalar_lea.smem %s0, 6
  %s13 = sld [smem:[%s12]]
  %s14 = scalar_lea.smem %s0, 7
  %s15 = sld [smem:[%s14]]
  %s16 = scalar_lea.smem %s0, 8
  %s17 = sld [smem:[%s16]]
  %s18 = scalar_lea.smem %s0, 9
  %s19 = sld [smem:[%s18]]
  %s20 = scalar_lea.smem %s0, 10
  %s21 = sld [smem:[%s20]]
  %s22 = scalar_lea.smem %s0, 11
  %s23 = sld [smem:[%s22]]
  %s24 = scalar_lea.smem %s0, 12
  %s25 = sld [smem:[%s24]]
  %s26 = scalar_lea.smem %s0, 13
  %s27 = sld [smem:[%s26]]
  %s28 = scalar_lea.smem %s0, 14
  %s29 = sld [smem:[%s28]]
  %s30 = scalar_lea.smem %s0, 15
  %s31 = sld [smem:[%s30]]
  %s32 = scalar_lea.smem %s0, 16
  %s33 = sld [smem:[%s32]]
  %s34 = scalar_lea.smem %s0, 17
  %s35 = sld [smem:[%s34]]
  %s36 = scalar_lea.smem %s0, 18
  %s37 = sld [smem:[%s36]]
  %s38 = scalar_lea.smem %s0, 19
  %s39 = sld [smem:[%s38]]
  %s40 = scalar_lea.smem %s0, 20
  %s41 = sld [smem:[%s40]]
  %s42 = scalar_lea.smem %s0, 21
  %s43 = sld [smem:[%s42]]
  %s44 = scalar_lea.smem %s0, 22
  %s45 = sld [smem:[%s44]]
  %s46 = scalar_lea.smem %s0, 23
  %s47 = sld [smem:[%s46]]
  %s48 = scalar_lea.smem %s0, 24
  %s49 = sld [smem:[%s48]]
  %s50 = scalar_lea.smem %s0, 25
  %s51 = sld [smem:[%s50]]
  %s52 = scalar_lea.smem %s0, 26
  %s53 = sld [smem:[%s52]]
  %s54 = scalar_lea.smem %s0, 27
  %s55 = sld [smem:[%s54]]
  %s56 = scalar_lea.smem %s0, 28
  %s57 = sld [smem:[%s56]]
  %s58 = scalar_lea.smem %s0, 29
  %s59 = sld [smem:[%s58]]
  %s60 = scalar_lea.smem %s0, 30
  %s61 = sld [smem:[%s60]]
  %s62 = scalar_lea.smem %s0, 31
  %s63 = sld [smem:[%s62]]
  %s64 = scalar_lea.smem %s0, 32
  %s65 = sld [smem:[%s64]]
  %s66 = scalar_lea.smem %s0, 33
  %s67 = sld [smem:[%s66]]
  %s68 = sld [smem:[#allocation0]]
  $region250: #{cnn_mlp_forward.1} parent=0
    _
  %s70 = ssub.s32 1, %s68
  %s71 = scalar_select 0, %s70, %s68
  $region1: #{cnn_mlp_forward.1} parent=0
    #allocation2 [shape = 'u8[4194304]{0}', space=vmem, size = 0x400000, scoped, tag = 'input window, operand 1, single buffered']
    #allocation3 [shape = 's32[1]{0}', space=sflag, size = 0x4, scoped, tag = 'scoped memory for cnn_mlp_forward.1']
    #allocation4 [shape = 's32[1]{0}', space=sflag, size = 0x4, scoped, tag = 'scoped memory for cnn_mlp_forward.1']
    #allocation5 [shape = 'u8[4096]{0}', space=vmem, size = 0x1000, scoped, tag = 'input window, operand 2, single buffered']
    #allocation6 [shape = 's32[1]{0}', space=sflag, size = 0x4, scoped, tag = 'scoped memory for cnn_mlp_forward.1']
    #allocation7 [shape = 'u8[65536]{0}', space=vmem, size = 0x10000, scoped, tag = 'input window, operand 4, single buffered']
    #allocation8 [shape = 'u8[512]{0}', space=vmem, size = 0x400, scoped, tag = 'input window, operand 5, single buffered']
    #allocation9 [shape = 's32[1]{0}', space=sflag, size = 0x4, scoped, tag = 'scoped memory for cnn_mlp_forward.1']
    #allocation10 [shape = 'u8[512]{0}', space=vmem, size = 0x400, scoped, tag = 'input window, operand 6, single buffered']
    #allocation11 [shape = 'u8[2097152]{0}', space=vmem, size = 0x200000, scoped, tag = 'input window, operand 7, single buffered']
    #allocation12 [shape = 's32[1]{0}', space=sflag, size = 0x4, scoped, tag = 'scoped memory for cnn_mlp_forward.1']
    #allocation13 [shape = 'u8[2048]{0}', space=vmem, size = 0x800, scoped, tag = 'input window, operand 8, single buffered']
    #allocation14 [shape = 'u8[65536]{0}', space=vmem, size = 0x10000, scoped, tag = 'input window, operand 10, single buffered']
    #allocation15 [shape = 's32[1]{0}', space=sflag, size = 0x4, scoped, tag = 'scoped memory for cnn_mlp_forward.1']
    #allocation16 [shape = 'u8[512]{0}', space=vmem, size = 0x400, scoped, tag = 'input window, operand 11, single buffered']
    #allocation17 [shape = 'u8[512]{0}', space=vmem, size = 0x400, scoped, tag = 'input window, operand 12, single buffered']
    #allocation18 [shape = 's32[1]{0}', space=sflag, size = 0x4, scoped, tag = 'scoped memory for cnn_mlp_forward.1']
    #allocation19 [shape = 'u8[524288]{0}', space=vmem, size = 0x80000, scoped, tag = 'input window, operand 13, single buffered']
    #allocation20 [shape = 'u8[1024]{0}', space=vmem, size = 0x400, scoped, tag = 'input window, operand 14, single buffered']
    #allocation21 [shape = 's32[1]{0}', space=sflag, size = 0x4, scoped, tag = 'scoped memory for cnn_mlp_forward.1']
    #allocation22 [shape = 'u8[65536]{0}', space=vmem, size = 0x10000, scoped, tag = 'input window, operand 16, single buffered']
    #allocation23 [shape = 'u8[512]{0}', space=vmem, size = 0x400, scoped, tag = 'input window, operand 17, single buffered']
    #allocation24 [shape = 's32[1]{0}', space=sflag, size = 0x4, scoped, tag = 'scoped memory for cnn_mlp_forward.1']
    #allocation25 [shape = 'u8[512]{0}', space=vmem, size = 0x400, scoped, tag = 'input window, operand 18, single buffered']
    #allocation26 [shape = 'u8[131072]{0}', space=vmem, size = 0x20000, scoped, tag = 'input window, operand 19, single buffered']
    #allocation27 [shape = 's32[1]{0}', space=sflag, size = 0x4, scoped, tag = 'scoped memory for cnn_mlp_forward.1']
    #allocation28 [shape = 'u8[512]{0}', space=vmem, size = 0x400, scoped, tag = 'input window, operand 20, single buffered']
    #allocation29 [shape = 'u8[65536]{0}', space=vmem, size = 0x10000, scoped, tag = 'input window, operand 21, single buffered']
    #allocation30 [shape = 's32[1]{0}', space=sflag, size = 0x4, scoped, tag = 'scoped memory for cnn_mlp_forward.1']
    #allocation31 [shape = 'u8[65536]{0}', space=vmem, size = 0x10000, scoped, tag = 'input window, operand 22, single buffered']
    #allocation32 [shape = 'u8[512]{0}', space=vmem, size = 0x400, scoped, tag = 'input window, operand 23, single buffered']
    #allocation33 [shape = 's32[1]{0}', space=sflag, size = 0x4, scoped, tag = 'scoped memory for cnn_mlp_forward.1']
    #allocation34 [shape = 'u8[512]{0}', space=vmem, size = 0x400, scoped, tag = 'input window, operand 24, single buffered']
    #allocation35 [shape = 'u8[65536]{0}', space=vmem, size = 0x10000, scoped, tag = 'input window, operand 25, single buffered']
    #allocation36 [shape = 's32[1]{0}', space=sflag, size = 0x4, scoped, tag = 'scoped memory for cnn_mlp_forward.1']
    #allocation37 [shape = 'u8[512]{0}', space=vmem, size = 0x400, scoped, tag = 'input window, operand 26, single buffered']
    #allocation38 [shape = 'u8[512]{0}', space=vmem, size = 0x400, scoped, tag = 'input window, operand 28, single buffered']
    #allocation39 [shape = 's32[1]{0}', space=sflag, size = 0x4, scoped, tag = 'scoped memory for cnn_mlp_forward.1']
    #allocation40 [shape = 'u8[512]{0}', space=vmem, size = 0x400, scoped, tag = 'input window, operand 30, single buffered']
    #allocation41 [shape = 'u8[16384]{0}', space=vmem, size = 0x4000, scoped, tag = 'input window, operand 31, single buffered']
    #allocation42 [shape = 's32[1]{0}', space=sflag, size = 0x4, scoped, tag = 'scoped memory for cnn_mlp_forward.1']
    #allocation43 [shape = 'u8[512]{0}', space=vmem, size = 0x400, scoped, tag = 'input window, operand 32, single buffered']
    #allocation44 [shape = 'u8[1024]{0}', space=vmem, size = 0x400, scoped, tag = 'output window, operand 0, single buffered']
    %72 = vsyncpa [#allocation3], 0
    %73 = vsyncpa [#allocation6], 0
    %74 = vsyncpa [#allocation9], 0
    %75 = vsyncpa [#allocation12], 0
    %76 = vsyncpa [#allocation15], 0
    %77 = vsyncpa [#allocation18], 0
    %78 = vsyncpa [#allocation21], 0
    %79 = vsyncpa [#allocation24], 0
    %80 = vsyncpa [#allocation27], 0
    %81 = vsyncpa [#allocation30], 0
    %82 = vsyncpa [#allocation33], 0
    %83 = vsyncpa [#allocation36], 0
    %84 = vsyncpa [#allocation39], 0
    %85 = vsyncpa [#allocation42], 0
    %86 = vsyncpa [#allocation4], 0
    // Predicated region
    $region2: #{cnn_mlp_forward.1} parent=1 // pred_check
      _
    $region3: #{cnn_mlp_forward.1} parent=1 // pred_check_branch
      %88 = sbr.rel (0) target = $region5
    $region4: #{cnn_mlp_forward.1} parent=1 // pred_region
      _
    $region5: #{cnn_mlp_forward.1} parent=1 // pred_fallthru
      _
    // Predicated region
    $region6: #{cnn_mlp_forward.1} parent=1 // pred_check
      _
    $region7: #{cnn_mlp_forward.1} parent=1 // pred_check_branch
      %90 = sbr.rel (0) target = $region9
    $region8: #{cnn_mlp_forward.1} parent=1 // pred_region
      %92 = vsyncadd [#allocation3], 0
      %s93 = sshll.u32 %s3, 4
      %s94 = int_to_ptr.hbm [resolvable:$true] %s93
      %s95 = sshll.u32 [#allocation2], 4
      %s96 = int_to_ptr.vmem [resolvable:$true] %s95
      %101 = dma.hbm_to_vmem [thread:$0]  %s94, 131072, %s96, [#allocation3], 1024, 1024, 64
    $region9: #{cnn_mlp_forward.1} parent=1 // pred_fallthru
      _
    // Predicated region
    $region10: #{cnn_mlp_forward.1} parent=1 // pred_check
      _
    $region11: #{cnn_mlp_forward.1} parent=1 // pred_check_branch
      %103 = sbr.rel (0) target = $region13
    $region12: #{cnn_mlp_forward.1} parent=1 // pred_region
      %105 = vsyncadd [#allocation6], 0
      %s107 = sshll.u32 %s5, 4
      %s108 = int_to_ptr.hbm [resolvable:$true] %s107
      %s109 = sshll.u32 [#allocation5], 4
      %s110 = int_to_ptr.vmem [resolvable:$true] %s109
      %112 = dma.hbm_to_vmem [thread:$0]  %s108, 128, %s110, [#allocation6]
    $region13: #{cnn_mlp_forward.1} parent=1 // pred_fallthru
      _
    // Predicated region
    $region14: #{cnn_mlp_forward.1} parent=1 // pred_check
      _
    $region15: #{cnn_mlp_forward.1} parent=1 // pred_check_branch
      %114 = sbr.rel (0) target = $region17
    $region16: #{cnn_mlp_forward.1} parent=1 // pred_region
      _
    $region17: #{cnn_mlp_forward.1} parent=1 // pred_fallthru
      _
    // Predicated region
    $region18: #{cnn_mlp_forward.1} parent=1 // pred_check
      _
    $region19: #{cnn_mlp_forward.1} parent=1 // pred_check_branch
      %116 = sbr.rel (0) target = $region21
    $region20: #{cnn_mlp_forward.1} parent=1 // pred_region
      %118 = vsyncadd [#allocation6], 0
      %s119 = sshll.u32 %s9, 4
      %s120 = int_to_ptr.hbm [resolvable:$true] %s119
      %s121 = sshll.u32 [#allocation7], 4
      %s122 = int_to_ptr.vmem [resolvable:$true] %s121
      %127 = dma.hbm_to_vmem [thread:$0]  %s120, 2048, %s122, [#allocation6], 1024, 1024, 64
    $region21: #{cnn_mlp_forward.1} parent=1 // pred_fallthru
      _
    // Predicated region
    $region22: #{cnn_mlp_forward.1} parent=1 // pred_check
      _
    $region23: #{cnn_mlp_forward.1} parent=1 // pred_check_branch
      %129 = sbr.rel (0) target = $region25
    $region24: #{cnn_mlp_forward.1} parent=1 // pred_region
      %131 = vsyncadd [#allocation9], 0
      %s133 = sshll.u32 %s11, 4
      %s134 = int_to_ptr.hbm [resolvable:$true] %s133
      %s135 = sshll.u32 [#allocation8], 4
      %s136 = int_to_ptr.vmem [resolvable:$true] %s135
      %138 = dma.hbm_to_vmem [thread:$0]  %s134, 16, %s136, [#allocation9]
    $region25: #{cnn_mlp_forward.1} parent=1 // pred_fallthru
      _
    // Predicated region
    $region26: #{cnn_mlp_forward.1} parent=1 // pred_check
      _
    $region27: #{cnn_mlp_forward.1} parent=1 // pred_check_branch
      %140 = sbr.rel (0) target = $region29
    $region28: #{cnn_mlp_forward.1} parent=1 // pred_region
      %142 = vsyncadd [#allocation9], 0
      %s144 = sshll.u32 %s13, 4
      %s145 = int_to_ptr.hbm [resolvable:$true] %s144
      %s146 = sshll.u32 [#allocation10], 4
      %s147 = int_to_ptr.vmem [resolvable:$true] %s146
      %149 = dma.hbm_to_vmem [thread:$0]  %s145, 16, %s147, [#allocation9]
    $region29: #{cnn_mlp_forward.1} parent=1 // pred_fallthru
      _
    // Predicated region
    $region30: #{cnn_mlp_forward.1} parent=1 // pred_check
      _
    $region31: #{cnn_mlp_forward.1} parent=1 // pred_check_branch
      %151 = sbr.rel (0) target = $region33
    $region32: #{cnn_mlp_forward.1} parent=1 // pred_region
      %153 = vsyncadd [#allocation12], 0
      %s154 = sshll.u32 %s15, 4
      %s155 = int_to_ptr.hbm [resolvable:$true] %s154
      %s156 = sshll.u32 [#allocation11], 4
      %s157 = int_to_ptr.vmem [resolvable:$true] %s156
      %162 = dma.hbm_to_vmem [thread:$0]  %s155, 65536, %s157, [#allocation12], 512, 512, 32
    $region33: #{cnn_mlp_forward.1} parent=1 // pred_fallthru
      _
    // Predicated region
    $region34: #{cnn_mlp_forward.1} parent=1 // pred_check
      _
    $region35: #{cnn_mlp_forward.1} parent=1 // pred_check_branch
      %164 = sbr.rel (0) target = $region37
    $region36: #{cnn_mlp_forward.1} parent=1 // pred_region
      %166 = vsyncadd [#allocation12], 0
      %s168 = sshll.u32 %s17, 4
      %s169 = int_to_ptr.hbm [resolvable:$true] %s168
      %s170 = sshll.u32 [#allocation13], 4
      %s171 = int_to_ptr.vmem [resolvable:$true] %s170
      %173 = dma.hbm_to_vmem [thread:$0]  %s169, 64, %s171, [#allocation12]
    $region37: #{cnn_mlp_forward.1} parent=1 // pred_fallthru
      _
    // Predicated region
    $region38: #{cnn_mlp_forward.1} parent=1 // pred_check
      _
    $region39: #{cnn_mlp_forward.1} parent=1 // pred_check_branch
      %175 = sbr.rel (0) target = $region41
    $region40: #{cnn_mlp_forward.1} parent=1 // pred_region
      _
    $region41: #{cnn_mlp_forward.1} parent=1 // pred_fallthru
      _
    // Predicated region
    $region42: #{cnn_mlp_forward.1} parent=1 // pred_check
      _
    $region43: #{cnn_mlp_forward.1} parent=1 // pred_check_branch
      %177 = sbr.rel (0) target = $region45
    $region44: #{cnn_mlp_forward.1} parent=1 // pred_region
      %179 = vsyncadd [#allocation15], 0
      %s180 = sshll.u32 %s21, 4
      %s181 = int_to_ptr.hbm [resolvable:$true] %s180
      %s182 = sshll.u32 [#allocation14], 4
      %s183 = int_to_ptr.vmem [resolvable:$true] %s182
      %188 = dma.hbm_to_vmem [thread:$0]  %s181, 2048, %s183, [#allocation15], 512, 512, 32
    $region45: #{cnn_mlp_forward.1} parent=1 // pred_fallthru
      _
    // Predicated region
    $region46: #{cnn_mlp_forward.1} parent=1 // pred_check
      _
    $region47: #{cnn_mlp_forward.1} parent=1 // pred_check_branch
      %190 = sbr.rel (0) target = $region49
    $region48: #{cnn_mlp_forward.1} parent=1 // pred_region
      %192 = vsyncadd [#allocation15], 0
      %s194 = sshll.u32 %s23, 4
      %s195 = int_to_ptr.hbm [resolvable:$true] %s194
      %s196 = sshll.u32 [#allocation16], 4
      %s197 = int_to_ptr.vmem [resolvable:$true] %s196
      %199 = dma.hbm_to_vmem [thread:$0]  %s195, 16, %s197, [#allocation15]
    $region49: #{cnn_mlp_forward.1} parent=1 // pred_fallthru
      _
    // Predicated region
    $region50: #{cnn_mlp_forward.1} parent=1 // pred_check
      _
    $region51: #{cnn_mlp_forward.1} parent=1 // pred_check_branch
      %201 = sbr.rel (0) target = $region53
    $region52: #{cnn_mlp_forward.1} parent=1 // pred_region
      %203 = vsyncadd [#allocation18], 0
      %s205 = sshll.u32 %s25, 4
      %s206 = int_to_ptr.hbm [resolvable:$true] %s205
      %s207 = sshll.u32 [#allocation17], 4
      %s208 = int_to_ptr.vmem [resolvable:$true] %s207
      %210 = dma.hbm_to_vmem [thread:$0]  %s206, 16, %s208, [#allocation18]
    $region53: #{cnn_mlp_forward.1} parent=1 // pred_fallthru
      _
    // Predicated region
    $region54: #{cnn_mlp_forward.1} parent=1 // pred_check
      _
    $region55: #{cnn_mlp_forward.1} parent=1 // pred_check_branch
      %212 = sbr.rel (0) target = $region57
    $region56: #{cnn_mlp_forward.1} parent=1 // pred_region
      %214 = vsyncadd [#allocation18], 0
      %s215 = sshll.u32 %s27, 4
      %s216 = int_to_ptr.hbm [resolvable:$true] %s215
      %s217 = sshll.u32 [#allocation19], 4
      %s218 = int_to_ptr.vmem [resolvable:$true] %s217
      %223 = dma.hbm_to_vmem [thread:$0]  %s216, 16384, %s218, [#allocation18], 256, 256, 16
    $region57: #{cnn_mlp_forward.1} parent=1 // pred_fallthru
      _
    // Predicated region
    $region58: #{cnn_mlp_forward.1} parent=1 // pred_check
      _
    $region59: #{cnn_mlp_forward.1} parent=1 // pred_check_branch
      %225 = sbr.rel (0) target = $region61
    $region60: #{cnn_mlp_forward.1} parent=1 // pred_region
      %227 = vsyncadd [#allocation21], 0
      %s229 = sshll.u32 %s29, 4
      %s230 = int_to_ptr.hbm [resolvable:$true] %s229
      %s231 = sshll.u32 [#allocation20], 4
      %s232 = int_to_ptr.vmem [resolvable:$true] %s231
      %234 = dma.hbm_to_vmem [thread:$0]  %s230, 32, %s232, [#allocation21]
    $region61: #{cnn_mlp_forward.1} parent=1 // pred_fallthru
      _
    // Predicated region
    $region62: #{cnn_mlp_forward.1} parent=1 // pred_check
      _
    $region63: #{cnn_mlp_forward.1} parent=1 // pred_check_branch
      %236 = sbr.rel (0) target = $region65
    $region64: #{cnn_mlp_forward.1} parent=1 // pred_region
      _
    $region65: #{cnn_mlp_forward.1} parent=1 // pred_fallthru
      _
    // Predicated region
    $region66: #{cnn_mlp_forward.1} parent=1 // pred_check
      _
    $region67: #{cnn_mlp_forward.1} parent=1 // pred_check_branch
      %238 = sbr.rel (0) target = $region69
    $region68: #{cnn_mlp_forward.1} parent=1 // pred_region
      %240 = vsyncadd [#allocation21], 0
      %s241 = sshll.u32 %s33, 4
      %s242 = int_to_ptr.hbm [resolvable:$true] %s241
      %s243 = sshll.u32 [#allocation22], 4
      %s244 = int_to_ptr.vmem [resolvable:$true] %s243
      %249 = dma.hbm_to_vmem [thread:$0]  %s242, 2048, %s244, [#allocation21], 256, 256, 16
    $region69: #{cnn_mlp_forward.1} parent=1 // pred_fallthru
      _
    // Predicated region
    $region70: #{cnn_mlp_forward.1} parent=1 // pred_check
      _
    $region71: #{cnn_mlp_forward.1} parent=1 // pred_check_branch
      %251 = sbr.rel (0) target = $region73
    $region72: #{cnn_mlp_forward.1} parent=1 // pred_region
      %253 = vsyncadd [#allocation24], 0
      %s255 = sshll.u32 %s35, 4
      %s256 = int_to_ptr.hbm [resolvable:$true] %s255
      %s257 = sshll.u32 [#allocation23], 4
      %s258 = int_to_ptr.vmem [resolvable:$true] %s257
      %260 = dma.hbm_to_vmem [thread:$0]  %s256, 16, %s258, [#allocation24]
    $region73: #{cnn_mlp_forward.1} parent=1 // pred_fallthru
      _
    // Predicated region
    $region74: #{cnn_mlp_forward.1} parent=1 // pred_check
      _
    $region75: #{cnn_mlp_forward.1} parent=1 // pred_check_branch
      %262 = sbr.rel (0) target = $region77
    $region76: #{cnn_mlp_forward.1} parent=1 // pred_region
      %264 = vsyncadd [#allocation24], 0
      %s266 = sshll.u32 %s37, 4
      %s267 = int_to_ptr.hbm [resolvable:$true] %s266
      %s268 = sshll.u32 [#allocation25], 4
      %s269 = int_to_ptr.vmem [resolvable:$true] %s268
      %271 = dma.hbm_to_vmem [thread:$0]  %s267, 16, %s269, [#allocation24]
    $region77: #{cnn_mlp_forward.1} parent=1 // pred_fallthru
      _
    // Predicated region
    $region78: #{cnn_mlp_forward.1} parent=1 // pred_check
      _
    $region79: #{cnn_mlp_forward.1} parent=1 // pred_check_branch
      %273 = sbr.rel (0) target = $region81
    $region80: #{cnn_mlp_forward.1} parent=1 // pred_region
      %275 = vsyncadd [#allocation27], 0
      %s276 = sshll.u32 %s39, 4
      %s277 = int_to_ptr.hbm [resolvable:$true] %s276
      %s278 = sshll.u32 [#allocation26], 4
      %s279 = int_to_ptr.vmem [resolvable:$true] %s278
      %284 = dma.hbm_to_vmem [thread:$0]  %s277, 4096, %s279, [#allocation27], 128, 128, 8
    $region81: #{cnn_mlp_forward.1} parent=1 // pred_fallthru
      _
    // Predicated region
    $region82: #{cnn_mlp_forward.1} parent=1 // pred_check
      _
    $region83: #{cnn_mlp_forward.1} parent=1 // pred_check_branch
      %286 = sbr.rel (0) target = $region85
    $region84: #{cnn_mlp_forward.1} parent=1 // pred_region
      %288 = vsyncadd [#allocation27], 0
      %s290 = sshll.u32 %s41, 4
      %s291 = int_to_ptr.hbm [resolvable:$true] %s290
      %s292 = sshll.u32 [#allocation28], 4
      %s293 = int_to_ptr.vmem [resolvable:$true] %s292
      %295 = dma.hbm_to_vmem [thread:$0]  %s291, 16, %s293, [#allocation27]
    $region85: #{cnn_mlp_forward.1} parent=1 // pred_fallthru
      _
    // Predicated region
    $region86: #{cnn_mlp_forward.1} parent=1 // pred_check
      _
    $region87: #{cnn_mlp_forward.1} parent=1 // pred_check_branch
      %297 = sbr.rel (0) target = $region89
    $region88: #{cnn_mlp_forward.1} parent=1 // pred_region
      %299 = vsyncadd [#allocation30], 0
      %s300 = sshll.u32 %s43, 4
      %s301 = int_to_ptr.hbm [resolvable:$true] %s300
      %s302 = sshll.u32 [#allocation29], 4
      %s303 = int_to_ptr.vmem [resolvable:$true] %s302
      %308 = dma.hbm_to_vmem [thread:$0]  %s301, 2048, %s303, [#allocation30], 128, 128, 8
    $region89: #{cnn_mlp_forward.1} parent=1 // pred_fallthru
      _
    // Predicated region
    $region90: #{cnn_mlp_forward.1} parent=1 // pred_check
      _
    $region91: #{cnn_mlp_forward.1} parent=1 // pred_check_branch
      %310 = sbr.rel (0) target = $region93
    $region92: #{cnn_mlp_forward.1} parent=1 // pred_region
      %312 = vsyncadd [#allocation30], 0
      %s313 = sshll.u32 %s45, 4
      %s314 = int_to_ptr.hbm [resolvable:$true] %s313
      %s315 = sshll.u32 [#allocation31], 4
      %s316 = int_to_ptr.vmem [resolvable:$true] %s315
      %321 = dma.hbm_to_vmem [thread:$0]  %s314, 2048, %s316, [#allocation30], 128, 128, 8
    $region93: #{cnn_mlp_forward.1} parent=1 // pred_fallthru
      _
    // Predicated region
    $region94: #{cnn_mlp_forward.1} parent=1 // pred_check
      _
    $region95: #{cnn_mlp_forward.1} parent=1 // pred_check_branch
      %323 = sbr.rel (0) target = $region97
    $region96: #{cnn_mlp_forward.1} parent=1 // pred_region
      %325 = vsyncadd [#allocation33], 0
      %s327 = sshll.u32 %s47, 4
      %s328 = int_to_ptr.hbm [resolvable:$true] %s327
      %s329 = sshll.u32 [#allocation32], 4
      %s330 = int_to_ptr.vmem [resolvable:$true] %s329
      %332 = dma.hbm_to_vmem [thread:$0]  %s328, 16, %s330, [#allocation33]
    $region97: #{cnn_mlp_forward.1} parent=1 // pred_fallthru
      _
    // Predicated region
    $region98: #{cnn_mlp_forward.1} parent=1 // pred_check
      _
    $region99: #{cnn_mlp_forward.1} parent=1 // pred_check_branch
      %334 = sbr.rel (0) target = $region101
    $region100: #{cnn_mlp_forward.1} parent=1 // pred_region
      %336 = vsyncadd [#allocation33], 0
      %s338 = sshll.u32 %s49, 4
      %s339 = int_to_ptr.hbm [resolvable:$true] %s338
      %s340 = sshll.u32 [#allocation34], 4
      %s341 = int_to_ptr.vmem [resolvable:$true] %s340
      %343 = dma.hbm_to_vmem [thread:$0]  %s339, 16, %s341, [#allocation33]
    $region101: #{cnn_mlp_forward.1} parent=1 // pred_fallthru
      _
    // Predicated region
    $region102: #{cnn_mlp_forward.1} parent=1 // pred_check
      _
    $region103: #{cnn_mlp_forward.1} parent=1 // pred_check_branch
      %345 = sbr.rel (0) target = $region105
    $region104: #{cnn_mlp_forward.1} parent=1 // pred_region
      %347 = vsyncadd [#allocation36], 0
      %s348 = sshll.u32 %s51, 4
      %s349 = int_to_ptr.hbm [resolvable:$true] %s348
      %s350 = sshll.u32 [#allocation35], 4
      %s351 = int_to_ptr.vmem [resolvable:$true] %s350
      %356 = dma.hbm_to_vmem [thread:$0]  %s349, 2048, %s351, [#allocation36], 128, 128, 8
    $region105: #{cnn_mlp_forward.1} parent=1 // pred_fallthru
      _
    // Predicated region
    $region106: #{cnn_mlp_forward.1} parent=1 // pred_check
      _
    $region107: #{cnn_mlp_forward.1} parent=1 // pred_check_branch
      %358 = sbr.rel (0) target = $region109
    $region108: #{cnn_mlp_forward.1} parent=1 // pred_region
      %360 = vsyncadd [#allocation36], 0
      %s362 = sshll.u32 %s53, 4
      %s363 = int_to_ptr.hbm [resolvable:$true] %s362
      %s364 = sshll.u32 [#allocation37], 4
      %s365 = int_to_ptr.vmem [resolvable:$true] %s364
      %367 = dma.hbm_to_vmem [thread:$0]  %s363, 16, %s365, [#allocation36]
    $region109: #{cnn_mlp_forward.1} parent=1 // pred_fallthru
      _
    // Predicated region
    $region110: #{cnn_mlp_forward.1} parent=1 // pred_check
      _
    $region111: #{cnn_mlp_forward.1} parent=1 // pred_check_branch
      %369 = sbr.rel (0) target = $region113
    $region112: #{cnn_mlp_forward.1} parent=1 // pred_region
      _
    $region113: #{cnn_mlp_forward.1} parent=1 // pred_fallthru
      _
    // Predicated region
    $region114: #{cnn_mlp_forward.1} parent=1 // pred_check
      _
    $region115: #{cnn_mlp_forward.1} parent=1 // pred_check_branch
      %371 = sbr.rel (0) target = $region117
    $region116: #{cnn_mlp_forward.1} parent=1 // pred_region
      %373 = vsyncadd [#allocation39], 0
      %s375 = sshll.u32 %s57, 4
      %s376 = int_to_ptr.hbm [resolvable:$true] %s375
      %s377 = sshll.u32 [#allocation38], 4
      %s378 = int_to_ptr.vmem [resolvable:$true] %s377
      %380 = dma.hbm_to_vmem [thread:$0]  %s376, 16, %s378, [#allocation39]
    $region117: #{cnn_mlp_forward.1} parent=1 // pred_fallthru
      _
    // Predicated region
    $region118: #{cnn_mlp_forward.1} parent=1 // pred_check
      _
    $region119: #{cnn_mlp_forward.1} parent=1 // pred_check_branch
      %382 = sbr.rel (0) target = $region121
    $region120: #{cnn_mlp_forward.1} parent=1 // pred_region
      _
    $region121: #{cnn_mlp_forward.1} parent=1 // pred_fallthru
      _
    // Predicated region
    $region122: #{cnn_mlp_forward.1} parent=1 // pred_check
      _
    $region123: #{cnn_mlp_forward.1} parent=1 // pred_check_branch
      %384 = sbr.rel (0) target = $region125
    $region124: #{cnn_mlp_forward.1} parent=1 // pred_region
      %386 = vsyncadd [#allocation39], 0
      %s388 = sshll.u32 %s61, 4
      %s389 = int_to_ptr.hbm [resolvable:$true] %s388
      %s390 = sshll.u32 [#allocation40], 4
      %s391 = int_to_ptr.vmem [resolvable:$true] %s390
      %393 = dma.hbm_to_vmem [thread:$0]  %s389, 16, %s391, [#allocation39]
    $region125: #{cnn_mlp_forward.1} parent=1 // pred_fallthru
      _
    // Predicated region
    $region126: #{cnn_mlp_forward.1} parent=1 // pred_check
      _
    $region127: #{cnn_mlp_forward.1} parent=1 // pred_check_branch
      %395 = sbr.rel (0) target = $region129
    $region128: #{cnn_mlp_forward.1} parent=1 // pred_region
      %397 = vsyncadd [#allocation42], 0
      %s398 = sshll.u32 %s63, 4
      %s399 = int_to_ptr.hbm [resolvable:$true] %s398
      %s400 = sshll.u32 [#allocation41], 4
      %s401 = int_to_ptr.vmem [resolvable:$true] %s400
      %406 = dma.hbm_to_vmem [thread:$0]  %s399, 512, %s401, [#allocation42], 128, 128, 8
    $region129: #{cnn_mlp_forward.1} parent=1 // pred_fallthru
      _
    // Predicated region
    $region130: #{cnn_mlp_forward.1} parent=1 // pred_check
      _
    $region131: #{cnn_mlp_forward.1} parent=1 // pred_check_branch
      %408 = sbr.rel (0) target = $region133
    $region132: #{cnn_mlp_forward.1} parent=1 // pred_region
      %410 = vsyncadd [#allocation42], 0
      %s412 = sshll.u32 %s65, 4
      %s413 = int_to_ptr.hbm [resolvable:$true] %s412
      %s414 = sshll.u32 [#allocation43], 4
      %s415 = int_to_ptr.vmem [resolvable:$true] %s414
      %417 = dma.hbm_to_vmem [thread:$0]  %s413, 16, %s415, [#allocation42]
    $region133: #{cnn_mlp_forward.1} parent=1 // pred_fallthru
      _
    // Predicated region
    $region134: #{cnn_mlp_forward.1} parent=1 // pred_check
      _
    $region135: #{cnn_mlp_forward.1} parent=1 // pred_check_branch
      %419 = sbr.rel (0) target = $region137
    $region136: #{cnn_mlp_forward.1} parent=1 // pred_region
      %421 = dma.done [#allocation3], 131072
    $region137: #{cnn_mlp_forward.1} parent=1 // pred_fallthru
      _
    // Predicated region
    $region138: #{cnn_mlp_forward.1} parent=1 // pred_check
      _
    $region139: #{cnn_mlp_forward.1} parent=1 // pred_check_branch
      %423 = sbr.rel (0) target = $region141
    $region140: #{cnn_mlp_forward.1} parent=1 // pred_region
      %425 = dma.done [#allocation6], 128
    $region141: #{cnn_mlp_forward.1} parent=1 // pred_fallthru
      _
    // Predicated region
    $region142: #{cnn_mlp_forward.1} parent=1 // pred_check
      _
    $region143: #{cnn_mlp_forward.1} parent=1 // pred_check_branch
      %427 = sbr.rel (0) target = $region145
    $region144: #{cnn_mlp_forward.1} parent=1 // pred_region
      %429 = dma.done [#allocation6], 2048
    $region145: #{cnn_mlp_forward.1} parent=1 // pred_fallthru
      _
    // Predicated region
    $region146: #{cnn_mlp_forward.1} parent=1 // pred_check
      _
    $region147: #{cnn_mlp_forward.1} parent=1 // pred_check_branch
      %431 = sbr.rel (0) target = $region149
    $region148: #{cnn_mlp_forward.1} parent=1 // pred_region
      %433 = dma.done [#allocation9], 16
    $region149: #{cnn_mlp_forward.1} parent=1 // pred_fallthru
      _
    // Predicated region
    $region150: #{cnn_mlp_forward.1} parent=1 // pred_check
      _
    $region151: #{cnn_mlp_forward.1} parent=1 // pred_check_branch
      %435 = sbr.rel (0) target = $region153
    $region152: #{cnn_mlp_forward.1} parent=1 // pred_region
      %437 = dma.done [#allocation9], 16
    $region153: #{cnn_mlp_forward.1} parent=1 // pred_fallthru
      _
    // Predicated region
    $region154: #{cnn_mlp_forward.1} parent=1 // pred_check
      _
    $region155: #{cnn_mlp_forward.1} parent=1 // pred_check_branch
      %439 = sbr.rel (0) target = $region157
    $region156: #{cnn_mlp_forward.1} parent=1 // pred_region
      %441 = dma.done [#allocation12], 65536
    $region157: #{cnn_mlp_forward.1} parent=1 // pred_fallthru
      _
    // Predicated region
    $region158: #{cnn_mlp_forward.1} parent=1 // pred_check
      _
    $region159: #{cnn_mlp_forward.1} parent=1 // pred_check_branch
      %443 = sbr.rel (0) target = $region161
    $region160: #{cnn_mlp_forward.1} parent=1 // pred_region
      %445 = dma.done [#allocation12], 64
    $region161: #{cnn_mlp_forward.1} parent=1 // pred_fallthru
      _
    // Predicated region
    $region162: #{cnn_mlp_forward.1} parent=1 // pred_check
      _
    $region163: #{cnn_mlp_forward.1} parent=1 // pred_check_branch
      %447 = sbr.rel (0) target = $region165
    $region164: #{cnn_mlp_forward.1} parent=1 // pred_region
      %449 = dma.done [#allocation15], 2048
    $region165: #{cnn_mlp_forward.1} parent=1 // pred_fallthru
      _
    // Predicated region
    $region166: #{cnn_mlp_forward.1} parent=1 // pred_check
      _
    $region167: #{cnn_mlp_forward.1} parent=1 // pred_check_branch
      %451 = sbr.rel (0) target = $region169
    $region168: #{cnn_mlp_forward.1} parent=1 // pred_region
      %453 = dma.done [#allocation15], 16
    $region169: #{cnn_mlp_forward.1} parent=1 // pred_fallthru
      _
    // Predicated region
    $region170: #{cnn_mlp_forward.1} parent=1 // pred_check
      _
    $region171: #{cnn_mlp_forward.1} parent=1 // pred_check_branch
      %455 = sbr.rel (0) target = $region173
    $region172: #{cnn_mlp_forward.1} parent=1 // pred_region
      %457 = dma.done [#allocation18], 16
    $region173: #{cnn_mlp_forward.1} parent=1 // pred_fallthru
      _
    // Predicated region
    $region174: #{cnn_mlp_forward.1} parent=1 // pred_check
      _
    $region175: #{cnn_mlp_forward.1} parent=1 // pred_check_branch
      %459 = sbr.rel (0) target = $region177
    $region176: #{cnn_mlp_forward.1} parent=1 // pred_region
      %461 = dma.done [#allocation18], 16384
    $region177: #{cnn_mlp_forward.1} parent=1 // pred_fallthru
      _
    // Predicated region
    $region178: #{cnn_mlp_forward.1} parent=1 // pred_check
      _
    $region179: #{cnn_mlp_forward.1} parent=1 // pred_check_branch
      %463 = sbr.rel (0) target = $region181
    $region180: #{cnn_mlp_forward.1} parent=1 // pred_region
      %465 = dma.done [#allocation21], 32
    $region181: #{cnn_mlp_forward.1} parent=1 // pred_fallthru
      _
    // Predicated region
    $region182: #{cnn_mlp_forward.1} parent=1 // pred_check
      _
    $region183: #{cnn_mlp_forward.1} parent=1 // pred_check_branch
      %467 = sbr.rel (0) target = $region185
    $region184: #{cnn_mlp_forward.1} parent=1 // pred_region
      %469 = dma.done [#allocation21], 2048
    $region185: #{cnn_mlp_forward.1} parent=1 // pred_fallthru
      _
    // Predicated region
    $region186: #{cnn_mlp_forward.1} parent=1 // pred_check
      _
    $region187: #{cnn_mlp_forward.1} parent=1 // pred_check_branch
      %471 = sbr.rel (0) target = $region189
    $region188: #{cnn_mlp_forward.1} parent=1 // pred_region
      %473 = dma.done [#allocation24], 16
    $region189: #{cnn_mlp_forward.1} parent=1 // pred_fallthru
      _
    // Predicated region
    $region190: #{cnn_mlp_forward.1} parent=1 // pred_check
      _
    $region191: #{cnn_mlp_forward.1} parent=1 // pred_check_branch
      %475 = sbr.rel (0) target = $region193
    $region192: #{cnn_mlp_forward.1} parent=1 // pred_region
      %477 = dma.done [#allocation24], 16
    $region193: #{cnn_mlp_forward.1} parent=1 // pred_fallthru
      _
    // Predicated region
    $region194: #{cnn_mlp_forward.1} parent=1 // pred_check
      _
    $region195: #{cnn_mlp_forward.1} parent=1 // pred_check_branch
      %479 = sbr.rel (0) target = $region197
    $region196: #{cnn_mlp_forward.1} parent=1 // pred_region
      %481 = dma.done [#allocation27], 4096
    $region197: #{cnn_mlp_forward.1} parent=1 // pred_fallthru
      _
    // Predicated region
    $region198: #{cnn_mlp_forward.1} parent=1 // pred_check
      _
    $region199: #{cnn_mlp_forward.1} parent=1 // pred_check_branch
      %483 = sbr.rel (0) target = $region201
    $region200: #{cnn_mlp_forward.1} parent=1 // pred_region
      %485 = dma.done [#allocation27], 16
    $region201: #{cnn_mlp_forward.1} parent=1 // pred_fallthru
      _
    // Predicated region
    $region202: #{cnn_mlp_forward.1} parent=1 // pred_check
      _
    $region203: #{cnn_mlp_forward.1} parent=1 // pred_check_branch
      %487 = sbr.rel (0) target = $region205
    $region204: #{cnn_mlp_forward.1} parent=1 // pred_region
      %489 = dma.done [#allocation30], 2048
    $region205: #{cnn_mlp_forward.1} parent=1 // pred_fallthru
      _
    // Predicated region
    $region206: #{cnn_mlp_forward.1} parent=1 // pred_check
      _
    $region207: #{cnn_mlp_forward.1} parent=1 // pred_check_branch
      %491 = sbr.rel (0) target = $region209
    $region208: #{cnn_mlp_forward.1} parent=1 // pred_region
      %493 = dma.done [#allocation30], 2048
    $region209: #{cnn_mlp_forward.1} parent=1 // pred_fallthru
      _
    // Predicated region
    $region210: #{cnn_mlp_forward.1} parent=1 // pred_check
      _
    $region211: #{cnn_mlp_forward.1} parent=1 // pred_check_branch
      %495 = sbr.rel (0) target = $region213
    $region212: #{cnn_mlp_forward.1} parent=1 // pred_region
      %497 = dma.done [#allocation33], 16
    $region213: #{cnn_mlp_forward.1} parent=1 // pred_fallthru
      _
    // Predicated region
    $region214: #{cnn_mlp_forward.1} parent=1 // pred_check
      _
    $region215: #{cnn_mlp_forward.1} parent=1 // pred_check_branch
      %499 = sbr.rel (0) target = $region217
    $region216: #{cnn_mlp_forward.1} parent=1 // pred_region
      %501 = dma.done [#allocation33], 16
    $region217: #{cnn_mlp_forward.1} parent=1 // pred_fallthru
      _
    // Predicated region
    $region218: #{cnn_mlp_forward.1} parent=1 // pred_check
      _
    $region219: #{cnn_mlp_forward.1} parent=1 // pred_check_branch
      %503 = sbr.rel (0) target = $region221
    $region220: #{cnn_mlp_forward.1} parent=1 // pred_region
      %505 = dma.done [#allocation36], 2048
    $region221: #{cnn_mlp_forward.1} parent=1 // pred_fallthru
      _
    // Predicated region
    $region222: #{cnn_mlp_forward.1} parent=1 // pred_check
      _
    $region223: #{cnn_mlp_forward.1} parent=1 // pred_check_branch
      %507 = sbr.rel (0) target = $region225
    $region224: #{cnn_mlp_forward.1} parent=1 // pred_region
      %509 = dma.done [#allocation36], 16
    $region225: #{cnn_mlp_forward.1} parent=1 // pred_fallthru
      _
    // Predicated region
    $region226: #{cnn_mlp_forward.1} parent=1 // pred_check
      _
    $region227: #{cnn_mlp_forward.1} parent=1 // pred_check_branch
      %511 = sbr.rel (0) target = $region229
    $region228: #{cnn_mlp_forward.1} parent=1 // pred_region
      %513 = dma.done [#allocation39], 16
    $region229: #{cnn_mlp_forward.1} parent=1 // pred_fallthru
      _
    // Predicated region
    $region230: #{cnn_mlp_forward.1} parent=1 // pred_check
      _
    $region231: #{cnn_mlp_forward.1} parent=1 // pred_check_branch
      %515 = sbr.rel (0) target = $region233
    $region232: #{cnn_mlp_forward.1} parent=1 // pred_region
      %517 = dma.done [#allocation39], 16
    $region233: #{cnn_mlp_forward.1} parent=1 // pred_fallthru
      _
    // Predicated region
    $region234: #{cnn_mlp_forward.1} parent=1 // pred_check
      _
    $region235: #{cnn_mlp_forward.1} parent=1 // pred_check_branch
      %519 = sbr.rel (0) target = $region237
    $region236: #{cnn_mlp_forward.1} parent=1 // pred_region
      %521 = dma.done [#allocation42], 512
    $region237: #{cnn_mlp_forward.1} parent=1 // pred_fallthru
      _
    // Predicated region
    $region238: #{cnn_mlp_forward.1} parent=1 // pred_check
      _
    $region239: #{cnn_mlp_forward.1} parent=1 // pred_check_branch
      %523 = sbr.rel (0) target = $region241
    $region240: #{cnn_mlp_forward.1} parent=1 // pred_region
      %525 = dma.done [#allocation42], 16
    $region241: #{cnn_mlp_forward.1} parent=1 // pred_fallthru
      _
    %v526 = vld [vmem:[%s1] sm:$0xff]
    %v527 = vld [vmem:[%s1 + $0x8] sm:$0xff]
    %v528 = vld [vmem:[#allocation2] sm:$0xff]
    %v529 = vld [vmem:[#allocation2 + $0x8] sm:$0xff]
    %v530 = vld [vmem:[#allocation2 + $0x10] sm:$0xff]
    %v531 = vld [vmem:[#allocation2 + $0x18] sm:$0xff]
    %v532 = vld [vmem:[#allocation2 + $0x20] sm:$0xff]
    %v533 = vld [vmem:[#allocation2 + $0x28] sm:$0xff]
    %v534 = vld [vmem:[#allocation2 + $0x30] sm:$0xff]
    %v535 = vld [vmem:[#allocation2 + $0x38] sm:$0xff]
    %v536 = vld [vmem:[#allocation2 + $0x40] sm:$0xff]
    %v537 = vld [vmem:[#allocation2 + $0x48] sm:$0xff]
    %v538 = vld [vmem:[#allocation2 + $0x50] sm:$0xff]
    %v539 = vld [vmem:[#allocation2 + $0x58] sm:$0xff]
    %v540 = vld [vmem:[#allocation2 + $0x60] sm:$0xff]
    %v541 = vld [vmem:[#allocation2 + $0x68] sm:$0xff]
    %v542 = vld [vmem:[#allocation2 + $0x70] sm:$0xff]
    %v543 = vld [vmem:[#allocation2 + $0x78] sm:$0xff]
    %v544 = vld [vmem:[#allocation2 + $0x80] sm:$0xff]
    %v545 = vld [vmem:[#allocation2 + $0x88] sm:$0xff]
    %v546 = vld [vmem:[#allocation2 + $0x90] sm:$0xff]
    %v547 = vld [vmem:[#allocation2 + $0x98] sm:$0xff]
    %v548 = vld [vmem:[#allocation2 + $0xa0] sm:$0xff]
    %v549 = vld [vmem:[#allocation2 + $0xa8] sm:$0xff]
    %v550 = vld [vmem:[#allocation2 + $0xb0] sm:$0xff]
    %v551 = vld [vmem:[#allocation2 + $0xb8] sm:$0xff]
    %v552 = vld [vmem:[#allocation2 + $0xc0] sm:$0xff]
    %v553 = vld [vmem:[#allocation2 + $0xc8] sm:$0xff]
    %v554 = vld [vmem:[#allocation2 + $0xd0] sm:$0xff]
    %v555 = vld [vmem:[#allocation2 + $0xd8] sm:$0xff]
    %v556 = vld [vmem:[#allocation2 + $0xe0] sm:$0xff]
    %v557 = vld [vmem:[#allocation2 + $0xe8] sm:$0xff]
    %v558 = vld [vmem:[#allocation2 + $0xf0] sm:$0xff]
    %v559 = vld [vmem:[#allocation2 + $0xf8] sm:$0xff]
    %v560 = vld [vmem:[#allocation2 + $0x100] sm:$0xff]
    %v561 = vld [vmem:[#allocation2 + $0x108] sm:$0xff]
    %v562 = vld [vmem:[#allocation2 + $0x110] sm:$0xff]
    %v563 = vld [vmem:[#allocation2 + $0x118] sm:$0xff]
    %v564 = vld [vmem:[#allocation2 + $0x120] sm:$0xff]
    %v565 = vld [vmem:[#allocation2 + $0x128] sm:$0xff]
    %v566 = vld [vmem:[#allocation2 + $0x130] sm:$0xff]
    %v567 = vld [vmem:[#allocation2 + $0x138] sm:$0xff]
    %v568 = vld [vmem:[#allocation2 + $0x140] sm:$0xff]
    %v569 = vld [vmem:[#allocation2 + $0x148] sm:$0xff]
    %v570 = vld [vmem:[#allocation2 + $0x150] sm:$0xff]
    %v571 = vld [vmem:[#allocation2 + $0x158] sm:$0xff]
    %v572 = vld [vmem:[#allocation2 + $0x160] sm:$0xff]
    %v573 = vld [vmem:[#allocation2 + $0x168] sm:$0xff]
    %v574 = vld [vmem:[#allocation2 + $0x170] sm:$0xff]
    %v575 = vld [vmem:[#allocation2 + $0x178] sm:$0xff]
    %v576 = vld [vmem:[#allocation2 + $0x180] sm:$0xff]
    %v577 = vld [vmem:[#allocation2 + $0x188] sm:$0xff]
    %v578 = vld [vmem:[#allocation2 + $0x190] sm:$0xff]
    %v579 = vld [vmem:[#allocation2 + $0x198] sm:$0xff]
    %v580 = vld [vmem:[#allocation2 + $0x1a0] sm:$0xff]
    %v581 = vld [vmem:[#allocation2 + $0x1a8] sm:$0xff]
    %v582 = vld [vmem:[#allocation2 + $0x1b0] sm:$0xff]
    %v583 = vld [vmem:[#allocation2 + $0x1b8] sm:$0xff]
    %v584 = vld [vmem:[#allocation2 + $0x1c0] sm:$0xff]
    %v585 = vld [vmem:[#allocation2 + $0x1c8] sm:$0xff]
    %v586 = vld [vmem:[#allocation2 + $0x1d0] sm:$0xff]
    %v587 = vld [vmem:[#allocation2 + $0x1d8] sm:$0xff]
    %v588 = vld [vmem:[#allocation2 + $0x1e0] sm:$0xff]
    %v589 = vld [vmem:[#allocation2 + $0x1e8] sm:$0xff]
    %v590 = vld [vmem:[#allocation2 + $0x1f0] sm:$0xff]
    %v591 = vld [vmem:[#allocation2 + $0x1f8] sm:$0xff]
    %v592 = vld [vmem:[#allocation2 + $0x200] sm:$0xff]
    %v593 = vld [vmem:[#allocation2 + $0x208] sm:$0xff]
    %v594 = vld [vmem:[#allocation2 + $0x210] sm:$0xff]
    %v595 = vld [vmem:[#allocation2 + $0x218] sm:$0xff]
    %v596 = vld [vmem:[#allocation2 + $0x220] sm:$0xff]
    %v597 = vld [vmem:[#allocation2 + $0x228] sm:$0xff]
    %v598 = vld [vmem:[#allocation2 + $0x230] sm:$0xff]
    %v599 = vld [vmem:[#allocation2 + $0x238] sm:$0xff]
    %v600 = vld [vmem:[#allocation2 + $0x240] sm:$0xff]
    %v601 = vld [vmem:[#allocation2 + $0x248] sm:$0xff]
    %v602 = vld [vmem:[#allocation2 + $0x250] sm:$0xff]
    %v603 = vld [vmem:[#allocation2 + $0x258] sm:$0xff]
    %v604 = vld [vmem:[#allocation2 + $0x260] sm:$0xff]
    %v605 = vld [vmem:[#allocation2 + $0x268] sm:$0xff]
    %v606 = vld [vmem:[#allocation2 + $0x270] sm:$0xff]
    %v607 = vld [vmem:[#allocation2 + $0x278] sm:$0xff]
    %v608 = vld [vmem:[#allocation2 + $0x280] sm:$0xff]
    %v609 = vld [vmem:[#allocation2 + $0x288] sm:$0xff]
    %v610 = vld [vmem:[#allocation2 + $0x290] sm:$0xff]
    %v611 = vld [vmem:[#allocation2 + $0x298] sm:$0xff]
    %v612 = vld [vmem:[#allocation2 + $0x2a0] sm:$0xff]
    %v613 = vld [vmem:[#allocation2 + $0x2a8] sm:$0xff]
    %v614 = vld [vmem:[#allocation2 + $0x2b0] sm:$0xff]
    %v615 = vld [vmem:[#allocation2 + $0x2b8] sm:$0xff]
    %v616 = vld [vmem:[#allocation2 + $0x2c0] sm:$0xff]
    %v617 = vld [vmem:[#allocation2 + $0x2c8] sm:$0xff]
    %v618 = vld [vmem:[#allocation2 + $0x2d0] sm:$0xff]
    %v619 = vld [vmem:[#allocation2 + $0x2d8] sm:$0xff]
    %v620 = vld [vmem:[#allocation2 + $0x2e0] sm:$0xff]
    %v621 = vld [vmem:[#allocation2 + $0x2e8] sm:$0xff]
    %v622 = vld [vmem:[#allocation2 + $0x2f0] sm:$0xff]
    %v623 = vld [vmem:[#allocation2 + $0x2f8] sm:$0xff]
    %v624 = vld [vmem:[#allocation2 + $0x300] sm:$0xff]
    %v625 = vld [vmem:[#allocation2 + $0x308] sm:$0xff]
    %v626 = vld [vmem:[#allocation2 + $0x310] sm:$0xff]
    %v627 = vld [vmem:[#allocation2 + $0x318] sm:$0xff]
    %v628 = vld [vmem:[#allocation2 + $0x320] sm:$0xff]
    %v629 = vld [vmem:[#allocation2 + $0x328] sm:$0xff]
    %v630 = vld [vmem:[#allocation2 + $0x330] sm:$0xff]
    %v631 = vld [vmem:[#allocation2 + $0x338] sm:$0xff]
    %v632 = vld [vmem:[#allocation2 + $0x340] sm:$0xff]
    %v633 = vld [vmem:[#allocation2 + $0x348] sm:$0xff]
    %v634 = vld [vmem:[#allocation2 + $0x350] sm:$0xff]
    %v635 = vld [vmem:[#allocation2 + $0x358] sm:$0xff]
    %v636 = vld [vmem:[#allocation2 + $0x360] sm:$0xff]
    %v637 = vld [vmem:[#allocation2 + $0x368] sm:$0xff]
    %v638 = vld [vmem:[#allocation2 + $0x370] sm:$0xff]
    %v639 = vld [vmem:[#allocation2 + $0x378] sm:$0xff]
    %v640 = vld [vmem:[#allocation2 + $0x380] sm:$0xff]
    %v641 = vld [vmem:[#allocation2 + $0x388] sm:$0xff]
    %v642 = vld [vmem:[#allocation2 + $0x390] sm:$0xff]
    %v643 = vld [vmem:[#allocation2 + $0x398] sm:$0xff]
    %v644 = vld [vmem:[#allocation2 + $0x3a0] sm:$0xff]
    %v645 = vld [vmem:[#allocation2 + $0x3a8] sm:$0xff]
    %v646 = vld [vmem:[#allocation2 + $0x3b0] sm:$0xff]
    %v647 = vld [vmem:[#allocation2 + $0x3b8] sm:$0xff]
    %v648 = vld [vmem:[#allocation2 + $0x3c0] sm:$0xff]
    %v649 = vld [vmem:[#allocation2 + $0x3c8] sm:$0xff]
    %v650 = vld [vmem:[#allocation2 + $0x3d0] sm:$0xff]
    %v651 = vld [vmem:[#allocation2 + $0x3d8] sm:$0xff]
    %v652 = vld [vmem:[#allocation2 + $0x3e0] sm:$0xff]
    %v653 = vld [vmem:[#allocation2 + $0x3e8] sm:$0xff]
    %v654 = vld [vmem:[#allocation2 + $0x3f0] sm:$0xff]
    %v655 = vld [vmem:[#allocation2 + $0x3f8] sm:$0xff]
    %v656 = vld [vmem:[#allocation2 + $0x400] sm:$0xff]
    %v657 = vld [vmem:[#allocation2 + $0x408] sm:$0xff]
    %v658 = vld [vmem:[#allocation2 + $0x410] sm:$0xff]
    %v659 = vld [vmem:[#allocation2 + $0x418] sm:$0xff]
    %v660 = vld [vmem:[#allocation2 + $0x420] sm:$0xff]
    %v661 = vld [vmem:[#allocation2 + $0x428] sm:$0xff]
    %v662 = vld [vmem:[#allocation2 + $0x430] sm:$0xff]
    %v663 = vld [vmem:[#allocation2 + $0x438] sm:$0xff]
    %v664 = vld [vmem:[#allocation2 + $0x440] sm:$0xff]
    %v665 = vld [vmem:[#allocation2 + $0x448] sm:$0xff]
    %v666 = vld [vmem:[#allocation2 + $0x450] sm:$0xff]
    %v667 = vld [vmem:[#allocation2 + $0x458] sm:$0xff]
    %v668 = vld [vmem:[#allocation2 + $0x460] sm:$0xff]
    %v669 = vld [vmem:[#allocation2 + $0x468] sm:$0xff]
    %v670 = vld [vmem:[#allocation2 + $0x470] sm:$0xff]
    %v671 = vld [vmem:[#allocation2 + $0x478] sm:$0xff]
    %v672 = vld [vmem:[#allocation2 + $0x480] sm:$0xff]
    %v673 = vld [vmem:[#allocation2 + $0x488] sm:$0xff]
    %v674 = vld [vmem:[#allocation2 + $0x490] sm:$0xff]
    %v675 = vld [vmem:[#allocation2 + $0x498] sm:$0xff]
    %v676 = vld [vmem:[#allocation2 + $0x4a0] sm:$0xff]
    %v677 = vld [vmem:[#allocation2 + $0x4a8] sm:$0xff]
    %v678 = vld [vmem:[#allocation2 + $0x4b0] sm:$0xff]
    %v679 = vld [vmem:[#allocation2 + $0x4b8] sm:$0xff]
    %v680 = vld [vmem:[#allocation2 + $0x4c0] sm:$0xff]
    %v681 = vld [vmem:[#allocation2 + $0x4c8] sm:$0xff]
    %v682 = vld [vmem:[#allocation2 + $0x4d0] sm:$0xff]
    %v683 = vld [vmem:[#allocation2 + $0x4d8] sm:$0xff]
    %v684 = vld [vmem:[#allocation2 + $0x4e0] sm:$0xff]
    %v685 = vld [vmem:[#allocation2 + $0x4e8] sm:$0xff]
    %v686 = vld [vmem:[#allocation2 + $0x4f0] sm:$0xff]
    %v687 = vld [vmem:[#allocation2 + $0x4f8] sm:$0xff]
    %v688 = vld [vmem:[#allocation2 + $0x500] sm:$0xff]
    %v689 = vld [vmem:[#allocation2 + $0x508] sm:$0xff]
    %v690 = vld [vmem:[#allocation2 + $0x510] sm:$0xff]
    %v691 = vld [vmem:[#allocation2 + $0x518] sm:$0xff]
    %v692 = vld [vmem:[#allocation2 + $0x520] sm:$0xff]
    %v693 = vld [vmem:[#allocation2 + $0x528] sm:$0xff]
    %v694 = vld [vmem:[#allocation2 + $0x530] sm:$0xff]
    %v695 = vld [vmem:[#allocation2 + $0x538] sm:$0xff]
    %v696 = vld [vmem:[#allocation2 + $0x540] sm:$0xff]
    %v697 = vld [vmem:[#allocation2 + $0x548] sm:$0xff]
    %v698 = vld [vmem:[#allocation2 + $0x550] sm:$0xff]
    %v699 = vld [vmem:[#allocation2 + $0x558] sm:$0xff]
    %v700 = vld [vmem:[#allocation2 + $0x560] sm:$0xff]
    %v701 = vld [vmem:[#allocation2 + $0x568] sm:$0xff]
    %v702 = vld [vmem:[#allocation2 + $0x570] sm:$0xff]
    %v703 = vld [vmem:[#allocation2 + $0x578] sm:$0xff]
    %v704 = vld [vmem:[#allocation2 + $0x580] sm:$0xff]
    %v705 = vld [vmem:[#allocation2 + $0x588] sm:$0xff]
    %v706 = vld [vmem:[#allocation2 + $0x590] sm:$0xff]
    %v707 = vld [vmem:[#allocation2 + $0x598] sm:$0xff]
    %v708 = vld [vmem:[#allocation2 + $0x5a0] sm:$0xff]
    %v709 = vld [vmem:[#allocation2 + $0x5a8] sm:$0xff]
    %v710 = vld [vmem:[#allocation2 + $0x5b0] sm:$0xff]
    %v711 = vld [vmem:[#allocation2 + $0x5b8] sm:$0xff]
    %v712 = vld [vmem:[#allocation2 + $0x5c0] sm:$0xff]
    %v713 = vld [vmem:[#allocation2 + $0x5c8] sm:$0xff]
    %v714 = vld [vmem:[#allocation2 + $0x5d0] sm:$0xff]
    %v715 = vld [vmem:[#allocation2 + $0x5d8] sm:$0xff]
    %v716 = vld [vmem:[#allocation2 + $0x5e0] sm:$0xff]
    %v717 = vld [vmem:[#allocation2 + $0x5e8] sm:$0xff]
    %v718 = vld [vmem:[#allocation2 + $0x5f0] sm:$0xff]
    %v719 = vld [vmem:[#allocation2 + $0x5f8] sm:$0xff]
    %v720 = vld [vmem:[#allocation2 + $0x600] sm:$0xff]
    %v721 = vld [vmem:[#allocation2 + $0x608] sm:$0xff]
    %v722 = vld [vmem:[#allocation2 + $0x610] sm:$0xff]
    %v723 = vld [vmem:[#allocation2 + $0x618] sm:$0xff]
    %v724 = vld [vmem:[#allocation2 + $0x620] sm:$0xff]
    %v725 = vld [vmem:[#allocation2 + $0x628] sm:$0xff]
    %v726 = vld [vmem:[#allocation2 + $0x630] sm:$0xff]
    %v727 = vld [vmem:[#allocation2 + $0x638] sm:$0xff]
    %v728 = vld [vmem:[#allocation2 + $0x640] sm:$0xff]
    %v729 = vld [vmem:[#allocation2 + $0x648] sm:$0xff]
    %v730 = vld [vmem:[#allocation2 + $0x650] sm:$0xff]
    %v731 = vld [vmem:[#allocation2 + $0x658] sm:$0xff]
    %v732 = vld [vmem:[#allocation2 + $0x660] sm:$0xff]
    %v733 = vld [vmem:[#allocation2 + $0x668] sm:$0xff]
    %v734 = vld [vmem:[#allocation2 + $0x670] sm:$0xff]
    %v735 = vld [vmem:[#allocation2 + $0x678] sm:$0xff]
    %v736 = vld [vmem:[#allocation2 + $0x680] sm:$0xff]
    %v737 = vld [vmem:[#allocation2 + $0x688] sm:$0xff]
    %v738 = vld [vmem:[#allocation2 + $0x690] sm:$0xff]
    %v739 = vld [vmem:[#allocation2 + $0x698] sm:$0xff]
    %v740 = vld [vmem:[#allocation2 + $0x6a0] sm:$0xff]
    %v741 = vld [vmem:[#allocation2 + $0x6a8] sm:$0xff]
    %v742 = vld [vmem:[#allocation2 + $0x6b0] sm:$0xff]
    %v743 = vld [vmem:[#allocation2 + $0x6b8] sm:$0xff]
    %v744 = vld [vmem:[#allocation2 + $0x6c0] sm:$0xff]
    %v745 = vld [vmem:[#allocation2 + $0x6c8] sm:$0xff]
    %v746 = vld [vmem:[#allocation2 + $0x6d0] sm:$0xff]
    %v747 = vld [vmem:[#allocation2 + $0x6d8] sm:$0xff]
    %v748 = vld [vmem:[#allocation2 + $0x6e0] sm:$0xff]
    %v749 = vld [vmem:[#allocation2 + $0x6e8] sm:$0xff]
    %v750 = vld [vmem:[#allocation2 + $0x6f0] sm:$0xff]
    %v751 = vld [vmem:[#allocation2 + $0x6f8] sm:$0xff]
    %v752 = vld [vmem:[#allocation2 + $0x700] sm:$0xff]
    %v753 = vld [vmem:[#allocation2 + $0x708] sm:$0xff]
    %v754 = vld [vmem:[#allocation2 + $0x710] sm:$0xff]
    %v755 = vld [vmem:[#allocation2 + $0x718] sm:$0xff]
    %v756 = vld [vmem:[#allocation2 + $0x720] sm:$0xff]
    %v757 = vld [vmem:[#allocation2 + $0x728] sm:$0xff]
    %v758 = vld [vmem:[#allocation2 + $0x730] sm:$0xff]
    %v759 = vld [vmem:[#allocation2 + $0x738] sm:$0xff]
    %v760 = vld [vmem:[#allocation2 + $0x740] sm:$0xff]
    %v761 = vld [vmem:[#allocation2 + $0x748] sm:$0xff]
    %v762 = vld [vmem:[#allocation2 + $0x750] sm:$0xff]
    %v763 = vld [vmem:[#allocation2 + $0x758] sm:$0xff]
    %v764 = vld [vmem:[#allocation2 + $0x760] sm:$0xff]
    %v765 = vld [vmem:[#allocation2 + $0x768] sm:$0xff]
    %v766 = vld [vmem:[#allocation2 + $0x770] sm:$0xff]
    %v767 = vld [vmem:[#allocation2 + $0x778] sm:$0xff]
    %v768 = vld [vmem:[#allocation2 + $0x780] sm:$0xff]
    %v769 = vld [vmem:[#allocation2 + $0x788] sm:$0xff]
    %v770 = vld [vmem:[#allocation2 + $0x790] sm:$0xff]
    %v771 = vld [vmem:[#allocation2 + $0x798] sm:$0xff]
    %v772 = vld [vmem:[#allocation2 + $0x7a0] sm:$0xff]
    %v773 = vld [vmem:[#allocation2 + $0x7a8] sm:$0xff]
    %v774 = vld [vmem:[#allocation2 + $0x7b0] sm:$0xff]
    %v775 = vld [vmem:[#allocation2 + $0x7b8] sm:$0xff]
    %v776 = vld [vmem:[#allocation2 + $0x7c0] sm:$0xff]
    %v777 = vld [vmem:[#allocation2 + $0x7c8] sm:$0xff]
    %v778 = vld [vmem:[#allocation2 + $0x7d0] sm:$0xff]
    %v779 = vld [vmem:[#allocation2 + $0x7d8] sm:$0xff]
    %v780 = vld [vmem:[#allocation2 + $0x7e0] sm:$0xff]
    %v781 = vld [vmem:[#allocation2 + $0x7e8] sm:$0xff]
    %v782 = vld [vmem:[#allocation2 + $0x7f0] sm:$0xff]
    %v783 = vld [vmem:[#allocation2 + $0x7f8] sm:$0xff]
    %v784 = vld [vmem:[#allocation2 + $0x800] sm:$0xff]
    %v785 = vld [vmem:[#allocation2 + $0x808] sm:$0xff]
    %v786 = vld [vmem:[#allocation2 + $0x810] sm:$0xff]
    %v787 = vld [vmem:[#allocation2 + $0x818] sm:$0xff]
    %v788 = vld [vmem:[#allocation2 + $0x820] sm:$0xff]
    %v789 = vld [vmem:[#allocation2 + $0x828] sm:$0xff]
    %v790 = vld [vmem:[#allocation2 + $0x830] sm:$0xff]
    %v791 = vld [vmem:[#allocation2 + $0x838] sm:$0xff]
    %v792 = vld [vmem:[#allocation2 + $0x840] sm:$0xff]
    %v793 = vld [vmem:[#allocation2 + $0x848] sm:$0xff]
    %v794 = vld [vmem:[#allocation2 + $0x850] sm:$0xff]
    %v795 = vld [vmem:[#allocation2 + $0x858] sm:$0xff]
    %v796 = vld [vmem:[#allocation2 + $0x860] sm:$0xff]
    %v797 = vld [vmem:[#allocation2 + $0x868] sm:$0xff]
    %v798 = vld [vmem:[#allocation2 + $0x870] sm:$0xff]
    %v799 = vld [vmem:[#allocation2 + $0x878] sm:$0xff]
    %v800 = vld [vmem:[#allocation2 + $0x880] sm:$0xff]
    %v801 = vld [vmem:[#allocation2 + $0x888] sm:$0xff]
    %v802 = vld [vmem:[#allocation2 + $0x890] sm:$0xff]
    %v803 = vld [vmem:[#allocation2 + $0x898] sm:$0xff]
    %v804 = vld [vmem:[#allocation2 + $0x8a0] sm:$0xff]
    %v805 = vld [vmem:[#allocation2 + $0x8a8] sm:$0xff]
    %v806 = vld [vmem:[#allocation2 + $0x8b0] sm:$0xff]
    %v807 = vld [vmem:[#allocation2 + $0x8b8] sm:$0xff]
    %v808 = vld [vmem:[#allocation2 + $0x8c0] sm:$0xff]
    %v809 = vld [vmem:[#allocation2 + $0x8c8] sm:$0xff]
    %v810 = vld [vmem:[#allocation2 + $0x8d0] sm:$0xff]
    %v811 = vld [vmem:[#allocation2 + $0x8d8] sm:$0xff]
    %v812 = vld [vmem:[#allocation2 + $0x8e0] sm:$0xff]
    %v813 = vld [vmem:[#allocation2 + $0x8e8] sm:$0xff]
    %v814 = vld [vmem:[#allocation2 + $0x8f0] sm:$0xff]
    %v815 = vld [vmem:[#allocation2 + $0x8f8] sm:$0xff]
    %v816 = vld [vmem:[#allocation2 + $0x900] sm:$0xff]
    %v817 = vld [vmem:[#allocation2 + $0x908] sm:$0xff]
    %v818 = vld [vmem:[#allocation2 + $0x910] sm:$0xff]
    %v819 = vld [vmem:[#allocation2 + $0x918] sm:$0xff]
    %v820 = vld [vmem:[#allocation2 + $0x920] sm:$0xff]
    %v821 = vld [vmem:[#allocation2 + $0x928] sm:$0xff]
    %v822 = vld [vmem:[#allocation2 + $0x930] sm:$0xff]
    %v823 = vld [vmem:[#allocation2 + $0x938] sm:$0xff]
    %v824 = vld [vmem:[#allocation2 + $0x940] sm:$0xff]
    %v825 = vld [vmem:[#allocation2 + $0x948] sm:$0xff]
    %v826 = vld [vmem:[#allocation2 + $0x950] sm:$0xff]
    %v827 = vld [vmem:[#allocation2 + $0x958] sm:$0xff]
    %v828 = vld [vmem:[#allocation2 + $0x960] sm:$0xff]
    %v829 = vld [vmem:[#allocation2 + $0x968] sm:$0xff]
    %v830 = vld [vmem:[#allocation2 + $0x970] sm:$0xff]
    %v831 = vld [vmem:[#allocation2 + $0x978] sm:$0xff]
    %v832 = vld [vmem:[#allocation2 + $0x980] sm:$0xff]
    %v833 = vld [vmem:[#allocation2 + $0x988] sm:$0xff]
    %v834 = vld [vmem:[#allocation2 + $0x990] sm:$0xff]
    %v835 = vld [vmem:[#allocation2 + $0x998] sm:$0xff]
    %v836 = vld [vmem:[#allocation2 + $0x9a0] sm:$0xff]
    %v837 = vld [vmem:[#allocation2 + $0x9a8] sm:$0xff]
    %v838 = vld [vmem:[#allocation2 + $0x9b0] sm:$0xff]
    %v839 = vld [vmem:[#allocation2 + $0x9b8] sm:$0xff]
    %v840 = vld [vmem:[#allocation2 + $0x9c0] sm:$0xff]
    %v841 = vld [vmem:[#allocation2 + $0x9c8] sm:$0xff]
    %v842 = vld [vmem:[#allocation2 + $0x9d0] sm:$0xff]
    %v843 = vld [vmem:[#allocation2 + $0x9d8] sm:$0xff]
    %v844 = vld [vmem:[#allocation2 + $0x9e0] sm:$0xff]
    %v845 = vld [vmem:[#allocation2 + $0x9e8] sm:$0xff]
    %v846 = vld [vmem:[#allocation2 + $0x9f0] sm:$0xff]
    %v847 = vld [vmem:[#allocation2 + $0x9f8] sm:$0xff]
    %v848 = vld [vmem:[#allocation2 + $0xa00] sm:$0xff]
    %v849 = vld [vmem:[#allocation2 + $0xa08] sm:$0xff]
    %v850 = vld [vmem:[#allocation2 + $0xa10] sm:$0xff]
    %v851 = vld [vmem:[#allocation2 + $0xa18] sm:$0xff]
    %v852 = vld [vmem:[#allocation2 + $0xa20] sm:$0xff]
    %v853 = vld [vmem:[#allocation2 + $0xa28] sm:$0xff]
    %v854 = vld [vmem:[#allocation2 + $0xa30] sm:$0xff]
    %v855 = vld [vmem:[#allocation2 + $0xa38] sm:$0xff]
    %v856 = vld [vmem:[#allocation2 + $0xa40] sm:$0xff]
    %v857 = vld [vmem:[#allocation2 + $0xa48] sm:$0xff]
    %v858 = vld [vmem:[#allocation2 + $0xa50] sm:$0xff]
    %v859 = vld [vmem:[#allocation2 + $0xa58] sm:$0xff]
    %v860 = vld [vmem:[#allocation2 + $0xa60] sm:$0xff]
    %v861 = vld [vmem:[#allocation2 + $0xa68] sm:$0xff]
    %v862 = vld [vmem:[#allocation2 + $0xa70] sm:$0xff]
    %v863 = vld [vmem:[#allocation2 + $0xa78] sm:$0xff]
    %v864 = vld [vmem:[#allocation2 + $0xa80] sm:$0xff]
    %v865 = vld [vmem:[#allocation2 + $0xa88] sm:$0xff]
    %v866 = vld [vmem:[#allocation2 + $0xa90] sm:$0xff]
    %v867 = vld [vmem:[#allocation2 + $0xa98] sm:$0xff]
    %v868 = vld [vmem:[#allocation2 + $0xaa0] sm:$0xff]
    %v869 = vld [vmem:[#allocation2 + $0xaa8] sm:$0xff]
    %v870 = vld [vmem:[#allocation2 + $0xab0] sm:$0xff]
    %v871 = vld [vmem:[#allocation2 + $0xab8] sm:$0xff]
    %v872 = vld [vmem:[#allocation2 + $0xac0] sm:$0xff]
    %v873 = vld [vmem:[#allocation2 + $0xac8] sm:$0xff]
    %v874 = vld [vmem:[#allocation2 + $0xad0] sm:$0xff]
    %v875 = vld [vmem:[#allocation2 + $0xad8] sm:$0xff]
    %v876 = vld [vmem:[#allocation2 + $0xae0] sm:$0xff]
    %v877 = vld [vmem:[#allocation2 + $0xae8] sm:$0xff]
    %v878 = vld [vmem:[#allocation2 + $0xaf0] sm:$0xff]
    %v879 = vld [vmem:[#allocation2 + $0xaf8] sm:$0xff]
    %v880 = vld [vmem:[#allocation2 + $0xb00] sm:$0xff]
    %v881 = vld [vmem:[#allocation2 + $0xb08] sm:$0xff]
    %v882 = vld [vmem:[#allocation2 + $0xb10] sm:$0xff]
    %v883 = vld [vmem:[#allocation2 + $0xb18] sm:$0xff]
    %v884 = vld [vmem:[#allocation2 + $0xb20] sm:$0xff]
    %v885 = vld [vmem:[#allocation2 + $0xb28] sm:$0xff]
    %v886 = vld [vmem:[#allocation2 + $0xb30] sm:$0xff]
    %v887 = vld [vmem:[#allocation2 + $0xb38] sm:$0xff]
    %v888 = vld [vmem:[#allocation2 + $0xb40] sm:$0xff]
    %v889 = vld [vmem:[#allocation2 + $0xb48] sm:$0xff]
    %v890 = vld [vmem:[#allocation2 + $0xb50] sm:$0xff]
    %v891 = vld [vmem:[#allocation2 + $0xb58] sm:$0xff]
    %v892 = vld [vmem:[#allocation2 + $0xb60] sm:$0xff]
    %v893 = vld [vmem:[#allocation2 + $0xb68] sm:$0xff]
    %v894 = vld [vmem:[#allocation2 + $0xb70] sm:$0xff]
    %v895 = vld [vmem:[#allocation2 + $0xb78] sm:$0xff]
    %v896 = vld [vmem:[#allocation2 + $0xb80] sm:$0xff]
    %v897 = vld [vmem:[#allocation2 + $0xb88] sm:$0xff]
    %v898 = vld [vmem:[#allocation2 + $0xb90] sm:$0xff]
    %v899 = vld [vmem:[#allocation2 + $0xb98] sm:$0xff]
    %v900 = vld [vmem:[#allocation2 + $0xba0] sm:$0xff]
    %v901 = vld [vmem:[#allocation2 + $0xba8] sm:$0xff]
    %v902 = vld [vmem:[#allocation2 + $0xbb0] sm:$0xff]
    %v903 = vld [vmem:[#allocation2 + $0xbb8] sm:$0xff]
    %v904 = vld [vmem:[#allocation2 + $0xbc0] sm:$0xff]
    %v905 = vld [vmem:[#allocation2 + $0xbc8] sm:$0xff]
    %v906 = vld [vmem:[#allocation2 + $0xbd0] sm:$0xff]
    %v907 = vld [vmem:[#allocation2 + $0xbd8] sm:$0xff]
    %v908 = vld [vmem:[#allocation2 + $0xbe0] sm:$0xff]
    %v909 = vld [vmem:[#allocation2 + $0xbe8] sm:$0xff]
    %v910 = vld [vmem:[#allocation2 + $0xbf0] sm:$0xff]
    %v911 = vld [vmem:[#allocation2 + $0xbf8] sm:$0xff]
    %v912 = vld [vmem:[#allocation2 + $0xc00] sm:$0xff]
    %v913 = vld [vmem:[#allocation2 + $0xc08] sm:$0xff]
    %v914 = vld [vmem:[#allocation2 + $0xc10] sm:$0xff]
    %v915 = vld [vmem:[#allocation2 + $0xc18] sm:$0xff]
    %v916 = vld [vmem:[#allocation2 + $0xc20] sm:$0xff]
    %v917 = vld [vmem:[#allocation2 + $0xc28] sm:$0xff]
    %v918 = vld [vmem:[#allocation2 + $0xc30] sm:$0xff]
    %v919 = vld [vmem:[#allocation2 + $0xc38] sm:$0xff]
    %v920 = vld [vmem:[#allocation2 + $0xc40] sm:$0xff]
    %v921 = vld [vmem:[#allocation2 + $0xc48] sm:$0xff]
    %v922 = vld [vmem:[#allocation2 + $0xc50] sm:$0xff]
    %v923 = vld [vmem:[#allocation2 + $0xc58] sm:$0xff]
    %v924 = vld [vmem:[#allocation2 + $0xc60] sm:$0xff]
    %v925 = vld [vmem:[#allocation2 + $0xc68] sm:$0xff]
    %v926 = vld [vmem:[#allocation2 + $0xc70] sm:$0xff]
    %v927 = vld [vmem:[#allocation2 + $0xc78] sm:$0xff]
    %v928 = vld [vmem:[#allocation2 + $0xc80] sm:$0xff]
    %v929 = vld [vmem:[#allocation2 + $0xc88] sm:$0xff]
    %v930 = vld [vmem:[#allocation2 + $0xc90] sm:$0xff]
    %v931 = vld [vmem:[#allocation2 + $0xc98] sm:$0xff]
    %v932 = vld [vmem:[#allocation2 + $0xca0] sm:$0xff]
    %v933 = vld [vmem:[#allocation2 + $0xca8] sm:$0xff]
    %v934 = vld [vmem:[#allocation2 + $0xcb0] sm:$0xff]
    %v935 = vld [vmem:[#allocation2 + $0xcb8] sm:$0xff]
    %v936 = vld [vmem:[#allocation2 + $0xcc0] sm:$0xff]
    %v937 = vld [vmem:[#allocation2 + $0xcc8] sm:$0xff]
    %v938 = vld [vmem:[#allocation2 + $0xcd0] sm:$0xff]
    %v939 = vld [vmem:[#allocation2 + $0xcd8] sm:$0xff]
    %v940 = vld [vmem:[#allocation2 + $0xce0] sm:$0xff]
    %v941 = vld [vmem:[#allocation2 + $0xce8] sm:$0xff]
    %v942 = vld [vmem:[#allocation2 + $0xcf0] sm:$0xff]
    %v943 = vld [vmem:[#allocation2 + $0xcf8] sm:$0xff]
    %v944 = vld [vmem:[#allocation2 + $0xd00] sm:$0xff]
    %v945 = vld [vmem:[#allocation2 + $0xd08] sm:$0xff]
    %v946 = vld [vmem:[#allocation2 + $0xd10] sm:$0xff]
    %v947 = vld [vmem:[#allocation2 + $0xd18] sm:$0xff]
    %v948 = vld [vmem:[#allocation2 + $0xd20] sm:$0xff]
    %v949 = vld [vmem:[#allocation2 + $0xd28] sm:$0xff]
    %v950 = vld [vmem:[#allocation2 + $0xd30] sm:$0xff]
    %v951 = vld [vmem:[#allocation2 + $0xd38] sm:$0xff]
    %v952 = vld [vmem:[#allocation2 + $0xd40] sm:$0xff]
    %v953 = vld [vmem:[#allocation2 + $0xd48] sm:$0xff]
    %v954 = vld [vmem:[#allocation2 + $0xd50] sm:$0xff]
    %v955 = vld [vmem:[#allocation2 + $0xd58] sm:$0xff]
    %v956 = vld [vmem:[#allocation2 + $0xd60] sm:$0xff]
    %v957 = vld [vmem:[#allocation2 + $0xd68] sm:$0xff]
    %v958 = vld [vmem:[#allocation2 + $0xd70] sm:$0xff]
    %v959 = vld [vmem:[#allocation2 + $0xd78] sm:$0xff]
    %v960 = vld [vmem:[#allocation2 + $0xd80] sm:$0xff]
    %v961 = vld [vmem:[#allocation2 + $0xd88] sm:$0xff]
    %v962 = vld [vmem:[#allocation2 + $0xd90] sm:$0xff]
    %v963 = vld [vmem:[#allocation2 + $0xd98] sm:$0xff]
    %v964 = vld [vmem:[#allocation2 + $0xda0] sm:$0xff]
    %v965 = vld [vmem:[#allocation2 + $0xda8] sm:$0xff]
    %v966 = vld [vmem:[#allocation2 + $0xdb0] sm:$0xff]
    %v967 = vld [vmem:[#allocation2 + $0xdb8] sm:$0xff]
    %v968 = vld [vmem:[#allocation2 + $0xdc0] sm:$0xff]
    %v969 = vld [vmem:[#allocation2 + $0xdc8] sm:$0xff]
    %v970 = vld [vmem:[#allocation2 + $0xdd0] sm:$0xff]
    %v971 = vld [vmem:[#allocation2 + $0xdd8] sm:$0xff]
    %v972 = vld [vmem:[#allocation2 + $0xde0] sm:$0xff]
    %v973 = vld [vmem:[#allocation2 + $0xde8] sm:$0xff]
    %v974 = vld [vmem:[#allocation2 + $0xdf0] sm:$0xff]
    %v975 = vld [vmem:[#allocation2 + $0xdf8] sm:$0xff]
    %v976 = vld [vmem:[#allocation2 + $0xe00] sm:$0xff]
    %v977 = vld [vmem:[#allocation2 + $0xe08] sm:$0xff]
    %v978 = vld [vmem:[#allocation2 + $0xe10] sm:$0xff]
    %v979 = vld [vmem:[#allocation2 + $0xe18] sm:$0xff]
    %v980 = vld [vmem:[#allocation2 + $0xe20] sm:$0xff]
    %v981 = vld [vmem:[#allocation2 + $0xe28] sm:$0xff]
    %v982 = vld [vmem:[#allocation2 + $0xe30] sm:$0xff]
    %v983 = vld [vmem:[#allocation2 + $0xe38] sm:$0xff]
    %v984 = vld [vmem:[#allocation2 + $0xe40] sm:$0xff]
    %v985 = vld [vmem:[#allocation2 + $0xe48] sm:$0xff]
    %v986 = vld [vmem:[#allocation2 + $0xe50] sm:$0xff]
    %v987 = vld [vmem:[#allocation2 + $0xe58] sm:$0xff]
    %v988 = vld [vmem:[#allocation2 + $0xe60] sm:$0xff]
    %v989 = vld [vmem:[#allocation2 + $0xe68] sm:$0xff]
    %v990 = vld [vmem:[#allocation2 + $0xe70] sm:$0xff]
    %v991 = vld [vmem:[#allocation2 + $0xe78] sm:$0xff]
    %v992 = vld [vmem:[#allocation2 + $0xe80] sm:$0xff]
    %v993 = vld [vmem:[#allocation2 + $0xe88] sm:$0xff]
    %v994 = vld [vmem:[#allocation2 + $0xe90] sm:$0xff]
    %v995 = vld [vmem:[#allocation2 + $0xe98] sm:$0xff]
    %v996 = vld [vmem:[#allocation2 + $0xea0] sm:$0xff]
    %v997 = vld [vmem:[#allocation2 + $0xea8] sm:$0xff]
    %v998 = vld [vmem:[#allocation2 + $0xeb0] sm:$0xff]
    %v999 = vld [vmem:[#allocation2 + $0xeb8] sm:$0xff]
    %v1000 = vld [vmem:[#allocation2 + $0xec0] sm:$0xff]
    %v1001 = vld [vmem:[#allocation2 + $0xec8] sm:$0xff]
    %v1002 = vld [vmem:[#allocation2 + $0xed0] sm:$0xff]
    %v1003 = vld [vmem:[#allocation2 + $0xed8] sm:$0xff]
    %v1004 = vld [vmem:[#allocation2 + $0xee0] sm:$0xff]
    %v1005 = vld [vmem:[#allocation2 + $0xee8] sm:$0xff]
    %v1006 = vld [vmem:[#allocation2 + $0xef0] sm:$0xff]
    %v1007 = vld [vmem:[#allocation2 + $0xef8] sm:$0xff]
    %v1008 = vld [vmem:[#allocation2 + $0xf00] sm:$0xff]
    %v1009 = vld [vmem:[#allocation2 + $0xf08] sm:$0xff]
    %v1010 = vld [vmem:[#allocation2 + $0xf10] sm:$0xff]
    %v1011 = vld [vmem:[#allocation2 + $0xf18] sm:$0xff]
    %v1012 = vld [vmem:[#allocation2 + $0xf20] sm:$0xff]
    %v1013 = vld [vmem:[#allocation2 + $0xf28] sm:$0xff]
    %v1014 = vld [vmem:[#allocation2 + $0xf30] sm:$0xff]
    %v1015 = vld [vmem:[#allocation2 + $0xf38] sm:$0xff]
    %v1016 = vld [vmem:[#allocation2 + $0xf40] sm:$0xff]
    %v1017 = vld [vmem:[#allocation2 + $0xf48] sm:$0xff]
    %v1018 = vld [vmem:[#allocation2 + $0xf50] sm:$0xff]
    %v1019 = vld [vmem:[#allocation2 + $0xf58] sm:$0xff]
    %v1020 = vld [vmem:[#allocation2 + $0xf60] sm:$0xff]
    %v1021 = vld [vmem:[#allocation2 + $0xf68] sm:$0xff]
    %v1022 = vld [vmem:[#allocation2 + $0xf70] sm:$0xff]
    %v1023 = vld [vmem:[#allocation2 + $0xf78] sm:$0xff]
    %v1024 = vld [vmem:[#allocation2 + $0xf80] sm:$0xff]
    %v1025 = vld [vmem:[#allocation2 + $0xf88] sm:$0xff]
    %v1026 = vld [vmem:[#allocation2 + $0xf90] sm:$0xff]
    %v1027 = vld [vmem:[#allocation2 + $0xf98] sm:$0xff]
    %v1028 = vld [vmem:[#allocation2 + $0xfa0] sm:$0xff]
    %v1029 = vld [vmem:[#allocation2 + $0xfa8] sm:$0xff]
    %v1030 = vld [vmem:[#allocation2 + $0xfb0] sm:$0xff]
    %v1031 = vld [vmem:[#allocation2 + $0xfb8] sm:$0xff]
    %v1032 = vld [vmem:[#allocation2 + $0xfc0] sm:$0xff]
    %v1033 = vld [vmem:[#allocation2 + $0xfc8] sm:$0xff]
    %v1034 = vld [vmem:[#allocation2 + $0xfd0] sm:$0xff]
    %v1035 = vld [vmem:[#allocation2 + $0xfd8] sm:$0xff]
    %v1036 = vld [vmem:[#allocation2 + $0xfe0] sm:$0xff]
    %v1037 = vld [vmem:[#allocation2 + $0xfe8] sm:$0xff]
    %v1038 = vld [vmem:[#allocation2 + $0xff0] sm:$0xff]
    %v1039 = vld [vmem:[#allocation2 + $0xff8] sm:$0xff]
    %v1040 = vld [vmem:[#allocation2 + $0x1000] sm:$0xff]
    %v1041 = vld [vmem:[#allocation2 + $0x1008] sm:$0xff]
    %v1042 = vld [vmem:[#allocation2 + $0x1010] sm:$0xff]
    %v1043 = vld [vmem:[#allocation2 + $0x1018] sm:$0xff]
    %v1044 = vld [vmem:[#allocation2 + $0x1020] sm:$0xff]
    %v1045 = vld [vmem:[#allocation2 + $0x1028] sm:$0xff]
    %v1046 = vld [vmem:[#allocation2 + $0x1030] sm:$0xff]
    %v1047 = vld [vmem:[#allocation2 + $0x1038] sm:$0xff]
    %v1048 = vld [vmem:[#allocation2 + $0x1040] sm:$0xff]
    %v1049 = vld [vmem:[#allocation2 + $0x1048] sm:$0xff]
    %v1050 = vld [vmem:[#allocation2 + $0x1050] sm:$0xff]
    %v1051 = vld [vmem:[#allocation2 + $0x1058] sm:$0xff]
    %v1052 = vld [vmem:[#allocation2 + $0x1060] sm:$0xff]
    %v1053 = vld [vmem:[#allocation2 + $0x1068] sm:$0xff]
    %v1054 = vld [vmem:[#allocation2 + $0x1070] sm:$0xff]
    %v1055 = vld [vmem:[#allocation2 + $0x1078] sm:$0xff]
    %v1056 = vld [vmem:[#allocation2 + $0x1080] sm:$0xff]
    %v1057 = vld [vmem:[#allocation2 + $0x1088] sm:$0xff]
    %v1058 = vld [vmem:[#allocation2 + $0x1090] sm:$0xff]
    %v1059 = vld [vmem:[#allocation2 + $0x1098] sm:$0xff]
    %v1060 = vld [vmem:[#allocation2 + $0x10a0] sm:$0xff]
    %v1061 = vld [vmem:[#allocation2 + $0x10a8] sm:$0xff]
    %v1062 = vld [vmem:[#allocation2 + $0x10b0] sm:$0xff]
    %v1063 = vld [vmem:[#allocation2 + $0x10b8] sm:$0xff]
    %v1064 = vld [vmem:[#allocation2 + $0x10c0] sm:$0xff]
    %v1065 = vld [vmem:[#allocation2 + $0x10c8] sm:$0xff]
    %v1066 = vld [vmem:[#allocation2 + $0x10d0] sm:$0xff]
    %v1067 = vld [vmem:[#allocation2 + $0x10d8] sm:$0xff]
    %v1068 = vld [vmem:[#allocation2 + $0x10e0] sm:$0xff]
    %v1069 = vld [vmem:[#allocation2 + $0x10e8] sm:$0xff]
    %v1070 = vld [vmem:[#allocation2 + $0x10f0] sm:$0xff]
    %v1071 = vld [vmem:[#allocation2 + $0x10f8] sm:$0xff]
    %v1072 = vld [vmem:[#allocation2 + $0x1100] sm:$0xff]
    %v1073 = vld [vmem:[#allocation2 + $0x1108] sm:$0xff]
    %v1074 = vld [vmem:[#allocation2 + $0x1110] sm:$0xff]
    %v1075 = vld [vmem:[#allocation2 + $0x1118] sm:$0xff]
    %v1076 = vld [vmem:[#allocation2 + $0x1120] sm:$0xff]
    %v1077 = vld [vmem:[#allocation2 + $0x1128] sm:$0xff]
    %v1078 = vld [vmem:[#allocation2 + $0x1130] sm:$0xff]
    %v1079 = vld [vmem:[#allocation2 + $0x1138] sm:$0xff]
    %v1080 = vld [vmem:[#allocation2 + $0x1140] sm:$0xff]
    %v1081 = vld [vmem:[#allocation2 + $0x1148] sm:$0xff]
    %v1082 = vld [vmem:[#allocation2 + $0x1150] sm:$0xff]
    %v1083 = vld [vmem:[#allocation2 + $0x1158] sm:$0xff]
    %v1084 = vld [vmem:[#allocation2 + $0x1160] sm:$0xff]
    %v1085 = vld [vmem:[#allocation2 + $0x1168] sm:$0xff]
    %v1086 = vld [vmem:[#allocation2 + $0x1170] sm:$0xff]
    %v1087 = vld [vmem:[#allocation2 + $0x1178] sm:$0xff]
    %v1088 = vld [vmem:[#allocation2 + $0x1180] sm:$0xff]
    %v1089 = vld [vmem:[#allocation2 + $0x1188] sm:$0xff]
    %v1090 = vld [vmem:[#allocation2 + $0x1190] sm:$0xff]
    %v1091 = vld [vmem:[#allocation2 + $0x1198] sm:$0xff]
    %v1092 = vld [vmem:[#allocation2 + $0x11a0] sm:$0xff]
    %v1093 = vld [vmem:[#allocation2 + $0x11a8] sm:$0xff]
    %v1094 = vld [vmem:[#allocation2 + $0x11b0] sm:$0xff]
    %v1095 = vld [vmem:[#allocation2 + $0x11b8] sm:$0xff]
    %v1096 = vld [vmem:[#allocation2 + $0x11c0] sm:$0xff]
    %v1097 = vld [vmem:[#allocation2 + $0x11c8] sm:$0xff]
    %v1098 = vld [vmem:[#allocation2 + $0x11d0] sm:$0xff]
    %v1099 = vld [vmem:[#allocation2 + $0x11d8] sm:$0xff]
    %v1100 = vld [vmem:[#allocation2 + $0x11e0] sm:$0xff]
    %v1101 = vld [vmem:[#allocation2 + $0x11e8] sm:$0xff]
    %v1102 = vld [vmem:[#allocation2 + $0x11f0] sm:$0xff]
    %v1103 = vld [vmem:[#allocation2 + $0x11f8] sm:$0xff]
    %v1104 = vld [vmem:[#allocation2 + $0x1200] sm:$0xff]
    %v1105 = vld [vmem:[#allocation2 + $0x1208] sm:$0xff]
    %v1106 = vld [vmem:[#allocation2 + $0x1210] sm:$0xff]
    %v1107 = vld [vmem:[#allocation2 + $0x1218] sm:$0xff]
    %v1108 = vld [vmem:[#allocation2 + $0x1220] sm:$0xff]
    %v1109 = vld [vmem:[#allocation2 + $0x1228] sm:$0xff]
    %v1110 = vld [vmem:[#allocation2 + $0x1230] sm:$0xff]
    %v1111 = vld [vmem:[#allocation2 + $0x1238] sm:$0xff]
    %v1112 = vld [vmem:[#allocation2 + $0x1240] sm:$0xff]
    %v1113 = vld [vmem:[#allocation2 + $0x1248] sm:$0xff]
    %v1114 = vld [vmem:[#allocation2 + $0x1250] sm:$0xff]
    %v1115 = vld [vmem:[#allocation2 + $0x1258] sm:$0xff]
    %v1116 = vld [vmem:[#allocation2 + $0x1260] sm:$0xff]
    %v1117 = vld [vmem:[#allocation2 + $0x1268] sm:$0xff]
    %v1118 = vld [vmem:[#allocation2 + $0x1270] sm:$0xff]
    %v1119 = vld [vmem:[#allocation2 + $0x1278] sm:$0xff]
    %v1120 = vld [vmem:[#allocation2 + $0x1280] sm:$0xff]
    %v1121 = vld [vmem:[#allocation2 + $0x1288] sm:$0xff]
    %v1122 = vld [vmem:[#allocation2 + $0x1290] sm:$0xff]
    %v1123 = vld [vmem:[#allocation2 + $0x1298] sm:$0xff]
    %v1124 = vld [vmem:[#allocation2 + $0x12a0] sm:$0xff]
    %v1125 = vld [vmem:[#allocation2 + $0x12a8] sm:$0xff]
    %v1126 = vld [vmem:[#allocation2 + $0x12b0] sm:$0xff]
    %v1127 = vld [vmem:[#allocation2 + $0x12b8] sm:$0xff]
    %v1128 = vld [vmem:[#allocation2 + $0x12c0] sm:$0xff]
    %v1129 = vld [vmem:[#allocation2 + $0x12c8] sm:$0xff]
    %v1130 = vld [vmem:[#allocation2 + $0x12d0] sm:$0xff]
    %v1131 = vld [vmem:[#allocation2 + $0x12d8] sm:$0xff]
    %v1132 = vld [vmem:[#allocation2 + $0x12e0] sm:$0xff]
    %v1133 = vld [vmem:[#allocation2 + $0x12e8] sm:$0xff]
    %v1134 = vld [vmem:[#allocation2 + $0x12f0] sm:$0xff]
    %v1135 = vld [vmem:[#allocation2 + $0x12f8] sm:$0xff]
    %v1136 = vld [vmem:[#allocation2 + $0x1300] sm:$0xff]
    %v1137 = vld [vmem:[#allocation2 + $0x1308] sm:$0xff]
    %v1138 = vld [vmem:[#allocation2 + $0x1310] sm:$0xff]
    %v1139 = vld [vmem:[#allocation2 + $0x1318] sm:$0xff]
    %v1140 = vld [vmem:[#allocation2 + $0x1320] sm:$0xff]
    %v1141 = vld [vmem:[#allocation2 + $0x1328] sm:$0xff]
    %v1142 = vld [vmem:[#allocation2 + $0x1330] sm:$0xff]
    %v1143 = vld [vmem:[#allocation2 + $0x1338] sm:$0xff]
    %v1144 = vld [vmem:[#allocation2 + $0x1340] sm:$0xff]
    %v1145 = vld [vmem:[#allocation2 + $0x1348] sm:$0xff]
    %v1146 = vld [vmem:[#allocation2 + $0x1350] sm:$0xff]
    %v1147 = vld [vmem:[#allocation2 + $0x1358] sm:$0xff]
    %v1148 = vld [vmem:[#allocation2 + $0x1360] sm:$0xff]
    %v1149 = vld [vmem:[#allocation2 + $0x1368] sm:$0xff]
    %v1150 = vld [vmem:[#allocation2 + $0x1370] sm:$0xff]
    %v1151 = vld [vmem:[#allocation2 + $0x1378] sm:$0xff]
    %v1152 = vld [vmem:[#allocation2 + $0x1380] sm:$0xff]
    %v1153 = vld [vmem:[#allocation2 + $0x1388] sm:$0xff]
    %v1154 = vld [vmem:[#allocation2 + $0x1390] sm:$0xff]
    %v1155 = vld [vmem:[#allocation2 + $0x1398] sm:$0xff]
    %v1156 = vld [vmem:[#allocation2 + $0x13a0] sm:$0xff]
    %v1157 = vld [vmem:[#allocation2 + $0x13a8] sm:$0xff]
    %v1158 = vld [vmem:[#allocation2 + $0x13b0] sm:$0xff]
    %v1159 = vld [vmem:[#allocation2 + $0x13b8] sm:$0xff]
    %v1160 = vld [vmem:[#allocation2 + $0x13c0] sm:$0xff]
    %v1161 = vld [vmem:[#allocation2 + $0x13c8] sm:$0xff]
    %v1162 = vld [vmem:[#allocation2 + $0x13d0] sm:$0xff]
    %v1163 = vld [vmem:[#allocation2 + $0x13d8] sm:$0xff]
    %v1164 = vld [vmem:[#allocation2 + $0x13e0] sm:$0xff]
    %v1165 = vld [vmem:[#allocation2 + $0x13e8] sm:$0xff]
    %v1166 = vld [vmem:[#allocation2 + $0x13f0] sm:$0xff]
    %v1167 = vld [vmem:[#allocation2 + $0x13f8] sm:$0xff]
    %v1168 = vld [vmem:[#allocation2 + $0x1400] sm:$0xff]
    %v1169 = vld [vmem:[#allocation2 + $0x1408] sm:$0xff]
    %v1170 = vld [vmem:[#allocation2 + $0x1410] sm:$0xff]
    %v1171 = vld [vmem:[#allocation2 + $0x1418] sm:$0xff]
    %v1172 = vld [vmem:[#allocation2 + $0x1420] sm:$0xff]
    %v1173 = vld [vmem:[#allocation2 + $0x1428] sm:$0xff]
    %v1174 = vld [vmem:[#allocation2 + $0x1430] sm:$0xff]
    %v1175 = vld [vmem:[#allocation2 + $0x1438] sm:$0xff]
    %v1176 = vld [vmem:[#allocation2 + $0x1440] sm:$0xff]
    %v1177 = vld [vmem:[#allocation2 + $0x1448] sm:$0xff]
    %v1178 = vld [vmem:[#allocation2 + $0x1450] sm:$0xff]
    %v1179 = vld [vmem:[#allocation2 + $0x1458] sm:$0xff]
    %v1180 = vld [vmem:[#allocation2 + $0x1460] sm:$0xff]
    %v1181 = vld [vmem:[#allocation2 + $0x1468] sm:$0xff]
    %v1182 = vld [vmem:[#allocation2 + $0x1470] sm:$0xff]
    %v1183 = vld [vmem:[#allocation2 + $0x1478] sm:$0xff]
    %v1184 = vld [vmem:[#allocation2 + $0x1480] sm:$0xff]
    %v1185 = vld [vmem:[#allocation2 + $0x1488] sm:$0xff]
    %v1186 = vld [vmem:[#allocation2 + $0x1490] sm:$0xff]
    %v1187 = vld [vmem:[#allocation2 + $0x1498] sm:$0xff]
    %v1188 = vld [vmem:[#allocation2 + $0x14a0] sm:$0xff]
    %v1189 = vld [vmem:[#allocation2 + $0x14a8] sm:$0xff]
    %v1190 = vld [vmem:[#allocation2 + $0x14b0] sm:$0xff]
    %v1191 = vld [vmem:[#allocation2 + $0x14b8] sm:$0xff]
    %v1192 = vld [vmem:[#allocation2 + $0x14c0] sm:$0xff]
    %v1193 = vld [vmem:[#allocation2 + $0x14c8] sm:$0xff]
    %v1194 = vld [vmem:[#allocation2 + $0x14d0] sm:$0xff]
    %v1195 = vld [vmem:[#allocation2 + $0x14d8] sm:$0xff]
    %v1196 = vld [vmem:[#allocation2 + $0x14e0] sm:$0xff]
    %v1197 = vld [vmem:[#allocation2 + $0x14e8] sm:$0xff]
    %v1198 = vld [vmem:[#allocation2 + $0x14f0] sm:$0xff]
    %v1199 = vld [vmem:[#allocation2 + $0x14f8] sm:$0xff]
    %v1200 = vld [vmem:[#allocation2 + $0x1500] sm:$0xff]
    %v1201 = vld [vmem:[#allocation2 + $0x1508] sm:$0xff]
    %v1202 = vld [vmem:[#allocation2 + $0x1510] sm:$0xff]
    %v1203 = vld [vmem:[#allocation2 + $0x1518] sm:$0xff]
    %v1204 = vld [vmem:[#allocation2 + $0x1520] sm:$0xff]
    %v1205 = vld [vmem:[#allocation2 + $0x1528] sm:$0xff]
    %v1206 = vld [vmem:[#allocation2 + $0x1530] sm:$0xff]
    %v1207 = vld [vmem:[#allocation2 + $0x1538] sm:$0xff]
    %v1208 = vld [vmem:[#allocation2 + $0x1540] sm:$0xff]
    %v1209 = vld [vmem:[#allocation2 + $0x1548] sm:$0xff]
    %v1210 = vld [vmem:[#allocation2 + $0x1550] sm:$0xff]
    %v1211 = vld [vmem:[#allocation2 + $0x1558] sm:$0xff]
    %v1212 = vld [vmem:[#allocation2 + $0x1560] sm:$0xff]
    %v1213 = vld [vmem:[#allocation2 + $0x1568] sm:$0xff]
    %v1214 = vld [vmem:[#allocation2 + $0x1570] sm:$0xff]
    %v1215 = vld [vmem:[#allocation2 + $0x1578] sm:$0xff]
    %v1216 = vld [vmem:[#allocation2 + $0x1580] sm:$0xff]
    %v1217 = vld [vmem:[#allocation2 + $0x1588] sm:$0xff]
    %v1218 = vld [vmem:[#allocation2 + $0x1590] sm:$0xff]
    %v1219 = vld [vmem:[#allocation2 + $0x1598] sm:$0xff]
    %v1220 = vld [vmem:[#allocation2 + $0x15a0] sm:$0xff]
    %v1221 = vld [vmem:[#allocation2 + $0x15a8] sm:$0xff]
    %v1222 = vld [vmem:[#allocation2 + $0x15b0] sm:$0xff]
    %v1223 = vld [vmem:[#allocation2 + $0x15b8] sm:$0xff]
    %v1224 = vld [vmem:[#allocation2 + $0x15c0] sm:$0xff]
    %v1225 = vld [vmem:[#allocation2 + $0x15c8] sm:$0xff]
    %v1226 = vld [vmem:[#allocation2 + $0x15d0] sm:$0xff]
    %v1227 = vld [vmem:[#allocation2 + $0x15d8] sm:$0xff]
    %v1228 = vld [vmem:[#allocation2 + $0x15e0] sm:$0xff]
    %v1229 = vld [vmem:[#allocation2 + $0x15e8] sm:$0xff]
    %v1230 = vld [vmem:[#allocation2 + $0x15f0] sm:$0xff]
    %v1231 = vld [vmem:[#allocation2 + $0x15f8] sm:$0xff]
    %v1232 = vld [vmem:[#allocation2 + $0x1600] sm:$0xff]
    %v1233 = vld [vmem:[#allocation2 + $0x1608] sm:$0xff]
    %v1234 = vld [vmem:[#allocation2 + $0x1610] sm:$0xff]
    %v1235 = vld [vmem:[#allocation2 + $0x1618] sm:$0xff]
    %v1236 = vld [vmem:[#allocation2 + $0x1620] sm:$0xff]
    %v1237 = vld [vmem:[#allocation2 + $0x1628] sm:$0xff]
    %v1238 = vld [vmem:[#allocation2 + $0x1630] sm:$0xff]
    %v1239 = vld [vmem:[#allocation2 + $0x1638] sm:$0xff]
    %v1240 = vld [vmem:[#allocation2 + $0x1640] sm:$0xff]
    %v1241 = vld [vmem:[#allocation2 + $0x1648] sm:$0xff]
    %v1242 = vld [vmem:[#allocation2 + $0x1650] sm:$0xff]
    %v1243 = vld [vmem:[#allocation2 + $0x1658] sm:$0xff]
    %v1244 = vld [vmem:[#allocation2 + $0x1660] sm:$0xff]
    %v1245 = vld [vmem:[#allocation2 + $0x1668] sm:$0xff]
    %v1246 = vld [vmem:[#allocation2 + $0x1670] sm:$0xff]
    %v1247 = vld [vmem:[#allocation2 + $0x1678] sm:$0xff]
    %v1248 = vld [vmem:[#allocation2 + $0x1680] sm:$0xff]
    %v1249 = vld [vmem:[#allocation2 + $0x1688] sm:$0xff]
    %v1250 = vld [vmem:[#allocation2 + $0x1690] sm:$0xff]
    %v1251 = vld [vmem:[#allocation2 + $0x1698] sm:$0xff]
    %v1252 = vld [vmem:[#allocation2 + $0x16a0] sm:$0xff]
    %v1253 = vld [vmem:[#allocation2 + $0x16a8] sm:$0xff]
    %v1254 = vld [vmem:[#allocation2 + $0x16b0] sm:$0xff]
    %v1255 = vld [vmem:[#allocation2 + $0x16b8] sm:$0xff]
    %v1256 = vld [vmem:[#allocation2 + $0x16c0] sm:$0xff]
    %v1257 = vld [vmem:[#allocation2 + $0x16c8] sm:$0xff]
    %v1258 = vld [vmem:[#allocation2 + $0x16d0] sm:$0xff]
    %v1259 = vld [vmem:[#allocation2 + $0x16d8] sm:$0xff]
    %v1260 = vld [vmem:[#allocation2 + $0x16e0] sm:$0xff]
    %v1261 = vld [vmem:[#allocation2 + $0x16e8] sm:$0xff]
    %v1262 = vld [vmem:[#allocation2 + $0x16f0] sm:$0xff]
    %v1263 = vld [vmem:[#allocation2 + $0x16f8] sm:$0xff]
    %v1264 = vld [vmem:[#allocation2 + $0x1700] sm:$0xff]
    %v1265 = vld [vmem:[#allocation2 + $0x1708] sm:$0xff]
    %v1266 = vld [vmem:[#allocation2 + $0x1710] sm:$0xff]
    %v1267 = vld [vmem:[#allocation2 + $0x1718] sm:$0xff]
    %v1268 = vld [vmem:[#allocation2 + $0x1720] sm:$0xff]
    %v1269 = vld [vmem:[#allocation2 + $0x1728] sm:$0xff]
    %v1270 = vld [vmem:[#allocation2 + $0x1730] sm:$0xff]
    %v1271 = vld [vmem:[#allocation2 + $0x1738] sm:$0xff]
    %v1272 = vld [vmem:[#allocation2 + $0x1740] sm:$0xff]
    %v1273 = vld [vmem:[#allocation2 + $0x1748] sm:$0xff]
    %v1274 = vld [vmem:[#allocation2 + $0x1750] sm:$0xff]
    %v1275 = vld [vmem:[#allocation2 + $0x1758] sm:$0xff]
    %v1276 = vld [vmem:[#allocation2 + $0x1760] sm:$0xff]
    %v1277 = vld [vmem:[#allocation2 + $0x1768] sm:$0xff]
    %v1278 = vld [vmem:[#allocation2 + $0x1770] sm:$0xff]
    %v1279 = vld [vmem:[#allocation2 + $0x1778] sm:$0xff]
    %v1280 = vld [vmem:[#allocation2 + $0x1780] sm:$0xff]
    %v1281 = vld [vmem:[#allocation2 + $0x1788] sm:$0xff]
    %v1282 = vld [vmem:[#allocation2 + $0x1790] sm:$0xff]
    %v1283 = vld [vmem:[#allocation2 + $0x1798] sm:$0xff]
    %v1284 = vld [vmem:[#allocation2 + $0x17a0] sm:$0xff]
    %v1285 = vld [vmem:[#allocation2 + $0x17a8] sm:$0xff]
    %v1286 = vld [vmem:[#allocation2 + $0x17b0] sm:$0xff]
    %v1287 = vld [vmem:[#allocation2 + $0x17b8] sm:$0xff]
    %v1288 = vld [vmem:[#allocation2 + $0x17c0] sm:$0xff]
    %v1289 = vld [vmem:[#allocation2 + $0x17c8] sm:$0xff]
    %v1290 = vld [vmem:[#allocation2 + $0x17d0] sm:$0xff]
    %v1291 = vld [vmem:[#allocation2 + $0x17d8] sm:$0xff]
    %v1292 = vld [vmem:[#allocation2 + $0x17e0] sm:$0xff]
    %v1293 = vld [vmem:[#allocation2 + $0x17e8] sm:$0xff]
    %v1294 = vld [vmem:[#allocation2 + $0x17f0] sm:$0xff]
    %v1295 = vld [vmem:[#allocation2 + $0x17f8] sm:$0xff]
    %v1296 = vld [vmem:[#allocation2 + $0x1800] sm:$0xff]
    %v1297 = vld [vmem:[#allocation2 + $0x1808] sm:$0xff]
    %v1298 = vld [vmem:[#allocation2 + $0x1810] sm:$0xff]
    %v1299 = vld [vmem:[#allocation2 + $0x1818] sm:$0xff]
    %v1300 = vld [vmem:[#allocation2 + $0x1820] sm:$0xff]
    %v1301 = vld [vmem:[#allocation2 + $0x1828] sm:$0xff]
    %v1302 = vld [vmem:[#allocation2 + $0x1830] sm:$0xff]
    %v1303 = vld [vmem:[#allocation2 + $0x1838] sm:$0xff]
    %v1304 = vld [vmem:[#allocation2 + $0x1840] sm:$0xff]
    %v1305 = vld [vmem:[#allocation2 + $0x1848] sm:$0xff]
    %v1306 = vld [vmem:[#allocation2 + $0x1850] sm:$0xff]
    %v1307 = vld [vmem:[#allocation2 + $0x1858] sm:$0xff]
    %v1308 = vld [vmem:[#allocation2 + $0x1860] sm:$0xff]
    %v1309 = vld [vmem:[#allocation2 + $0x1868] sm:$0xff]
    %v1310 = vld [vmem:[#allocation2 + $0x1870] sm:$0xff]
    %v1311 = vld [vmem:[#allocation2 + $0x1878] sm:$0xff]
    %v1312 = vld [vmem:[#allocation2 + $0x1880] sm:$0xff]
    %v1313 = vld [vmem:[#allocation2 + $0x1888] sm:$0xff]
    %v1314 = vld [vmem:[#allocation2 + $0x1890] sm:$0xff]
    %v1315 = vld [vmem:[#allocation2 + $0x1898] sm:$0xff]
    %v1316 = vld [vmem:[#allocation2 + $0x18a0] sm:$0xff]
    %v1317 = vld [vmem:[#allocation2 + $0x18a8] sm:$0xff]
    %v1318 = vld [vmem:[#allocation2 + $0x18b0] sm:$0xff]
    %v1319 = vld [vmem:[#allocation2 + $0x18b8] sm:$0xff]
    %v1320 = vld [vmem:[#allocation2 + $0x18c0] sm:$0xff]
    %v1321 = vld [vmem:[#allocation2 + $0x18c8] sm:$0xff]
    %v1322 = vld [vmem:[#allocation2 + $0x18d0] sm:$0xff]
    %v1323 = vld [vmem:[#allocation2 + $0x18d8] sm:$0xff]
    %v1324 = vld [vmem:[#allocation2 + $0x18e0] sm:$0xff]
    %v1325 = vld [vmem:[#allocation2 + $0x18e8] sm:$0xff]
    %v1326 = vld [vmem:[#allocation2 + $0x18f0] sm:$0xff]
    %v1327 = vld [vmem:[#allocation2 + $0x18f8] sm:$0xff]
    %v1328 = vld [vmem:[#allocation2 + $0x1900] sm:$0xff]
    %v1329 = vld [vmem:[#allocation2 + $0x1908] sm:$0xff]
    %v1330 = vld [vmem:[#allocation2 + $0x1910] sm:$0xff]
    %v1331 = vld [vmem:[#allocation2 + $0x1918] sm:$0xff]
    %v1332 = vld [vmem:[#allocation2 + $0x1920] sm:$0xff]
    %v1333 = vld [vmem:[#allocation2 + $0x1928] sm:$0xff]
    %v1334 = vld [vmem:[#allocation2 + $0x1930] sm:$0xff]
    %v1335 = vld [vmem:[#allocation2 + $0x1938] sm:$0xff]
    %v1336 = vld [vmem:[#allocation2 + $0x1940] sm:$0xff]
    %v1337 = vld [vmem:[#allocation2 + $0x1948] sm:$0xff]
    %v1338 = vld [vmem:[#allocation2 + $0x1950] sm:$0xff]
    %v1339 = vld [vmem:[#allocation2 + $0x1958] sm:$0xff]
    %v1340 = vld [vmem:[#allocation2 + $0x1960] sm:$0xff]
    %v1341 = vld [vmem:[#allocation2 + $0x1968] sm:$0xff]
    %v1342 = vld [vmem:[#allocation2 + $0x1970] sm:$0xff]
    %v1343 = vld [vmem:[#allocation2 + $0x1978] sm:$0xff]
    %v1344 = vld [vmem:[#allocation2 + $0x1980] sm:$0xff]
    %v1345 = vld [vmem:[#allocation2 + $0x1988] sm:$0xff]
    %v1346 = vld [vmem:[#allocation2 + $0x1990] sm:$0xff]
    %v1347 = vld [vmem:[#allocation2 + $0x1998] sm:$0xff]
    %v1348 = vld [vmem:[#allocation2 + $0x19a0] sm:$0xff]
    %v1349 = vld [vmem:[#allocation2 + $0x19a8] sm:$0xff]
    %v1350 = vld [vmem:[#allocation2 + $0x19b0] sm:$0xff]
    %v1351 = vld [vmem:[#allocation2 + $0x19b8] sm:$0xff]
    %v1352 = vld [vmem:[#allocation2 + $0x19c0] sm:$0xff]
    %v1353 = vld [vmem:[#allocation2 + $0x19c8] sm:$0xff]
    %v1354 = vld [vmem:[#allocation2 + $0x19d0] sm:$0xff]
    %v1355 = vld [vmem:[#allocation2 + $0x19d8] sm:$0xff]
    %v1356 = vld [vmem:[#allocation2 + $0x19e0] sm:$0xff]
    %v1357 = vld [vmem:[#allocation2 + $0x19e8] sm:$0xff]
    %v1358 = vld [vmem:[#allocation2 + $0x19f0] sm:$0xff]
    %v1359 = vld [vmem:[#allocation2 + $0x19f8] sm:$0xff]
    %v1360 = vld [vmem:[#allocation2 + $0x1a00] sm:$0xff]
    %v1361 = vld [vmem:[#allocation2 + $0x1a08] sm:$0xff]
    %v1362 = vld [vmem:[#allocation2 + $0x1a10] sm:$0xff]
    %v1363 = vld [vmem:[#allocation2 + $0x1a18] sm:$0xff]
    %v1364 = vld [vmem:[#allocation2 + $0x1a20] sm:$0xff]
    %v1365 = vld [vmem:[#allocation2 + $0x1a28] sm:$0xff]
    %v1366 = vld [vmem:[#allocation2 + $0x1a30] sm:$0xff]
    %v1367 = vld [vmem:[#allocation2 + $0x1a38] sm:$0xff]
    %v1368 = vld [vmem:[#allocation2 + $0x1a40] sm:$0xff]
    %v1369 = vld [vmem:[#allocation2 + $0x1a48] sm:$0xff]
    %v1370 = vld [vmem:[#allocation2 + $0x1a50] sm:$0xff]
    %v1371 = vld [vmem:[#allocation2 + $0x1a58] sm:$0xff]
    %v1372 = vld [vmem:[#allocation2 + $0x1a60] sm:$0xff]
    %v1373 = vld [vmem:[#allocation2 + $0x1a68] sm:$0xff]
    %v1374 = vld [vmem:[#allocation2 + $0x1a70] sm:$0xff]
    %v1375 = vld [vmem:[#allocation2 + $0x1a78] sm:$0xff]
    %v1376 = vld [vmem:[#allocation2 + $0x1a80] sm:$0xff]
    %v1377 = vld [vmem:[#allocation2 + $0x1a88] sm:$0xff]
    %v1378 = vld [vmem:[#allocation2 + $0x1a90] sm:$0xff]
    %v1379 = vld [vmem:[#allocation2 + $0x1a98] sm:$0xff]
    %v1380 = vld [vmem:[#allocation2 + $0x1aa0] sm:$0xff]
    %v1381 = vld [vmem:[#allocation2 + $0x1aa8] sm:$0xff]
    %v1382 = vld [vmem:[#allocation2 + $0x1ab0] sm:$0xff]
    %v1383 = vld [vmem:[#allocation2 + $0x1ab8] sm:$0xff]
    %v1384 = vld [vmem:[#allocation2 + $0x1ac0] sm:$0xff]
    %v1385 = vld [vmem:[#allocation2 + $0x1ac8] sm:$0xff]
    %v1386 = vld [vmem:[#allocation2 + $0x1ad0] sm:$0xff]
    %v1387 = vld [vmem:[#allocation2 + $0x1ad8] sm:$0xff]
    %v1388 = vld [vmem:[#allocation2 + $0x1ae0] sm:$0xff]
    %v1389 = vld [vmem:[#allocation2 + $0x1ae8] sm:$0xff]
    %v1390 = vld [vmem:[#allocation2 + $0x1af0] sm:$0xff]
    %v1391 = vld [vmem:[#allocation2 + $0x1af8] sm:$0xff]
    %v1392 = vld [vmem:[#allocation2 + $0x1b00] sm:$0xff]
    %v1393 = vld [vmem:[#allocation2 + $0x1b08] sm:$0xff]
    %v1394 = vld [vmem:[#allocation2 + $0x1b10] sm:$0xff]
    %v1395 = vld [vmem:[#allocation2 + $0x1b18] sm:$0xff]
    %v1396 = vld [vmem:[#allocation2 + $0x1b20] sm:$0xff]
    %v1397 = vld [vmem:[#allocation2 + $0x1b28] sm:$0xff]
    %v1398 = vld [vmem:[#allocation2 + $0x1b30] sm:$0xff]
    %v1399 = vld [vmem:[#allocation2 + $0x1b38] sm:$0xff]
    %v1400 = vld [vmem:[#allocation2 + $0x1b40] sm:$0xff]
    %v1401 = vld [vmem:[#allocation2 + $0x1b48] sm:$0xff]
    %v1402 = vld [vmem:[#allocation2 + $0x1b50] sm:$0xff]
    %v1403 = vld [vmem:[#allocation2 + $0x1b58] sm:$0xff]
    %v1404 = vld [vmem:[#allocation2 + $0x1b60] sm:$0xff]
    %v1405 = vld [vmem:[#allocation2 + $0x1b68] sm:$0xff]
    %v1406 = vld [vmem:[#allocation2 + $0x1b70] sm:$0xff]
    %v1407 = vld [vmem:[#allocation2 + $0x1b78] sm:$0xff]
    %v1408 = vld [vmem:[#allocation2 + $0x1b80] sm:$0xff]
    %v1409 = vld [vmem:[#allocation2 + $0x1b88] sm:$0xff]
    %v1410 = vld [vmem:[#allocation2 + $0x1b90] sm:$0xff]
    %v1411 = vld [vmem:[#allocation2 + $0x1b98] sm:$0xff]
    %v1412 = vld [vmem:[#allocation2 + $0x1ba0] sm:$0xff]
    %v1413 = vld [vmem:[#allocation2 + $0x1ba8] sm:$0xff]
    %v1414 = vld [vmem:[#allocation2 + $0x1bb0] sm:$0xff]
    %v1415 = vld [vmem:[#allocation2 + $0x1bb8] sm:$0xff]
    %v1416 = vld [vmem:[#allocation2 + $0x1bc0] sm:$0xff]
    %v1417 = vld [vmem:[#allocation2 + $0x1bc8] sm:$0xff]
    %v1418 = vld [vmem:[#allocation2 + $0x1bd0] sm:$0xff]
    %v1419 = vld [vmem:[#allocation2 + $0x1bd8] sm:$0xff]
    %v1420 = vld [vmem:[#allocation2 + $0x1be0] sm:$0xff]
    %v1421 = vld [vmem:[#allocation2 + $0x1be8] sm:$0xff]
    %v1422 = vld [vmem:[#allocation2 + $0x1bf0] sm:$0xff]
    %v1423 = vld [vmem:[#allocation2 + $0x1bf8] sm:$0xff]
    %v1424 = vld [vmem:[#allocation2 + $0x1c00] sm:$0xff]
    %v1425 = vld [vmem:[#allocation2 + $0x1c08] sm:$0xff]
    %v1426 = vld [vmem:[#allocation2 + $0x1c10] sm:$0xff]
    %v1427 = vld [vmem:[#allocation2 + $0x1c18] sm:$0xff]
    %v1428 = vld [vmem:[#allocation2 + $0x1c20] sm:$0xff]
    %v1429 = vld [vmem:[#allocation2 + $0x1c28] sm:$0xff]
    %v1430 = vld [vmem:[#allocation2 + $0x1c30] sm:$0xff]
    %v1431 = vld [vmem:[#allocation2 + $0x1c38] sm:$0xff]
    %v1432 = vld [vmem:[#allocation2 + $0x1c40] sm:$0xff]
    %v1433 = vld [vmem:[#allocation2 + $0x1c48] sm:$0xff]
    %v1434 = vld [vmem:[#allocation2 + $0x1c50] sm:$0xff]
    %v1435 = vld [vmem:[#allocation2 + $0x1c58] sm:$0xff]
    %v1436 = vld [vmem:[#allocation2 + $0x1c60] sm:$0xff]
    %v1437 = vld [vmem:[#allocation2 + $0x1c68] sm:$0xff]
    %v1438 = vld [vmem:[#allocation2 + $0x1c70] sm:$0xff]
    %v1439 = vld [vmem:[#allocation2 + $0x1c78] sm:$0xff]
    %v1440 = vld [vmem:[#allocation2 + $0x1c80] sm:$0xff]
    %v1441 = vld [vmem:[#allocation2 + $0x1c88] sm:$0xff]
    %v1442 = vld [vmem:[#allocation2 + $0x1c90] sm:$0xff]
    %v1443 = vld [vmem:[#allocation2 + $0x1c98] sm:$0xff]
    %v1444 = vld [vmem:[#allocation2 + $0x1ca0] sm:$0xff]
    %v1445 = vld [vmem:[#allocation2 + $0x1ca8] sm:$0xff]
    %v1446 = vld [vmem:[#allocation2 + $0x1cb0] sm:$0xff]
    %v1447 = vld [vmem:[#allocation2 + $0x1cb8] sm:$0xff]
    %v1448 = vld [vmem:[#allocation2 + $0x1cc0] sm:$0xff]
    %v1449 = vld [vmem:[#allocation2 + $0x1cc8] sm:$0xff]
    %v1450 = vld [vmem:[#allocation2 + $0x1cd0] sm:$0xff]
    %v1451 = vld [vmem:[#allocation2 + $0x1cd8] sm:$0xff]
    %v1452 = vld [vmem:[#allocation2 + $0x1ce0] sm:$0xff]
    %v1453 = vld [vmem:[#allocation2 + $0x1ce8] sm:$0xff]
    %v1454 = vld [vmem:[#allocation2 + $0x1cf0] sm:$0xff]
    %v1455 = vld [vmem:[#allocation2 + $0x1cf8] sm:$0xff]
    %v1456 = vld [vmem:[#allocation2 + $0x1d00] sm:$0xff]
    %v1457 = vld [vmem:[#allocation2 + $0x1d08] sm:$0xff]
    %v1458 = vld [vmem:[#allocation2 + $0x1d10] sm:$0xff]
    %v1459 = vld [vmem:[#allocation2 + $0x1d18] sm:$0xff]
    %v1460 = vld [vmem:[#allocation2 + $0x1d20] sm:$0xff]
    %v1461 = vld [vmem:[#allocation2 + $0x1d28] sm:$0xff]
    %v1462 = vld [vmem:[#allocation2 + $0x1d30] sm:$0xff]
    %v1463 = vld [vmem:[#allocation2 + $0x1d38] sm:$0xff]
    %v1464 = vld [vmem:[#allocation2 + $0x1d40] sm:$0xff]
    %v1465 = vld [vmem:[#allocation2 + $0x1d48] sm:$0xff]
    %v1466 = vld [vmem:[#allocation2 + $0x1d50] sm:$0xff]
    %v1467 = vld [vmem:[#allocation2 + $0x1d58] sm:$0xff]
    %v1468 = vld [vmem:[#allocation2 + $0x1d60] sm:$0xff]
    %v1469 = vld [vmem:[#allocation2 + $0x1d68] sm:$0xff]
    %v1470 = vld [vmem:[#allocation2 + $0x1d70] sm:$0xff]
    %v1471 = vld [vmem:[#allocation2 + $0x1d78] sm:$0xff]
    %v1472 = vld [vmem:[#allocation2 + $0x1d80] sm:$0xff]
    %v1473 = vld [vmem:[#allocation2 + $0x1d88] sm:$0xff]
    %v1474 = vld [vmem:[#allocation2 + $0x1d90] sm:$0xff]
    %v1475 = vld [vmem:[#allocation2 + $0x1d98] sm:$0xff]
    %v1476 = vld [vmem:[#allocation2 + $0x1da0] sm:$0xff]
    %v1477 = vld [vmem:[#allocation2 + $0x1da8] sm:$0xff]
    %v1478 = vld [vmem:[#allocation2 + $0x1db0] sm:$0xff]
    %v1479 = vld [vmem:[#allocation2 + $0x1db8] sm:$0xff]
    %v1480 = vld [vmem:[#allocation2 + $0x1dc0] sm:$0xff]
    %v1481 = vld [vmem:[#allocation2 + $0x1dc8] sm:$0xff]
    %v1482 = vld [vmem:[#allocation2 + $0x1dd0] sm:$0xff]
    %v1483 = vld [vmem:[#allocation2 + $0x1dd8] sm:$0xff]
    %v1484 = vld [vmem:[#allocation2 + $0x1de0] sm:$0xff]
    %v1485 = vld [vmem:[#allocation2 + $0x1de8] sm:$0xff]
    %v1486 = vld [vmem:[#allocation2 + $0x1df0] sm:$0xff]
    %v1487 = vld [vmem:[#allocation2 + $0x1df8] sm:$0xff]
    %v1488 = vld [vmem:[#allocation2 + $0x1e00] sm:$0xff]
    %v1489 = vld [vmem:[#allocation2 + $0x1e08] sm:$0xff]
    %v1490 = vld [vmem:[#allocation2 + $0x1e10] sm:$0xff]
    %v1491 = vld [vmem:[#allocation2 + $0x1e18] sm:$0xff]
    %v1492 = vld [vmem:[#allocation2 + $0x1e20] sm:$0xff]
    %v1493 = vld [vmem:[#allocation2 + $0x1e28] sm:$0xff]
    %v1494 = vld [vmem:[#allocation2 + $0x1e30] sm:$0xff]
    %v1495 = vld [vmem:[#allocation2 + $0x1e38] sm:$0xff]
    %v1496 = vld [vmem:[#allocation2 + $0x1e40] sm:$0xff]
    %v1497 = vld [vmem:[#allocation2 + $0x1e48] sm:$0xff]
    %v1498 = vld [vmem:[#allocation2 + $0x1e50] sm:$0xff]
    %v1499 = vld [vmem:[#allocation2 + $0x1e58] sm:$0xff]
    %v1500 = vld [vmem:[#allocation2 + $0x1e60] sm:$0xff]
    %v1501 = vld [vmem:[#allocation2 + $0x1e68] sm:$0xff]
    %v1502 = vld [vmem:[#allocation2 + $0x1e70] sm:$0xff]
    %v1503 = vld [vmem:[#allocation2 + $0x1e78] sm:$0xff]
    %v1504 = vld [vmem:[#allocation2 + $0x1e80] sm:$0xff]
    %v1505 = vld [vmem:[#allocation2 + $0x1e88] sm:$0xff]
    %v1506 = vld [vmem:[#allocation2 + $0x1e90] sm:$0xff]
    %v1507 = vld [vmem:[#allocation2 + $0x1e98] sm:$0xff]
    %v1508 = vld [vmem:[#allocation2 + $0x1ea0] sm:$0xff]
    %v1509 = vld [vmem:[#allocation2 + $0x1ea8] sm:$0xff]
    %v1510 = vld [vmem:[#allocation2 + $0x1eb0] sm:$0xff]
    %v1511 = vld [vmem:[#allocation2 + $0x1eb8] sm:$0xff]
    %v1512 = vld [vmem:[#allocation2 + $0x1ec0] sm:$0xff]
    %v1513 = vld [vmem:[#allocation2 + $0x1ec8] sm:$0xff]
    %v1514 = vld [vmem:[#allocation2 + $0x1ed0] sm:$0xff]
    %v1515 = vld [vmem:[#allocation2 + $0x1ed8] sm:$0xff]
    %v1516 = vld [vmem:[#allocation2 + $0x1ee0] sm:$0xff]
    %v1517 = vld [vmem:[#allocation2 + $0x1ee8] sm:$0xff]
    %v1518 = vld [vmem:[#allocation2 + $0x1ef0] sm:$0xff]
    %v1519 = vld [vmem:[#allocation2 + $0x1ef8] sm:$0xff]
    %v1520 = vld [vmem:[#allocation2 + $0x1f00] sm:$0xff]
    %v1521 = vld [vmem:[#allocation2 + $0x1f08] sm:$0xff]
    %v1522 = vld [vmem:[#allocation2 + $0x1f10] sm:$0xff]
    %v1523 = vld [vmem:[#allocation2 + $0x1f18] sm:$0xff]
    %v1524 = vld [vmem:[#allocation2 + $0x1f20] sm:$0xff]
    %v1525 = vld [vmem:[#allocation2 + $0x1f28] sm:$0xff]
    %v1526 = vld [vmem:[#allocation2 + $0x1f30] sm:$0xff]
    %v1527 = vld [vmem:[#allocation2 + $0x1f38] sm:$0xff]
    %v1528 = vld [vmem:[#allocation2 + $0x1f40] sm:$0xff]
    %v1529 = vld [vmem:[#allocation2 + $0x1f48] sm:$0xff]
    %v1530 = vld [vmem:[#allocation2 + $0x1f50] sm:$0xff]
    %v1531 = vld [vmem:[#allocation2 + $0x1f58] sm:$0xff]
    %v1532 = vld [vmem:[#allocation2 + $0x1f60] sm:$0xff]
    %v1533 = vld [vmem:[#allocation2 + $0x1f68] sm:$0xff]
    %v1534 = vld [vmem:[#allocation2 + $0x1f70] sm:$0xff]
    %v1535 = vld [vmem:[#allocation2 + $0x1f78] sm:$0xff]
    %v1536 = vld [vmem:[#allocation2 + $0x1f80] sm:$0xff]
    %v1537 = vld [vmem:[#allocation2 + $0x1f88] sm:$0xff]
    %v1538 = vld [vmem:[#allocation2 + $0x1f90] sm:$0xff]
    %v1539 = vld [vmem:[#allocation2 + $0x1f98] sm:$0xff]
    %v1540 = vld [vmem:[#allocation2 + $0x1fa0] sm:$0xff]
    %v1541 = vld [vmem:[#allocation2 + $0x1fa8] sm:$0xff]
    %v1542 = vld [vmem:[#allocation2 + $0x1fb0] sm:$0xff]
    %v1543 = vld [vmem:[#allocation2 + $0x1fb8] sm:$0xff]
    %v1544 = vld [vmem:[#allocation2 + $0x1fc0] sm:$0xff]
    %v1545 = vld [vmem:[#allocation2 + $0x1fc8] sm:$0xff]
    %v1546 = vld [vmem:[#allocation2 + $0x1fd0] sm:$0xff]
    %v1547 = vld [vmem:[#allocation2 + $0x1fd8] sm:$0xff]
    %v1548 = vld [vmem:[#allocation2 + $0x1fe0] sm:$0xff]
    %v1549 = vld [vmem:[#allocation2 + $0x1fe8] sm:$0xff]
    %v1550 = vld [vmem:[#allocation2 + $0x1ff0] sm:$0xff]
    %v1551 = vld [vmem:[#allocation2 + $0x1ff8] sm:$0xff]
    %1553 = vst [vmem:[#allocation1] ss:$4 sm:$0xff] %v527
    %v1554 = vld.sshfl [vmem:[#allocation1] sm:$0xff pattern:$0x73625140]
    %v1555 = vld.sshfl [vmem:[#allocation1 + $0x8] sm:$0xff pattern:$0x73625140]
    %v1556 = vld.sshfl [vmem:[#allocation1 + $0x10] sm:$0xff pattern:$0x73625140]
    %v1557 = vld.sshfl [vmem:[#allocation1 + $0x18] sm:$0xff pattern:$0x73625140]
    %1562 = vmatpush.msra.mxu0 %v1160
    %1563 = vmatpush.msra.mxu0 %v1152
    %1564 = vmatpush.msra.mxu0 %v1144
    %1565 = vmatpush.msra.mxu0 %v1136
    %1566 = vmatpush.msra.mxu0 %v1128
    %1567 = vmatpush.msra.mxu0 %v1120
    %1568 = vmatpush.msra.mxu0 %v1112
    %1569 = vmatpush.msra.mxu0 %v1104
    %1570 = vmatpush.msra.mxu0 %v1096
    %1571 = vmatpush.msra.mxu0 %v1088
    %1572 = vmatpush.msra.mxu0 %v1080
    %1573 = vmatpush.msra.mxu0 %v1072
    %1574 = vmatpush.msra.mxu0 %v1064
    %1575 = vmatpush.msra.mxu0 %v1056
    %1576 = vmatpush.msra.mxu0 %v1048
    %1577 = vmatpush.msra.mxu0 %v1040
    %1578 = vmatmul.f32.gmra.mxu0 %v1554
    %v1579 = vpop.f32.mrf.mxu0
    %v1580 = vadd.f32 0.0, %v1579
    %1581 = vdwg.mxu0
    %1582 = vmatpush.msra.mxu0 %v1288
    %1583 = vmatpush.msra.mxu0 %v1280
    %1584 = vmatpush.msra.mxu0 %v1272
    %1585 = vmatpush.msra.mxu0 %v1264
    %1586 = vmatpush.msra.mxu0 %v1256
    %1587 = vmatpush.msra.mxu0 %v1248
    %1588 = vmatpush.msra.mxu0 %v1240
    %1589 = vmatpush.msra.mxu0 %v1232
    %1590 = vmatpush.msra.mxu0 %v1224
    %1591 = vmatpush.msra.mxu0 %v1216
    %1592 = vmatpush.msra.mxu0 %v1208
    %1593 = vmatpush.msra.mxu0 %v1200
    %1594 = vmatpush.msra.mxu0 %v1192
    %1595 = vmatpush.msra.mxu0 %v1184
    %1596 = vmatpush.msra.mxu0 %v1176
    %1597 = vmatpush.msra.mxu0 %v1168
    %1598 = vmatmul.f32.gmra.mxu0 %v1555
    %v1599 = vpop.f32.mrf.mxu0
    %v1600 = vadd.f32 %v1580, %v1599
    %1601 = vdwg.mxu0
    %1602 = vmatpush.msra.mxu0 %v1416
    %1603 = vmatpush.msra.mxu0 %v1408
    %1604 = vmatpush.msra.mxu0 %v1400
    %1605 = vmatpush.msra.mxu0 %v1392
    %1606 = vmatpush.msra.mxu0 %v1384
    %1607 = vmatpush.msra.mxu0 %v1376
    %1608 = vmatpush.msra.mxu0 %v1368
    %1609 = vmatpush.msra.mxu0 %v1360
    %1610 = vmatpush.msra.mxu0 %v1352
    %1611 = vmatpush.msra.mxu0 %v1344
    %1612 = vmatpush.msra.mxu0 %v1336
    %1613 = vmatpush.msra.mxu0 %v1328
    %1614 = vmatpush.msra.mxu0 %v1320
    %1615 = vmatpush.msra.mxu0 %v1312
    %1616 = vmatpush.msra.mxu0 %v1304
    %1617 = vmatpush.msra.mxu0 %v1296
    %1618 = vmatmul.f32.gmra.mxu0 %v1556
    %v1619 = vpop.f32.mrf.mxu0
    %v1620 = vadd.f32 %v1600, %v1619
    %1621 = vdwg.mxu0
    %1622 = vmatpush.msra.mxu0 %v1544
    %1623 = vmatpush.msra.mxu0 %v1536
    %1624 = vmatpush.msra.mxu0 %v1528
    %1625 = vmatpush.msra.mxu0 %v1520
    %1626 = vmatpush.msra.mxu0 %v1512
    %1627 = vmatpush.msra.mxu0 %v1504
    %1628 = vmatpush.msra.mxu0 %v1496
    %1629 = vmatpush.msra.mxu0 %v1488
    %1630 = vmatpush.msra.mxu0 %v1480
    %1631 = vmatpush.msra.mxu0 %v1472
    %1632 = vmatpush.msra.mxu0 %v1464
    %1633 = vmatpush.msra.mxu0 %v1456
    %1634 = vmatpush.msra.mxu0 %v1448
    %1635 = vmatpush.msra.mxu0 %v1440
    %1636 = vmatpush.msra.mxu0 %v1432
    %1637 = vmatpush.msra.mxu0 %v1424
    %1638 = vmatmul.f32.gmra.mxu0 %v1557
    %v1639 = vpop.f32.mrf.mxu0
    %v1640 = vadd.f32 %v1620, %v1639
    %1641 = vdwg.mxu0
    %1642 = vmatpush.msra.mxu0 %v1161
    %1643 = vmatpush.msra.mxu0 %v1153
    %1644 = vmatpush.msra.mxu0 %v1145
    %1645 = vmatpush.msra.mxu0 %v1137
    %1646 = vmatpush.msra.mxu0 %v1129
    %1647 = vmatpush.msra.mxu0 %v1121
    %1648 = vmatpush.msra.mxu0 %v1113
    %1649 = vmatpush.msra.mxu0 %v1105
    %1650 = vmatpush.msra.mxu0 %v1097
    %1651 = vmatpush.msra.mxu0 %v1089
    %1652 = vmatpush.msra.mxu0 %v1081
    %1653 = vmatpush.msra.mxu0 %v1073
    %1654 = vmatpush.msra.mxu0 %v1065
    %1655 = vmatpush.msra.mxu0 %v1057
    %1656 = vmatpush.msra.mxu0 %v1049
    %1657 = vmatpush.msra.mxu0 %v1041
    %1658 = vmatmul.f32.gmra.mxu0 %v1554
    %v1659 = vpop.f32.mrf.mxu0
    %v1660 = vadd.f32 0.0, %v1659
    %1661 = vdwg.mxu0
    %1662 = vmatpush.msra.mxu0 %v1289
    %1663 = vmatpush.msra.mxu0 %v1281
    %1664 = vmatpush.msra.mxu0 %v1273
    %1665 = vmatpush.msra.mxu0 %v1265
    %1666 = vmatpush.msra.mxu0 %v1257
    %1667 = vmatpush.msra.mxu0 %v1249
    %1668 = vmatpush.msra.mxu0 %v1241
    %1669 = vmatpush.msra.mxu0 %v1233
    %1670 = vmatpush.msra.mxu0 %v1225
    %1671 = vmatpush.msra.mxu0 %v1217
    %1672 = vmatpush.msra.mxu0 %v1209
    %1673 = vmatpush.msra.mxu0 %v1201
    %1674 = vmatpush.msra.mxu0 %v1193
    %1675 = vmatpush.msra.mxu0 %v1185
    %1676 = vmatpush.msra.mxu0 %v1177
    %1677 = vmatpush.msra.mxu0 %v1169
    %1678 = vmatmul.f32.gmra.mxu0 %v1555
    %v1679 = vpop.f32.mrf.mxu0
    %v1680 = vadd.f32 %v1660, %v1679
    %1681 = vdwg.mxu0
    %1682 = vmatpush.msra.mxu0 %v1417
    %1683 = vmatpush.msra.mxu0 %v1409
    %1684 = vmatpush.msra.mxu0 %v1401
    %1685 = vmatpush.msra.mxu0 %v1393
    %1686 = vmatpush.msra.mxu0 %v1385
    %1687 = vmatpush.msra.mxu0 %v1377
    %1688 = vmatpush.msra.mxu0 %v1369
    %1689 = vmatpush.msra.mxu0 %v1361
    %1690 = vmatpush.msra.mxu0 %v1353
    %1691 = vmatpush.msra.mxu0 %v1345
    %1692 = vmatpush.msra.mxu0 %v1337
    %1693 = vmatpush.msra.mxu0 %v1329
    %1694 = vmatpush.msra.mxu0 %v1321
    %1695 = vmatpush.msra.mxu0 %v1313
    %1696 = vmatpush.msra.mxu0 %v1305
    %1697 = vmatpush.msra.mxu0 %v1297
    %1698 = vmatmul.f32.gmra.mxu0 %v1556
    %v1699 = vpop.f32.mrf.mxu0
    %v1700 = vadd.f32 %v1680, %v1699
    %1701 = vdwg.mxu0
    %1702 = vmatpush.msra.mxu0 %v1545
    %1703 = vmatpush.msra.mxu0 %v1537
    %1704 = vmatpush.msra.mxu0 %v1529
    %1705 = vmatpush.msra.mxu0 %v1521
    %1706 = vmatpush.msra.mxu0 %v1513
    %1707 = vmatpush.msra.mxu0 %v1505
    %1708 = vmatpush.msra.mxu0 %v1497
    %1709 = vmatpush.msra.mxu0 %v1489
    %1710 = vmatpush.msra.mxu0 %v1481
    %1711 = vmatpush.msra.mxu0 %v1473
    %1712 = vmatpush.msra.mxu0 %v1465
    %1713 = vmatpush.msra.mxu0 %v1457
    %1714 = vmatpush.msra.mxu0 %v1449
    %1715 = vmatpush.msra.mxu0 %v1441
    %1716 = vmatpush.msra.mxu0 %v1433
    %1717 = vmatpush.msra.mxu0 %v1425
    %1718 = vmatmul.f32.gmra.mxu0 %v1557
    %v1719 = vpop.f32.mrf.mxu0
    %v1720 = vadd.f32 %v1700, %v1719
    %1721 = vdwg.mxu0
    %1722 = vmatpush.msra.mxu0 %v1162
    %1723 = vmatpush.msra.mxu0 %v1154
    %1724 = vmatpush.msra.mxu0 %v1146
    %1725 = vmatpush.msra.mxu0 %v1138
    %1726 = vmatpush.msra.mxu0 %v1130
    %1727 = vmatpush.msra.mxu0 %v1122
    %1728 = vmatpush.msra.mxu0 %v1114
    %1729 = vmatpush.msra.mxu0 %v1106
    %1730 = vmatpush.msra.mxu0 %v1098
    %1731 = vmatpush.msra.mxu0 %v1090
    %1732 = vmatpush.msra.mxu0 %v1082
    %1733 = vmatpush.msra.mxu0 %v1074
    %1734 = vmatpush.msra.mxu0 %v1066
    %1735 = vmatpush.msra.mxu0 %v1058
    %1736 = vmatpush.msra.mxu0 %v1050
    %1737 = vmatpush.msra.mxu0 %v1042
    %1738 = vmatmul.f32.gmra.mxu0 %v1554
    %v1739 = vpop.f32.mrf.mxu0
    %v1740 = vadd.f32 0.0, %v1739
    %1741 = vdwg.mxu0
    %1742 = vmatpush.msra.mxu0 %v1290
    %1743 = vmatpush.msra.mxu0 %v1282
    %1744 = vmatpush.msra.mxu0 %v1274
    %1745 = vmatpush.msra.mxu0 %v1266
    %1746 = vmatpush.msra.mxu0 %v1258
    %1747 = vmatpush.msra.mxu0 %v1250
    %1748 = vmatpush.msra.mxu0 %v1242
    %1749 = vmatpush.msra.mxu0 %v1234
    %1750 = vmatpush.msra.mxu0 %v1226
    %1751 = vmatpush.msra.mxu0 %v1218
    %1752 = vmatpush.msra.mxu0 %v1210
    %1753 = vmatpush.msra.mxu0 %v1202
    %1754 = vmatpush.msra.mxu0 %v1194
    %1755 = vmatpush.msra.mxu0 %v1186
    %1756 = vmatpush.msra.mxu0 %v1178
    %1757 = vmatpush.msra.mxu0 %v1170
    %1758 = vmatmul.f32.gmra.mxu0 %v1555
    %v1759 = vpop.f32.mrf.mxu0
    %v1760 = vadd.f32 %v1740, %v1759
    %1761 = vdwg.mxu0
    %1762 = vmatpush.msra.mxu0 %v1418
    %1763 = vmatpush.msra.mxu0 %v1410
    %1764 = vmatpush.msra.mxu0 %v1402
    %1765 = vmatpush.msra.mxu0 %v1394
    %1766 = vmatpush.msra.mxu0 %v1386
    %1767 = vmatpush.msra.mxu0 %v1378
    %1768 = vmatpush.msra.mxu0 %v1370
    %1769 = vmatpush.msra.mxu0 %v1362
    %1770 = vmatpush.msra.mxu0 %v1354
    %1771 = vmatpush.msra.mxu0 %v1346
    %1772 = vmatpush.msra.mxu0 %v1338
    %1773 = vmatpush.msra.mxu0 %v1330
    %1774 = vmatpush.msra.mxu0 %v1322
    %1775 = vmatpush.msra.mxu0 %v1314
    %1776 = vmatpush.msra.mxu0 %v1306
    %1777 = vmatpush.msra.mxu0 %v1298
    %1778 = vmatmul.f32.gmra.mxu0 %v1556
    %v1779 = vpop.f32.mrf.mxu0
    %v1780 = vadd.f32 %v1760, %v1779
    %1781 = vdwg.mxu0
    %1782 = vmatpush.msra.mxu0 %v1546
    %1783 = vmatpush.msra.mxu0 %v1538
    %1784 = vmatpush.msra.mxu0 %v1530
    %1785 = vmatpush.msra.mxu0 %v1522
    %1786 = vmatpush.msra.mxu0 %v1514
    %1787 = vmatpush.msra.mxu0 %v1506
    %1788 = vmatpush.msra.mxu0 %v1498
    %1789 = vmatpush.msra.mxu0 %v1490
    %1790 = vmatpush.msra.mxu0 %v1482
    %1791 = vmatpush.msra.mxu0 %v1474
    %1792 = vmatpush.msra.mxu0 %v1466
    %1793 = vmatpush.msra.mxu0 %v1458
    %1794 = vmatpush.msra.mxu0 %v1450
    %1795 = vmatpush.msra.mxu0 %v1442
    %1796 = vmatpush.msra.mxu0 %v1434
    %1797 = vmatpush.msra.mxu0 %v1426
    %1798 = vmatmul.f32.gmra.mxu0 %v1557
    %v1799 = vpop.f32.mrf.mxu0
    %v1800 = vadd.f32 %v1780, %v1799
    %1801 = vdwg.mxu0
    %1802 = vmatpush.msra.mxu0 %v1163
    %1803 = vmatpush.msra.mxu0 %v1155
    %1804 = vmatpush.msra.mxu0 %v1147
    %1805 = vmatpush.msra.mxu0 %v1139
    %1806 = vmatpush.msra.mxu0 %v1131
    %1807 = vmatpush.msra.mxu0 %v1123
    %1808 = vmatpush.msra.mxu0 %v1115
    %1809 = vmatpush.msra.mxu0 %v1107
    %1810 = vmatpush.msra.mxu0 %v1099
    %1811 = vmatpush.msra.mxu0 %v1091
    %1812 = vmatpush.msra.mxu0 %v1083
    %1813 = vmatpush.msra.mxu0 %v1075
    %1814 = vmatpush.msra.mxu0 %v1067
    %1815 = vmatpush.msra.mxu0 %v1059
    %1816 = vmatpush.msra.mxu0 %v1051
    %1817 = vmatpush.msra.mxu0 %v1043
    %1818 = vmatmul.f32.gmra.mxu0 %v1554
    %v1819 = vpop.f32.mrf.mxu0
    %v1820 = vadd.f32 0.0, %v1819
    %1821 = vdwg.mxu0
    %1822 = vmatpush.msra.mxu0 %v1291
    %1823 = vmatpush.msra.mxu0 %v1283
    %1824 = vmatpush.msra.mxu0 %v1275
    %1825 = vmatpush.msra.mxu0 %v1267
    %1826 = vmatpush.msra.mxu0 %v1259
    %1827 = vmatpush.msra.mxu0 %v1251
    %1828 = vmatpush.msra.mxu0 %v1243
    %1829 = vmatpush.msra.mxu0 %v1235
    %1830 = vmatpush.msra.mxu0 %v1227
    %1831 = vmatpush.msra.mxu0 %v1219
    %1832 = vmatpush.msra.mxu0 %v1211
    %1833 = vmatpush.msra.mxu0 %v1203
    %1834 = vmatpush.msra.mxu0 %v1195
    %1835 = vmatpush.msra.mxu0 %v1187
    %1836 = vmatpush.msra.mxu0 %v1179
    %1837 = vmatpush.msra.mxu0 %v1171
    %1838 = vmatmul.f32.gmra.mxu0 %v1555
    %v1839 = vpop.f32.mrf.mxu0
    %v1840 = vadd.f32 %v1820, %v1839
    %1841 = vdwg.mxu0
    %1842 = vmatpush.msra.mxu0 %v1419
    %1843 = vmatpush.msra.mxu0 %v1411
    %1844 = vmatpush.msra.mxu0 %v1403
    %1845 = vmatpush.msra.mxu0 %v1395
    %1846 = vmatpush.msra.mxu0 %v1387
    %1847 = vmatpush.msra.mxu0 %v1379
    %1848 = vmatpush.msra.mxu0 %v1371
    %1849 = vmatpush.msra.mxu0 %v1363
    %1850 = vmatpush.msra.mxu0 %v1355
    %1851 = vmatpush.msra.mxu0 %v1347
    %1852 = vmatpush.msra.mxu0 %v1339
    %1853 = vmatpush.msra.mxu0 %v1331
    %1854 = vmatpush.msra.mxu0 %v1323
    %1855 = vmatpush.msra.mxu0 %v1315
    %1856 = vmatpush.msra.mxu0 %v1307
    %1857 = vmatpush.msra.mxu0 %v1299
    %1858 = vmatmul.f32.gmra.mxu0 %v1556
    %v1859 = vpop.f32.mrf.mxu0
    %v1860 = vadd.f32 %v1840, %v1859
    %1861 = vdwg.mxu0
    %1862 = vmatpush.msra.mxu0 %v1547
    %1863 = vmatpush.msra.mxu0 %v1539
    %1864 = vmatpush.msra.mxu0 %v1531
    %1865 = vmatpush.msra.mxu0 %v1523
    %1866 = vmatpush.msra.mxu0 %v1515
    %1867 = vmatpush.msra.mxu0 %v1507
    %1868 = vmatpush.msra.mxu0 %v1499
    %1869 = vmatpush.msra.mxu0 %v1491
    %1870 = vmatpush.msra.mxu0 %v1483
    %1871 = vmatpush.msra.mxu0 %v1475
    %1872 = vmatpush.msra.mxu0 %v1467
    %1873 = vmatpush.msra.mxu0 %v1459
    %1874 = vmatpush.msra.mxu0 %v1451
    %1875 = vmatpush.msra.mxu0 %v1443
    %1876 = vmatpush.msra.mxu0 %v1435
    %1877 = vmatpush.msra.mxu0 %v1427
    %1878 = vmatmul.f32.gmra.mxu0 %v1557
    %v1879 = vpop.f32.mrf.mxu0
    %v1880 = vadd.f32 %v1860, %v1879
    %1881 = vdwg.mxu0
    %1882 = vmatpush.msra.mxu0 %v1164
    %1883 = vmatpush.msra.mxu0 %v1156
    %1884 = vmatpush.msra.mxu0 %v1148
    %1885 = vmatpush.msra.mxu0 %v1140
    %1886 = vmatpush.msra.mxu0 %v1132
    %1887 = vmatpush.msra.mxu0 %v1124
    %1888 = vmatpush.msra.mxu0 %v1116
    %1889 = vmatpush.msra.mxu0 %v1108
    %1890 = vmatpush.msra.mxu0 %v1100
    %1891 = vmatpush.msra.mxu0 %v1092
    %1892 = vmatpush.msra.mxu0 %v1084
    %1893 = vmatpush.msra.mxu0 %v1076
    %1894 = vmatpush.msra.mxu0 %v1068
    %1895 = vmatpush.msra.mxu0 %v1060
    %1896 = vmatpush.msra.mxu0 %v1052
    %1897 = vmatpush.msra.mxu0 %v1044
    %1898 = vmatmul.f32.gmra.mxu0 %v1554
    %v1899 = vpop.f32.mrf.mxu0
    %v1900 = vadd.f32 0.0, %v1899
    %1901 = vdwg.mxu0
    %1902 = vmatpush.msra.mxu0 %v1292
    %1903 = vmatpush.msra.mxu0 %v1284
    %1904 = vmatpush.msra.mxu0 %v1276
    %1905 = vmatpush.msra.mxu0 %v1268
    %1906 = vmatpush.msra.mxu0 %v1260
    %1907 = vmatpush.msra.mxu0 %v1252
    %1908 = vmatpush.msra.mxu0 %v1244
    %1909 = vmatpush.msra.mxu0 %v1236
    %1910 = vmatpush.msra.mxu0 %v1228
    %1911 = vmatpush.msra.mxu0 %v1220
    %1912 = vmatpush.msra.mxu0 %v1212
    %1913 = vmatpush.msra.mxu0 %v1204
    %1914 = vmatpush.msra.mxu0 %v1196
    %1915 = vmatpush.msra.mxu0 %v1188
    %1916 = vmatpush.msra.mxu0 %v1180
    %1917 = vmatpush.msra.mxu0 %v1172
    %1918 = vmatmul.f32.gmra.mxu0 %v1555
    %v1919 = vpop.f32.mrf.mxu0
    %v1920 = vadd.f32 %v1900, %v1919
    %1921 = vdwg.mxu0
    %1922 = vmatpush.msra.mxu0 %v1420
    %1923 = vmatpush.msra.mxu0 %v1412
    %1924 = vmatpush.msra.mxu0 %v1404
    %1925 = vmatpush.msra.mxu0 %v1396
    %1926 = vmatpush.msra.mxu0 %v1388
    %1927 = vmatpush.msra.mxu0 %v1380
    %1928 = vmatpush.msra.mxu0 %v1372
    %1929 = vmatpush.msra.mxu0 %v1364
    %1930 = vmatpush.msra.mxu0 %v1356
    %1931 = vmatpush.msra.mxu0 %v1348
    %1932 = vmatpush.msra.mxu0 %v1340
    %1933 = vmatpush.msra.mxu0 %v1332
    %1934 = vmatpush.msra.mxu0 %v1324
    %1935 = vmatpush.msra.mxu0 %v1316
    %1936 = vmatpush.msra.mxu0 %v1308
    %1937 = vmatpush.msra.mxu0 %v1300
    %1938 = vmatmul.f32.gmra.mxu0 %v1556
    %v1939 = vpop.f32.mrf.mxu0
    %v1940 = vadd.f32 %v1920, %v1939
    %1941 = vdwg.mxu0
    %1942 = vmatpush.msra.mxu0 %v1548
    %1943 = vmatpush.msra.mxu0 %v1540
    %1944 = vmatpush.msra.mxu0 %v1532
    %1945 = vmatpush.msra.mxu0 %v1524
    %1946 = vmatpush.msra.mxu0 %v1516
    %1947 = vmatpush.msra.mxu0 %v1508
    %1948 = vmatpush.msra.mxu0 %v1500
    %1949 = vmatpush.msra.mxu0 %v1492
    %1950 = vmatpush.msra.mxu0 %v1484
    %1951 = vmatpush.msra.mxu0 %v1476
    %1952 = vmatpush.msra.mxu0 %v1468
    %1953 = vmatpush.msra.mxu0 %v1460
    %1954 = vmatpush.msra.mxu0 %v1452
    %1955 = vmatpush.msra.mxu0 %v1444
    %1956 = vmatpush.msra.mxu0 %v1436
    %1957 = vmatpush.msra.mxu0 %v1428
    %1958 = vmatmul.f32.gmra.mxu0 %v1557
    %v1959 = vpop.f32.mrf.mxu0
    %v1960 = vadd.f32 %v1940, %v1959
    %1961 = vdwg.mxu0
    %1962 = vmatpush.msra.mxu0 %v1165
    %1963 = vmatpush.msra.mxu0 %v1157
    %1964 = vmatpush.msra.mxu0 %v1149
    %1965 = vmatpush.msra.mxu0 %v1141
    %1966 = vmatpush.msra.mxu0 %v1133
    %1967 = vmatpush.msra.mxu0 %v1125
    %1968 = vmatpush.msra.mxu0 %v1117
    %1969 = vmatpush.msra.mxu0 %v1109
    %1970 = vmatpush.msra.mxu0 %v1101
    %1971 = vmatpush.msra.mxu0 %v1093
    %1972 = vmatpush.msra.mxu0 %v1085
    %1973 = vmatpush.msra.mxu0 %v1077
    %1974 = vmatpush.msra.mxu0 %v1069
    %1975 = vmatpush.msra.mxu0 %v1061
    %1976 = vmatpush.msra.mxu0 %v1053
    %1977 = vmatpush.msra.mxu0 %v1045
    %1978 = vmatmul.f32.gmra.mxu0 %v1554
    %v1979 = vpop.f32.mrf.mxu0
    %v1980 = vadd.f32 0.0, %v1979
    %1981 = vdwg.mxu0
    %1982 = vmatpush.msra.mxu0 %v1293
    %1983 = vmatpush.msra.mxu0 %v1285
    %1984 = vmatpush.msra.mxu0 %v1277
    %1985 = vmatpush.msra.mxu0 %v1269
    %1986 = vmatpush.msra.mxu0 %v1261
    %1987 = vmatpush.msra.mxu0 %v1253
    %1988 = vmatpush.msra.mxu0 %v1245
    %1989 = vmatpush.msra.mxu0 %v1237
    %1990 = vmatpush.msra.mxu0 %v1229
    %1991 = vmatpush.msra.mxu0 %v1221
    %1992 = vmatpush.msra.mxu0 %v1213
    %1993 = vmatpush.msra.mxu0 %v1205
    %1994 = vmatpush.msra.mxu0 %v1197
    %1995 = vmatpush.msra.mxu0 %v1189
    %1996 = vmatpush.msra.mxu0 %v1181
    %1997 = vmatpush.msra.mxu0 %v1173
    %1998 = vmatmul.f32.gmra.mxu0 %v1555
    %v1999 = vpop.f32.mrf.mxu0
    %v2000 = vadd.f32 %v1980, %v1999
    %2001 = vdwg.mxu0
    %2002 = vmatpush.msra.mxu0 %v1421
    %2003 = vmatpush.msra.mxu0 %v1413
    %2004 = vmatpush.msra.mxu0 %v1405
    %2005 = vmatpush.msra.mxu0 %v1397
    %2006 = vmatpush.msra.mxu0 %v1389
    %2007 = vmatpush.msra.mxu0 %v1381
    %2008 = vmatpush.msra.mxu0 %v1373
    %2009 = vmatpush.msra.mxu0 %v1365
    %2010 = vmatpush.msra.mxu0 %v1357
    %2011 = vmatpush.msra.mxu0 %v1349
    %2012 = vmatpush.msra.mxu0 %v1341
    %2013 = vmatpush.msra.mxu0 %v1333
    %2014 = vmatpush.msra.mxu0 %v1325
    %2015 = vmatpush.msra.mxu0 %v1317
    %2016 = vmatpush.msra.mxu0 %v1309
    %2017 = vmatpush.msra.mxu0 %v1301
    %2018 = vmatmul.f32.gmra.mxu0 %v1556
    %v2019 = vpop.f32.mrf.mxu0
    %v2020 = vadd.f32 %v2000, %v2019
    %2021 = vdwg.mxu0
    %2022 = vmatpush.msra.mxu0 %v1549
    %2023 = vmatpush.msra.mxu0 %v1541
    %2024 = vmatpush.msra.mxu0 %v1533
    %2025 = vmatpush.msra.mxu0 %v1525
    %2026 = vmatpush.msra.mxu0 %v1517
    %2027 = vmatpush.msra.mxu0 %v1509
    %2028 = vmatpush.msra.mxu0 %v1501
    %2029 = vmatpush.msra.mxu0 %v1493
    %2030 = vmatpush.msra.mxu0 %v1485
    %2031 = vmatpush.msra.mxu0 %v1477
    %2032 = vmatpush.msra.mxu0 %v1469
    %2033 = vmatpush.msra.mxu0 %v1461
    %2034 = vmatpush.msra.mxu0 %v1453
    %2035 = vmatpush.msra.mxu0 %v1445
    %2036 = vmatpush.msra.mxu0 %v1437
    %2037 = vmatpush.msra.mxu0 %v1429
    %2038 = vmatmul.f32.gmra.mxu0 %v1557
    %v2039 = vpop.f32.mrf.mxu0
    %v2040 = vadd.f32 %v2020, %v2039
    %2041 = vdwg.mxu0
    %2042 = vmatpush.msra.mxu0 %v1166
    %2043 = vmatpush.msra.mxu0 %v1158
    %2044 = vmatpush.msra.mxu0 %v1150
    %2045 = vmatpush.msra.mxu0 %v1142
    %2046 = vmatpush.msra.mxu0 %v1134
    %2047 = vmatpush.msra.mxu0 %v1126
    %2048 = vmatpush.msra.mxu0 %v1118
    %2049 = vmatpush.msra.mxu0 %v1110
    %2050 = vmatpush.msra.mxu0 %v1102
    %2051 = vmatpush.msra.mxu0 %v1094
    %2052 = vmatpush.msra.mxu0 %v1086
    %2053 = vmatpush.msra.mxu0 %v1078
    %2054 = vmatpush.msra.mxu0 %v1070
    %2055 = vmatpush.msra.mxu0 %v1062
    %2056 = vmatpush.msra.mxu0 %v1054
    %2057 = vmatpush.msra.mxu0 %v1046
    %2058 = vmatmul.f32.gmra.mxu0 %v1554
    %v2059 = vpop.f32.mrf.mxu0
    %v2060 = vadd.f32 0.0, %v2059
    %2061 = vdwg.mxu0
    %2062 = vmatpush.msra.mxu0 %v1294
    %2063 = vmatpush.msra.mxu0 %v1286
    %2064 = vmatpush.msra.mxu0 %v1278
    %2065 = vmatpush.msra.mxu0 %v1270
    %2066 = vmatpush.msra.mxu0 %v1262
    %2067 = vmatpush.msra.mxu0 %v1254
    %2068 = vmatpush.msra.mxu0 %v1246
    %2069 = vmatpush.msra.mxu0 %v1238
    %2070 = vmatpush.msra.mxu0 %v1230
    %2071 = vmatpush.msra.mxu0 %v1222
    %2072 = vmatpush.msra.mxu0 %v1214
    %2073 = vmatpush.msra.mxu0 %v1206
    %2074 = vmatpush.msra.mxu0 %v1198
    %2075 = vmatpush.msra.mxu0 %v1190
    %2076 = vmatpush.msra.mxu0 %v1182
    %2077 = vmatpush.msra.mxu0 %v1174
    %2078 = vmatmul.f32.gmra.mxu0 %v1555
    %v2079 = vpop.f32.mrf.mxu0
    %v2080 = vadd.f32 %v2060, %v2079
    %2081 = vdwg.mxu0
    %2082 = vmatpush.msra.mxu0 %v1422
    %2083 = vmatpush.msra.mxu0 %v1414
    %2084 = vmatpush.msra.mxu0 %v1406
    %2085 = vmatpush.msra.mxu0 %v1398
    %2086 = vmatpush.msra.mxu0 %v1390
    %2087 = vmatpush.msra.mxu0 %v1382
    %2088 = vmatpush.msra.mxu0 %v1374
    %2089 = vmatpush.msra.mxu0 %v1366
    %2090 = vmatpush.msra.mxu0 %v1358
    %2091 = vmatpush.msra.mxu0 %v1350
    %2092 = vmatpush.msra.mxu0 %v1342
    %2093 = vmatpush.msra.mxu0 %v1334
    %2094 = vmatpush.msra.mxu0 %v1326
    %2095 = vmatpush.msra.mxu0 %v1318
    %2096 = vmatpush.msra.mxu0 %v1310
    %2097 = vmatpush.msra.mxu0 %v1302
    %2098 = vmatmul.f32.gmra.mxu0 %v1556
    %v2099 = vpop.f32.mrf.mxu0
    %v2100 = vadd.f32 %v2080, %v2099
    %2101 = vdwg.mxu0
    %2102 = vmatpush.msra.mxu0 %v1550
    %2103 = vmatpush.msra.mxu0 %v1542
    %2104 = vmatpush.msra.mxu0 %v1534
    %2105 = vmatpush.msra.mxu0 %v1526
    %2106 = vmatpush.msra.mxu0 %v1518
    %2107 = vmatpush.msra.mxu0 %v1510
    %2108 = vmatpush.msra.mxu0 %v1502
    %2109 = vmatpush.msra.mxu0 %v1494
    %2110 = vmatpush.msra.mxu0 %v1486
    %2111 = vmatpush.msra.mxu0 %v1478
    %2112 = vmatpush.msra.mxu0 %v1470
    %2113 = vmatpush.msra.mxu0 %v1462
    %2114 = vmatpush.msra.mxu0 %v1454
    %2115 = vmatpush.msra.mxu0 %v1446
    %2116 = vmatpush.msra.mxu0 %v1438
    %2117 = vmatpush.msra.mxu0 %v1430
    %2118 = vmatmul.f32.gmra.mxu0 %v1557
    %v2119 = vpop.f32.mrf.mxu0
    %v2120 = vadd.f32 %v2100, %v2119
    %2121 = vdwg.mxu0
    %2122 = vmatpush.msra.mxu0 %v1167
    %2123 = vmatpush.msra.mxu0 %v1159
    %2124 = vmatpush.msra.mxu0 %v1151
    %2125 = vmatpush.msra.mxu0 %v1143
    %2126 = vmatpush.msra.mxu0 %v1135
    %2127 = vmatpush.msra.mxu0 %v1127
    %2128 = vmatpush.msra.mxu0 %v1119
    %2129 = vmatpush.msra.mxu0 %v1111
    %2130 = vmatpush.msra.mxu0 %v1103
    %2131 = vmatpush.msra.mxu0 %v1095
    %2132 = vmatpush.msra.mxu0 %v1087
    %2133 = vmatpush.msra.mxu0 %v1079
    %2134 = vmatpush.msra.mxu0 %v1071
    %2135 = vmatpush.msra.mxu0 %v1063
    %2136 = vmatpush.msra.mxu0 %v1055
    %2137 = vmatpush.msra.mxu0 %v1047
    %2138 = vmatmul.f32.gmra.mxu0 %v1554
    %v2139 = vpop.f32.mrf.mxu0
    %v2140 = vadd.f32 0.0, %v2139
    %2141 = vdwg.mxu0
    %2142 = vmatpush.msra.mxu0 %v1295
    %2143 = vmatpush.msra.mxu0 %v1287
    %2144 = vmatpush.msra.mxu0 %v1279
    %2145 = vmatpush.msra.mxu0 %v1271
    %2146 = vmatpush.msra.mxu0 %v1263
    %2147 = vmatpush.msra.mxu0 %v1255
    %2148 = vmatpush.msra.mxu0 %v1247
    %2149 = vmatpush.msra.mxu0 %v1239
    %2150 = vmatpush.msra.mxu0 %v1231
    %2151 = vmatpush.msra.mxu0 %v1223
    %2152 = vmatpush.msra.mxu0 %v1215
    %2153 = vmatpush.msra.mxu0 %v1207
    %2154 = vmatpush.msra.mxu0 %v1199
    %2155 = vmatpush.msra.mxu0 %v1191
    %2156 = vmatpush.msra.mxu0 %v1183
    %2157 = vmatpush.msra.mxu0 %v1175
    %2158 = vmatmul.f32.gmra.mxu0 %v1555
    %v2159 = vpop.f32.mrf.mxu0
    %v2160 = vadd.f32 %v2140, %v2159
    %2161 = vdwg.mxu0
    %2162 = vmatpush.msra.mxu0 %v1423
    %2163 = vmatpush.msra.mxu0 %v1415
    %2164 = vmatpush.msra.mxu0 %v1407
    %2165 = vmatpush.msra.mxu0 %v1399
    %2166 = vmatpush.msra.mxu0 %v1391
    %2167 = vmatpush.msra.mxu0 %v1383
    %2168 = vmatpush.msra.mxu0 %v1375
    %2169 = vmatpush.msra.mxu0 %v1367
    %2170 = vmatpush.msra.mxu0 %v1359
    %2171 = vmatpush.msra.mxu0 %v1351
    %2172 = vmatpush.msra.mxu0 %v1343
    %2173 = vmatpush.msra.mxu0 %v1335
    %2174 = vmatpush.msra.mxu0 %v1327
    %2175 = vmatpush.msra.mxu0 %v1319
    %2176 = vmatpush.msra.mxu0 %v1311
    %2177 = vmatpush.msra.mxu0 %v1303
    %2178 = vmatmul.f32.gmra.mxu0 %v1556
    %v2179 = vpop.f32.mrf.mxu0
    %v2180 = vadd.f32 %v2160, %v2179
    %2181 = vdwg.mxu0
    %2182 = vmatpush.msra.mxu0 %v1551
    %2183 = vmatpush.msra.mxu0 %v1543
    %2184 = vmatpush.msra.mxu0 %v1535
    %2185 = vmatpush.msra.mxu0 %v1527
    %2186 = vmatpush.msra.mxu0 %v1519
    %2187 = vmatpush.msra.mxu0 %v1511
    %2188 = vmatpush.msra.mxu0 %v1503
    %2189 = vmatpush.msra.mxu0 %v1495
    %2190 = vmatpush.msra.mxu0 %v1487
    %2191 = vmatpush.msra.mxu0 %v1479
    %2192 = vmatpush.msra.mxu0 %v1471
    %2193 = vmatpush.msra.mxu0 %v1463
    %2194 = vmatpush.msra.mxu0 %v1455
    %2195 = vmatpush.msra.mxu0 %v1447
    %2196 = vmatpush.msra.mxu0 %v1439
    %2197 = vmatpush.msra.mxu0 %v1431
    %2198 = vmatmul.f32.gmra.mxu0 %v1557
    %v2199 = vpop.f32.mrf.mxu0
    %v2200 = vadd.f32 %v2180, %v2199
    %2201 = vdwg.mxu0
    %2203 = vst [vmem:[#allocation1] ss:$4 sm:$0xff] %v526
    %v2204 = vld.sshfl [vmem:[#allocation1] sm:$0xff pattern:$0x73625140]
    %v2205 = vld.sshfl [vmem:[#allocation1 + $0x8] sm:$0xff pattern:$0x73625140]
    %v2206 = vld.sshfl [vmem:[#allocation1 + $0x10] sm:$0xff pattern:$0x73625140]
    %v2207 = vld.sshfl [vmem:[#allocation1 + $0x18] sm:$0xff pattern:$0x73625140]
    %2212 = vmatpush.msra.mxu0 %v648
    %2213 = vmatpush.msra.mxu0 %v640
    %2214 = vmatpush.msra.mxu0 %v632
    %2215 = vmatpush.msra.mxu0 %v624
    %2216 = vmatpush.msra.mxu0 %v616
    %2217 = vmatpush.msra.mxu0 %v608
    %2218 = vmatpush.msra.mxu0 %v600
    %2219 = vmatpush.msra.mxu0 %v592
    %2220 = vmatpush.msra.mxu0 %v584
    %2221 = vmatpush.msra.mxu0 %v576
    %2222 = vmatpush.msra.mxu0 %v568
    %2223 = vmatpush.msra.mxu0 %v560
    %2224 = vmatpush.msra.mxu0 %v552
    %2225 = vmatpush.msra.mxu0 %v544
    %2226 = vmatpush.msra.mxu0 %v536
    %2227 = vmatpush.msra.mxu0 %v528
    %2228 = vmatmul.f32.gmra.mxu0 %v2204
    %v2229 = vpop.f32.mrf.mxu0
    %v2230 = vadd.f32 %v1640, %v2229
    %2231 = vdwg.mxu0
    %2232 = vmatpush.msra.mxu0 %v776
    %2233 = vmatpush.msra.mxu0 %v768
    %2234 = vmatpush.msra.mxu0 %v760
    %2235 = vmatpush.msra.mxu0 %v752
    %2236 = vmatpush.msra.mxu0 %v744
    %2237 = vmatpush.msra.mxu0 %v736
    %2238 = vmatpush.msra.mxu0 %v728
    %2239 = vmatpush.msra.mxu0 %v720
    %2240 = vmatpush.msra.mxu0 %v712
    %2241 = vmatpush.msra.mxu0 %v704
    %2242 = vmatpush.msra.mxu0 %v696
    %2243 = vmatpush.msra.mxu0 %v688
    %2244 = vmatpush.msra.mxu0 %v680
    %2245 = vmatpush.msra.mxu0 %v672
    %2246 = vmatpush.msra.mxu0 %v664
    %2247 = vmatpush.msra.mxu0 %v656
    %2248 = vmatmul.f32.gmra.mxu0 %v2205
    %v2249 = vpop.f32.mrf.mxu0
    %v2250 = vadd.f32 %v2230, %v2249
    %2251 = vdwg.mxu0
    %2252 = vmatpush.msra.mxu0 %v904
    %2253 = vmatpush.msra.mxu0 %v896
    %2254 = vmatpush.msra.mxu0 %v888
    %2255 = vmatpush.msra.mxu0 %v880
    %2256 = vmatpush.msra.mxu0 %v872
    %2257 = vmatpush.msra.mxu0 %v864
    %2258 = vmatpush.msra.mxu0 %v856
    %2259 = vmatpush.msra.mxu0 %v848
    %2260 = vmatpush.msra.mxu0 %v840
    %2261 = vmatpush.msra.mxu0 %v832
    %2262 = vmatpush.msra.mxu0 %v824
    %2263 = vmatpush.msra.mxu0 %v816
    %2264 = vmatpush.msra.mxu0 %v808
    %2265 = vmatpush.msra.mxu0 %v800
    %2266 = vmatpush.msra.mxu0 %v792
    %2267 = vmatpush.msra.mxu0 %v784
    %2268 = vmatmul.f32.gmra.mxu0 %v2206
    %v2269 = vpop.f32.mrf.mxu0
    %v2270 = vadd.f32 %v2250, %v2269
    %2271 = vdwg.mxu0
    %2272 = vmatpush.msra.mxu0 %v1032
    %2273 = vmatpush.msra.mxu0 %v1024
    %2274 = vmatpush.msra.mxu0 %v1016
    %2275 = vmatpush.msra.mxu0 %v1008
    %2276 = vmatpush.msra.mxu0 %v1000
    %2277 = vmatpush.msra.mxu0 %v992
    %2278 = vmatpush.msra.mxu0 %v984
    %2279 = vmatpush.msra.mxu0 %v976
    %2280 = vmatpush.msra.mxu0 %v968
    %2281 = vmatpush.msra.mxu0 %v960
    %2282 = vmatpush.msra.mxu0 %v952
    %2283 = vmatpush.msra.mxu0 %v944
    %2284 = vmatpush.msra.mxu0 %v936
    %2285 = vmatpush.msra.mxu0 %v928
    %2286 = vmatpush.msra.mxu0 %v920
    %2287 = vmatpush.msra.mxu0 %v912
    %2288 = vmatmul.f32.gmra.mxu0 %v2207
    %v2289 = vpop.f32.mrf.mxu0
    %v2290 = vadd.f32 %v2270, %v2289
    %2291 = vdwg.mxu0
    %2292 = vmatpush.msra.mxu0 %v649
    %2293 = vmatpush.msra.mxu0 %v641
    %2294 = vmatpush.msra.mxu0 %v633
    %2295 = vmatpush.msra.mxu0 %v625
    %2296 = vmatpush.msra.mxu0 %v617
    %2297 = vmatpush.msra.mxu0 %v609
    %2298 = vmatpush.msra.mxu0 %v601
    %2299 = vmatpush.msra.mxu0 %v593
    %2300 = vmatpush.msra.mxu0 %v585
    %2301 = vmatpush.msra.mxu0 %v577
    %2302 = vmatpush.msra.mxu0 %v569
    %2303 = vmatpush.msra.mxu0 %v561
    %2304 = vmatpush.msra.mxu0 %v553
    %2305 = vmatpush.msra.mxu0 %v545
    %2306 = vmatpush.msra.mxu0 %v537
    %2307 = vmatpush.msra.mxu0 %v529
    %2308 = vmatmul.f32.gmra.mxu0 %v2204
    %v2309 = vpop.f32.mrf.mxu0
    %v2310 = vadd.f32 %v1720, %v2309
    %2311 = vdwg.mxu0
    %2312 = vmatpush.msra.mxu0 %v777
    %2313 = vmatpush.msra.mxu0 %v769
    %2314 = vmatpush.msra.mxu0 %v761
    %2315 = vmatpush.msra.mxu0 %v753
    %2316 = vmatpush.msra.mxu0 %v745
    %2317 = vmatpush.msra.mxu0 %v737
    %2318 = vmatpush.msra.mxu0 %v729
    %2319 = vmatpush.msra.mxu0 %v721
    %2320 = vmatpush.msra.mxu0 %v713
    %2321 = vmatpush.msra.mxu0 %v705
    %2322 = vmatpush.msra.mxu0 %v697
    %2323 = vmatpush.msra.mxu0 %v689
    %2324 = vmatpush.msra.mxu0 %v681
    %2325 = vmatpush.msra.mxu0 %v673
    %2326 = vmatpush.msra.mxu0 %v665
    %2327 = vmatpush.msra.mxu0 %v657
    %2328 = vmatmul.f32.gmra.mxu0 %v2205
    %v2329 = vpop.f32.mrf.mxu0
    %v2330 = vadd.f32 %v2310, %v2329
    %2331 = vdwg.mxu0
    %2332 = vmatpush.msra.mxu0 %v905
    %2333 = vmatpush.msra.mxu0 %v897
    %2334 = vmatpush.msra.mxu0 %v889
    %2335 = vmatpush.msra.mxu0 %v881
    %2336 = vmatpush.msra.mxu0 %v873
    %2337 = vmatpush.msra.mxu0 %v865
    %2338 = vmatpush.msra.mxu0 %v857
    %2339 = vmatpush.msra.mxu0 %v849
    %2340 = vmatpush.msra.mxu0 %v841
    %2341 = vmatpush.msra.mxu0 %v833
    %2342 = vmatpush.msra.mxu0 %v825
    %2343 = vmatpush.msra.mxu0 %v817
    %2344 = vmatpush.msra.mxu0 %v809
    %2345 = vmatpush.msra.mxu0 %v801
    %2346 = vmatpush.msra.mxu0 %v793
    %2347 = vmatpush.msra.mxu0 %v785
    %2348 = vmatmul.f32.gmra.mxu0 %v2206
    %v2349 = vpop.f32.mrf.mxu0
    %v2350 = vadd.f32 %v2330, %v2349
    %2351 = vdwg.mxu0
    %2352 = vmatpush.msra.mxu0 %v1033
    %2353 = vmatpush.msra.mxu0 %v1025
    %2354 = vmatpush.msra.mxu0 %v1017
    %2355 = vmatpush.msra.mxu0 %v1009
    %2356 = vmatpush.msra.mxu0 %v1001
    %2357 = vmatpush.msra.mxu0 %v993
    %2358 = vmatpush.msra.mxu0 %v985
    %2359 = vmatpush.msra.mxu0 %v977
    %2360 = vmatpush.msra.mxu0 %v969
    %2361 = vmatpush.msra.mxu0 %v961
    %2362 = vmatpush.msra.mxu0 %v953
    %2363 = vmatpush.msra.mxu0 %v945
    %2364 = vmatpush.msra.mxu0 %v937
    %2365 = vmatpush.msra.mxu0 %v929
    %2366 = vmatpush.msra.mxu0 %v921
    %2367 = vmatpush.msra.mxu0 %v913
    %2368 = vmatmul.f32.gmra.mxu0 %v2207
    %v2369 = vpop.f32.mrf.mxu0
    %v2370 = vadd.f32 %v2350, %v2369
    %2371 = vdwg.mxu0
    %2372 = vmatpush.msra.mxu0 %v650
    %2373 = vmatpush.msra.mxu0 %v642
    %2374 = vmatpush.msra.mxu0 %v634
    %2375 = vmatpush.msra.mxu0 %v626
    %2376 = vmatpush.msra.mxu0 %v618
    %2377 = vmatpush.msra.mxu0 %v610
    %2378 = vmatpush.msra.mxu0 %v602
    %2379 = vmatpush.msra.mxu0 %v594
    %2380 = vmatpush.msra.mxu0 %v586
    %2381 = vmatpush.msra.mxu0 %v578
    %2382 = vmatpush.msra.mxu0 %v570
    %2383 = vmatpush.msra.mxu0 %v562
    %2384 = vmatpush.msra.mxu0 %v554
    %2385 = vmatpush.msra.mxu0 %v546
    %2386 = vmatpush.msra.mxu0 %v538
    %2387 = vmatpush.msra.mxu0 %v530
    %2388 = vmatmul.f32.gmra.mxu0 %v2204
    %v2389 = vpop.f32.mrf.mxu0
    %v2390 = vadd.f32 %v1800, %v2389
    %2391 = vdwg.mxu0
    %2392 = vmatpush.msra.mxu0 %v778
    %2393 = vmatpush.msra.mxu0 %v770
    %2394 = vmatpush.msra.mxu0 %v762
    %2395 = vmatpush.msra.mxu0 %v754
    %2396 = vmatpush.msra.mxu0 %v746
    %2397 = vmatpush.msra.mxu0 %v738
    %2398 = vmatpush.msra.mxu0 %v730
    %2399 = vmatpush.msra.mxu0 %v722
    %2400 = vmatpush.msra.mxu0 %v714
    %2401 = vmatpush.msra.mxu0 %v706
    %2402 = vmatpush.msra.mxu0 %v698
    %2403 = vmatpush.msra.mxu0 %v690
    %2404 = vmatpush.msra.mxu0 %v682
    %2405 = vmatpush.msra.mxu0 %v674
    %2406 = vmatpush.msra.mxu0 %v666
    %2407 = vmatpush.msra.mxu0 %v658
    %2408 = vmatmul.f32.gmra.mxu0 %v2205
    %v2409 = vpop.f32.mrf.mxu0
    %v2410 = vadd.f32 %v2390, %v2409
    %2411 = vdwg.mxu0
    %2412 = vmatpush.msra.mxu0 %v906
    %2413 = vmatpush.msra.mxu0 %v898
    %2414 = vmatpush.msra.mxu0 %v890
    %2415 = vmatpush.msra.mxu0 %v882
    %2416 = vmatpush.msra.mxu0 %v874
    %2417 = vmatpush.msra.mxu0 %v866
    %2418 = vmatpush.msra.mxu0 %v858
    %2419 = vmatpush.msra.mxu0 %v850
    %2420 = vmatpush.msra.mxu0 %v842
    %2421 = vmatpush.msra.mxu0 %v834
    %2422 = vmatpush.msra.mxu0 %v826
    %2423 = vmatpush.msra.mxu0 %v818
    %2424 = vmatpush.msra.mxu0 %v810
    %2425 = vmatpush.msra.mxu0 %v802
    %2426 = vmatpush.msra.mxu0 %v794
    %2427 = vmatpush.msra.mxu0 %v786
    %2428 = vmatmul.f32.gmra.mxu0 %v2206
    %v2429 = vpop.f32.mrf.mxu0
    %v2430 = vadd.f32 %v2410, %v2429
    %2431 = vdwg.mxu0
    %2432 = vmatpush.msra.mxu0 %v1034
    %2433 = vmatpush.msra.mxu0 %v1026
    %2434 = vmatpush.msra.mxu0 %v1018
    %2435 = vmatpush.msra.mxu0 %v1010
    %2436 = vmatpush.msra.mxu0 %v1002
    %2437 = vmatpush.msra.mxu0 %v994
    %2438 = vmatpush.msra.mxu0 %v986
    %2439 = vmatpush.msra.mxu0 %v978
    %2440 = vmatpush.msra.mxu0 %v970
    %2441 = vmatpush.msra.mxu0 %v962
    %2442 = vmatpush.msra.mxu0 %v954
    %2443 = vmatpush.msra.mxu0 %v946
    %2444 = vmatpush.msra.mxu0 %v938
    %2445 = vmatpush.msra.mxu0 %v930
    %2446 = vmatpush.msra.mxu0 %v922
    %2447 = vmatpush.msra.mxu0 %v914
    %2448 = vmatmul.f32.gmra.mxu0 %v2207
    %v2449 = vpop.f32.mrf.mxu0
    %v2450 = vadd.f32 %v2430, %v2449
    %2451 = vdwg.mxu0
    %2452 = vmatpush.msra.mxu0 %v651
    %2453 = vmatpush.msra.mxu0 %v643
    %2454 = vmatpush.msra.mxu0 %v635
    %2455 = vmatpush.msra.mxu0 %v627
    %2456 = vmatpush.msra.mxu0 %v619
    %2457 = vmatpush.msra.mxu0 %v611
    %2458 = vmatpush.msra.mxu0 %v603
    %2459 = vmatpush.msra.mxu0 %v595
    %2460 = vmatpush.msra.mxu0 %v587
    %2461 = vmatpush.msra.mxu0 %v579
    %2462 = vmatpush.msra.mxu0 %v571
    %2463 = vmatpush.msra.mxu0 %v563
    %2464 = vmatpush.msra.mxu0 %v555
    %2465 = vmatpush.msra.mxu0 %v547
    %2466 = vmatpush.msra.mxu0 %v539
    %2467 = vmatpush.msra.mxu0 %v531
    %2468 = vmatmul.f32.gmra.mxu0 %v2204
    %v2469 = vpop.f32.mrf.mxu0
    %v2470 = vadd.f32 %v1880, %v2469
    %2471 = vdwg.mxu0
    %2472 = vmatpush.msra.mxu0 %v779
    %2473 = vmatpush.msra.mxu0 %v771
    %2474 = vmatpush.msra.mxu0 %v763
    %2475 = vmatpush.msra.mxu0 %v755
    %2476 = vmatpush.msra.mxu0 %v747
    %2477 = vmatpush.msra.mxu0 %v739
    %2478 = vmatpush.msra.mxu0 %v731
    %2479 = vmatpush.msra.mxu0 %v723
    %2480 = vmatpush.msra.mxu0 %v715
    %2481 = vmatpush.msra.mxu0 %v707
    %2482 = vmatpush.msra.mxu0 %v699
    %2483 = vmatpush.msra.mxu0 %v691
    %2484 = vmatpush.msra.mxu0 %v683
    %2485 = vmatpush.msra.mxu0 %v675
    %2486 = vmatpush.msra.mxu0 %v667
    %2487 = vmatpush.msra.mxu0 %v659
    %2488 = vmatmul.f32.gmra.mxu0 %v2205
    %v2489 = vpop.f32.mrf.mxu0
    %v2490 = vadd.f32 %v2470, %v2489
    %2491 = vdwg.mxu0
    %2492 = vmatpush.msra.mxu0 %v907
    %2493 = vmatpush.msra.mxu0 %v899
    %2494 = vmatpush.msra.mxu0 %v891
    %2495 = vmatpush.msra.mxu0 %v883
    %2496 = vmatpush.msra.mxu0 %v875
    %2497 = vmatpush.msra.mxu0 %v867
    %2498 = vmatpush.msra.mxu0 %v859
    %2499 = vmatpush.msra.mxu0 %v851
    %2500 = vmatpush.msra.mxu0 %v843
    %2501 = vmatpush.msra.mxu0 %v835
    %2502 = vmatpush.msra.mxu0 %v827
    %2503 = vmatpush.msra.mxu0 %v819
    %2504 = vmatpush.msra.mxu0 %v811
    %2505 = vmatpush.msra.mxu0 %v803
    %2506 = vmatpush.msra.mxu0 %v795
    %2507 = vmatpush.msra.mxu0 %v787
    %2508 = vmatmul.f32.gmra.mxu0 %v2206
    %v2509 = vpop.f32.mrf.mxu0
    %v2510 = vadd.f32 %v2490, %v2509
    %2511 = vdwg.mxu0
    %2512 = vmatpush.msra.mxu0 %v1035
    %2513 = vmatpush.msra.mxu0 %v1027
    %2514 = vmatpush.msra.mxu0 %v1019
    %2515 = vmatpush.msra.mxu0 %v1011
    %2516 = vmatpush.msra.mxu0 %v1003
    %2517 = vmatpush.msra.mxu0 %v995
    %2518 = vmatpush.msra.mxu0 %v987
    %2519 = vmatpush.msra.mxu0 %v979
    %2520 = vmatpush.msra.mxu0 %v971
    %2521 = vmatpush.msra.mxu0 %v963
    %2522 = vmatpush.msra.mxu0 %v955
    %2523 = vmatpush.msra.mxu0 %v947
    %2524 = vmatpush.msra.mxu0 %v939
    %2525 = vmatpush.msra.mxu0 %v931
    %2526 = vmatpush.msra.mxu0 %v923
    %2527 = vmatpush.msra.mxu0 %v915
    %2528 = vmatmul.f32.gmra.mxu0 %v2207
    %v2529 = vpop.f32.mrf.mxu0
    %v2530 = vadd.f32 %v2510, %v2529
    %2531 = vdwg.mxu0
    %2532 = vmatpush.msra.mxu0 %v652
    %2533 = vmatpush.msra.mxu0 %v644
    %2534 = vmatpush.msra.mxu0 %v636
    %2535 = vmatpush.msra.mxu0 %v628
    %2536 = vmatpush.msra.mxu0 %v620
    %2537 = vmatpush.msra.mxu0 %v612
    %2538 = vmatpush.msra.mxu0 %v604
    %2539 = vmatpush.msra.mxu0 %v596
    %2540 = vmatpush.msra.mxu0 %v588
    %2541 = vmatpush.msra.mxu0 %v580
    %2542 = vmatpush.msra.mxu0 %v572
    %2543 = vmatpush.msra.mxu0 %v564
    %2544 = vmatpush.msra.mxu0 %v556
    %2545 = vmatpush.msra.mxu0 %v548
    %2546 = vmatpush.msra.mxu0 %v540
    %2547 = vmatpush.msra.mxu0 %v532
    %2548 = vmatmul.f32.gmra.mxu0 %v2204
    %v2549 = vpop.f32.mrf.mxu0
    %v2550 = vadd.f32 %v1960, %v2549
    %2551 = vdwg.mxu0
    %2552 = vmatpush.msra.mxu0 %v780
    %2553 = vmatpush.msra.mxu0 %v772
    %2554 = vmatpush.msra.mxu0 %v764
    %2555 = vmatpush.msra.mxu0 %v756
    %2556 = vmatpush.msra.mxu0 %v748
    %2557 = vmatpush.msra.mxu0 %v740
    %2558 = vmatpush.msra.mxu0 %v732
    %2559 = vmatpush.msra.mxu0 %v724
    %2560 = vmatpush.msra.mxu0 %v716
    %2561 = vmatpush.msra.mxu0 %v708
    %2562 = vmatpush.msra.mxu0 %v700
    %2563 = vmatpush.msra.mxu0 %v692
    %2564 = vmatpush.msra.mxu0 %v684
    %2565 = vmatpush.msra.mxu0 %v676
    %2566 = vmatpush.msra.mxu0 %v668
    %2567 = vmatpush.msra.mxu0 %v660
    %2568 = vmatmul.f32.gmra.mxu0 %v2205
    %v2569 = vpop.f32.mrf.mxu0
    %v2570 = vadd.f32 %v2550, %v2569
    %2571 = vdwg.mxu0
    %2572 = vmatpush.msra.mxu0 %v908
    %2573 = vmatpush.msra.mxu0 %v900
    %2574 = vmatpush.msra.mxu0 %v892
    %2575 = vmatpush.msra.mxu0 %v884
    %2576 = vmatpush.msra.mxu0 %v876
    %2577 = vmatpush.msra.mxu0 %v868
    %2578 = vmatpush.msra.mxu0 %v860
    %2579 = vmatpush.msra.mxu0 %v852
    %2580 = vmatpush.msra.mxu0 %v844
    %2581 = vmatpush.msra.mxu0 %v836
    %2582 = vmatpush.msra.mxu0 %v828
    %2583 = vmatpush.msra.mxu0 %v820
    %2584 = vmatpush.msra.mxu0 %v812
    %2585 = vmatpush.msra.mxu0 %v804
    %2586 = vmatpush.msra.mxu0 %v796
    %2587 = vmatpush.msra.mxu0 %v788
    %2588 = vmatmul.f32.gmra.mxu0 %v2206
    %v2589 = vpop.f32.mrf.mxu0
    %v2590 = vadd.f32 %v2570, %v2589
    %2591 = vdwg.mxu0
    %2592 = vmatpush.msra.mxu0 %v1036
    %2593 = vmatpush.msra.mxu0 %v1028
    %2594 = vmatpush.msra.mxu0 %v1020
    %2595 = vmatpush.msra.mxu0 %v1012
    %2596 = vmatpush.msra.mxu0 %v1004
    %2597 = vmatpush.msra.mxu0 %v996
    %2598 = vmatpush.msra.mxu0 %v988
    %2599 = vmatpush.msra.mxu0 %v980
    %2600 = vmatpush.msra.mxu0 %v972
    %2601 = vmatpush.msra.mxu0 %v964
    %2602 = vmatpush.msra.mxu0 %v956
    %2603 = vmatpush.msra.mxu0 %v948
    %2604 = vmatpush.msra.mxu0 %v940
    %2605 = vmatpush.msra.mxu0 %v932
    %2606 = vmatpush.msra.mxu0 %v924
    %2607 = vmatpush.msra.mxu0 %v916
    %2608 = vmatmul.f32.gmra.mxu0 %v2207
    %v2609 = vpop.f32.mrf.mxu0
    %v2610 = vadd.f32 %v2590, %v2609
    %2611 = vdwg.mxu0
    %2612 = vmatpush.msra.mxu0 %v653
    %2613 = vmatpush.msra.mxu0 %v645
    %2614 = vmatpush.msra.mxu0 %v637
    %2615 = vmatpush.msra.mxu0 %v629
    %2616 = vmatpush.msra.mxu0 %v621
    %2617 = vmatpush.msra.mxu0 %v613
    %2618 = vmatpush.msra.mxu0 %v605
    %2619 = vmatpush.msra.mxu0 %v597
    %2620 = vmatpush.msra.mxu0 %v589
    %2621 = vmatpush.msra.mxu0 %v581
    %2622 = vmatpush.msra.mxu0 %v573
    %2623 = vmatpush.msra.mxu0 %v565
    %2624 = vmatpush.msra.mxu0 %v557
    %2625 = vmatpush.msra.mxu0 %v549
    %2626 = vmatpush.msra.mxu0 %v541
    %2627 = vmatpush.msra.mxu0 %v533
    %2628 = vmatmul.f32.gmra.mxu0 %v2204
    %v2629 = vpop.f32.mrf.mxu0
    %v2630 = vadd.f32 %v2040, %v2629
    %2631 = vdwg.mxu0
    %2632 = vmatpush.msra.mxu0 %v781
    %2633 = vmatpush.msra.mxu0 %v773
    %2634 = vmatpush.msra.mxu0 %v765
    %2635 = vmatpush.msra.mxu0 %v757
    %2636 = vmatpush.msra.mxu0 %v749
    %2637 = vmatpush.msra.mxu0 %v741
    %2638 = vmatpush.msra.mxu0 %v733
    %2639 = vmatpush.msra.mxu0 %v725
    %2640 = vmatpush.msra.mxu0 %v717
    %2641 = vmatpush.msra.mxu0 %v709
    %2642 = vmatpush.msra.mxu0 %v701
    %2643 = vmatpush.msra.mxu0 %v693
    %2644 = vmatpush.msra.mxu0 %v685
    %2645 = vmatpush.msra.mxu0 %v677
    %2646 = vmatpush.msra.mxu0 %v669
    %2647 = vmatpush.msra.mxu0 %v661
    %2648 = vmatmul.f32.gmra.mxu0 %v2205
    %v2649 = vpop.f32.mrf.mxu0
    %v2650 = vadd.f32 %v2630, %v2649
    %2651 = vdwg.mxu0
    %2652 = vmatpush.msra.mxu0 %v909
    %2653 = vmatpush.msra.mxu0 %v901
    %2654 = vmatpush.msra.mxu0 %v893
    %2655 = vmatpush.msra.mxu0 %v885
    %2656 = vmatpush.msra.mxu0 %v877
    %2657 = vmatpush.msra.mxu0 %v869
    %2658 = vmatpush.msra.mxu0 %v861
    %2659 = vmatpush.msra.mxu0 %v853
    %2660 = vmatpush.msra.mxu0 %v845
    %2661 = vmatpush.msra.mxu0 %v837
    %2662 = vmatpush.msra.mxu0 %v829
    %2663 = vmatpush.msra.mxu0 %v821
    %2664 = vmatpush.msra.mxu0 %v813
    %2665 = vmatpush.msra.mxu0 %v805
    %2666 = vmatpush.msra.mxu0 %v797
    %2667 = vmatpush.msra.mxu0 %v789
    %2668 = vmatmul.f32.gmra.mxu0 %v2206
    %v2669 = vpop.f32.mrf.mxu0
    %v2670 = vadd.f32 %v2650, %v2669
    %2671 = vdwg.mxu0
    %2672 = vmatpush.msra.mxu0 %v1037
    %2673 = vmatpush.msra.mxu0 %v1029
    %2674 = vmatpush.msra.mxu0 %v1021
    %2675 = vmatpush.msra.mxu0 %v1013
    %2676 = vmatpush.msra.mxu0 %v1005
    %2677 = vmatpush.msra.mxu0 %v997
    %2678 = vmatpush.msra.mxu0 %v989
    %2679 = vmatpush.msra.mxu0 %v981
    %2680 = vmatpush.msra.mxu0 %v973
    %2681 = vmatpush.msra.mxu0 %v965
    %2682 = vmatpush.msra.mxu0 %v957
    %2683 = vmatpush.msra.mxu0 %v949
    %2684 = vmatpush.msra.mxu0 %v941
    %2685 = vmatpush.msra.mxu0 %v933
    %2686 = vmatpush.msra.mxu0 %v925
    %2687 = vmatpush.msra.mxu0 %v917
    %2688 = vmatmul.f32.gmra.mxu0 %v2207
    %v2689 = vpop.f32.mrf.mxu0
    %v2690 = vadd.f32 %v2670, %v2689
    %2691 = vdwg.mxu0
    %2692 = vmatpush.msra.mxu0 %v654
    %2693 = vmatpush.msra.mxu0 %v646
    %2694 = vmatpush.msra.mxu0 %v638
    %2695 = vmatpush.msra.mxu0 %v630
    %2696 = vmatpush.msra.mxu0 %v622
    %2697 = vmatpush.msra.mxu0 %v614
    %2698 = vmatpush.msra.mxu0 %v606
    %2699 = vmatpush.msra.mxu0 %v598
    %2700 = vmatpush.msra.mxu0 %v590
    %2701 = vmatpush.msra.mxu0 %v582
    %2702 = vmatpush.msra.mxu0 %v574
    %2703 = vmatpush.msra.mxu0 %v566
    %2704 = vmatpush.msra.mxu0 %v558
    %2705 = vmatpush.msra.mxu0 %v550
    %2706 = vmatpush.msra.mxu0 %v542
    %2707 = vmatpush.msra.mxu0 %v534
    %2708 = vmatmul.f32.gmra.mxu0 %v2204
    %v2709 = vpop.f32.mrf.mxu0
    %v2710 = vadd.f32 %v2120, %v2709
    %2711 = vdwg.mxu0
    %2712 = vmatpush.msra.mxu0 %v782
    %2713 = vmatpush.msra.mxu0 %v774
    %2714 = vmatpush.msra.mxu0 %v766
    %2715 = vmatpush.msra.mxu0 %v758
    %2716 = vmatpush.msra.mxu0 %v750
    %2717 = vmatpush.msra.mxu0 %v742
    %2718 = vmatpush.msra.mxu0 %v734
    %2719 = vmatpush.msra.mxu0 %v726
    %2720 = vmatpush.msra.mxu0 %v718
    %2721 = vmatpush.msra.mxu0 %v710
    %2722 = vmatpush.msra.mxu0 %v702
    %2723 = vmatpush.msra.mxu0 %v694
    %2724 = vmatpush.msra.mxu0 %v686
    %2725 = vmatpush.msra.mxu0 %v678
    %2726 = vmatpush.msra.mxu0 %v670
    %2727 = vmatpush.msra.mxu0 %v662
    %2728 = vmatmul.f32.gmra.mxu0 %v2205
    %v2729 = vpop.f32.mrf.mxu0
    %v2730 = vadd.f32 %v2710, %v2729
    %2731 = vdwg.mxu0
    %2732 = vmatpush.msra.mxu0 %v910
    %2733 = vmatpush.msra.mxu0 %v902
    %2734 = vmatpush.msra.mxu0 %v894
    %2735 = vmatpush.msra.mxu0 %v886
    %2736 = vmatpush.msra.mxu0 %v878
    %2737 = vmatpush.msra.mxu0 %v870
    %2738 = vmatpush.msra.mxu0 %v862
    %2739 = vmatpush.msra.mxu0 %v854
    %2740 = vmatpush.msra.mxu0 %v846
    %2741 = vmatpush.msra.mxu0 %v838
    %2742 = vmatpush.msra.mxu0 %v830
    %2743 = vmatpush.msra.mxu0 %v822
    %2744 = vmatpush.msra.mxu0 %v814
    %2745 = vmatpush.msra.mxu0 %v806
    %2746 = vmatpush.msra.mxu0 %v798
    %2747 = vmatpush.msra.mxu0 %v790
    %2748 = vmatmul.f32.gmra.mxu0 %v2206
    %v2749 = vpop.f32.mrf.mxu0
    %v2750 = vadd.f32 %v2730, %v2749
    %2751 = vdwg.mxu0
    %2752 = vmatpush.msra.mxu0 %v1038
    %2753 = vmatpush.msra.mxu0 %v1030
    %2754 = vmatpush.msra.mxu0 %v1022
    %2755 = vmatpush.msra.mxu0 %v1014
    %2756 = vmatpush.msra.mxu0 %v1006
    %2757 = vmatpush.msra.mxu0 %v998
    %2758 = vmatpush.msra.mxu0 %v990
    %2759 = vmatpush.msra.mxu0 %v982
    %2760 = vmatpush.msra.mxu0 %v974
    %2761 = vmatpush.msra.mxu0 %v966
    %2762 = vmatpush.msra.mxu0 %v958
    %2763 = vmatpush.msra.mxu0 %v950
    %2764 = vmatpush.msra.mxu0 %v942
    %2765 = vmatpush.msra.mxu0 %v934
    %2766 = vmatpush.msra.mxu0 %v926
    %2767 = vmatpush.msra.mxu0 %v918
    %2768 = vmatmul.f32.gmra.mxu0 %v2207
    %v2769 = vpop.f32.mrf.mxu0
    %v2770 = vadd.f32 %v2750, %v2769
    %2771 = vdwg.mxu0
    %2772 = vmatpush.msra.mxu0 %v655
    %2773 = vmatpush.msra.mxu0 %v647
    %2774 = vmatpush.msra.mxu0 %v639
    %2775 = vmatpush.msra.mxu0 %v631
    %2776 = vmatpush.msra.mxu0 %v623
    %2777 = vmatpush.msra.mxu0 %v615
    %2778 = vmatpush.msra.mxu0 %v607
    %2779 = vmatpush.msra.mxu0 %v599
    %2780 = vmatpush.msra.mxu0 %v591
    %2781 = vmatpush.msra.mxu0 %v583
    %2782 = vmatpush.msra.mxu0 %v575
    %2783 = vmatpush.msra.mxu0 %v567
    %2784 = vmatpush.msra.mxu0 %v559
    %2785 = vmatpush.msra.mxu0 %v551
    %2786 = vmatpush.msra.mxu0 %v543
    %2787 = vmatpush.msra.mxu0 %v535
    %2788 = vmatmul.f32.gmra.mxu0 %v2204
    %v2789 = vpop.f32.mrf.mxu0
    %v2790 = vadd.f32 %v2200, %v2789
    %2791 = vdwg.mxu0
    %2792 = vmatpush.msra.mxu0 %v783
    %2793 = vmatpush.msra.mxu0 %v775
    %2794 = vmatpush.msra.mxu0 %v767
    %2795 = vmatpush.msra.mxu0 %v759
    %2796 = vmatpush.msra.mxu0 %v751
    %2797 = vmatpush.msra.mxu0 %v743
    %2798 = vmatpush.msra.mxu0 %v735
    %2799 = vmatpush.msra.mxu0 %v727
    %2800 = vmatpush.msra.mxu0 %v719
    %2801 = vmatpush.msra.mxu0 %v711
    %2802 = vmatpush.msra.mxu0 %v703
    %2803 = vmatpush.msra.mxu0 %v695
    %2804 = vmatpush.msra.mxu0 %v687
    %2805 = vmatpush.msra.mxu0 %v679
    %2806 = vmatpush.msra.mxu0 %v671
    %2807 = vmatpush.msra.mxu0 %v663
    %2808 = vmatmul.f32.gmra.mxu0 %v2205
    %v2809 = vpop.f32.mrf.mxu0
    %v2810 = vadd.f32 %v2790, %v2809
    %2811 = vdwg.mxu0
    %2812 = vmatpush.msra.mxu0 %v911
    %2813 = vmatpush.msra.mxu0 %v903
    %2814 = vmatpush.msra.mxu0 %v895
    %2815 = vmatpush.msra.mxu0 %v887
    %2816 = vmatpush.msra.mxu0 %v879
    %2817 = vmatpush.msra.mxu0 %v871
    %2818 = vmatpush.msra.mxu0 %v863
    %2819 = vmatpush.msra.mxu0 %v855
    %2820 = vmatpush.msra.mxu0 %v847
    %2821 = vmatpush.msra.mxu0 %v839
    %2822 = vmatpush.msra.mxu0 %v831
    %2823 = vmatpush.msra.mxu0 %v823
    %2824 = vmatpush.msra.mxu0 %v815
    %2825 = vmatpush.msra.mxu0 %v807
    %2826 = vmatpush.msra.mxu0 %v799
    %2827 = vmatpush.msra.mxu0 %v791
    %2828 = vmatmul.f32.gmra.mxu0 %v2206
    %v2829 = vpop.f32.mrf.mxu0
    %v2830 = vadd.f32 %v2810, %v2829
    %2831 = vdwg.mxu0
    %2832 = vmatpush.msra.mxu0 %v1039
    %2833 = vmatpush.msra.mxu0 %v1031
    %2834 = vmatpush.msra.mxu0 %v1023
    %2835 = vmatpush.msra.mxu0 %v1015
    %2836 = vmatpush.msra.mxu0 %v1007
    %2837 = vmatpush.msra.mxu0 %v999
    %2838 = vmatpush.msra.mxu0 %v991
    %2839 = vmatpush.msra.mxu0 %v983
    %2840 = vmatpush.msra.mxu0 %v975
    %2841 = vmatpush.msra.mxu0 %v967
    %2842 = vmatpush.msra.mxu0 %v959
    %2843 = vmatpush.msra.mxu0 %v951
    %2844 = vmatpush.msra.mxu0 %v943
    %2845 = vmatpush.msra.mxu0 %v935
    %2846 = vmatpush.msra.mxu0 %v927
    %2847 = vmatpush.msra.mxu0 %v919
    %2848 = vmatmul.f32.gmra.mxu0 %v2207
    %v2849 = vpop.f32.mrf.mxu0
    %v2850 = vadd.f32 %v2830, %v2849
    %2851 = vdwg.mxu0
    %v2852 = vld [vmem:[#allocation5] sm:$0xff]
    %v2854 = vperm.slane %v2852, 0
    %v2855 = vperm.slane %v2852, 1
    %v2856 = vperm.slane %v2852, 2
    %v2857 = vperm.slane %v2852, 3
    %v2858 = vperm.slane %v2852, 4
    %v2859 = vperm.slane %v2852, 5
    %v2860 = vperm.slane %v2852, 6
    %v2861 = vperm.slane %v2852, 7
    %v2870 = vadd.f32 %v2290, %v2854
    %v2871 = vadd.f32 %v2370, %v2855
    %v2872 = vadd.f32 %v2450, %v2856
    %v2873 = vadd.f32 %v2530, %v2857
    %v2874 = vadd.f32 %v2610, %v2858
    %v2875 = vadd.f32 %v2690, %v2859
    %v2876 = vadd.f32 %v2770, %v2860
    %v2877 = vadd.f32 %v2850, %v2861
    %vm2878 = vcmask 1041408
    %v2879 = vsel %vm2878, %v2870, 0.0
    %v2880 = vrot.slane %v2879, 4
    %v2881 = vadd.f32 %v2879, %v2880
    %v2882 = vrot.slane %v2881, 2
    %v2883 = vadd.f32 %v2881, %v2882
    %v2884 = vrot.slane %v2883, 1
    %v2885 = vadd.f32 %v2883, %v2884
    %v2886 = vsel %vm2878, %v2871, 0.0
    %v2887 = vrot.slane %v2886, 4
    %v2888 = vadd.f32 %v2886, %v2887
    %v2889 = vrot.slane %v2888, 2
    %v2890 = vadd.f32 %v2888, %v2889
    %v2891 = vrot.slane %v2890, 1
    %v2892 = vadd.f32 %v2890, %v2891
    %v2893 = vsel %vm2878, %v2872, 0.0
    %v2894 = vrot.slane %v2893, 4
    %v2895 = vadd.f32 %v2893, %v2894
    %v2896 = vrot.slane %v2895, 2
    %v2897 = vadd.f32 %v2895, %v2896
    %v2898 = vrot.slane %v2897, 1
    %v2899 = vadd.f32 %v2897, %v2898
    %v2900 = vsel %vm2878, %v2873, 0.0
    %v2901 = vrot.slane %v2900, 4
    %v2902 = vadd.f32 %v2900, %v2901
    %v2903 = vrot.slane %v2902, 2
    %v2904 = vadd.f32 %v2902, %v2903
    %v2905 = vrot.slane %v2904, 1
    %v2906 = vadd.f32 %v2904, %v2905
    %v2907 = vsel %vm2878, %v2874, 0.0
    %v2908 = vrot.slane %v2907, 4
    %v2909 = vadd.f32 %v2907, %v2908
    %v2910 = vrot.slane %v2909, 2
    %v2911 = vadd.f32 %v2909, %v2910
    %v2912 = vrot.slane %v2911, 1
    %v2913 = vadd.f32 %v2911, %v2912
    %v2914 = vsel %vm2878, %v2875, 0.0
    %v2915 = vrot.slane %v2914, 4
    %v2916 = vadd.f32 %v2914, %v2915
    %v2917 = vrot.slane %v2916, 2
    %v2918 = vadd.f32 %v2916, %v2917
    %v2919 = vrot.slane %v2918, 1
    %v2920 = vadd.f32 %v2918, %v2919
    %v2921 = vsel %vm2878, %v2876, 0.0
    %v2922 = vrot.slane %v2921, 4
    %v2923 = vadd.f32 %v2921, %v2922
    %v2924 = vrot.slane %v2923, 2
    %v2925 = vadd.f32 %v2923, %v2924
    %v2926 = vrot.slane %v2925, 1
    %v2927 = vadd.f32 %v2925, %v2926
    %v2928 = vsel %vm2878, %v2877, 0.0
    %v2929 = vrot.slane %v2928, 4
    %v2930 = vadd.f32 %v2928, %v2929
    %v2931 = vrot.slane %v2930, 2
    %v2932 = vadd.f32 %v2930, %v2931
    %v2933 = vrot.slane %v2932, 1
    %v2934 = vadd.f32 %v2932, %v2933
    %v2935 = vmul.f32 %v2870, %v2870
    %v2936 = vmul.f32 %v2871, %v2871
    %v2937 = vmul.f32 %v2872, %v2872
    %v2938 = vmul.f32 %v2873, %v2873
    %v2939 = vmul.f32 %v2874, %v2874
    %v2940 = vmul.f32 %v2875, %v2875
    %v2941 = vmul.f32 %v2876, %v2876
    %v2942 = vmul.f32 %v2877, %v2877
    %v2943 = vsel %vm2878, %v2935, 0.0
    %v2944 = vrot.slane %v2943, 4
    %v2945 = vadd.f32 %v2943, %v2944
    %v2946 = vrot.slane %v2945, 2
    %v2947 = vadd.f32 %v2945, %v2946
    %v2948 = vrot.slane %v2947, 1
    %v2949 = vadd.f32 %v2947, %v2948
    %v2950 = vsel %vm2878, %v2936, 0.0
    %v2951 = vrot.slane %v2950, 4
    %v2952 = vadd.f32 %v2950, %v2951
    %v2953 = vrot.slane %v2952, 2
    %v2954 = vadd.f32 %v2952, %v2953
    %v2955 = vrot.slane %v2954, 1
    %v2956 = vadd.f32 %v2954, %v2955
    %v2957 = vsel %vm2878, %v2937, 0.0
    %v2958 = vrot.slane %v2957, 4
    %v2959 = vadd.f32 %v2957, %v2958
    %v2960 = vrot.slane %v2959, 2
    %v2961 = vadd.f32 %v2959, %v2960
    %v2962 = vrot.slane %v2961, 1
    %v2963 = vadd.f32 %v2961, %v2962
    %v2964 = vsel %vm2878, %v2938, 0.0
    %v2965 = vrot.slane %v2964, 4
    %v2966 = vadd.f32 %v2964, %v2965
    %v2967 = vrot.slane %v2966, 2
    %v2968 = vadd.f32 %v2966, %v2967
    %v2969 = vrot.slane %v2968, 1
    %v2970 = vadd.f32 %v2968, %v2969
    %v2971 = vsel %vm2878, %v2939, 0.0
    %v2972 = vrot.slane %v2971, 4
    %v2973 = vadd.f32 %v2971, %v2972
    %v2974 = vrot.slane %v2973, 2
    %v2975 = vadd.f32 %v2973, %v2974
    %v2976 = vrot.slane %v2975, 1
    %v2977 = vadd.f32 %v2975, %v2976
    %v2978 = vsel %vm2878, %v2940, 0.0
    %v2979 = vrot.slane %v2978, 4
    %v2980 = vadd.f32 %v2978, %v2979
    %v2981 = vrot.slane %v2980, 2
    %v2982 = vadd.f32 %v2980, %v2981
    %v2983 = vrot.slane %v2982, 1
    %v2984 = vadd.f32 %v2982, %v2983
    %v2985 = vsel %vm2878, %v2941, 0.0
    %v2986 = vrot.slane %v2985, 4
    %v2987 = vadd.f32 %v2985, %v2986
    %v2988 = vrot.slane %v2987, 2
    %v2989 = vadd.f32 %v2987, %v2988
    %v2990 = vrot.slane %v2989, 1
    %v2991 = vadd.f32 %v2989, %v2990
    %v2992 = vsel %vm2878, %v2942, 0.0
    %v2993 = vrot.slane %v2992, 4
    %v2994 = vadd.f32 %v2992, %v2993
    %v2995 = vrot.slane %v2994, 2
    %v2996 = vadd.f32 %v2994, %v2995
    %v2997 = vrot.slane %v2996, 1
    %v2998 = vadd.f32 %v2996, %v2997
    %v2999 = vld [vmem:[%s7] sm:$0xff]
    %v3000 = vld [vmem:[%s7 + $0x8] sm:$0xff]
    %v3001 = vld [vmem:[%s7 + $0x10] sm:$0xff]
    %v3002 = vld [vmem:[%s7 + $0x18] sm:$0xff]
    %v3003 = vld [vmem:[%s7 + $0x20] sm:$0xff]
    %v3004 = vld [vmem:[%s7 + $0x28] sm:$0xff]
    %v3005 = vld [vmem:[%s7 + $0x30] sm:$0xff]
    %v3006 = vld [vmem:[%s7 + $0x38] sm:$0xff]
    %v3007 = vld [vmem:[%s7 + $0x40] sm:$0xff]
    %v3008 = vld [vmem:[%s7 + $0x48] sm:$0xff]
    %v3009 = vld [vmem:[%s7 + $0x50] sm:$0xff]
    %v3010 = vld [vmem:[%s7 + $0x58] sm:$0xff]
    %v3011 = vld [vmem:[%s7 + $0x60] sm:$0xff]
    %v3012 = vld [vmem:[%s7 + $0x68] sm:$0xff]
    %v3013 = vld [vmem:[%s7 + $0x70] sm:$0xff]
    %v3014 = vld [vmem:[%s7 + $0x78] sm:$0xff]
    %v3015 = vld [vmem:[%s7 + $0x80] sm:$0xff]
    %v3016 = vld [vmem:[%s7 + $0x88] sm:$0xff]
    %v3017 = vld [vmem:[%s7 + $0x90] sm:$0xff]
    %v3018 = vld [vmem:[%s7 + $0x98] sm:$0xff]
    %v3019 = vld [vmem:[%s7 + $0xa0] sm:$0xff]
    %v3020 = vld [vmem:[%s7 + $0xa8] sm:$0xff]
    %v3021 = vld [vmem:[%s7 + $0xb0] sm:$0xff]
    %v3022 = vld [vmem:[%s7 + $0xb8] sm:$0xff]
    %v3023 = vld [vmem:[%s7 + $0xc0] sm:$0xff]
    %v3024 = vld [vmem:[%s7 + $0xc8] sm:$0xff]
    %v3025 = vld [vmem:[%s7 + $0xd0] sm:$0xff]
    %v3026 = vld [vmem:[%s7 + $0xd8] sm:$0xff]
    %v3027 = vld [vmem:[%s7 + $0xe0] sm:$0xff]
    %v3028 = vld [vmem:[%s7 + $0xe8] sm:$0xff]
    %v3029 = vld [vmem:[%s7 + $0xf0] sm:$0xff]
    %v3030 = vld [vmem:[%s7 + $0xf8] sm:$0xff]
    %v3031 = vld [vmem:[%s7 + $0x100] sm:$0xff]
    %v3032 = vld [vmem:[%s7 + $0x108] sm:$0xff]
    %v3033 = vld [vmem:[%s7 + $0x110] sm:$0xff]
    %v3034 = vld [vmem:[%s7 + $0x118] sm:$0xff]
    %v3035 = vld [vmem:[%s7 + $0x120] sm:$0xff]
    %v3036 = vld [vmem:[%s7 + $0x128] sm:$0xff]
    %v3037 = vld [vmem:[%s7 + $0x130] sm:$0xff]
    %v3038 = vld [vmem:[%s7 + $0x138] sm:$0xff]
    %v3039 = vld [vmem:[%s7 + $0x140] sm:$0xff]
    %v3040 = vld [vmem:[%s7 + $0x148] sm:$0xff]
    %v3041 = vld [vmem:[%s7 + $0x150] sm:$0xff]
    %v3042 = vld [vmem:[%s7 + $0x158] sm:$0xff]
    %v3043 = vld [vmem:[%s7 + $0x160] sm:$0xff]
    %v3044 = vld [vmem:[%s7 + $0x168] sm:$0xff]
    %v3045 = vld [vmem:[%s7 + $0x170] sm:$0xff]
    %v3046 = vld [vmem:[%s7 + $0x178] sm:$0xff]
    %v3047 = vld [vmem:[%s7 + $0x180] sm:$0xff]
    %v3048 = vld [vmem:[%s7 + $0x188] sm:$0xff]
    %v3049 = vld [vmem:[%s7 + $0x190] sm:$0xff]
    %v3050 = vld [vmem:[%s7 + $0x198] sm:$0xff]
    %v3051 = vld [vmem:[%s7 + $0x1a0] sm:$0xff]
    %v3052 = vld [vmem:[%s7 + $0x1a8] sm:$0xff]
    %v3053 = vld [vmem:[%s7 + $0x1b0] sm:$0xff]
    %v3054 = vld [vmem:[%s7 + $0x1b8] sm:$0xff]
    %v3055 = vld [vmem:[%s7 + $0x1c0] sm:$0xff]
    %v3056 = vld [vmem:[%s7 + $0x1c8] sm:$0xff]
    %v3057 = vld [vmem:[%s7 + $0x1d0] sm:$0xff]
    %v3058 = vld [vmem:[%s7 + $0x1d8] sm:$0xff]
    %v3059 = vld [vmem:[%s7 + $0x1e0] sm:$0xff]
    %v3060 = vld [vmem:[%s7 + $0x1e8] sm:$0xff]
    %v3061 = vld [vmem:[%s7 + $0x1f0] sm:$0xff]
    %v3062 = vld [vmem:[%s7 + $0x1f8] sm:$0xff]
    %v3063 = vld [vmem:[%s7 + $0x200] sm:$0xff]
    %v3064 = vld [vmem:[%s7 + $0x208] sm:$0xff]
    %v3065 = vld [vmem:[%s7 + $0x210] sm:$0xff]
    %v3066 = vld [vmem:[%s7 + $0x218] sm:$0xff]
    %v3067 = vld [vmem:[%s7 + $0x220] sm:$0xff]
    %v3068 = vld [vmem:[%s7 + $0x228] sm:$0xff]
    %v3069 = vld [vmem:[%s7 + $0x230] sm:$0xff]
    %v3070 = vld [vmem:[%s7 + $0x238] sm:$0xff]
    %v3071 = vld [vmem:[%s7 + $0x240] sm:$0xff]
    %v3072 = vld [vmem:[%s7 + $0x248] sm:$0xff]
    %v3073 = vld [vmem:[%s7 + $0x250] sm:$0xff]
    %v3074 = vld [vmem:[%s7 + $0x258] sm:$0xff]
    %v3075 = vld [vmem:[%s7 + $0x260] sm:$0xff]
    %v3076 = vld [vmem:[%s7 + $0x268] sm:$0xff]
    %v3077 = vld [vmem:[%s7 + $0x270] sm:$0xff]
    %v3078 = vld [vmem:[%s7 + $0x278] sm:$0xff]
    %v3079 = vld [vmem:[%s7 + $0x280] sm:$0xff]
    %v3080 = vld [vmem:[%s7 + $0x288] sm:$0xff]
    %v3081 = vld [vmem:[%s7 + $0x290] sm:$0xff]
    %v3082 = vld [vmem:[%s7 + $0x298] sm:$0xff]
    %v3083 = vld [vmem:[%s7 + $0x2a0] sm:$0xff]
    %v3084 = vld [vmem:[%s7 + $0x2a8] sm:$0xff]
    %v3085 = vld [vmem:[%s7 + $0x2b0] sm:$0xff]
    %v3086 = vld [vmem:[%s7 + $0x2b8] sm:$0xff]
    %v3087 = vld [vmem:[%s7 + $0x2c0] sm:$0xff]
    %v3088 = vld [vmem:[%s7 + $0x2c8] sm:$0xff]
    %v3089 = vld [vmem:[%s7 + $0x2d0] sm:$0xff]
    %v3090 = vld [vmem:[%s7 + $0x2d8] sm:$0xff]
    %v3091 = vld [vmem:[%s7 + $0x2e0] sm:$0xff]
    %v3092 = vld [vmem:[%s7 + $0x2e8] sm:$0xff]
    %v3093 = vld [vmem:[%s7 + $0x2f0] sm:$0xff]
    %v3094 = vld [vmem:[%s7 + $0x2f8] sm:$0xff]
    %v3095 = vld [vmem:[%s7 + $0x300] sm:$0xff]
    %v3096 = vld [vmem:[%s7 + $0x308] sm:$0xff]
    %v3097 = vld [vmem:[%s7 + $0x310] sm:$0xff]
    %v3098 = vld [vmem:[%s7 + $0x318] sm:$0xff]
    %v3099 = vld [vmem:[%s7 + $0x320] sm:$0xff]
    %v3100 = vld [vmem:[%s7 + $0x328] sm:$0xff]
    %v3101 = vld [vmem:[%s7 + $0x330] sm:$0xff]
    %v3102 = vld [vmem:[%s7 + $0x338] sm:$0xff]
    %v3103 = vld [vmem:[%s7 + $0x340] sm:$0xff]
    %v3104 = vld [vmem:[%s7 + $0x348] sm:$0xff]
    %v3105 = vld [vmem:[%s7 + $0x350] sm:$0xff]
    %v3106 = vld [vmem:[%s7 + $0x358] sm:$0xff]
    %v3107 = vld [vmem:[%s7 + $0x360] sm:$0xff]
    %v3108 = vld [vmem:[%s7 + $0x368] sm:$0xff]
    %v3109 = vld [vmem:[%s7 + $0x370] sm:$0xff]
    %v3110 = vld [vmem:[%s7 + $0x378] sm:$0xff]
    %v3111 = vld [vmem:[%s7 + $0x380] sm:$0xff]
    %v3112 = vld [vmem:[%s7 + $0x388] sm:$0xff]
    %v3113 = vld [vmem:[%s7 + $0x390] sm:$0xff]
    %v3114 = vld [vmem:[%s7 + $0x398] sm:$0xff]
    %v3115 = vld [vmem:[%s7 + $0x3a0] sm:$0xff]
    %v3116 = vld [vmem:[%s7 + $0x3a8] sm:$0xff]
    %v3117 = vld [vmem:[%s7 + $0x3b0] sm:$0xff]
    %v3118 = vld [vmem:[%s7 + $0x3b8] sm:$0xff]
    %v3119 = vld [vmem:[%s7 + $0x3c0] sm:$0xff]
    %v3120 = vld [vmem:[%s7 + $0x3c8] sm:$0xff]
    %v3121 = vld [vmem:[%s7 + $0x3d0] sm:$0xff]
    %v3122 = vld [vmem:[%s7 + $0x3d8] sm:$0xff]
    %v3123 = vld [vmem:[%s7 + $0x3e0] sm:$0xff]
    %v3124 = vld [vmem:[%s7 + $0x3e8] sm:$0xff]
    %v3125 = vld [vmem:[%s7 + $0x3f0] sm:$0xff]
    %v3126 = vld [vmem:[%s7 + $0x3f8] sm:$0xff]
    %3127 = vmatpush.msra.mxu0 %v3014
    %3128 = vmatpush.msra.mxu0 %v3013
    %3129 = vmatpush.msra.mxu0 %v3012
    %3130 = vmatpush.msra.mxu0 %v3011
    %3131 = vmatpush.msra.mxu0 %v3010
    %3132 = vmatpush.msra.mxu0 %v3009
    %3133 = vmatpush.msra.mxu0 %v3008
    %3134 = vmatpush.msra.mxu0 %v3007
    %3135 = vmatpush.msra.mxu0 %v3006
    %3136 = vmatpush.msra.mxu0 %v3005
    %3137 = vmatpush.msra.mxu0 %v3004
    %3138 = vmatpush.msra.mxu0 %v3003
    %3139 = vmatpush.msra.mxu0 %v3002
    %3140 = vmatpush.msra.mxu0 %v3001
    %3141 = vmatpush.msra.mxu0 %v3000
    %3142 = vmatpush.msra.mxu0 %v2999
    %3143 = vmatmul.f32.gmra.mxu0 %v2885
    %v3144 = vpop.f32.mrf.mxu0
    %v3145 = vadd.f32 0.0, %v3144
    %3146 = vdwg.mxu0
    %3147 = vmatpush.msra.mxu0 %v3030
    %3148 = vmatpush.msra.mxu0 %v3029
    %3149 = vmatpush.msra.mxu0 %v3028
    %3150 = vmatpush.msra.mxu0 %v3027
    %3151 = vmatpush.msra.mxu0 %v3026
    %3152 = vmatpush.msra.mxu0 %v3025
    %3153 = vmatpush.msra.mxu0 %v3024
    %3154 = vmatpush.msra.mxu0 %v3023
    %3155 = vmatpush.msra.mxu0 %v3022
    %3156 = vmatpush.msra.mxu0 %v3021
    %3157 = vmatpush.msra.mxu0 %v3020
    %3158 = vmatpush.msra.mxu0 %v3019
    %3159 = vmatpush.msra.mxu0 %v3018
    %3160 = vmatpush.msra.mxu0 %v3017
    %3161 = vmatpush.msra.mxu0 %v3016
    %3162 = vmatpush.msra.mxu0 %v3015
    %3163 = vmatmul.f32.gmra.mxu0 %v2892
    %v3164 = vpop.f32.mrf.mxu0
    %v3165 = vadd.f32 %v3145, %v3164
    %3166 = vdwg.mxu0
    %3167 = vmatpush.msra.mxu0 %v3046
    %3168 = vmatpush.msra.mxu0 %v3045
    %3169 = vmatpush.msra.mxu0 %v3044
    %3170 = vmatpush.msra.mxu0 %v3043
    %3171 = vmatpush.msra.mxu0 %v3042
    %3172 = vmatpush.msra.mxu0 %v3041
    %3173 = vmatpush.msra.mxu0 %v3040
    %3174 = vmatpush.msra.mxu0 %v3039
    %3175 = vmatpush.msra.mxu0 %v3038
    %3176 = vmatpush.msra.mxu0 %v3037
    %3177 = vmatpush.msra.mxu0 %v3036
    %3178 = vmatpush.msra.mxu0 %v3035
    %3179 = vmatpush.msra.mxu0 %v3034
    %3180 = vmatpush.msra.mxu0 %v3033
    %3181 = vmatpush.msra.mxu0 %v3032
    %3182 = vmatpush.msra.mxu0 %v3031
    %3183 = vmatmul.f32.gmra.mxu0 %v2899
    %v3184 = vpop.f32.mrf.mxu0
    %v3185 = vadd.f32 %v3165, %v3184
    %3186 = vdwg.mxu0
    %3187 = vmatpush.msra.mxu0 %v3062
    %3188 = vmatpush.msra.mxu0 %v3061
    %3189 = vmatpush.msra.mxu0 %v3060
    %3190 = vmatpush.msra.mxu0 %v3059
    %3191 = vmatpush.msra.mxu0 %v3058
    %3192 = vmatpush.msra.mxu0 %v3057
    %3193 = vmatpush.msra.mxu0 %v3056
    %3194 = vmatpush.msra.mxu0 %v3055
    %3195 = vmatpush.msra.mxu0 %v3054
    %3196 = vmatpush.msra.mxu0 %v3053
    %3197 = vmatpush.msra.mxu0 %v3052
    %3198 = vmatpush.msra.mxu0 %v3051
    %3199 = vmatpush.msra.mxu0 %v3050
    %3200 = vmatpush.msra.mxu0 %v3049
    %3201 = vmatpush.msra.mxu0 %v3048
    %3202 = vmatpush.msra.mxu0 %v3047
    %3203 = vmatmul.f32.gmra.mxu0 %v2906
    %v3204 = vpop.f32.mrf.mxu0
    %v3205 = vadd.f32 %v3185, %v3204
    %3206 = vdwg.mxu0
    %3207 = vmatpush.msra.mxu0 %v3078
    %3208 = vmatpush.msra.mxu0 %v3077
    %3209 = vmatpush.msra.mxu0 %v3076
    %3210 = vmatpush.msra.mxu0 %v3075
    %3211 = vmatpush.msra.mxu0 %v3074
    %3212 = vmatpush.msra.mxu0 %v3073
    %3213 = vmatpush.msra.mxu0 %v3072
    %3214 = vmatpush.msra.mxu0 %v3071
    %3215 = vmatpush.msra.mxu0 %v3070
    %3216 = vmatpush.msra.mxu0 %v3069
    %3217 = vmatpush.msra.mxu0 %v3068
    %3218 = vmatpush.msra.mxu0 %v3067
    %3219 = vmatpush.msra.mxu0 %v3066
    %3220 = vmatpush.msra.mxu0 %v3065
    %3221 = vmatpush.msra.mxu0 %v3064
    %3222 = vmatpush.msra.mxu0 %v3063
    %3223 = vmatmul.f32.gmra.mxu0 %v2913
    %v3224 = vpop.f32.mrf.mxu0
    %v3225 = vadd.f32 %v3205, %v3224
    %3226 = vdwg.mxu0
    %3227 = vmatpush.msra.mxu0 %v3094
    %3228 = vmatpush.msra.mxu0 %v3093
    %3229 = vmatpush.msra.mxu0 %v3092
    %3230 = vmatpush.msra.mxu0 %v3091
    %3231 = vmatpush.msra.mxu0 %v3090
    %3232 = vmatpush.msra.mxu0 %v3089
    %3233 = vmatpush.msra.mxu0 %v3088
    %3234 = vmatpush.msra.mxu0 %v3087
    %3235 = vmatpush.msra.mxu0 %v3086
    %3236 = vmatpush.msra.mxu0 %v3085
    %3237 = vmatpush.msra.mxu0 %v3084
    %3238 = vmatpush.msra.mxu0 %v3083
    %3239 = vmatpush.msra.mxu0 %v3082
    %3240 = vmatpush.msra.mxu0 %v3081
    %3241 = vmatpush.msra.mxu0 %v3080
    %3242 = vmatpush.msra.mxu0 %v3079
    %3243 = vmatmul.f32.gmra.mxu0 %v2920
    %v3244 = vpop.f32.mrf.mxu0
    %v3245 = vadd.f32 %v3225, %v3244
    %3246 = vdwg.mxu0
    %3247 = vmatpush.msra.mxu0 %v3110
    %3248 = vmatpush.msra.mxu0 %v3109
    %3249 = vmatpush.msra.mxu0 %v3108
    %3250 = vmatpush.msra.mxu0 %v3107
    %3251 = vmatpush.msra.mxu0 %v3106
    %3252 = vmatpush.msra.mxu0 %v3105
    %3253 = vmatpush.msra.mxu0 %v3104
    %3254 = vmatpush.msra.mxu0 %v3103
    %3255 = vmatpush.msra.mxu0 %v3102
    %3256 = vmatpush.msra.mxu0 %v3101
    %3257 = vmatpush.msra.mxu0 %v3100
    %3258 = vmatpush.msra.mxu0 %v3099
    %3259 = vmatpush.msra.mxu0 %v3098
    %3260 = vmatpush.msra.mxu0 %v3097
    %3261 = vmatpush.msra.mxu0 %v3096
    %3262 = vmatpush.msra.mxu0 %v3095
    %3263 = vmatmul.f32.gmra.mxu0 %v2927
    %v3264 = vpop.f32.mrf.mxu0
    %v3265 = vadd.f32 %v3245, %v3264
    %3266 = vdwg.mxu0
    %3267 = vmatpush.msra.mxu0 %v3126
    %3268 = vmatpush.msra.mxu0 %v3125
    %3269 = vmatpush.msra.mxu0 %v3124
    %3270 = vmatpush.msra.mxu0 %v3123
    %3271 = vmatpush.msra.mxu0 %v3122
    %3272 = vmatpush.msra.mxu0 %v3121
    %3273 = vmatpush.msra.mxu0 %v3120
    %3274 = vmatpush.msra.mxu0 %v3119
    %3275 = vmatpush.msra.mxu0 %v3118
    %3276 = vmatpush.msra.mxu0 %v3117
    %3277 = vmatpush.msra.mxu0 %v3116
    %3278 = vmatpush.msra.mxu0 %v3115
    %3279 = vmatpush.msra.mxu0 %v3114
    %3280 = vmatpush.msra.mxu0 %v3113
    %3281 = vmatpush.msra.mxu0 %v3112
    %3282 = vmatpush.msra.mxu0 %v3111
    %3283 = vmatmul.f32.gmra.mxu0 %v2934
    %v3284 = vpop.f32.mrf.mxu0
    %v3285 = vadd.f32 %v3265, %v3284
    %3286 = vdwg.mxu0
    %v3287 = vmul.f32 %v3285, 0.0078125
    %3288 = vmatpush.msra.mxu0 %v3014
    %3289 = vmatpush.msra.mxu0 %v3013
    %3290 = vmatpush.msra.mxu0 %v3012
    %3291 = vmatpush.msra.mxu0 %v3011
    %3292 = vmatpush.msra.mxu0 %v3010
    %3293 = vmatpush.msra.mxu0 %v3009
    %3294 = vmatpush.msra.mxu0 %v3008
    %3295 = vmatpush.msra.mxu0 %v3007
    %3296 = vmatpush.msra.mxu0 %v3006
    %3297 = vmatpush.msra.mxu0 %v3005
    %3298 = vmatpush.msra.mxu0 %v3004
    %3299 = vmatpush.msra.mxu0 %v3003
    %3300 = vmatpush.msra.mxu0 %v3002
    %3301 = vmatpush.msra.mxu0 %v3001
    %3302 = vmatpush.msra.mxu0 %v3000
    %3303 = vmatpush.msra.mxu0 %v2999
    %3304 = vmatmul.f32.gmra.mxu0 %v2949
    %v3305 = vpop.f32.mrf.mxu0
    %v3306 = vadd.f32 0.0, %v3305
    %3307 = vdwg.mxu0
    %3308 = vmatpush.msra.mxu0 %v3030
    %3309 = vmatpush.msra.mxu0 %v3029
    %3310 = vmatpush.msra.mxu0 %v3028
    %3311 = vmatpush.msra.mxu0 %v3027
    %3312 = vmatpush.msra.mxu0 %v3026
    %3313 = vmatpush.msra.mxu0 %v3025
    %3314 = vmatpush.msra.mxu0 %v3024
    %3315 = vmatpush.msra.mxu0 %v3023
    %3316 = vmatpush.msra.mxu0 %v3022
    %3317 = vmatpush.msra.mxu0 %v3021
    %3318 = vmatpush.msra.mxu0 %v3020
    %3319 = vmatpush.msra.mxu0 %v3019
    %3320 = vmatpush.msra.mxu0 %v3018
    %3321 = vmatpush.msra.mxu0 %v3017
    %3322 = vmatpush.msra.mxu0 %v3016
    %3323 = vmatpush.msra.mxu0 %v3015
    %3324 = vmatmul.f32.gmra.mxu0 %v2956
    %v3325 = vpop.f32.mrf.mxu0
    %v3326 = vadd.f32 %v3306, %v3325
    %3327 = vdwg.mxu0
    %3328 = vmatpush.msra.mxu0 %v3046
    %3329 = vmatpush.msra.mxu0 %v3045
    %3330 = vmatpush.msra.mxu0 %v3044
    %3331 = vmatpush.msra.mxu0 %v3043
    %3332 = vmatpush.msra.mxu0 %v3042
    %3333 = vmatpush.msra.mxu0 %v3041
    %3334 = vmatpush.msra.mxu0 %v3040
    %3335 = vmatpush.msra.mxu0 %v3039
    %3336 = vmatpush.msra.mxu0 %v3038
    %3337 = vmatpush.msra.mxu0 %v3037
    %3338 = vmatpush.msra.mxu0 %v3036
    %3339 = vmatpush.msra.mxu0 %v3035
    %3340 = vmatpush.msra.mxu0 %v3034
    %3341 = vmatpush.msra.mxu0 %v3033
    %3342 = vmatpush.msra.mxu0 %v3032
    %3343 = vmatpush.msra.mxu0 %v3031
    %3344 = vmatmul.f32.gmra.mxu0 %v2963
    %v3345 = vpop.f32.mrf.mxu0
    %v3346 = vadd.f32 %v3326, %v3345
    %3347 = vdwg.mxu0
    %3348 = vmatpush.msra.mxu0 %v3062
    %3349 = vmatpush.msra.mxu0 %v3061
    %3350 = vmatpush.msra.mxu0 %v3060
    %3351 = vmatpush.msra.mxu0 %v3059
    %3352 = vmatpush.msra.mxu0 %v3058
    %3353 = vmatpush.msra.mxu0 %v3057
    %3354 = vmatpush.msra.mxu0 %v3056
    %3355 = vmatpush.msra.mxu0 %v3055
    %3356 = vmatpush.msra.mxu0 %v3054
    %3357 = vmatpush.msra.mxu0 %v3053
    %3358 = vmatpush.msra.mxu0 %v3052
    %3359 = vmatpush.msra.mxu0 %v3051
    %3360 = vmatpush.msra.mxu0 %v3050
    %3361 = vmatpush.msra.mxu0 %v3049
    %3362 = vmatpush.msra.mxu0 %v3048
    %3363 = vmatpush.msra.mxu0 %v3047
    %3364 = vmatmul.f32.gmra.mxu0 %v2970
    %v3365 = vpop.f32.mrf.mxu0
    %v3366 = vadd.f32 %v3346, %v3365
    %3367 = vdwg.mxu0
    %3368 = vmatpush.msra.mxu0 %v3078
    %3369 = vmatpush.msra.mxu0 %v3077
    %3370 = vmatpush.msra.mxu0 %v3076
    %3371 = vmatpush.msra.mxu0 %v3075
    %3372 = vmatpush.msra.mxu0 %v3074
    %3373 = vmatpush.msra.mxu0 %v3073
    %3374 = vmatpush.msra.mxu0 %v3072
    %3375 = vmatpush.msra.mxu0 %v3071
    %3376 = vmatpush.msra.mxu0 %v3070
    %3377 = vmatpush.msra.mxu0 %v3069
    %3378 = vmatpush.msra.mxu0 %v3068
    %3379 = vmatpush.msra.mxu0 %v3067
    %3380 = vmatpush.msra.mxu0 %v3066
    %3381 = vmatpush.msra.mxu0 %v3065
    %3382 = vmatpush.msra.mxu0 %v3064
    %3383 = vmatpush.msra.mxu0 %v3063
    %3384 = vmatmul.f32.gmra.mxu0 %v2977
    %v3385 = vpop.f32.mrf.mxu0
    %v3386 = vadd.f32 %v3366, %v3385
    %3387 = vdwg.mxu0
    %3388 = vmatpush.msra.mxu0 %v3094
    %3389 = vmatpush.msra.mxu0 %v3093
    %3390 = vmatpush.msra.mxu0 %v3092
    %3391 = vmatpush.msra.mxu0 %v3091
    %3392 = vmatpush.msra.mxu0 %v3090
    %3393 = vmatpush.msra.mxu0 %v3089
    %3394 = vmatpush.msra.mxu0 %v3088
    %3395 = vmatpush.msra.mxu0 %v3087
    %3396 = vmatpush.msra.mxu0 %v3086
    %3397 = vmatpush.msra.mxu0 %v3085
    %3398 = vmatpush.msra.mxu0 %v3084
    %3399 = vmatpush.msra.mxu0 %v3083
    %3400 = vmatpush.msra.mxu0 %v3082
    %3401 = vmatpush.msra.mxu0 %v3081
    %3402 = vmatpush.msra.mxu0 %v3080
    %3403 = vmatpush.msra.mxu0 %v3079
    %3404 = vmatmul.f32.gmra.mxu0 %v2984
    %v3405 = vpop.f32.mrf.mxu0
    %v3406 = vadd.f32 %v3386, %v3405
    %3407 = vdwg.mxu0
    %3408 = vmatpush.msra.mxu0 %v3110
    %3409 = vmatpush.msra.mxu0 %v3109
    %3410 = vmatpush.msra.mxu0 %v3108
    %3411 = vmatpush.msra.mxu0 %v3107
    %3412 = vmatpush.msra.mxu0 %v3106
    %3413 = vmatpush.msra.mxu0 %v3105
    %3414 = vmatpush.msra.mxu0 %v3104
    %3415 = vmatpush.msra.mxu0 %v3103
    %3416 = vmatpush.msra.mxu0 %v3102
    %3417 = vmatpush.msra.mxu0 %v3101
    %3418 = vmatpush.msra.mxu0 %v3100
    %3419 = vmatpush.msra.mxu0 %v3099
    %3420 = vmatpush.msra.mxu0 %v3098
    %3421 = vmatpush.msra.mxu0 %v3097
    %3422 = vmatpush.msra.mxu0 %v3096
    %3423 = vmatpush.msra.mxu0 %v3095
    %3424 = vmatmul.f32.gmra.mxu0 %v2991
    %v3425 = vpop.f32.mrf.mxu0
    %v3426 = vadd.f32 %v3406, %v3425
    %3427 = vdwg.mxu0
    %3428 = vmatpush.msra.mxu0 %v3126
    %3429 = vmatpush.msra.mxu0 %v3125
    %3430 = vmatpush.msra.mxu0 %v3124
    %3431 = vmatpush.msra.mxu0 %v3123
    %3432 = vmatpush.msra.mxu0 %v3122
    %3433 = vmatpush.msra.mxu0 %v3121
    %3434 = vmatpush.msra.mxu0 %v3120
    %3435 = vmatpush.msra.mxu0 %v3119
    %3436 = vmatpush.msra.mxu0 %v3118
    %3437 = vmatpush.msra.mxu0 %v3117
    %3438 = vmatpush.msra.mxu0 %v3116
    %3439 = vmatpush.msra.mxu0 %v3115
    %3440 = vmatpush.msra.mxu0 %v3114
    %3441 = vmatpush.msra.mxu0 %v3113
    %3442 = vmatpush.msra.mxu0 %v3112
    %3443 = vmatpush.msra.mxu0 %v3111
    %3444 = vmatmul.f32.gmra.mxu0 %v2998
    %v3445 = vpop.f32.mrf.mxu0
    %v3446 = vadd.f32 %v3426, %v3445
    %3447 = vdwg.mxu0
    %v3448 = vmul.f32 %v3446, 0.0078125
    %v3449 = vmul.f32 %v3287, %v3287
    %v3450 = vsub.f32 %v3448, %v3449
    %v3451 = vld [vmem:[#allocation8] sm:$0x1]
    %v3452 = vadd.f32 %v3450, 1e-05
    %v3453 = vrsqrt.pop %v3452
    %v3454 = vmul.f32 %v3453, %v3452
    %v3455 = vmul.f32 %v3454, %v3453
    %v3456 = vmul.f32 0.5, %v3455
    %v3457 = vsub.f32 1.5, %v3456
    %v3458 = vmul.f32 %v3453, %v3457
    %vm3459 = vweird.f32 %v3452
    %vm3460 = vweird.f32 %v3453
    %vm3461 = vmor %vm3459, %vm3460
    %v3462 = vsel %vm3461, %v3453, %v3458
    %v3463 = vmul.f32 %v3451, %v3462
    %v3464 = vld [vmem:[#allocation10] sm:$0x1]
    %v3465 = vmul.f32 %v3287, %v3463
    %v3466 = vsub.f32 %v3464, %v3465
    %v3467 = vld [vmem:[#allocation7] sm:$0xff]
    %v3468 = vld [vmem:[#allocation7 + $0x8] sm:$0xff]
    %v3469 = vld [vmem:[#allocation7 + $0x10] sm:$0xff]
    %v3470 = vld [vmem:[#allocation7 + $0x18] sm:$0xff]
    %v3471 = vld [vmem:[#allocation7 + $0x20] sm:$0xff]
    %v3472 = vld [vmem:[#allocation7 + $0x28] sm:$0xff]
    %v3473 = vld [vmem:[#allocation7 + $0x30] sm:$0xff]
    %v3474 = vld [vmem:[#allocation7 + $0x38] sm:$0xff]
    %v3475 = vld [vmem:[#allocation7 + $0x40] sm:$0xff]
    %v3476 = vld [vmem:[#allocation7 + $0x48] sm:$0xff]
    %v3477 = vld [vmem:[#allocation7 + $0x50] sm:$0xff]
    %v3478 = vld [vmem:[#allocation7 + $0x58] sm:$0xff]
    %v3479 = vld [vmem:[#allocation7 + $0x60] sm:$0xff]
    %v3480 = vld [vmem:[#allocation7 + $0x68] sm:$0xff]
    %v3481 = vld [vmem:[#allocation7 + $0x70] sm:$0xff]
    %v3482 = vld [vmem:[#allocation7 + $0x78] sm:$0xff]
    %vm3483 = vcmask 130048
    %v3485 = vsel %vm3483, %v3463, 0
    %3487 = vmatpush.msra.mxu0 0.0
    %3488 = vmatpush.msra.mxu0 0.0
    %3489 = vmatpush.msra.mxu0 0.0
    %3490 = vmatpush.msra.mxu0 0.0
    %3491 = vmatpush.msra.mxu0 0.0
    %3492 = vmatpush.msra.mxu0 0.0
    %3493 = vmatpush.msra.mxu0 0.0
    %3494 = vmatpush.msra.mxu0 0.0
    %3495 = vmatpush.msra.mxu0 0.0
    %3496 = vmatpush.msra.mxu0 0.0
    %3497 = vmatpush.msra.mxu0 0.0
    %3498 = vmatpush.msra.mxu0 0.0
    %3499 = vmatpush.msra.mxu0 0.0
    %3500 = vmatpush.msra.mxu0 0.0
    %3501 = vmatpush.msra.mxu0 %v3475
    %3502 = vmatpush.msra.mxu0 %v3467
    %3503 = vmatmul.f32.gmra.mxu0 %v3485
    %v3504 = vpop.f32.mrf.mxu0
    %v3505 = vadd.f32 0.0, %v3504
    %3506 = vdwg.mxu0
    %3507 = vmatpush.msra.mxu0 0.0
    %3508 = vmatpush.msra.mxu0 0.0
    %3509 = vmatpush.msra.mxu0 0.0
    %3510 = vmatpush.msra.mxu0 0.0
    %3511 = vmatpush.msra.mxu0 0.0
    %3512 = vmatpush.msra.mxu0 0.0
    %3513 = vmatpush.msra.mxu0 0.0
    %3514 = vmatpush.msra.mxu0 0.0
    %3515 = vmatpush.msra.mxu0 0.0
    %3516 = vmatpush.msra.mxu0 0.0
    %3517 = vmatpush.msra.mxu0 0.0
    %3518 = vmatpush.msra.mxu0 0.0
    %3519 = vmatpush.msra.mxu0 0.0
    %3520 = vmatpush.msra.mxu0 0.0
    %3521 = vmatpush.msra.mxu0 %v3476
    %3522 = vmatpush.msra.mxu0 %v3468
    %3523 = vmatmul.f32.gmra.mxu0 %v3485
    %v3524 = vpop.f32.mrf.mxu0
    %v3525 = vadd.f32 0.0, %v3524
    %3526 = vdwg.mxu0
    %3527 = vmatpush.msra.mxu0 0.0
    %3528 = vmatpush.msra.mxu0 0.0
    %3529 = vmatpush.msra.mxu0 0.0
    %3530 = vmatpush.msra.mxu0 0.0
    %3531 = vmatpush.msra.mxu0 0.0
    %3532 = vmatpush.msra.mxu0 0.0
    %3533 = vmatpush.msra.mxu0 0.0
    %3534 = vmatpush.msra.mxu0 0.0
    %3535 = vmatpush.msra.mxu0 0.0
    %3536 = vmatpush.msra.mxu0 0.0
    %3537 = vmatpush.msra.mxu0 0.0
    %3538 = vmatpush.msra.mxu0 0.0
    %3539 = vmatpush.msra.mxu0 0.0
    %3540 = vmatpush.msra.mxu0 0.0
    %3541 = vmatpush.msra.mxu0 %v3477
    %3542 = vmatpush.msra.mxu0 %v3469
    %3543 = vmatmul.f32.gmra.mxu0 %v3485
    %v3544 = vpop.f32.mrf.mxu0
    %v3545 = vadd.f32 0.0, %v3544
    %3546 = vdwg.mxu0
    %3547 = vmatpush.msra.mxu0 0.0
    %3548 = vmatpush.msra.mxu0 0.0
    %3549 = vmatpush.msra.mxu0 0.0
    %3550 = vmatpush.msra.mxu0 0.0
    %3551 = vmatpush.msra.mxu0 0.0
    %3552 = vmatpush.msra.mxu0 0.0
    %3553 = vmatpush.msra.mxu0 0.0
    %3554 = vmatpush.msra.mxu0 0.0
    %3555 = vmatpush.msra.mxu0 0.0
    %3556 = vmatpush.msra.mxu0 0.0
    %3557 = vmatpush.msra.mxu0 0.0
    %3558 = vmatpush.msra.mxu0 0.0
    %3559 = vmatpush.msra.mxu0 0.0
    %3560 = vmatpush.msra.mxu0 0.0
    %3561 = vmatpush.msra.mxu0 %v3478
    %3562 = vmatpush.msra.mxu0 %v3470
    %3563 = vmatmul.f32.gmra.mxu0 %v3485
    %v3564 = vpop.f32.mrf.mxu0
    %v3565 = vadd.f32 0.0, %v3564
    %3566 = vdwg.mxu0
    %3567 = vmatpush.msra.mxu0 0.0
    %3568 = vmatpush.msra.mxu0 0.0
    %3569 = vmatpush.msra.mxu0 0.0
    %3570 = vmatpush.msra.mxu0 0.0
    %3571 = vmatpush.msra.mxu0 0.0
    %3572 = vmatpush.msra.mxu0 0.0
    %3573 = vmatpush.msra.mxu0 0.0
    %3574 = vmatpush.msra.mxu0 0.0
    %3575 = vmatpush.msra.mxu0 0.0
    %3576 = vmatpush.msra.mxu0 0.0
    %3577 = vmatpush.msra.mxu0 0.0
    %3578 = vmatpush.msra.mxu0 0.0
    %3579 = vmatpush.msra.mxu0 0.0
    %3580 = vmatpush.msra.mxu0 0.0
    %3581 = vmatpush.msra.mxu0 %v3479
    %3582 = vmatpush.msra.mxu0 %v3471
    %3583 = vmatmul.f32.gmra.mxu0 %v3485
    %v3584 = vpop.f32.mrf.mxu0
    %v3585 = vadd.f32 0.0, %v3584
    %3586 = vdwg.mxu0
    %3587 = vmatpush.msra.mxu0 0.0
    %3588 = vmatpush.msra.mxu0 0.0
    %3589 = vmatpush.msra.mxu0 0.0
    %3590 = vmatpush.msra.mxu0 0.0
    %3591 = vmatpush.msra.mxu0 0.0
    %3592 = vmatpush.msra.mxu0 0.0
    %3593 = vmatpush.msra.mxu0 0.0
    %3594 = vmatpush.msra.mxu0 0.0
    %3595 = vmatpush.msra.mxu0 0.0
    %3596 = vmatpush.msra.mxu0 0.0
    %3597 = vmatpush.msra.mxu0 0.0
    %3598 = vmatpush.msra.mxu0 0.0
    %3599 = vmatpush.msra.mxu0 0.0
    %3600 = vmatpush.msra.mxu0 0.0
    %3601 = vmatpush.msra.mxu0 %v3480
    %3602 = vmatpush.msra.mxu0 %v3472
    %3603 = vmatmul.f32.gmra.mxu0 %v3485
    %v3604 = vpop.f32.mrf.mxu0
    %v3605 = vadd.f32 0.0, %v3604
    %3606 = vdwg.mxu0
    %3607 = vmatpush.msra.mxu0 0.0
    %3608 = vmatpush.msra.mxu0 0.0
    %3609 = vmatpush.msra.mxu0 0.0
    %3610 = vmatpush.msra.mxu0 0.0
    %3611 = vmatpush.msra.mxu0 0.0
    %3612 = vmatpush.msra.mxu0 0.0
    %3613 = vmatpush.msra.mxu0 0.0
    %3614 = vmatpush.msra.mxu0 0.0
    %3615 = vmatpush.msra.mxu0 0.0
    %3616 = vmatpush.msra.mxu0 0.0
    %3617 = vmatpush.msra.mxu0 0.0
    %3618 = vmatpush.msra.mxu0 0.0
    %3619 = vmatpush.msra.mxu0 0.0
    %3620 = vmatpush.msra.mxu0 0.0
    %3621 = vmatpush.msra.mxu0 %v3481
    %3622 = vmatpush.msra.mxu0 %v3473
    %3623 = vmatmul.f32.gmra.mxu0 %v3485
    %v3624 = vpop.f32.mrf.mxu0
    %v3625 = vadd.f32 0.0, %v3624
    %3626 = vdwg.mxu0
    %3627 = vmatpush.msra.mxu0 0.0
    %3628 = vmatpush.msra.mxu0 0.0
    %3629 = vmatpush.msra.mxu0 0.0
    %3630 = vmatpush.msra.mxu0 0.0
    %3631 = vmatpush.msra.mxu0 0.0
    %3632 = vmatpush.msra.mxu0 0.0
    %3633 = vmatpush.msra.mxu0 0.0
    %3634 = vmatpush.msra.mxu0 0.0
    %3635 = vmatpush.msra.mxu0 0.0
    %3636 = vmatpush.msra.mxu0 0.0
    %3637 = vmatpush.msra.mxu0 0.0
    %3638 = vmatpush.msra.mxu0 0.0
    %3639 = vmatpush.msra.mxu0 0.0
    %3640 = vmatpush.msra.mxu0 0.0
    %3641 = vmatpush.msra.mxu0 %v3482
    %3642 = vmatpush.msra.mxu0 %v3474
    %3643 = vmatmul.f32.gmra.mxu0 %v3485
    %v3644 = vpop.f32.mrf.mxu0
    %v3645 = vadd.f32 0.0, %v3644
    %3646 = vdwg.mxu0
    %v3647 = vperm.slane %v3505, 0
    %v3648 = vperm.slane %v3525, 0
    %v3649 = vperm.slane %v3545, 0
    %v3650 = vperm.slane %v3565, 0
    %v3651 = vperm.slane %v3585, 0
    %v3652 = vperm.slane %v3605, 0
    %v3653 = vperm.slane %v3625, 0
    %v3654 = vperm.slane %v3645, 0
    %v3655 = vmul.f32 %v2870, %v3647
    %v3656 = vmul.f32 %v2871, %v3648
    %v3657 = vmul.f32 %v2872, %v3649
    %v3658 = vmul.f32 %v2873, %v3650
    %v3659 = vmul.f32 %v2874, %v3651
    %v3660 = vmul.f32 %v2875, %v3652
    %v3661 = vmul.f32 %v2876, %v3653
    %v3662 = vmul.f32 %v2877, %v3654
    %v3664 = vsel %vm3483, %v3466, 0
    %3666 = vmatpush.msra.mxu0 0.0
    %3667 = vmatpush.msra.mxu0 0.0
    %3668 = vmatpush.msra.mxu0 0.0
    %3669 = vmatpush.msra.mxu0 0.0
    %3670 = vmatpush.msra.mxu0 0.0
    %3671 = vmatpush.msra.mxu0 0.0
    %3672 = vmatpush.msra.mxu0 0.0
    %3673 = vmatpush.msra.mxu0 0.0
    %3674 = vmatpush.msra.mxu0 0.0
    %3675 = vmatpush.msra.mxu0 0.0
    %3676 = vmatpush.msra.mxu0 0.0
    %3677 = vmatpush.msra.mxu0 0.0
    %3678 = vmatpush.msra.mxu0 0.0
    %3679 = vmatpush.msra.mxu0 0.0
    %3680 = vmatpush.msra.mxu0 %v3475
    %3681 = vmatpush.msra.mxu0 %v3467
    %3682 = vmatmul.f32.gmra.mxu0 %v3664
    %v3683 = vpop.f32.mrf.mxu0
    %v3684 = vadd.f32 0.0, %v3683
    %3685 = vdwg.mxu0
    %3686 = vmatpush.msra.mxu0 0.0
    %3687 = vmatpush.msra.mxu0 0.0
    %3688 = vmatpush.msra.mxu0 0.0
    %3689 = vmatpush.msra.mxu0 0.0
    %3690 = vmatpush.msra.mxu0 0.0
    %3691 = vmatpush.msra.mxu0 0.0
    %3692 = vmatpush.msra.mxu0 0.0
    %3693 = vmatpush.msra.mxu0 0.0
    %3694 = vmatpush.msra.mxu0 0.0
    %3695 = vmatpush.msra.mxu0 0.0
    %3696 = vmatpush.msra.mxu0 0.0
    %3697 = vmatpush.msra.mxu0 0.0
    %3698 = vmatpush.msra.mxu0 0.0
    %3699 = vmatpush.msra.mxu0 0.0
    %3700 = vmatpush.msra.mxu0 %v3476
    %3701 = vmatpush.msra.mxu0 %v3468
    %3702 = vmatmul.f32.gmra.mxu0 %v3664
    %v3703 = vpop.f32.mrf.mxu0
    %v3704 = vadd.f32 0.0, %v3703
    %3705 = vdwg.mxu0
    %3706 = vmatpush.msra.mxu0 0.0
    %3707 = vmatpush.msra.mxu0 0.0
    %3708 = vmatpush.msra.mxu0 0.0
    %3709 = vmatpush.msra.mxu0 0.0
    %3710 = vmatpush.msra.mxu0 0.0
    %3711 = vmatpush.msra.mxu0 0.0
    %3712 = vmatpush.msra.mxu0 0.0
    %3713 = vmatpush.msra.mxu0 0.0
    %3714 = vmatpush.msra.mxu0 0.0
    %3715 = vmatpush.msra.mxu0 0.0
    %3716 = vmatpush.msra.mxu0 0.0
    %3717 = vmatpush.msra.mxu0 0.0
    %3718 = vmatpush.msra.mxu0 0.0
    %3719 = vmatpush.msra.mxu0 0.0
    %3720 = vmatpush.msra.mxu0 %v3477
    %3721 = vmatpush.msra.mxu0 %v3469
    %3722 = vmatmul.f32.gmra.mxu0 %v3664
    %v3723 = vpop.f32.mrf.mxu0
    %v3724 = vadd.f32 0.0, %v3723
    %3725 = vdwg.mxu0
    %3726 = vmatpush.msra.mxu0 0.0
    %3727 = vmatpush.msra.mxu0 0.0
    %3728 = vmatpush.msra.mxu0 0.0
    %3729 = vmatpush.msra.mxu0 0.0
    %3730 = vmatpush.msra.mxu0 0.0
    %3731 = vmatpush.msra.mxu0 0.0
    %3732 = vmatpush.msra.mxu0 0.0
    %3733 = vmatpush.msra.mxu0 0.0
    %3734 = vmatpush.msra.mxu0 0.0
    %3735 = vmatpush.msra.mxu0 0.0
    %3736 = vmatpush.msra.mxu0 0.0
    %3737 = vmatpush.msra.mxu0 0.0
    %3738 = vmatpush.msra.mxu0 0.0
    %3739 = vmatpush.msra.mxu0 0.0
    %3740 = vmatpush.msra.mxu0 %v3478
    %3741 = vmatpush.msra.mxu0 %v3470
    %3742 = vmatmul.f32.gmra.mxu0 %v3664
    %v3743 = vpop.f32.mrf.mxu0
    %v3744 = vadd.f32 0.0, %v3743
    %3745 = vdwg.mxu0
    %3746 = vmatpush.msra.mxu0 0.0
    %3747 = vmatpush.msra.mxu0 0.0
    %3748 = vmatpush.msra.mxu0 0.0
    %3749 = vmatpush.msra.mxu0 0.0
    %3750 = vmatpush.msra.mxu0 0.0
    %3751 = vmatpush.msra.mxu0 0.0
    %3752 = vmatpush.msra.mxu0 0.0
    %3753 = vmatpush.msra.mxu0 0.0
    %3754 = vmatpush.msra.mxu0 0.0
    %3755 = vmatpush.msra.mxu0 0.0
    %3756 = vmatpush.msra.mxu0 0.0
    %3757 = vmatpush.msra.mxu0 0.0
    %3758 = vmatpush.msra.mxu0 0.0
    %3759 = vmatpush.msra.mxu0 0.0
    %3760 = vmatpush.msra.mxu0 %v3479
    %3761 = vmatpush.msra.mxu0 %v3471
    %3762 = vmatmul.f32.gmra.mxu0 %v3664
    %v3763 = vpop.f32.mrf.mxu0
    %v3764 = vadd.f32 0.0, %v3763
    %3765 = vdwg.mxu0
    %3766 = vmatpush.msra.mxu0 0.0
    %3767 = vmatpush.msra.mxu0 0.0
    %3768 = vmatpush.msra.mxu0 0.0
    %3769 = vmatpush.msra.mxu0 0.0
    %3770 = vmatpush.msra.mxu0 0.0
    %3771 = vmatpush.msra.mxu0 0.0
    %3772 = vmatpush.msra.mxu0 0.0
    %3773 = vmatpush.msra.mxu0 0.0
    %3774 = vmatpush.msra.mxu0 0.0
    %3775 = vmatpush.msra.mxu0 0.0
    %3776 = vmatpush.msra.mxu0 0.0
    %3777 = vmatpush.msra.mxu0 0.0
    %3778 = vmatpush.msra.mxu0 0.0
    %3779 = vmatpush.msra.mxu0 0.0
    %3780 = vmatpush.msra.mxu0 %v3480
    %3781 = vmatpush.msra.mxu0 %v3472
    %3782 = vmatmul.f32.gmra.mxu0 %v3664
    %v3783 = vpop.f32.mrf.mxu0
    %v3784 = vadd.f32 0.0, %v3783
    %3785 = vdwg.mxu0
    %3786 = vmatpush.msra.mxu0 0.0
    %3787 = vmatpush.msra.mxu0 0.0
    %3788 = vmatpush.msra.mxu0 0.0
    %3789 = vmatpush.msra.mxu0 0.0
    %3790 = vmatpush.msra.mxu0 0.0
    %3791 = vmatpush.msra.mxu0 0.0
    %3792 = vmatpush.msra.mxu0 0.0
    %3793 = vmatpush.msra.mxu0 0.0
    %3794 = vmatpush.msra.mxu0 0.0
    %3795 = vmatpush.msra.mxu0 0.0
    %3796 = vmatpush.msra.mxu0 0.0
    %3797 = vmatpush.msra.mxu0 0.0
    %3798 = vmatpush.msra.mxu0 0.0
    %3799 = vmatpush.msra.mxu0 0.0
    %3800 = vmatpush.msra.mxu0 %v3481
    %3801 = vmatpush.msra.mxu0 %v3473
    %3802 = vmatmul.f32.gmra.mxu0 %v3664
    %v3803 = vpop.f32.mrf.mxu0
    %v3804 = vadd.f32 0.0, %v3803
    %3805 = vdwg.mxu0
    %3806 = vmatpush.msra.mxu0 0.0
    %3807 = vmatpush.msra.mxu0 0.0
    %3808 = vmatpush.msra.mxu0 0.0
    %3809 = vmatpush.msra.mxu0 0.0
    %3810 = vmatpush.msra.mxu0 0.0
    %3811 = vmatpush.msra.mxu0 0.0
    %3812 = vmatpush.msra.mxu0 0.0
    %3813 = vmatpush.msra.mxu0 0.0
    %3814 = vmatpush.msra.mxu0 0.0
    %3815 = vmatpush.msra.mxu0 0.0
    %3816 = vmatpush.msra.mxu0 0.0
    %3817 = vmatpush.msra.mxu0 0.0
    %3818 = vmatpush.msra.mxu0 0.0
    %3819 = vmatpush.msra.mxu0 0.0
    %3820 = vmatpush.msra.mxu0 %v3482
    %3821 = vmatpush.msra.mxu0 %v3474
    %3822 = vmatmul.f32.gmra.mxu0 %v3664
    %v3823 = vpop.f32.mrf.mxu0
    %v3824 = vadd.f32 0.0, %v3823
    %3825 = vdwg.mxu0
    %v3826 = vperm.slane %v3684, 0
    %v3827 = vperm.slane %v3704, 0
    %v3828 = vperm.slane %v3724, 0
    %v3829 = vperm.slane %v3744, 0
    %v3830 = vperm.slane %v3764, 0
    %v3831 = vperm.slane %v3784, 0
    %v3832 = vperm.slane %v3804, 0
    %v3833 = vperm.slane %v3824, 0
    %v3834 = vadd.f32 %v3655, %v3826
    %v3835 = vadd.f32 %v3656, %v3827
    %v3836 = vadd.f32 %v3657, %v3828
    %v3837 = vadd.f32 %v3658, %v3829
    %v3838 = vadd.f32 %v3659, %v3830
    %v3839 = vadd.f32 %v3660, %v3831
    %v3840 = vadd.f32 %v3661, %v3832
    %v3841 = vadd.f32 %v3662, %v3833
    %v3842 = vmul.f32 %v3834, 0.01
    %v3843 = vmul.f32 %v3835, 0.01
    %v3844 = vmul.f32 %v3836, 0.01
    %v3845 = vmul.f32 %v3837, 0.01
    %v3846 = vmul.f32 %v3838, 0.01
    %v3847 = vmul.f32 %v3839, 0.01
    %v3848 = vmul.f32 %v3840, 0.01
    %v3849 = vmul.f32 %v3841, 0.01
    %v3850 = vmax.f32 %v3834, %v3842
    %v3851 = vmax.f32 %v3835, %v3843
    %v3852 = vmax.f32 %v3836, %v3844
    %v3853 = vmax.f32 %v3837, %v3845
    %v3854 = vmax.f32 %v3838, %v3846
    %v3855 = vmax.f32 %v3839, %v3847
    %v3856 = vmax.f32 %v3840, %v3848
    %v3857 = vmax.f32 %v3841, %v3849
    %v3858 = vld [vmem:[#allocation11] sm:$0xff]
    %v3859 = vld [vmem:[#allocation11 + $0x8] sm:$0xff]
    %v3860 = vld [vmem:[#allocation11 + $0x10] sm:$0xff]
    %v3861 = vld [vmem:[#allocation11 + $0x18] sm:$0xff]
    %v3862 = vld [vmem:[#allocation11 + $0x20] sm:$0xff]
    %v3863 = vld [vmem:[#allocation11 + $0x28] sm:$0xff]
    %v3864 = vld [vmem:[#allocation11 + $0x30] sm:$0xff]
    %v3865 = vld [vmem:[#allocation11 + $0x38] sm:$0xff]
    %v3866 = vld [vmem:[#allocation11 + $0x40] sm:$0xff]
    %v3867 = vld [vmem:[#allocation11 + $0x48] sm:$0xff]
    %v3868 = vld [vmem:[#allocation11 + $0x50] sm:$0xff]
    %v3869 = vld [vmem:[#allocation11 + $0x58] sm:$0xff]
    %v3870 = vld [vmem:[#allocation11 + $0x60] sm:$0xff]
    %v3871 = vld [vmem:[#allocation11 + $0x68] sm:$0xff]
    %v3872 = vld [vmem:[#allocation11 + $0x70] sm:$0xff]
    %v3873 = vld [vmem:[#allocation11 + $0x78] sm:$0xff]
    %v3874 = vld [vmem:[#allocation11 + $0x80] sm:$0xff]
    %v3875 = vld [vmem:[#allocation11 + $0x88] sm:$0xff]
    %v3876 = vld [vmem:[#allocation11 + $0x90] sm:$0xff]
    %v3877 = vld [vmem:[#allocation11 + $0x98] sm:$0xff]
    %v3878 = vld [vmem:[#allocation11 + $0xa0] sm:$0xff]
    %v3879 = vld [vmem:[#allocation11 + $0xa8] sm:$0xff]
    %v3880 = vld [vmem:[#allocation11 + $0xb0] sm:$0xff]
    %v3881 = vld [vmem:[#allocation11 + $0xb8] sm:$0xff]
    %v3882 = vld [vmem:[#allocation11 + $0xc0] sm:$0xff]
    %v3883 = vld [vmem:[#allocation11 + $0xc8] sm:$0xff]
    %v3884 = vld [vmem:[#allocation11 + $0xd0] sm:$0xff]
    %v3885 = vld [vmem:[#allocation11 + $0xd8] sm:$0xff]
    %v3886 = vld [vmem:[#allocation11 + $0xe0] sm:$0xff]
    %v3887 = vld [vmem:[#allocation11 + $0xe8] sm:$0xff]
    %v3888 = vld [vmem:[#allocation11 + $0xf0] sm:$0xff]
    %v3889 = vld [vmem:[#allocation11 + $0xf8] sm:$0xff]
    %v3890 = vld [vmem:[#allocation11 + $0x100] sm:$0xff]
    %v3891 = vld [vmem:[#allocation11 + $0x108] sm:$0xff]
    %v3892 = vld [vmem:[#allocation11 + $0x110] sm:$0xff]
    %v3893 = vld [vmem:[#allocation11 + $0x118] sm:$0xff]
    %v3894 = vld [vmem:[#allocation11 + $0x120] sm:$0xff]
    %v3895 = vld [vmem:[#allocation11 + $0x128] sm:$0xff]
    %v3896 = vld [vmem:[#allocation11 + $0x130] sm:$0xff]
    %v3897 = vld [vmem:[#allocation11 + $0x138] sm:$0xff]
    %v3898 = vld [vmem:[#allocation11 + $0x140] sm:$0xff]
    %v3899 = vld [vmem:[#allocation11 + $0x148] sm:$0xff]
    %v3900 = vld [vmem:[#allocation11 + $0x150] sm:$0xff]
    %v3901 = vld [vmem:[#allocation11 + $0x158] sm:$0xff]
    %v3902 = vld [vmem:[#allocation11 + $0x160] sm:$0xff]
    %v3903 = vld [vmem:[#allocation11 + $0x168] sm:$0xff]
    %v3904 = vld [vmem:[#allocation11 + $0x170] sm:$0xff]
    %v3905 = vld [vmem:[#allocation11 + $0x178] sm:$0xff]
    %v3906 = vld [vmem:[#allocation11 + $0x180] sm:$0xff]
    %v3907 = vld [vmem:[#allocation11 + $0x188] sm:$0xff]
    %v3908 = vld [vmem:[#allocation11 + $0x190] sm:$0xff]
    %v3909 = vld [vmem:[#allocation11 + $0x198] sm:$0xff]
    %v3910 = vld [vmem:[#allocation11 + $0x1a0] sm:$0xff]
    %v3911 = vld [vmem:[#allocation11 + $0x1a8] sm:$0xff]
    %v3912 = vld [vmem:[#allocation11 + $0x1b0] sm:$0xff]
    %v3913 = vld [vmem:[#allocation11 + $0x1b8] sm:$0xff]
    %v3914 = vld [vmem:[#allocation11 + $0x1c0] sm:$0xff]
    %v3915 = vld [vmem:[#allocation11 + $0x1c8] sm:$0xff]
    %v3916 = vld [vmem:[#allocation11 + $0x1d0] sm:$0xff]
    %v3917 = vld [vmem:[#allocation11 + $0x1d8] sm:$0xff]
    %v3918 = vld [vmem:[#allocation11 + $0x1e0] sm:$0xff]
    %v3919 = vld [vmem:[#allocation11 + $0x1e8] sm:$0xff]
    %v3920 = vld [vmem:[#allocation11 + $0x1f0] sm:$0xff]
    %v3921 = vld [vmem:[#allocation11 + $0x1f8] sm:$0xff]
    %v3922 = vld [vmem:[#allocation11 + $0x200] sm:$0xff]
    %v3923 = vld [vmem:[#allocation11 + $0x208] sm:$0xff]
    %v3924 = vld [vmem:[#allocation11 + $0x210] sm:$0xff]
    %v3925 = vld [vmem:[#allocation11 + $0x218] sm:$0xff]
    %v3926 = vld [vmem:[#allocation11 + $0x220] sm:$0xff]
    %v3927 = vld [vmem:[#allocation11 + $0x228] sm:$0xff]
    %v3928 = vld [vmem:[#allocation11 + $0x230] sm:$0xff]
    %v3929 = vld [vmem:[#allocation11 + $0x238] sm:$0xff]
    %v3930 = vld [vmem:[#allocation11 + $0x240] sm:$0xff]
    %v3931 = vld [vmem:[#allocation11 + $0x248] sm:$0xff]
    %v3932 = vld [vmem:[#allocation11 + $0x250] sm:$0xff]
    %v3933 = vld [vmem:[#allocation11 + $0x258] sm:$0xff]
    %v3934 = vld [vmem:[#allocation11 + $0x260] sm:$0xff]
    %v3935 = vld [vmem:[#allocation11 + $0x268] sm:$0xff]
    %v3936 = vld [vmem:[#allocation11 + $0x270] sm:$0xff]
    %v3937 = vld [vmem:[#allocation11 + $0x278] sm:$0xff]
    %v3938 = vld [vmem:[#allocation11 + $0x280] sm:$0xff]
    %v3939 = vld [vmem:[#allocation11 + $0x288] sm:$0xff]
    %v3940 = vld [vmem:[#allocation11 + $0x290] sm:$0xff]
    %v3941 = vld [vmem:[#allocation11 + $0x298] sm:$0xff]
    %v3942 = vld [vmem:[#allocation11 + $0x2a0] sm:$0xff]
    %v3943 = vld [vmem:[#allocation11 + $0x2a8] sm:$0xff]
    %v3944 = vld [vmem:[#allocation11 + $0x2b0] sm:$0xff]
    %v3945 = vld [vmem:[#allocation11 + $0x2b8] sm:$0xff]
    %v3946 = vld [vmem:[#allocation11 + $0x2c0] sm:$0xff]
    %v3947 = vld [vmem:[#allocation11 + $0x2c8] sm:$0xff]
    %v3948 = vld [vmem:[#allocation11 + $0x2d0] sm:$0xff]
    %v3949 = vld [vmem:[#allocation11 + $0x2d8] sm:$0xff]
    %v3950 = vld [vmem:[#allocation11 + $0x2e0] sm:$0xff]
    %v3951 = vld [vmem:[#allocation11 + $0x2e8] sm:$0xff]
    %v3952 = vld [vmem:[#allocation11 + $0x2f0] sm:$0xff]
    %v3953 = vld [vmem:[#allocation11 + $0x2f8] sm:$0xff]
    %v3954 = vld [vmem:[#allocation11 + $0x300] sm:$0xff]
    %v3955 = vld [vmem:[#allocation11 + $0x308] sm:$0xff]
    %v3956 = vld [vmem:[#allocation11 + $0x310] sm:$0xff]
    %v3957 = vld [vmem:[#allocation11 + $0x318] sm:$0xff]
    %v3958 = vld [vmem:[#allocation11 + $0x320] sm:$0xff]
    %v3959 = vld [vmem:[#allocation11 + $0x328] sm:$0xff]
    %v3960 = vld [vmem:[#allocation11 + $0x330] sm:$0xff]
    %v3961 = vld [vmem:[#allocation11 + $0x338] sm:$0xff]
    %v3962 = vld [vmem:[#allocation11 + $0x340] sm:$0xff]
    %v3963 = vld [vmem:[#allocation11 + $0x348] sm:$0xff]
    %v3964 = vld [vmem:[#allocation11 + $0x350] sm:$0xff]
    %v3965 = vld [vmem:[#allocation11 + $0x358] sm:$0xff]
    %v3966 = vld [vmem:[#allocation11 + $0x360] sm:$0xff]
    %v3967 = vld [vmem:[#allocation11 + $0x368] sm:$0xff]
    %v3968 = vld [vmem:[#allocation11 + $0x370] sm:$0xff]
    %v3969 = vld [vmem:[#allocation11 + $0x378] sm:$0xff]
    %v3970 = vld [vmem:[#allocation11 + $0x380] sm:$0xff]
    %v3971 = vld [vmem:[#allocation11 + $0x388] sm:$0xff]
    %v3972 = vld [vmem:[#allocation11 + $0x390] sm:$0xff]
    %v3973 = vld [vmem:[#allocation11 + $0x398] sm:$0xff]
    %v3974 = vld [vmem:[#allocation11 + $0x3a0] sm:$0xff]
    %v3975 = vld [vmem:[#allocation11 + $0x3a8] sm:$0xff]
    %v3976 = vld [vmem:[#allocation11 + $0x3b0] sm:$0xff]
    %v3977 = vld [vmem:[#allocation11 + $0x3b8] sm:$0xff]
    %v3978 = vld [vmem:[#allocation11 + $0x3c0] sm:$0xff]
    %v3979 = vld [vmem:[#allocation11 + $0x3c8] sm:$0xff]
    %v3980 = vld [vmem:[#allocation11 + $0x3d0] sm:$0xff]
    %v3981 = vld [vmem:[#allocation11 + $0x3d8] sm:$0xff]
    %v3982 = vld [vmem:[#allocation11 + $0x3e0] sm:$0xff]
    %v3983 = vld [vmem:[#allocation11 + $0x3e8] sm:$0xff]
    %v3984 = vld [vmem:[#allocation11 + $0x3f0] sm:$0xff]
    %v3985 = vld [vmem:[#allocation11 + $0x3f8] sm:$0xff]
    %v3986 = vld [vmem:[#allocation11 + $0x400] sm:$0xff]
    %v3987 = vld [vmem:[#allocation11 + $0x408] sm:$0xff]
    %v3988 = vld [vmem:[#allocation11 + $0x410] sm:$0xff]
    %v3989 = vld [vmem:[#allocation11 + $0x418] sm:$0xff]
    %v3990 = vld [vmem:[#allocation11 + $0x420] sm:$0xff]
    %v3991 = vld [vmem:[#allocation11 + $0x428] sm:$0xff]
    %v3992 = vld [vmem:[#allocation11 + $0x430] sm:$0xff]
    %v3993 = vld [vmem:[#allocation11 + $0x438] sm:$0xff]
    %v3994 = vld [vmem:[#allocation11 + $0x440] sm:$0xff]
    %v3995 = vld [vmem:[#allocation11 + $0x448] sm:$0xff]
    %v3996 = vld [vmem:[#allocation11 + $0x450] sm:$0xff]
    %v3997 = vld [vmem:[#allocation11 + $0x458] sm:$0xff]
    %v3998 = vld [vmem:[#allocation11 + $0x460] sm:$0xff]
    %v3999 = vld [vmem:[#allocation11 + $0x468] sm:$0xff]
    %v4000 = vld [vmem:[#allocation11 + $0x470] sm:$0xff]
    %v4001 = vld [vmem:[#allocation11 + $0x478] sm:$0xff]
    %v4002 = vld [vmem:[#allocation11 + $0x480] sm:$0xff]
    %v4003 = vld [vmem:[#allocation11 + $0x488] sm:$0xff]
    %v4004 = vld [vmem:[#allocation11 + $0x490] sm:$0xff]
    %v4005 = vld [vmem:[#allocation11 + $0x498] sm:$0xff]
    %v4006 = vld [vmem:[#allocation11 + $0x4a0] sm:$0xff]
    %v4007 = vld [vmem:[#allocation11 + $0x4a8] sm:$0xff]
    %v4008 = vld [vmem:[#allocation11 + $0x4b0] sm:$0xff]
    %v4009 = vld [vmem:[#allocation11 + $0x4b8] sm:$0xff]
    %v4010 = vld [vmem:[#allocation11 + $0x4c0] sm:$0xff]
    %v4011 = vld [vmem:[#allocation11 + $0x4c8] sm:$0xff]
    %v4012 = vld [vmem:[#allocation11 + $0x4d0] sm:$0xff]
    %v4013 = vld [vmem:[#allocation11 + $0x4d8] sm:$0xff]
    %v4014 = vld [vmem:[#allocation11 + $0x4e0] sm:$0xff]
    %v4015 = vld [vmem:[#allocation11 + $0x4e8] sm:$0xff]
    %v4016 = vld [vmem:[#allocation11 + $0x4f0] sm:$0xff]
    %v4017 = vld [vmem:[#allocation11 + $0x4f8] sm:$0xff]
    %v4018 = vld [vmem:[#allocation11 + $0x500] sm:$0xff]
    %v4019 = vld [vmem:[#allocation11 + $0x508] sm:$0xff]
    %v4020 = vld [vmem:[#allocation11 + $0x510] sm:$0xff]
    %v4021 = vld [vmem:[#allocation11 + $0x518] sm:$0xff]
    %v4022 = vld [vmem:[#allocation11 + $0x520] sm:$0xff]
    %v4023 = vld [vmem:[#allocation11 + $0x528] sm:$0xff]
    %v4024 = vld [vmem:[#allocation11 + $0x530] sm:$0xff]
    %v4025 = vld [vmem:[#allocation11 + $0x538] sm:$0xff]
    %v4026 = vld [vmem:[#allocation11 + $0x540] sm:$0xff]
    %v4027 = vld [vmem:[#allocation11 + $0x548] sm:$0xff]
    %v4028 = vld [vmem:[#allocation11 + $0x550] sm:$0xff]
    %v4029 = vld [vmem:[#allocation11 + $0x558] sm:$0xff]
    %v4030 = vld [vmem:[#allocation11 + $0x560] sm:$0xff]
    %v4031 = vld [vmem:[#allocation11 + $0x568] sm:$0xff]
    %v4032 = vld [vmem:[#allocation11 + $0x570] sm:$0xff]
    %v4033 = vld [vmem:[#allocation11 + $0x578] sm:$0xff]
    %v4034 = vld [vmem:[#allocation11 + $0x580] sm:$0xff]
    %v4035 = vld [vmem:[#allocation11 + $0x588] sm:$0xff]
    %v4036 = vld [vmem:[#allocation11 + $0x590] sm:$0xff]
    %v4037 = vld [vmem:[#allocation11 + $0x598] sm:$0xff]
    %v4038 = vld [vmem:[#allocation11 + $0x5a0] sm:$0xff]
    %v4039 = vld [vmem:[#allocation11 + $0x5a8] sm:$0xff]
    %v4040 = vld [vmem:[#allocation11 + $0x5b0] sm:$0xff]
    %v4041 = vld [vmem:[#allocation11 + $0x5b8] sm:$0xff]
    %v4042 = vld [vmem:[#allocation11 + $0x5c0] sm:$0xff]
    %v4043 = vld [vmem:[#allocation11 + $0x5c8] sm:$0xff]
    %v4044 = vld [vmem:[#allocation11 + $0x5d0] sm:$0xff]
    %v4045 = vld [vmem:[#allocation11 + $0x5d8] sm:$0xff]
    %v4046 = vld [vmem:[#allocation11 + $0x5e0] sm:$0xff]
    %v4047 = vld [vmem:[#allocation11 + $0x5e8] sm:$0xff]
    %v4048 = vld [vmem:[#allocation11 + $0x5f0] sm:$0xff]
    %v4049 = vld [vmem:[#allocation11 + $0x5f8] sm:$0xff]
    %v4050 = vld [vmem:[#allocation11 + $0x600] sm:$0xff]
    %v4051 = vld [vmem:[#allocation11 + $0x608] sm:$0xff]
    %v4052 = vld [vmem:[#allocation11 + $0x610] sm:$0xff]
    %v4053 = vld [vmem:[#allocation11 + $0x618] sm:$0xff]
    %v4054 = vld [vmem:[#allocation11 + $0x620] sm:$0xff]
    %v4055 = vld [vmem:[#allocation11 + $0x628] sm:$0xff]
    %v4056 = vld [vmem:[#allocation11 + $0x630] sm:$0xff]
    %v4057 = vld [vmem:[#allocation11 + $0x638] sm:$0xff]
    %v4058 = vld [vmem:[#allocation11 + $0x640] sm:$0xff]
    %v4059 = vld [vmem:[#allocation11 + $0x648] sm:$0xff]
    %v4060 = vld [vmem:[#allocation11 + $0x650] sm:$0xff]
    %v4061 = vld [vmem:[#allocation11 + $0x658] sm:$0xff]
    %v4062 = vld [vmem:[#allocation11 + $0x660] sm:$0xff]
    %v4063 = vld [vmem:[#allocation11 + $0x668] sm:$0xff]
    %v4064 = vld [vmem:[#allocation11 + $0x670] sm:$0xff]
    %v4065 = vld [vmem:[#allocation11 + $0x678] sm:$0xff]
    %v4066 = vld [vmem:[#allocation11 + $0x680] sm:$0xff]
    %v4067 = vld [vmem:[#allocation11 + $0x688] sm:$0xff]
    %v4068 = vld [vmem:[#allocation11 + $0x690] sm:$0xff]
    %v4069 = vld [vmem:[#allocation11 + $0x698] sm:$0xff]
    %v4070 = vld [vmem:[#allocation11 + $0x6a0] sm:$0xff]
    %v4071 = vld [vmem:[#allocation11 + $0x6a8] sm:$0xff]
    %v4072 = vld [vmem:[#allocation11 + $0x6b0] sm:$0xff]
    %v4073 = vld [vmem:[#allocation11 + $0x6b8] sm:$0xff]
    %v4074 = vld [vmem:[#allocation11 + $0x6c0] sm:$0xff]
    %v4075 = vld [vmem:[#allocation11 + $0x6c8] sm:$0xff]
    %v4076 = vld [vmem:[#allocation11 + $0x6d0] sm:$0xff]
    %v4077 = vld [vmem:[#allocation11 + $0x6d8] sm:$0xff]
    %v4078 = vld [vmem:[#allocation11 + $0x6e0] sm:$0xff]
    %v4079 = vld [vmem:[#allocation11 + $0x6e8] sm:$0xff]
    %v4080 = vld [vmem:[#allocation11 + $0x6f0] sm:$0xff]
    %v4081 = vld [vmem:[#allocation11 + $0x6f8] sm:$0xff]
    %v4082 = vld [vmem:[#allocation11 + $0x700] sm:$0xff]
    %v4083 = vld [vmem:[#allocation11 + $0x708] sm:$0xff]
    %v4084 = vld [vmem:[#allocation11 + $0x710] sm:$0xff]
    %v4085 = vld [vmem:[#allocation11 + $0x718] sm:$0xff]
    %v4086 = vld [vmem:[#allocation11 + $0x720] sm:$0xff]
    %v4087 = vld [vmem:[#allocation11 + $0x728] sm:$0xff]
    %v4088 = vld [vmem:[#allocation11 + $0x730] sm:$0xff]
    %v4089 = vld [vmem:[#allocation11 + $0x738] sm:$0xff]
    %v4090 = vld [vmem:[#allocation11 + $0x740] sm:$0xff]
    %v4091 = vld [vmem:[#allocation11 + $0x748] sm:$0xff]
    %v4092 = vld [vmem:[#allocation11 + $0x750] sm:$0xff]
    %v4093 = vld [vmem:[#allocation11 + $0x758] sm:$0xff]
    %v4094 = vld [vmem:[#allocation11 + $0x760] sm:$0xff]
    %v4095 = vld [vmem:[#allocation11 + $0x768] sm:$0xff]
    %v4096 = vld [vmem:[#allocation11 + $0x770] sm:$0xff]
    %v4097 = vld [vmem:[#allocation11 + $0x778] sm:$0xff]
    %v4098 = vld [vmem:[#allocation11 + $0x780] sm:$0xff]
    %v4099 = vld [vmem:[#allocation11 + $0x788] sm:$0xff]
    %v4100 = vld [vmem:[#allocation11 + $0x790] sm:$0xff]
    %v4101 = vld [vmem:[#allocation11 + $0x798] sm:$0xff]
    %v4102 = vld [vmem:[#allocation11 + $0x7a0] sm:$0xff]
    %v4103 = vld [vmem:[#allocation11 + $0x7a8] sm:$0xff]
    %v4104 = vld [vmem:[#allocation11 + $0x7b0] sm:$0xff]
    %v4105 = vld [vmem:[#allocation11 + $0x7b8] sm:$0xff]
    %v4106 = vld [vmem:[#allocation11 + $0x7c0] sm:$0xff]
    %v4107 = vld [vmem:[#allocation11 + $0x7c8] sm:$0xff]
    %v4108 = vld [vmem:[#allocation11 + $0x7d0] sm:$0xff]
    %v4109 = vld [vmem:[#allocation11 + $0x7d8] sm:$0xff]
    %v4110 = vld [vmem:[#allocation11 + $0x7e0] sm:$0xff]
    %v4111 = vld [vmem:[#allocation11 + $0x7e8] sm:$0xff]
    %v4112 = vld [vmem:[#allocation11 + $0x7f0] sm:$0xff]
    %v4113 = vld [vmem:[#allocation11 + $0x7f8] sm:$0xff]
    %v4114 = vld [vmem:[#allocation11 + $0x800] sm:$0xff]
    %v4115 = vld [vmem:[#allocation11 + $0x808] sm:$0xff]
    %v4116 = vld [vmem:[#allocation11 + $0x810] sm:$0xff]
    %v4117 = vld [vmem:[#allocation11 + $0x818] sm:$0xff]
    %v4118 = vld [vmem:[#allocation11 + $0x820] sm:$0xff]
    %v4119 = vld [vmem:[#allocation11 + $0x828] sm:$0xff]
    %v4120 = vld [vmem:[#allocation11 + $0x830] sm:$0xff]
    %v4121 = vld [vmem:[#allocation11 + $0x838] sm:$0xff]
    %v4122 = vld [vmem:[#allocation11 + $0x840] sm:$0xff]
    %v4123 = vld [vmem:[#allocation11 + $0x848] sm:$0xff]
    %v4124 = vld [vmem:[#allocation11 + $0x850] sm:$0xff]
    %v4125 = vld [vmem:[#allocation11 + $0x858] sm:$0xff]
    %v4126 = vld [vmem:[#allocation11 + $0x860] sm:$0xff]
    %v4127 = vld [vmem:[#allocation11 + $0x868] sm:$0xff]
    %v4128 = vld [vmem:[#allocation11 + $0x870] sm:$0xff]
    %v4129 = vld [vmem:[#allocation11 + $0x878] sm:$0xff]
    %v4130 = vld [vmem:[#allocation11 + $0x880] sm:$0xff]
    %v4131 = vld [vmem:[#allocation11 + $0x888] sm:$0xff]
    %v4132 = vld [vmem:[#allocation11 + $0x890] sm:$0xff]
    %v4133 = vld [vmem:[#allocation11 + $0x898] sm:$0xff]
    %v4134 = vld [vmem:[#allocation11 + $0x8a0] sm:$0xff]
    %v4135 = vld [vmem:[#allocation11 + $0x8a8] sm:$0xff]
    %v4136 = vld [vmem:[#allocation11 + $0x8b0] sm:$0xff]
    %v4137 = vld [vmem:[#allocation11 + $0x8b8] sm:$0xff]
    %v4138 = vld [vmem:[#allocation11 + $0x8c0] sm:$0xff]
    %v4139 = vld [vmem:[#allocation11 + $0x8c8] sm:$0xff]
    %v4140 = vld [vmem:[#allocation11 + $0x8d0] sm:$0xff]
    %v4141 = vld [vmem:[#allocation11 + $0x8d8] sm:$0xff]
    %v4142 = vld [vmem:[#allocation11 + $0x8e0] sm:$0xff]
    %v4143 = vld [vmem:[#allocation11 + $0x8e8] sm:$0xff]
    %v4144 = vld [vmem:[#allocation11 + $0x8f0] sm:$0xff]
    %v4145 = vld [vmem:[#allocation11 + $0x8f8] sm:$0xff]
    %v4146 = vld [vmem:[#allocation11 + $0x900] sm:$0xff]
    %v4147 = vld [vmem:[#allocation11 + $0x908] sm:$0xff]
    %v4148 = vld [vmem:[#allocation11 + $0x910] sm:$0xff]
    %v4149 = vld [vmem:[#allocation11 + $0x918] sm:$0xff]
    %v4150 = vld [vmem:[#allocation11 + $0x920] sm:$0xff]
    %v4151 = vld [vmem:[#allocation11 + $0x928] sm:$0xff]
    %v4152 = vld [vmem:[#allocation11 + $0x930] sm:$0xff]
    %v4153 = vld [vmem:[#allocation11 + $0x938] sm:$0xff]
    %v4154 = vld [vmem:[#allocation11 + $0x940] sm:$0xff]
    %v4155 = vld [vmem:[#allocation11 + $0x948] sm:$0xff]
    %v4156 = vld [vmem:[#allocation11 + $0x950] sm:$0xff]
    %v4157 = vld [vmem:[#allocation11 + $0x958] sm:$0xff]
    %v4158 = vld [vmem:[#allocation11 + $0x960] sm:$0xff]
    %v4159 = vld [vmem:[#allocation11 + $0x968] sm:$0xff]
    %v4160 = vld [vmem:[#allocation11 + $0x970] sm:$0xff]
    %v4161 = vld [vmem:[#allocation11 + $0x978] sm:$0xff]
    %v4162 = vld [vmem:[#allocation11 + $0x980] sm:$0xff]
    %v4163 = vld [vmem:[#allocation11 + $0x988] sm:$0xff]
    %v4164 = vld [vmem:[#allocation11 + $0x990] sm:$0xff]
    %v4165 = vld [vmem:[#allocation11 + $0x998] sm:$0xff]
    %v4166 = vld [vmem:[#allocation11 + $0x9a0] sm:$0xff]
    %v4167 = vld [vmem:[#allocation11 + $0x9a8] sm:$0xff]
    %v4168 = vld [vmem:[#allocation11 + $0x9b0] sm:$0xff]
    %v4169 = vld [vmem:[#allocation11 + $0x9b8] sm:$0xff]
    %v4170 = vld [vmem:[#allocation11 + $0x9c0] sm:$0xff]
    %v4171 = vld [vmem:[#allocation11 + $0x9c8] sm:$0xff]
    %v4172 = vld [vmem:[#allocation11 + $0x9d0] sm:$0xff]
    %v4173 = vld [vmem:[#allocation11 + $0x9d8] sm:$0xff]
    %v4174 = vld [vmem:[#allocation11 + $0x9e0] sm:$0xff]
    %v4175 = vld [vmem:[#allocation11 + $0x9e8] sm:$0xff]
    %v4176 = vld [vmem:[#allocation11 + $0x9f0] sm:$0xff]
    %v4177 = vld [vmem:[#allocation11 + $0x9f8] sm:$0xff]
    %v4178 = vld [vmem:[#allocation11 + $0xa00] sm:$0xff]
    %v4179 = vld [vmem:[#allocation11 + $0xa08] sm:$0xff]
    %v4180 = vld [vmem:[#allocation11 + $0xa10] sm:$0xff]
    %v4181 = vld [vmem:[#allocation11 + $0xa18] sm:$0xff]
    %v4182 = vld [vmem:[#allocation11 + $0xa20] sm:$0xff]
    %v4183 = vld [vmem:[#allocation11 + $0xa28] sm:$0xff]
    %v4184 = vld [vmem:[#allocation11 + $0xa30] sm:$0xff]
    %v4185 = vld [vmem:[#allocation11 + $0xa38] sm:$0xff]
    %v4186 = vld [vmem:[#allocation11 + $0xa40] sm:$0xff]
    %v4187 = vld [vmem:[#allocation11 + $0xa48] sm:$0xff]
    %v4188 = vld [vmem:[#allocation11 + $0xa50] sm:$0xff]
    %v4189 = vld [vmem:[#allocation11 + $0xa58] sm:$0xff]
    %v4190 = vld [vmem:[#allocation11 + $0xa60] sm:$0xff]
    %v4191 = vld [vmem:[#allocation11 + $0xa68] sm:$0xff]
    %v4192 = vld [vmem:[#allocation11 + $0xa70] sm:$0xff]
    %v4193 = vld [vmem:[#allocation11 + $0xa78] sm:$0xff]
    %v4194 = vld [vmem:[#allocation11 + $0xa80] sm:$0xff]
    %v4195 = vld [vmem:[#allocation11 + $0xa88] sm:$0xff]
    %v4196 = vld [vmem:[#allocation11 + $0xa90] sm:$0xff]
    %v4197 = vld [vmem:[#allocation11 + $0xa98] sm:$0xff]
    %v4198 = vld [vmem:[#allocation11 + $0xaa0] sm:$0xff]
    %v4199 = vld [vmem:[#allocation11 + $0xaa8] sm:$0xff]
    %v4200 = vld [vmem:[#allocation11 + $0xab0] sm:$0xff]
    %v4201 = vld [vmem:[#allocation11 + $0xab8] sm:$0xff]
    %v4202 = vld [vmem:[#allocation11 + $0xac0] sm:$0xff]
    %v4203 = vld [vmem:[#allocation11 + $0xac8] sm:$0xff]
    %v4204 = vld [vmem:[#allocation11 + $0xad0] sm:$0xff]
    %v4205 = vld [vmem:[#allocation11 + $0xad8] sm:$0xff]
    %v4206 = vld [vmem:[#allocation11 + $0xae0] sm:$0xff]
    %v4207 = vld [vmem:[#allocation11 + $0xae8] sm:$0xff]
    %v4208 = vld [vmem:[#allocation11 + $0xaf0] sm:$0xff]
    %v4209 = vld [vmem:[#allocation11 + $0xaf8] sm:$0xff]
    %v4210 = vld [vmem:[#allocation11 + $0xb00] sm:$0xff]
    %v4211 = vld [vmem:[#allocation11 + $0xb08] sm:$0xff]
    %v4212 = vld [vmem:[#allocation11 + $0xb10] sm:$0xff]
    %v4213 = vld [vmem:[#allocation11 + $0xb18] sm:$0xff]
    %v4214 = vld [vmem:[#allocation11 + $0xb20] sm:$0xff]
    %v4215 = vld [vmem:[#allocation11 + $0xb28] sm:$0xff]
    %v4216 = vld [vmem:[#allocation11 + $0xb30] sm:$0xff]
    %v4217 = vld [vmem:[#allocation11 + $0xb38] sm:$0xff]
    %v4218 = vld [vmem:[#allocation11 + $0xb40] sm:$0xff]
    %v4219 = vld [vmem:[#allocation11 + $0xb48] sm:$0xff]
    %v4220 = vld [vmem:[#allocation11 + $0xb50] sm:$0xff]
    %v4221 = vld [vmem:[#allocation11 + $0xb58] sm:$0xff]
    %v4222 = vld [vmem:[#allocation11 + $0xb60] sm:$0xff]
    %v4223 = vld [vmem:[#allocation11 + $0xb68] sm:$0xff]
    %v4224 = vld [vmem:[#allocation11 + $0xb70] sm:$0xff]
    %v4225 = vld [vmem:[#allocation11 + $0xb78] sm:$0xff]
    %v4226 = vld [vmem:[#allocation11 + $0xb80] sm:$0xff]
    %v4227 = vld [vmem:[#allocation11 + $0xb88] sm:$0xff]
    %v4228 = vld [vmem:[#allocation11 + $0xb90] sm:$0xff]
    %v4229 = vld [vmem:[#allocation11 + $0xb98] sm:$0xff]
    %v4230 = vld [vmem:[#allocation11 + $0xba0] sm:$0xff]
    %v4231 = vld [vmem:[#allocation11 + $0xba8] sm:$0xff]
    %v4232 = vld [vmem:[#allocation11 + $0xbb0] sm:$0xff]
    %v4233 = vld [vmem:[#allocation11 + $0xbb8] sm:$0xff]
    %v4234 = vld [vmem:[#allocation11 + $0xbc0] sm:$0xff]
    %v4235 = vld [vmem:[#allocation11 + $0xbc8] sm:$0xff]
    %v4236 = vld [vmem:[#allocation11 + $0xbd0] sm:$0xff]
    %v4237 = vld [vmem:[#allocation11 + $0xbd8] sm:$0xff]
    %v4238 = vld [vmem:[#allocation11 + $0xbe0] sm:$0xff]
    %v4239 = vld [vmem:[#allocation11 + $0xbe8] sm:$0xff]
    %v4240 = vld [vmem:[#allocation11 + $0xbf0] sm:$0xff]
    %v4241 = vld [vmem:[#allocation11 + $0xbf8] sm:$0xff]
    %v4242 = vld [vmem:[#allocation11 + $0xc00] sm:$0xff]
    %v4243 = vld [vmem:[#allocation11 + $0xc08] sm:$0xff]
    %v4244 = vld [vmem:[#allocation11 + $0xc10] sm:$0xff]
    %v4245 = vld [vmem:[#allocation11 + $0xc18] sm:$0xff]
    %v4246 = vld [vmem:[#allocation11 + $0xc20] sm:$0xff]
    %v4247 = vld [vmem:[#allocation11 + $0xc28] sm:$0xff]
    %v4248 = vld [vmem:[#allocation11 + $0xc30] sm:$0xff]
    %v4249 = vld [vmem:[#allocation11 + $0xc38] sm:$0xff]
    %v4250 = vld [vmem:[#allocation11 + $0xc40] sm:$0xff]
    %v4251 = vld [vmem:[#allocation11 + $0xc48] sm:$0xff]
    %v4252 = vld [vmem:[#allocation11 + $0xc50] sm:$0xff]
    %v4253 = vld [vmem:[#allocation11 + $0xc58] sm:$0xff]
    %v4254 = vld [vmem:[#allocation11 + $0xc60] sm:$0xff]
    %v4255 = vld [vmem:[#allocation11 + $0xc68] sm:$0xff]
    %v4256 = vld [vmem:[#allocation11 + $0xc70] sm:$0xff]
    %v4257 = vld [vmem:[#allocation11 + $0xc78] sm:$0xff]
    %v4258 = vld [vmem:[#allocation11 + $0xc80] sm:$0xff]
    %v4259 = vld [vmem:[#allocation11 + $0xc88] sm:$0xff]
    %v4260 = vld [vmem:[#allocation11 + $0xc90] sm:$0xff]
    %v4261 = vld [vmem:[#allocation11 + $0xc98] sm:$0xff]
    %v4262 = vld [vmem:[#allocation11 + $0xca0] sm:$0xff]
    %v4263 = vld [vmem:[#allocation11 + $0xca8] sm:$0xff]
    %v4264 = vld [vmem:[#allocation11 + $0xcb0] sm:$0xff]
    %v4265 = vld [vmem:[#allocation11 + $0xcb8] sm:$0xff]
    %v4266 = vld [vmem:[#allocation11 + $0xcc0] sm:$0xff]
    %v4267 = vld [vmem:[#allocation11 + $0xcc8] sm:$0xff]
    %v4268 = vld [vmem:[#allocation11 + $0xcd0] sm:$0xff]
    %v4269 = vld [vmem:[#allocation11 + $0xcd8] sm:$0xff]
    %v4270 = vld [vmem:[#allocation11 + $0xce0] sm:$0xff]
    %v4271 = vld [vmem:[#allocation11 + $0xce8] sm:$0xff]
    %v4272 = vld [vmem:[#allocation11 + $0xcf0] sm:$0xff]
    %v4273 = vld [vmem:[#allocation11 + $0xcf8] sm:$0xff]
    %v4274 = vld [vmem:[#allocation11 + $0xd00] sm:$0xff]
    %v4275 = vld [vmem:[#allocation11 + $0xd08] sm:$0xff]
    %v4276 = vld [vmem:[#allocation11 + $0xd10] sm:$0xff]
    %v4277 = vld [vmem:[#allocation11 + $0xd18] sm:$0xff]
    %v4278 = vld [vmem:[#allocation11 + $0xd20] sm:$0xff]
    %v4279 = vld [vmem:[#allocation11 + $0xd28] sm:$0xff]
    %v4280 = vld [vmem:[#allocation11 + $0xd30] sm:$0xff]
    %v4281 = vld [vmem:[#allocation11 + $0xd38] sm:$0xff]
    %v4282 = vld [vmem:[#allocation11 + $0xd40] sm:$0xff]
    %v4283 = vld [vmem:[#allocation11 + $0xd48] sm:$0xff]
    %v4284 = vld [vmem:[#allocation11 + $0xd50] sm:$0xff]
    %v4285 = vld [vmem:[#allocation11 + $0xd58] sm:$0xff]
    %v4286 = vld [vmem:[#allocation11 + $0xd60] sm:$0xff]
    %v4287 = vld [vmem:[#allocation11 + $0xd68] sm:$0xff]
    %v4288 = vld [vmem:[#allocation11 + $0xd70] sm:$0xff]
    %v4289 = vld [vmem:[#allocation11 + $0xd78] sm:$0xff]
    %v4290 = vld [vmem:[#allocation11 + $0xd80] sm:$0xff]
    %v4291 = vld [vmem:[#allocation11 + $0xd88] sm:$0xff]
    %v4292 = vld [vmem:[#allocation11 + $0xd90] sm:$0xff]
    %v4293 = vld [vmem:[#allocation11 + $0xd98] sm:$0xff]
    %v4294 = vld [vmem:[#allocation11 + $0xda0] sm:$0xff]
    %v4295 = vld [vmem:[#allocation11 + $0xda8] sm:$0xff]
    %v4296 = vld [vmem:[#allocation11 + $0xdb0] sm:$0xff]
    %v4297 = vld [vmem:[#allocation11 + $0xdb8] sm:$0xff]
    %v4298 = vld [vmem:[#allocation11 + $0xdc0] sm:$0xff]
    %v4299 = vld [vmem:[#allocation11 + $0xdc8] sm:$0xff]
    %v4300 = vld [vmem:[#allocation11 + $0xdd0] sm:$0xff]
    %v4301 = vld [vmem:[#allocation11 + $0xdd8] sm:$0xff]
    %v4302 = vld [vmem:[#allocation11 + $0xde0] sm:$0xff]
    %v4303 = vld [vmem:[#allocation11 + $0xde8] sm:$0xff]
    %v4304 = vld [vmem:[#allocation11 + $0xdf0] sm:$0xff]
    %v4305 = vld [vmem:[#allocation11 + $0xdf8] sm:$0xff]
    %v4306 = vld [vmem:[#allocation11 + $0xe00] sm:$0xff]
    %v4307 = vld [vmem:[#allocation11 + $0xe08] sm:$0xff]
    %v4308 = vld [vmem:[#allocation11 + $0xe10] sm:$0xff]
    %v4309 = vld [vmem:[#allocation11 + $0xe18] sm:$0xff]
    %v4310 = vld [vmem:[#allocation11 + $0xe20] sm:$0xff]
    %v4311 = vld [vmem:[#allocation11 + $0xe28] sm:$0xff]
    %v4312 = vld [vmem:[#allocation11 + $0xe30] sm:$0xff]
    %v4313 = vld [vmem:[#allocation11 + $0xe38] sm:$0xff]
    %v4314 = vld [vmem:[#allocation11 + $0xe40] sm:$0xff]
    %v4315 = vld [vmem:[#allocation11 + $0xe48] sm:$0xff]
    %v4316 = vld [vmem:[#allocation11 + $0xe50] sm:$0xff]
    %v4317 = vld [vmem:[#allocation11 + $0xe58] sm:$0xff]
    %v4318 = vld [vmem:[#allocation11 + $0xe60] sm:$0xff]
    %v4319 = vld [vmem:[#allocation11 + $0xe68] sm:$0xff]
    %v4320 = vld [vmem:[#allocation11 + $0xe70] sm:$0xff]
    %v4321 = vld [vmem:[#allocation11 + $0xe78] sm:$0xff]
    %v4322 = vld [vmem:[#allocation11 + $0xe80] sm:$0xff]
    %v4323 = vld [vmem:[#allocation11 + $0xe88] sm:$0xff]
    %v4324 = vld [vmem:[#allocation11 + $0xe90] sm:$0xff]
    %v4325 = vld [vmem:[#allocation11 + $0xe98] sm:$0xff]
    %v4326 = vld [vmem:[#allocation11 + $0xea0] sm:$0xff]
    %v4327 = vld [vmem:[#allocation11 + $0xea8] sm:$0xff]
    %v4328 = vld [vmem:[#allocation11 + $0xeb0] sm:$0xff]
    %v4329 = vld [vmem:[#allocation11 + $0xeb8] sm:$0xff]
    %v4330 = vld [vmem:[#allocation11 + $0xec0] sm:$0xff]
    %v4331 = vld [vmem:[#allocation11 + $0xec8] sm:$0xff]
    %v4332 = vld [vmem:[#allocation11 + $0xed0] sm:$0xff]
    %v4333 = vld [vmem:[#allocation11 + $0xed8] sm:$0xff]
    %v4334 = vld [vmem:[#allocation11 + $0xee0] sm:$0xff]
    %v4335 = vld [vmem:[#allocation11 + $0xee8] sm:$0xff]
    %v4336 = vld [vmem:[#allocation11 + $0xef0] sm:$0xff]
    %v4337 = vld [vmem:[#allocation11 + $0xef8] sm:$0xff]
    %v4338 = vld [vmem:[#allocation11 + $0xf00] sm:$0xff]
    %v4339 = vld [vmem:[#allocation11 + $0xf08] sm:$0xff]
    %v4340 = vld [vmem:[#allocation11 + $0xf10] sm:$0xff]
    %v4341 = vld [vmem:[#allocation11 + $0xf18] sm:$0xff]
    %v4342 = vld [vmem:[#allocation11 + $0xf20] sm:$0xff]
    %v4343 = vld [vmem:[#allocation11 + $0xf28] sm:$0xff]
    %v4344 = vld [vmem:[#allocation11 + $0xf30] sm:$0xff]
    %v4345 = vld [vmem:[#allocation11 + $0xf38] sm:$0xff]
    %v4346 = vld [vmem:[#allocation11 + $0xf40] sm:$0xff]
    %v4347 = vld [vmem:[#allocation11 + $0xf48] sm:$0xff]
    %v4348 = vld [vmem:[#allocation11 + $0xf50] sm:$0xff]
    %v4349 = vld [vmem:[#allocation11 + $0xf58] sm:$0xff]
    %v4350 = vld [vmem:[#allocation11 + $0xf60] sm:$0xff]
    %v4351 = vld [vmem:[#allocation11 + $0xf68] sm:$0xff]
    %v4352 = vld [vmem:[#allocation11 + $0xf70] sm:$0xff]
    %v4353 = vld [vmem:[#allocation11 + $0xf78] sm:$0xff]
    %v4354 = vld [vmem:[#allocation11 + $0xf80] sm:$0xff]
    %v4355 = vld [vmem:[#allocation11 + $0xf88] sm:$0xff]
    %v4356 = vld [vmem:[#allocation11 + $0xf90] sm:$0xff]
    %v4357 = vld [vmem:[#allocation11 + $0xf98] sm:$0xff]
    %v4358 = vld [vmem:[#allocation11 + $0xfa0] sm:$0xff]
    %v4359 = vld [vmem:[#allocation11 + $0xfa8] sm:$0xff]
    %v4360 = vld [vmem:[#allocation11 + $0xfb0] sm:$0xff]
    %v4361 = vld [vmem:[#allocation11 + $0xfb8] sm:$0xff]
    %v4362 = vld [vmem:[#allocation11 + $0xfc0] sm:$0xff]
    %v4363 = vld [vmem:[#allocation11 + $0xfc8] sm:$0xff]
    %v4364 = vld [vmem:[#allocation11 + $0xfd0] sm:$0xff]
    %v4365 = vld [vmem:[#allocation11 + $0xfd8] sm:$0xff]
    %v4366 = vld [vmem:[#allocation11 + $0xfe0] sm:$0xff]
    %v4367 = vld [vmem:[#allocation11 + $0xfe8] sm:$0xff]
    %v4368 = vld [vmem:[#allocation11 + $0xff0] sm:$0xff]
    %v4369 = vld [vmem:[#allocation11 + $0xff8] sm:$0xff]
    %4370 = vmatpush.msra.mxu0 %v4174
    %4371 = vmatpush.msra.mxu0 %v4170
    %4372 = vmatpush.msra.mxu0 %v4166
    %4373 = vmatpush.msra.mxu0 %v4162
    %4374 = vmatpush.msra.mxu0 %v4158
    %4375 = vmatpush.msra.mxu0 %v4154
    %4376 = vmatpush.msra.mxu0 %v4150
    %4377 = vmatpush.msra.mxu0 %v4146
    %4378 = vmatpush.msra.mxu0 %v4142
    %4379 = vmatpush.msra.mxu0 %v4138
    %4380 = vmatpush.msra.mxu0 %v4134
    %4381 = vmatpush.msra.mxu0 %v4130
    %4382 = vmatpush.msra.mxu0 %v4126
    %4383 = vmatpush.msra.mxu0 %v4122
    %4384 = vmatpush.msra.mxu0 %v4118
    %4385 = vmatpush.msra.mxu0 %v4114
    %4386 = vmatmul.f32.gmra.mxu0 %v3854
    %v4387 = vpop.f32.mrf.mxu0
    %v4388 = vadd.f32 0.0, %v4387
    %4389 = vdwg.mxu0
    %4390 = vmatpush.msra.mxu0 %v4238
    %4391 = vmatpush.msra.mxu0 %v4234
    %4392 = vmatpush.msra.mxu0 %v4230
    %4393 = vmatpush.msra.mxu0 %v4226
    %4394 = vmatpush.msra.mxu0 %v4222
    %4395 = vmatpush.msra.mxu0 %v4218
    %4396 = vmatpush.msra.mxu0 %v4214
    %4397 = vmatpush.msra.mxu0 %v4210
    %4398 = vmatpush.msra.mxu0 %v4206
    %4399 = vmatpush.msra.mxu0 %v4202
    %4400 = vmatpush.msra.mxu0 %v4198
    %4401 = vmatpush.msra.mxu0 %v4194
    %4402 = vmatpush.msra.mxu0 %v4190
    %4403 = vmatpush.msra.mxu0 %v4186
    %4404 = vmatpush.msra.mxu0 %v4182
    %4405 = vmatpush.msra.mxu0 %v4178
    %4406 = vmatmul.f32.gmra.mxu0 %v3855
    %v4407 = vpop.f32.mrf.mxu0
    %v4408 = vadd.f32 %v4388, %v4407
    %4409 = vdwg.mxu0
    %4410 = vmatpush.msra.mxu0 %v4302
    %4411 = vmatpush.msra.mxu0 %v4298
    %4412 = vmatpush.msra.mxu0 %v4294
    %4413 = vmatpush.msra.mxu0 %v4290
    %4414 = vmatpush.msra.mxu0 %v4286
    %4415 = vmatpush.msra.mxu0 %v4282
    %4416 = vmatpush.msra.mxu0 %v4278
    %4417 = vmatpush.msra.mxu0 %v4274
    %4418 = vmatpush.msra.mxu0 %v4270
    %4419 = vmatpush.msra.mxu0 %v4266
    %4420 = vmatpush.msra.mxu0 %v4262
    %4421 = vmatpush.msra.mxu0 %v4258
    %4422 = vmatpush.msra.mxu0 %v4254
    %4423 = vmatpush.msra.mxu0 %v4250
    %4424 = vmatpush.msra.mxu0 %v4246
    %4425 = vmatpush.msra.mxu0 %v4242
    %4426 = vmatmul.f32.gmra.mxu0 %v3856
    %v4427 = vpop.f32.mrf.mxu0
    %v4428 = vadd.f32 %v4408, %v4427
    %4429 = vdwg.mxu0
    %4430 = vmatpush.msra.mxu0 %v4366
    %4431 = vmatpush.msra.mxu0 %v4362
    %4432 = vmatpush.msra.mxu0 %v4358
    %4433 = vmatpush.msra.mxu0 %v4354
    %4434 = vmatpush.msra.mxu0 %v4350
    %4435 = vmatpush.msra.mxu0 %v4346
    %4436 = vmatpush.msra.mxu0 %v4342
    %4437 = vmatpush.msra.mxu0 %v4338
    %4438 = vmatpush.msra.mxu0 %v4334
    %4439 = vmatpush.msra.mxu0 %v4330
    %4440 = vmatpush.msra.mxu0 %v4326
    %4441 = vmatpush.msra.mxu0 %v4322
    %4442 = vmatpush.msra.mxu0 %v4318
    %4443 = vmatpush.msra.mxu0 %v4314
    %4444 = vmatpush.msra.mxu0 %v4310
    %4445 = vmatpush.msra.mxu0 %v4306
    %4446 = vmatmul.f32.gmra.mxu0 %v3857
    %v4447 = vpop.f32.mrf.mxu0
    %v4448 = vadd.f32 %v4428, %v4447
    %4449 = vdwg.mxu0
    %4450 = vmatpush.msra.mxu0 %v4175
    %4451 = vmatpush.msra.mxu0 %v4171
    %4452 = vmatpush.msra.mxu0 %v4167
    %4453 = vmatpush.msra.mxu0 %v4163
    %4454 = vmatpush.msra.mxu0 %v4159
    %4455 = vmatpush.msra.mxu0 %v4155
    %4456 = vmatpush.msra.mxu0 %v4151
    %4457 = vmatpush.msra.mxu0 %v4147
    %4458 = vmatpush.msra.mxu0 %v4143
    %4459 = vmatpush.msra.mxu0 %v4139
    %4460 = vmatpush.msra.mxu0 %v4135
    %4461 = vmatpush.msra.mxu0 %v4131
    %4462 = vmatpush.msra.mxu0 %v4127
    %4463 = vmatpush.msra.mxu0 %v4123
    %4464 = vmatpush.msra.mxu0 %v4119
    %4465 = vmatpush.msra.mxu0 %v4115
    %4466 = vmatmul.f32.gmra.mxu0 %v3854
    %v4467 = vpop.f32.mrf.mxu0
    %v4468 = vadd.f32 0.0, %v4467
    %4469 = vdwg.mxu0
    %4470 = vmatpush.msra.mxu0 %v4239
    %4471 = vmatpush.msra.mxu0 %v4235
    %4472 = vmatpush.msra.mxu0 %v4231
    %4473 = vmatpush.msra.mxu0 %v4227
    %4474 = vmatpush.msra.mxu0 %v4223
    %4475 = vmatpush.msra.mxu0 %v4219
    %4476 = vmatpush.msra.mxu0 %v4215
    %4477 = vmatpush.msra.mxu0 %v4211
    %4478 = vmatpush.msra.mxu0 %v4207
    %4479 = vmatpush.msra.mxu0 %v4203
    %4480 = vmatpush.msra.mxu0 %v4199
    %4481 = vmatpush.msra.mxu0 %v4195
    %4482 = vmatpush.msra.mxu0 %v4191
    %4483 = vmatpush.msra.mxu0 %v4187
    %4484 = vmatpush.msra.mxu0 %v4183
    %4485 = vmatpush.msra.mxu0 %v4179
    %4486 = vmatmul.f32.gmra.mxu0 %v3855
    %v4487 = vpop.f32.mrf.mxu0
    %v4488 = vadd.f32 %v4468, %v4487
    %4489 = vdwg.mxu0
    %4490 = vmatpush.msra.mxu0 %v4303
    %4491 = vmatpush.msra.mxu0 %v4299
    %4492 = vmatpush.msra.mxu0 %v4295
    %4493 = vmatpush.msra.mxu0 %v4291
    %4494 = vmatpush.msra.mxu0 %v4287
    %4495 = vmatpush.msra.mxu0 %v4283
    %4496 = vmatpush.msra.mxu0 %v4279
    %4497 = vmatpush.msra.mxu0 %v4275
    %4498 = vmatpush.msra.mxu0 %v4271
    %4499 = vmatpush.msra.mxu0 %v4267
    %4500 = vmatpush.msra.mxu0 %v4263
    %4501 = vmatpush.msra.mxu0 %v4259
    %4502 = vmatpush.msra.mxu0 %v4255
    %4503 = vmatpush.msra.mxu0 %v4251
    %4504 = vmatpush.msra.mxu0 %v4247
    %4505 = vmatpush.msra.mxu0 %v4243
    %4506 = vmatmul.f32.gmra.mxu0 %v3856
    %v4507 = vpop.f32.mrf.mxu0
    %v4508 = vadd.f32 %v4488, %v4507
    %4509 = vdwg.mxu0
    %4510 = vmatpush.msra.mxu0 %v4367
    %4511 = vmatpush.msra.mxu0 %v4363
    %4512 = vmatpush.msra.mxu0 %v4359
    %4513 = vmatpush.msra.mxu0 %v4355
    %4514 = vmatpush.msra.mxu0 %v4351
    %4515 = vmatpush.msra.mxu0 %v4347
    %4516 = vmatpush.msra.mxu0 %v4343
    %4517 = vmatpush.msra.mxu0 %v4339
    %4518 = vmatpush.msra.mxu0 %v4335
    %4519 = vmatpush.msra.mxu0 %v4331
    %4520 = vmatpush.msra.mxu0 %v4327
    %4521 = vmatpush.msra.mxu0 %v4323
    %4522 = vmatpush.msra.mxu0 %v4319
    %4523 = vmatpush.msra.mxu0 %v4315
    %4524 = vmatpush.msra.mxu0 %v4311
    %4525 = vmatpush.msra.mxu0 %v4307
    %4526 = vmatmul.f32.gmra.mxu0 %v3857
    %v4527 = vpop.f32.mrf.mxu0
    %v4528 = vadd.f32 %v4508, %v4527
    %4529 = vdwg.mxu0
    %4530 = vmatpush.msra.mxu0 %v4176
    %4531 = vmatpush.msra.mxu0 %v4172
    %4532 = vmatpush.msra.mxu0 %v4168
    %4533 = vmatpush.msra.mxu0 %v4164
    %4534 = vmatpush.msra.mxu0 %v4160
    %4535 = vmatpush.msra.mxu0 %v4156
    %4536 = vmatpush.msra.mxu0 %v4152
    %4537 = vmatpush.msra.mxu0 %v4148
    %4538 = vmatpush.msra.mxu0 %v4144
    %4539 = vmatpush.msra.mxu0 %v4140
    %4540 = vmatpush.msra.mxu0 %v4136
    %4541 = vmatpush.msra.mxu0 %v4132
    %4542 = vmatpush.msra.mxu0 %v4128
    %4543 = vmatpush.msra.mxu0 %v4124
    %4544 = vmatpush.msra.mxu0 %v4120
    %4545 = vmatpush.msra.mxu0 %v4116
    %4546 = vmatmul.f32.gmra.mxu0 %v3854
    %v4547 = vpop.f32.mrf.mxu0
    %v4548 = vadd.f32 0.0, %v4547
    %4549 = vdwg.mxu0
    %4550 = vmatpush.msra.mxu0 %v4240
    %4551 = vmatpush.msra.mxu0 %v4236
    %4552 = vmatpush.msra.mxu0 %v4232
    %4553 = vmatpush.msra.mxu0 %v4228
    %4554 = vmatpush.msra.mxu0 %v4224
    %4555 = vmatpush.msra.mxu0 %v4220
    %4556 = vmatpush.msra.mxu0 %v4216
    %4557 = vmatpush.msra.mxu0 %v4212
    %4558 = vmatpush.msra.mxu0 %v4208
    %4559 = vmatpush.msra.mxu0 %v4204
    %4560 = vmatpush.msra.mxu0 %v4200
    %4561 = vmatpush.msra.mxu0 %v4196
    %4562 = vmatpush.msra.mxu0 %v4192
    %4563 = vmatpush.msra.mxu0 %v4188
    %4564 = vmatpush.msra.mxu0 %v4184
    %4565 = vmatpush.msra.mxu0 %v4180
    %4566 = vmatmul.f32.gmra.mxu0 %v3855
    %v4567 = vpop.f32.mrf.mxu0
    %v4568 = vadd.f32 %v4548, %v4567
    %4569 = vdwg.mxu0
    %4570 = vmatpush.msra.mxu0 %v4304
    %4571 = vmatpush.msra.mxu0 %v4300
    %4572 = vmatpush.msra.mxu0 %v4296
    %4573 = vmatpush.msra.mxu0 %v4292
    %4574 = vmatpush.msra.mxu0 %v4288
    %4575 = vmatpush.msra.mxu0 %v4284
    %4576 = vmatpush.msra.mxu0 %v4280
    %4577 = vmatpush.msra.mxu0 %v4276
    %4578 = vmatpush.msra.mxu0 %v4272
    %4579 = vmatpush.msra.mxu0 %v4268
    %4580 = vmatpush.msra.mxu0 %v4264
    %4581 = vmatpush.msra.mxu0 %v4260
    %4582 = vmatpush.msra.mxu0 %v4256
    %4583 = vmatpush.msra.mxu0 %v4252
    %4584 = vmatpush.msra.mxu0 %v4248
    %4585 = vmatpush.msra.mxu0 %v4244
    %4586 = vmatmul.f32.gmra.mxu0 %v3856
    %v4587 = vpop.f32.mrf.mxu0
    %v4588 = vadd.f32 %v4568, %v4587
    %4589 = vdwg.mxu0
    %4590 = vmatpush.msra.mxu0 %v4368
    %4591 = vmatpush.msra.mxu0 %v4364
    %4592 = vmatpush.msra.mxu0 %v4360
    %4593 = vmatpush.msra.mxu0 %v4356
    %4594 = vmatpush.msra.mxu0 %v4352
    %4595 = vmatpush.msra.mxu0 %v4348
    %4596 = vmatpush.msra.mxu0 %v4344
    %4597 = vmatpush.msra.mxu0 %v4340
    %4598 = vmatpush.msra.mxu0 %v4336
    %4599 = vmatpush.msra.mxu0 %v4332
    %4600 = vmatpush.msra.mxu0 %v4328
    %4601 = vmatpush.msra.mxu0 %v4324
    %4602 = vmatpush.msra.mxu0 %v4320
    %4603 = vmatpush.msra.mxu0 %v4316
    %4604 = vmatpush.msra.mxu0 %v4312
    %4605 = vmatpush.msra.mxu0 %v4308
    %4606 = vmatmul.f32.gmra.mxu0 %v3857
    %v4607 = vpop.f32.mrf.mxu0
    %v4608 = vadd.f32 %v4588, %v4607
    %4609 = vdwg.mxu0
    %4610 = vmatpush.msra.mxu0 %v4177
    %4611 = vmatpush.msra.mxu0 %v4173
    %4612 = vmatpush.msra.mxu0 %v4169
    %4613 = vmatpush.msra.mxu0 %v4165
    %4614 = vmatpush.msra.mxu0 %v4161
    %4615 = vmatpush.msra.mxu0 %v4157
    %4616 = vmatpush.msra.mxu0 %v4153
    %4617 = vmatpush.msra.mxu0 %v4149
    %4618 = vmatpush.msra.mxu0 %v4145
    %4619 = vmatpush.msra.mxu0 %v4141
    %4620 = vmatpush.msra.mxu0 %v4137
    %4621 = vmatpush.msra.mxu0 %v4133
    %4622 = vmatpush.msra.mxu0 %v4129
    %4623 = vmatpush.msra.mxu0 %v4125
    %4624 = vmatpush.msra.mxu0 %v4121
    %4625 = vmatpush.msra.mxu0 %v4117
    %4626 = vmatmul.f32.gmra.mxu0 %v3854
    %v4627 = vpop.f32.mrf.mxu0
    %v4628 = vadd.f32 0.0, %v4627
    %4629 = vdwg.mxu0
    %4630 = vmatpush.msra.mxu0 %v4241
    %4631 = vmatpush.msra.mxu0 %v4237
    %4632 = vmatpush.msra.mxu0 %v4233
    %4633 = vmatpush.msra.mxu0 %v4229
    %4634 = vmatpush.msra.mxu0 %v4225
    %4635 = vmatpush.msra.mxu0 %v4221
    %4636 = vmatpush.msra.mxu0 %v4217
    %4637 = vmatpush.msra.mxu0 %v4213
    %4638 = vmatpush.msra.mxu0 %v4209
    %4639 = vmatpush.msra.mxu0 %v4205
    %4640 = vmatpush.msra.mxu0 %v4201
    %4641 = vmatpush.msra.mxu0 %v4197
    %4642 = vmatpush.msra.mxu0 %v4193
    %4643 = vmatpush.msra.mxu0 %v4189
    %4644 = vmatpush.msra.mxu0 %v4185
    %4645 = vmatpush.msra.mxu0 %v4181
    %4646 = vmatmul.f32.gmra.mxu0 %v3855
    %v4647 = vpop.f32.mrf.mxu0
    %v4648 = vadd.f32 %v4628, %v4647
    %4649 = vdwg.mxu0
    %4650 = vmatpush.msra.mxu0 %v4305
    %4651 = vmatpush.msra.mxu0 %v4301
    %4652 = vmatpush.msra.mxu0 %v4297
    %4653 = vmatpush.msra.mxu0 %v4293
    %4654 = vmatpush.msra.mxu0 %v4289
    %4655 = vmatpush.msra.mxu0 %v4285
    %4656 = vmatpush.msra.mxu0 %v4281
    %4657 = vmatpush.msra.mxu0 %v4277
    %4658 = vmatpush.msra.mxu0 %v4273
    %4659 = vmatpush.msra.mxu0 %v4269
    %4660 = vmatpush.msra.mxu0 %v4265
    %4661 = vmatpush.msra.mxu0 %v4261
    %4662 = vmatpush.msra.mxu0 %v4257
    %4663 = vmatpush.msra.mxu0 %v4253
    %4664 = vmatpush.msra.mxu0 %v4249
    %4665 = vmatpush.msra.mxu0 %v4245
    %4666 = vmatmul.f32.gmra.mxu0 %v3856
    %v4667 = vpop.f32.mrf.mxu0
    %v4668 = vadd.f32 %v4648, %v4667
    %4669 = vdwg.mxu0
    %4670 = vmatpush.msra.mxu0 %v4369
    %4671 = vmatpush.msra.mxu0 %v4365
    %4672 = vmatpush.msra.mxu0 %v4361
    %4673 = vmatpush.msra.mxu0 %v4357
    %4674 = vmatpush.msra.mxu0 %v4353
    %4675 = vmatpush.msra.mxu0 %v4349
    %4676 = vmatpush.msra.mxu0 %v4345
    %4677 = vmatpush.msra.mxu0 %v4341
    %4678 = vmatpush.msra.mxu0 %v4337
    %4679 = vmatpush.msra.mxu0 %v4333
    %4680 = vmatpush.msra.mxu0 %v4329
    %4681 = vmatpush.msra.mxu0 %v4325
    %4682 = vmatpush.msra.mxu0 %v4321
    %4683 = vmatpush.msra.mxu0 %v4317
    %4684 = vmatpush.msra.mxu0 %v4313
    %4685 = vmatpush.msra.mxu0 %v4309
    %4686 = vmatmul.f32.gmra.mxu0 %v3857
    %v4687 = vpop.f32.mrf.mxu0
    %v4688 = vadd.f32 %v4668, %v4687
    %4689 = vdwg.mxu0
    %4690 = vmatpush.msra.mxu0 %v3918
    %4691 = vmatpush.msra.mxu0 %v3914
    %4692 = vmatpush.msra.mxu0 %v3910
    %4693 = vmatpush.msra.mxu0 %v3906
    %4694 = vmatpush.msra.mxu0 %v3902
    %4695 = vmatpush.msra.mxu0 %v3898
    %4696 = vmatpush.msra.mxu0 %v3894
    %4697 = vmatpush.msra.mxu0 %v3890
    %4698 = vmatpush.msra.mxu0 %v3886
    %4699 = vmatpush.msra.mxu0 %v3882
    %4700 = vmatpush.msra.mxu0 %v3878
    %4701 = vmatpush.msra.mxu0 %v3874
    %4702 = vmatpush.msra.mxu0 %v3870
    %4703 = vmatpush.msra.mxu0 %v3866
    %4704 = vmatpush.msra.mxu0 %v3862
    %4705 = vmatpush.msra.mxu0 %v3858
    %4706 = vmatmul.f32.gmra.mxu0 %v3850
    %v4707 = vpop.f32.mrf.mxu0
    %v4708 = vadd.f32 %v4448, %v4707
    %4709 = vdwg.mxu0
    %4710 = vmatpush.msra.mxu0 %v3982
    %4711 = vmatpush.msra.mxu0 %v3978
    %4712 = vmatpush.msra.mxu0 %v3974
    %4713 = vmatpush.msra.mxu0 %v3970
    %4714 = vmatpush.msra.mxu0 %v3966
    %4715 = vmatpush.msra.mxu0 %v3962
    %4716 = vmatpush.msra.mxu0 %v3958
    %4717 = vmatpush.msra.mxu0 %v3954
    %4718 = vmatpush.msra.mxu0 %v3950
    %4719 = vmatpush.msra.mxu0 %v3946
    %4720 = vmatpush.msra.mxu0 %v3942
    %4721 = vmatpush.msra.mxu0 %v3938
    %4722 = vmatpush.msra.mxu0 %v3934
    %4723 = vmatpush.msra.mxu0 %v3930
    %4724 = vmatpush.msra.mxu0 %v3926
    %4725 = vmatpush.msra.mxu0 %v3922
    %4726 = vmatmul.f32.gmra.mxu0 %v3851
    %v4727 = vpop.f32.mrf.mxu0
    %v4728 = vadd.f32 %v4708, %v4727
    %4729 = vdwg.mxu0
    %4730 = vmatpush.msra.mxu0 %v4046
    %4731 = vmatpush.msra.mxu0 %v4042
    %4732 = vmatpush.msra.mxu0 %v4038
    %4733 = vmatpush.msra.mxu0 %v4034
    %4734 = vmatpush.msra.mxu0 %v4030
    %4735 = vmatpush.msra.mxu0 %v4026
    %4736 = vmatpush.msra.mxu0 %v4022
    %4737 = vmatpush.msra.mxu0 %v4018
    %4738 = vmatpush.msra.mxu0 %v4014
    %4739 = vmatpush.msra.mxu0 %v4010
    %4740 = vmatpush.msra.mxu0 %v4006
    %4741 = vmatpush.msra.mxu0 %v4002
    %4742 = vmatpush.msra.mxu0 %v3998
    %4743 = vmatpush.msra.mxu0 %v3994
    %4744 = vmatpush.msra.mxu0 %v3990
    %4745 = vmatpush.msra.mxu0 %v3986
    %4746 = vmatmul.f32.gmra.mxu0 %v3852
    %v4747 = vpop.f32.mrf.mxu0
    %v4748 = vadd.f32 %v4728, %v4747
    %4749 = vdwg.mxu0
    %4750 = vmatpush.msra.mxu0 %v4110
    %4751 = vmatpush.msra.mxu0 %v4106
    %4752 = vmatpush.msra.mxu0 %v4102
    %4753 = vmatpush.msra.mxu0 %v4098
    %4754 = vmatpush.msra.mxu0 %v4094
    %4755 = vmatpush.msra.mxu0 %v4090
    %4756 = vmatpush.msra.mxu0 %v4086
    %4757 = vmatpush.msra.mxu0 %v4082
    %4758 = vmatpush.msra.mxu0 %v4078
    %4759 = vmatpush.msra.mxu0 %v4074
    %4760 = vmatpush.msra.mxu0 %v4070
    %4761 = vmatpush.msra.mxu0 %v4066
    %4762 = vmatpush.msra.mxu0 %v4062
    %4763 = vmatpush.msra.mxu0 %v4058
    %4764 = vmatpush.msra.mxu0 %v4054
    %4765 = vmatpush.msra.mxu0 %v4050
    %4766 = vmatmul.f32.gmra.mxu0 %v3853
    %v4767 = vpop.f32.mrf.mxu0
    %v4768 = vadd.f32 %v4748, %v4767
    %4769 = vdwg.mxu0
    %4770 = vmatpush.msra.mxu0 %v3919
    %4771 = vmatpush.msra.mxu0 %v3915
    %4772 = vmatpush.msra.mxu0 %v3911
    %4773 = vmatpush.msra.mxu0 %v3907
    %4774 = vmatpush.msra.mxu0 %v3903
    %4775 = vmatpush.msra.mxu0 %v3899
    %4776 = vmatpush.msra.mxu0 %v3895
    %4777 = vmatpush.msra.mxu0 %v3891
    %4778 = vmatpush.msra.mxu0 %v3887
    %4779 = vmatpush.msra.mxu0 %v3883
    %4780 = vmatpush.msra.mxu0 %v3879
    %4781 = vmatpush.msra.mxu0 %v3875
    %4782 = vmatpush.msra.mxu0 %v3871
    %4783 = vmatpush.msra.mxu0 %v3867
    %4784 = vmatpush.msra.mxu0 %v3863
    %4785 = vmatpush.msra.mxu0 %v3859
    %4786 = vmatmul.f32.gmra.mxu0 %v3850
    %v4787 = vpop.f32.mrf.mxu0
    %v4788 = vadd.f32 %v4528, %v4787
    %4789 = vdwg.mxu0
    %4790 = vmatpush.msra.mxu0 %v3983
    %4791 = vmatpush.msra.mxu0 %v3979
    %4792 = vmatpush.msra.mxu0 %v3975
    %4793 = vmatpush.msra.mxu0 %v3971
    %4794 = vmatpush.msra.mxu0 %v3967
    %4795 = vmatpush.msra.mxu0 %v3963
    %4796 = vmatpush.msra.mxu0 %v3959
    %4797 = vmatpush.msra.mxu0 %v3955
    %4798 = vmatpush.msra.mxu0 %v3951
    %4799 = vmatpush.msra.mxu0 %v3947
    %4800 = vmatpush.msra.mxu0 %v3943
    %4801 = vmatpush.msra.mxu0 %v3939
    %4802 = vmatpush.msra.mxu0 %v3935
    %4803 = vmatpush.msra.mxu0 %v3931
    %4804 = vmatpush.msra.mxu0 %v3927
    %4805 = vmatpush.msra.mxu0 %v3923
    %4806 = vmatmul.f32.gmra.mxu0 %v3851
    %v4807 = vpop.f32.mrf.mxu0
    %v4808 = vadd.f32 %v4788, %v4807
    %4809 = vdwg.mxu0
    %4810 = vmatpush.msra.mxu0 %v4047
    %4811 = vmatpush.msra.mxu0 %v4043
    %4812 = vmatpush.msra.mxu0 %v4039
    %4813 = vmatpush.msra.mxu0 %v4035
    %4814 = vmatpush.msra.mxu0 %v4031
    %4815 = vmatpush.msra.mxu0 %v4027
    %4816 = vmatpush.msra.mxu0 %v4023
    %4817 = vmatpush.msra.mxu0 %v4019
    %4818 = vmatpush.msra.mxu0 %v4015
    %4819 = vmatpush.msra.mxu0 %v4011
    %4820 = vmatpush.msra.mxu0 %v4007
    %4821 = vmatpush.msra.mxu0 %v4003
    %4822 = vmatpush.msra.mxu0 %v3999
    %4823 = vmatpush.msra.mxu0 %v3995
    %4824 = vmatpush.msra.mxu0 %v3991
    %4825 = vmatpush.msra.mxu0 %v3987
    %4826 = vmatmul.f32.gmra.mxu0 %v3852
    %v4827 = vpop.f32.mrf.mxu0
    %v4828 = vadd.f32 %v4808, %v4827
    %4829 = vdwg.mxu0
    %4830 = vmatpush.msra.mxu0 %v4111
    %4831 = vmatpush.msra.mxu0 %v4107
    %4832 = vmatpush.msra.mxu0 %v4103
    %4833 = vmatpush.msra.mxu0 %v4099
    %4834 = vmatpush.msra.mxu0 %v4095
    %4835 = vmatpush.msra.mxu0 %v4091
    %4836 = vmatpush.msra.mxu0 %v4087
    %4837 = vmatpush.msra.mxu0 %v4083
    %4838 = vmatpush.msra.mxu0 %v4079
    %4839 = vmatpush.msra.mxu0 %v4075
    %4840 = vmatpush.msra.mxu0 %v4071
    %4841 = vmatpush.msra.mxu0 %v4067
    %4842 = vmatpush.msra.mxu0 %v4063
    %4843 = vmatpush.msra.mxu0 %v4059
    %4844 = vmatpush.msra.mxu0 %v4055
    %4845 = vmatpush.msra.mxu0 %v4051
    %4846 = vmatmul.f32.gmra.mxu0 %v3853
    %v4847 = vpop.f32.mrf.mxu0
    %v4848 = vadd.f32 %v4828, %v4847
    %4849 = vdwg.mxu0
    %4850 = vmatpush.msra.mxu0 %v3920
    %4851 = vmatpush.msra.mxu0 %v3916
    %4852 = vmatpush.msra.mxu0 %v3912
    %4853 = vmatpush.msra.mxu0 %v3908
    %4854 = vmatpush.msra.mxu0 %v3904
    %4855 = vmatpush.msra.mxu0 %v3900
    %4856 = vmatpush.msra.mxu0 %v3896
    %4857 = vmatpush.msra.mxu0 %v3892
    %4858 = vmatpush.msra.mxu0 %v3888
    %4859 = vmatpush.msra.mxu0 %v3884
    %4860 = vmatpush.msra.mxu0 %v3880
    %4861 = vmatpush.msra.mxu0 %v3876
    %4862 = vmatpush.msra.mxu0 %v3872
    %4863 = vmatpush.msra.mxu0 %v3868
    %4864 = vmatpush.msra.mxu0 %v3864
    %4865 = vmatpush.msra.mxu0 %v3860
    %4866 = vmatmul.f32.gmra.mxu0 %v3850
    %v4867 = vpop.f32.mrf.mxu0
    %v4868 = vadd.f32 %v4608, %v4867
    %4869 = vdwg.mxu0
    %4870 = vmatpush.msra.mxu0 %v3984
    %4871 = vmatpush.msra.mxu0 %v3980
    %4872 = vmatpush.msra.mxu0 %v3976
    %4873 = vmatpush.msra.mxu0 %v3972
    %4874 = vmatpush.msra.mxu0 %v3968
    %4875 = vmatpush.msra.mxu0 %v3964
    %4876 = vmatpush.msra.mxu0 %v3960
    %4877 = vmatpush.msra.mxu0 %v3956
    %4878 = vmatpush.msra.mxu0 %v3952
    %4879 = vmatpush.msra.mxu0 %v3948
    %4880 = vmatpush.msra.mxu0 %v3944
    %4881 = vmatpush.msra.mxu0 %v3940
    %4882 = vmatpush.msra.mxu0 %v3936
    %4883 = vmatpush.msra.mxu0 %v3932
    %4884 = vmatpush.msra.mxu0 %v3928
    %4885 = vmatpush.msra.mxu0 %v3924
    %4886 = vmatmul.f32.gmra.mxu0 %v3851
    %v4887 = vpop.f32.mrf.mxu0
    %v4888 = vadd.f32 %v4868, %v4887
    %4889 = vdwg.mxu0
    %4890 = vmatpush.msra.mxu0 %v4048
    %4891 = vmatpush.msra.mxu0 %v4044
    %4892 = vmatpush.msra.mxu0 %v4040
    %4893 = vmatpush.msra.mxu0 %v4036
    %4894 = vmatpush.msra.mxu0 %v4032
    %4895 = vmatpush.msra.mxu0 %v4028
    %4896 = vmatpush.msra.mxu0 %v4024
    %4897 = vmatpush.msra.mxu0 %v4020
    %4898 = vmatpush.msra.mxu0 %v4016
    %4899 = vmatpush.msra.mxu0 %v4012
    %4900 = vmatpush.msra.mxu0 %v4008
    %4901 = vmatpush.msra.mxu0 %v4004
    %4902 = vmatpush.msra.mxu0 %v4000
    %4903 = vmatpush.msra.mxu0 %v3996
    %4904 = vmatpush.msra.mxu0 %v3992
    %4905 = vmatpush.msra.mxu0 %v3988
    %4906 = vmatmul.f32.gmra.mxu0 %v3852
    %v4907 = vpop.f32.mrf.mxu0
    %v4908 = vadd.f32 %v4888, %v4907
    %4909 = vdwg.mxu0
    %4910 = vmatpush.msra.mxu0 %v4112
    %4911 = vmatpush.msra.mxu0 %v4108
    %4912 = vmatpush.msra.mxu0 %v4104
    %4913 = vmatpush.msra.mxu0 %v4100
    %4914 = vmatpush.msra.mxu0 %v4096
    %4915 = vmatpush.msra.mxu0 %v4092
    %4916 = vmatpush.msra.mxu0 %v4088
    %4917 = vmatpush.msra.mxu0 %v4084
    %4918 = vmatpush.msra.mxu0 %v4080
    %4919 = vmatpush.msra.mxu0 %v4076
    %4920 = vmatpush.msra.mxu0 %v4072
    %4921 = vmatpush.msra.mxu0 %v4068
    %4922 = vmatpush.msra.mxu0 %v4064
    %4923 = vmatpush.msra.mxu0 %v4060
    %4924 = vmatpush.msra.mxu0 %v4056
    %4925 = vmatpush.msra.mxu0 %v4052
    %4926 = vmatmul.f32.gmra.mxu0 %v3853
    %v4927 = vpop.f32.mrf.mxu0
    %v4928 = vadd.f32 %v4908, %v4927
    %4929 = vdwg.mxu0
    %4930 = vmatpush.msra.mxu0 %v3921
    %4931 = vmatpush.msra.mxu0 %v3917
    %4932 = vmatpush.msra.mxu0 %v3913
    %4933 = vmatpush.msra.mxu0 %v3909
    %4934 = vmatpush.msra.mxu0 %v3905
    %4935 = vmatpush.msra.mxu0 %v3901
    %4936 = vmatpush.msra.mxu0 %v3897
    %4937 = vmatpush.msra.mxu0 %v3893
    %4938 = vmatpush.msra.mxu0 %v3889
    %4939 = vmatpush.msra.mxu0 %v3885
    %4940 = vmatpush.msra.mxu0 %v3881
    %4941 = vmatpush.msra.mxu0 %v3877
    %4942 = vmatpush.msra.mxu0 %v3873
    %4943 = vmatpush.msra.mxu0 %v3869
    %4944 = vmatpush.msra.mxu0 %v3865
    %4945 = vmatpush.msra.mxu0 %v3861
    %4946 = vmatmul.f32.gmra.mxu0 %v3850
    %v4947 = vpop.f32.mrf.mxu0
    %v4948 = vadd.f32 %v4688, %v4947
    %4949 = vdwg.mxu0
    %4950 = vmatpush.msra.mxu0 %v3985
    %4951 = vmatpush.msra.mxu0 %v3981
    %4952 = vmatpush.msra.mxu0 %v3977
    %4953 = vmatpush.msra.mxu0 %v3973
    %4954 = vmatpush.msra.mxu0 %v3969
    %4955 = vmatpush.msra.mxu0 %v3965
    %4956 = vmatpush.msra.mxu0 %v3961
    %4957 = vmatpush.msra.mxu0 %v3957
    %4958 = vmatpush.msra.mxu0 %v3953
    %4959 = vmatpush.msra.mxu0 %v3949
    %4960 = vmatpush.msra.mxu0 %v3945
    %4961 = vmatpush.msra.mxu0 %v3941
    %4962 = vmatpush.msra.mxu0 %v3937
    %4963 = vmatpush.msra.mxu0 %v3933
    %4964 = vmatpush.msra.mxu0 %v3929
    %4965 = vmatpush.msra.mxu0 %v3925
    %4966 = vmatmul.f32.gmra.mxu0 %v3851
    %v4967 = vpop.f32.mrf.mxu0
    %v4968 = vadd.f32 %v4948, %v4967
    %4969 = vdwg.mxu0
    %4970 = vmatpush.msra.mxu0 %v4049
    %4971 = vmatpush.msra.mxu0 %v4045
    %4972 = vmatpush.msra.mxu0 %v4041
    %4973 = vmatpush.msra.mxu0 %v4037
    %4974 = vmatpush.msra.mxu0 %v4033
    %4975 = vmatpush.msra.mxu0 %v4029
    %4976 = vmatpush.msra.mxu0 %v4025
    %4977 = vmatpush.msra.mxu0 %v4021
    %4978 = vmatpush.msra.mxu0 %v4017
    %4979 = vmatpush.msra.mxu0 %v4013
    %4980 = vmatpush.msra.mxu0 %v4009
    %4981 = vmatpush.msra.mxu0 %v4005
    %4982 = vmatpush.msra.mxu0 %v4001
    %4983 = vmatpush.msra.mxu0 %v3997
    %4984 = vmatpush.msra.mxu0 %v3993
    %4985 = vmatpush.msra.mxu0 %v3989
    %4986 = vmatmul.f32.gmra.mxu0 %v3852
    %v4987 = vpop.f32.mrf.mxu0
    %v4988 = vadd.f32 %v4968, %v4987
    %4989 = vdwg.mxu0
    %4990 = vmatpush.msra.mxu0 %v4113
    %4991 = vmatpush.msra.mxu0 %v4109
    %4992 = vmatpush.msra.mxu0 %v4105
    %4993 = vmatpush.msra.mxu0 %v4101
    %4994 = vmatpush.msra.mxu0 %v4097
    %4995 = vmatpush.msra.mxu0 %v4093
    %4996 = vmatpush.msra.mxu0 %v4089
    %4997 = vmatpush.msra.mxu0 %v4085
    %4998 = vmatpush.msra.mxu0 %v4081
    %4999 = vmatpush.msra.mxu0 %v4077
    %5000 = vmatpush.msra.mxu0 %v4073
    %5001 = vmatpush.msra.mxu0 %v4069
    %5002 = vmatpush.msra.mxu0 %v4065
    %5003 = vmatpush.msra.mxu0 %v4061
    %5004 = vmatpush.msra.mxu0 %v4057
    %5005 = vmatpush.msra.mxu0 %v4053
    %5006 = vmatmul.f32.gmra.mxu0 %v3853
    %v5007 = vpop.f32.mrf.mxu0
    %v5008 = vadd.f32 %v4988, %v5007
    %5009 = vdwg.mxu0
    %v5010 = vld [vmem:[#allocation13] sm:$0xf]
    %v5012 = vperm.slane %v5010, 0
    %v5013 = vperm.slane %v5010, 1
    %v5014 = vperm.slane %v5010, 2
    %v5015 = vperm.slane %v5010, 3
    %v5020 = vadd.f32 %v4768, %v5012
    %v5021 = vadd.f32 %v4848, %v5013
    %v5022 = vadd.f32 %v4928, %v5014
    %v5023 = vadd.f32 %v5008, %v5015
    %v5024 = vsel %vm2878, %v5020, 0.0
    %v5025 = vrot.slane %v5024, 4
    %v5026 = vadd.f32 %v5024, %v5025
    %v5027 = vrot.slane %v5026, 2
    %v5028 = vadd.f32 %v5026, %v5027
    %v5029 = vrot.slane %v5028, 1
    %v5030 = vadd.f32 %v5028, %v5029
    %v5031 = vsel %vm2878, %v5021, 0.0
    %v5032 = vrot.slane %v5031, 4
    %v5033 = vadd.f32 %v5031, %v5032
    %v5034 = vrot.slane %v5033, 2
    %v5035 = vadd.f32 %v5033, %v5034
    %v5036 = vrot.slane %v5035, 1
    %v5037 = vadd.f32 %v5035, %v5036
    %v5038 = vsel %vm2878, %v5022, 0.0
    %v5039 = vrot.slane %v5038, 4
    %v5040 = vadd.f32 %v5038, %v5039
    %v5041 = vrot.slane %v5040, 2
    %v5042 = vadd.f32 %v5040, %v5041
    %v5043 = vrot.slane %v5042, 1
    %v5044 = vadd.f32 %v5042, %v5043
    %v5045 = vsel %vm2878, %v5023, 0.0
    %v5046 = vrot.slane %v5045, 4
    %v5047 = vadd.f32 %v5045, %v5046
    %v5048 = vrot.slane %v5047, 2
    %v5049 = vadd.f32 %v5047, %v5048
    %v5050 = vrot.slane %v5049, 1
    %v5051 = vadd.f32 %v5049, %v5050
    %v5052 = vmul.f32 %v5020, %v5020
    %v5053 = vmul.f32 %v5021, %v5021
    %v5054 = vmul.f32 %v5022, %v5022
    %v5055 = vmul.f32 %v5023, %v5023
    %v5056 = vsel %vm2878, %v5052, 0.0
    %v5057 = vrot.slane %v5056, 4
    %v5058 = vadd.f32 %v5056, %v5057
    %v5059 = vrot.slane %v5058, 2
    %v5060 = vadd.f32 %v5058, %v5059
    %v5061 = vrot.slane %v5060, 1
    %v5062 = vadd.f32 %v5060, %v5061
    %v5063 = vsel %vm2878, %v5053, 0.0
    %v5064 = vrot.slane %v5063, 4
    %v5065 = vadd.f32 %v5063, %v5064
    %v5066 = vrot.slane %v5065, 2
    %v5067 = vadd.f32 %v5065, %v5066
    %v5068 = vrot.slane %v5067, 1
    %v5069 = vadd.f32 %v5067, %v5068
    %v5070 = vsel %vm2878, %v5054, 0.0
    %v5071 = vrot.slane %v5070, 4
    %v5072 = vadd.f32 %v5070, %v5071
    %v5073 = vrot.slane %v5072, 2
    %v5074 = vadd.f32 %v5072, %v5073
    %v5075 = vrot.slane %v5074, 1
    %v5076 = vadd.f32 %v5074, %v5075
    %v5077 = vsel %vm2878, %v5055, 0.0
    %v5078 = vrot.slane %v5077, 4
    %v5079 = vadd.f32 %v5077, %v5078
    %v5080 = vrot.slane %v5079, 2
    %v5081 = vadd.f32 %v5079, %v5080
    %v5082 = vrot.slane %v5081, 1
    %v5083 = vadd.f32 %v5081, %v5082
    %v5084 = vld [vmem:[%s19] sm:$0xff]
    %v5085 = vld [vmem:[%s19 + $0x8] sm:$0xff]
    %v5086 = vld [vmem:[%s19 + $0x10] sm:$0xff]
    %v5087 = vld [vmem:[%s19 + $0x18] sm:$0xff]
    %v5088 = vld [vmem:[%s19 + $0x20] sm:$0xff]
    %v5089 = vld [vmem:[%s19 + $0x28] sm:$0xff]
    %v5090 = vld [vmem:[%s19 + $0x30] sm:$0xff]
    %v5091 = vld [vmem:[%s19 + $0x38] sm:$0xff]
    %v5092 = vld [vmem:[%s19 + $0x40] sm:$0xff]
    %v5093 = vld [vmem:[%s19 + $0x48] sm:$0xff]
    %v5094 = vld [vmem:[%s19 + $0x50] sm:$0xff]
    %v5095 = vld [vmem:[%s19 + $0x58] sm:$0xff]
    %v5096 = vld [vmem:[%s19 + $0x60] sm:$0xff]
    %v5097 = vld [vmem:[%s19 + $0x68] sm:$0xff]
    %v5098 = vld [vmem:[%s19 + $0x70] sm:$0xff]
    %v5099 = vld [vmem:[%s19 + $0x78] sm:$0xff]
    %v5100 = vld [vmem:[%s19 + $0x80] sm:$0xff]
    %v5101 = vld [vmem:[%s19 + $0x88] sm:$0xff]
    %v5102 = vld [vmem:[%s19 + $0x90] sm:$0xff]
    %v5103 = vld [vmem:[%s19 + $0x98] sm:$0xff]
    %v5104 = vld [vmem:[%s19 + $0xa0] sm:$0xff]
    %v5105 = vld [vmem:[%s19 + $0xa8] sm:$0xff]
    %v5106 = vld [vmem:[%s19 + $0xb0] sm:$0xff]
    %v5107 = vld [vmem:[%s19 + $0xb8] sm:$0xff]
    %v5108 = vld [vmem:[%s19 + $0xc0] sm:$0xff]
    %v5109 = vld [vmem:[%s19 + $0xc8] sm:$0xff]
    %v5110 = vld [vmem:[%s19 + $0xd0] sm:$0xff]
    %v5111 = vld [vmem:[%s19 + $0xd8] sm:$0xff]
    %v5112 = vld [vmem:[%s19 + $0xe0] sm:$0xff]
    %v5113 = vld [vmem:[%s19 + $0xe8] sm:$0xff]
    %v5114 = vld [vmem:[%s19 + $0xf0] sm:$0xff]
    %v5115 = vld [vmem:[%s19 + $0xf8] sm:$0xff]
    %v5116 = vld [vmem:[%s19 + $0x100] sm:$0xff]
    %v5117 = vld [vmem:[%s19 + $0x108] sm:$0xff]
    %v5118 = vld [vmem:[%s19 + $0x110] sm:$0xff]
    %v5119 = vld [vmem:[%s19 + $0x118] sm:$0xff]
    %v5120 = vld [vmem:[%s19 + $0x120] sm:$0xff]
    %v5121 = vld [vmem:[%s19 + $0x128] sm:$0xff]
    %v5122 = vld [vmem:[%s19 + $0x130] sm:$0xff]
    %v5123 = vld [vmem:[%s19 + $0x138] sm:$0xff]
    %v5124 = vld [vmem:[%s19 + $0x140] sm:$0xff]
    %v5125 = vld [vmem:[%s19 + $0x148] sm:$0xff]
    %v5126 = vld [vmem:[%s19 + $0x150] sm:$0xff]
    %v5127 = vld [vmem:[%s19 + $0x158] sm:$0xff]
    %v5128 = vld [vmem:[%s19 + $0x160] sm:$0xff]
    %v5129 = vld [vmem:[%s19 + $0x168] sm:$0xff]
    %v5130 = vld [vmem:[%s19 + $0x170] sm:$0xff]
    %v5131 = vld [vmem:[%s19 + $0x178] sm:$0xff]
    %v5132 = vld [vmem:[%s19 + $0x180] sm:$0xff]
    %v5133 = vld [vmem:[%s19 + $0x188] sm:$0xff]
    %v5134 = vld [vmem:[%s19 + $0x190] sm:$0xff]
    %v5135 = vld [vmem:[%s19 + $0x198] sm:$0xff]
    %v5136 = vld [vmem:[%s19 + $0x1a0] sm:$0xff]
    %v5137 = vld [vmem:[%s19 + $0x1a8] sm:$0xff]
    %v5138 = vld [vmem:[%s19 + $0x1b0] sm:$0xff]
    %v5139 = vld [vmem:[%s19 + $0x1b8] sm:$0xff]
    %v5140 = vld [vmem:[%s19 + $0x1c0] sm:$0xff]
    %v5141 = vld [vmem:[%s19 + $0x1c8] sm:$0xff]
    %v5142 = vld [vmem:[%s19 + $0x1d0] sm:$0xff]
    %v5143 = vld [vmem:[%s19 + $0x1d8] sm:$0xff]
    %v5144 = vld [vmem:[%s19 + $0x1e0] sm:$0xff]
    %v5145 = vld [vmem:[%s19 + $0x1e8] sm:$0xff]
    %v5146 = vld [vmem:[%s19 + $0x1f0] sm:$0xff]
    %v5147 = vld [vmem:[%s19 + $0x1f8] sm:$0xff]
    %5148 = vmatpush.msra.mxu0 %v5099
    %5149 = vmatpush.msra.mxu0 %v5098
    %5150 = vmatpush.msra.mxu0 %v5097
    %5151 = vmatpush.msra.mxu0 %v5096
    %5152 = vmatpush.msra.mxu0 %v5095
    %5153 = vmatpush.msra.mxu0 %v5094
    %5154 = vmatpush.msra.mxu0 %v5093
    %5155 = vmatpush.msra.mxu0 %v5092
    %5156 = vmatpush.msra.mxu0 %v5091
    %5157 = vmatpush.msra.mxu0 %v5090
    %5158 = vmatpush.msra.mxu0 %v5089
    %5159 = vmatpush.msra.mxu0 %v5088
    %5160 = vmatpush.msra.mxu0 %v5087
    %5161 = vmatpush.msra.mxu0 %v5086
    %5162 = vmatpush.msra.mxu0 %v5085
    %5163 = vmatpush.msra.mxu0 %v5084
    %5164 = vmatmul.f32.gmra.mxu0 %v5030
    %v5165 = vpop.f32.mrf.mxu0
    %v5166 = vadd.f32 0.0, %v5165
    %5167 = vdwg.mxu0
    %5168 = vmatpush.msra.mxu0 %v5115
    %5169 = vmatpush.msra.mxu0 %v5114
    %5170 = vmatpush.msra.mxu0 %v5113
    %5171 = vmatpush.msra.mxu0 %v5112
    %5172 = vmatpush.msra.mxu0 %v5111
    %5173 = vmatpush.msra.mxu0 %v5110
    %5174 = vmatpush.msra.mxu0 %v5109
    %5175 = vmatpush.msra.mxu0 %v5108
    %5176 = vmatpush.msra.mxu0 %v5107
    %5177 = vmatpush.msra.mxu0 %v5106
    %5178 = vmatpush.msra.mxu0 %v5105
    %5179 = vmatpush.msra.mxu0 %v5104
    %5180 = vmatpush.msra.mxu0 %v5103
    %5181 = vmatpush.msra.mxu0 %v5102
    %5182 = vmatpush.msra.mxu0 %v5101
    %5183 = vmatpush.msra.mxu0 %v5100
    %5184 = vmatmul.f32.gmra.mxu0 %v5037
    %v5185 = vpop.f32.mrf.mxu0
    %v5186 = vadd.f32 %v5166, %v5185
    %5187 = vdwg.mxu0
    %5188 = vmatpush.msra.mxu0 %v5131
    %5189 = vmatpush.msra.mxu0 %v5130
    %5190 = vmatpush.msra.mxu0 %v5129
    %5191 = vmatpush.msra.mxu0 %v5128
    %5192 = vmatpush.msra.mxu0 %v5127
    %5193 = vmatpush.msra.mxu0 %v5126
    %5194 = vmatpush.msra.mxu0 %v5125
    %5195 = vmatpush.msra.mxu0 %v5124
    %5196 = vmatpush.msra.mxu0 %v5123
    %5197 = vmatpush.msra.mxu0 %v5122
    %5198 = vmatpush.msra.mxu0 %v5121
    %5199 = vmatpush.msra.mxu0 %v5120
    %5200 = vmatpush.msra.mxu0 %v5119
    %5201 = vmatpush.msra.mxu0 %v5118
    %5202 = vmatpush.msra.mxu0 %v5117
    %5203 = vmatpush.msra.mxu0 %v5116
    %5204 = vmatmul.f32.gmra.mxu0 %v5044
    %v5205 = vpop.f32.mrf.mxu0
    %v5206 = vadd.f32 %v5186, %v5205
    %5207 = vdwg.mxu0
    %5208 = vmatpush.msra.mxu0 %v5147
    %5209 = vmatpush.msra.mxu0 %v5146
    %5210 = vmatpush.msra.mxu0 %v5145
    %5211 = vmatpush.msra.mxu0 %v5144
    %5212 = vmatpush.msra.mxu0 %v5143
    %5213 = vmatpush.msra.mxu0 %v5142
    %5214 = vmatpush.msra.mxu0 %v5141
    %5215 = vmatpush.msra.mxu0 %v5140
    %5216 = vmatpush.msra.mxu0 %v5139
    %5217 = vmatpush.msra.mxu0 %v5138
    %5218 = vmatpush.msra.mxu0 %v5137
    %5219 = vmatpush.msra.mxu0 %v5136
    %5220 = vmatpush.msra.mxu0 %v5135
    %5221 = vmatpush.msra.mxu0 %v5134
    %5222 = vmatpush.msra.mxu0 %v5133
    %5223 = vmatpush.msra.mxu0 %v5132
    %5224 = vmatmul.f32.gmra.mxu0 %v5051
    %v5225 = vpop.f32.mrf.mxu0
    %v5226 = vadd.f32 %v5206, %v5225
    %5227 = vdwg.mxu0
    %v5228 = vmul.f32 %v5226, 0.03125
    %5229 = vmatpush.msra.mxu0 %v5099
    %5230 = vmatpush.msra.mxu0 %v5098
    %5231 = vmatpush.msra.mxu0 %v5097
    %5232 = vmatpush.msra.mxu0 %v5096
    %5233 = vmatpush.msra.mxu0 %v5095
    %5234 = vmatpush.msra.mxu0 %v5094
    %5235 = vmatpush.msra.mxu0 %v5093
    %5236 = vmatpush.msra.mxu0 %v5092
    %5237 = vmatpush.msra.mxu0 %v5091
    %5238 = vmatpush.msra.mxu0 %v5090
    %5239 = vmatpush.msra.mxu0 %v5089
    %5240 = vmatpush.msra.mxu0 %v5088
    %5241 = vmatpush.msra.mxu0 %v5087
    %5242 = vmatpush.msra.mxu0 %v5086
    %5243 = vmatpush.msra.mxu0 %v5085
    %5244 = vmatpush.msra.mxu0 %v5084
    %5245 = vmatmul.f32.gmra.mxu0 %v5062
    %v5246 = vpop.f32.mrf.mxu0
    %v5247 = vadd.f32 0.0, %v5246
    %5248 = vdwg.mxu0
    %5249 = vmatpush.msra.mxu0 %v5115
    %5250 = vmatpush.msra.mxu0 %v5114
    %5251 = vmatpush.msra.mxu0 %v5113
    %5252 = vmatpush.msra.mxu0 %v5112
    %5253 = vmatpush.msra.mxu0 %v5111
    %5254 = vmatpush.msra.mxu0 %v5110
    %5255 = vmatpush.msra.mxu0 %v5109
    %5256 = vmatpush.msra.mxu0 %v5108
    %5257 = vmatpush.msra.mxu0 %v5107
    %5258 = vmatpush.msra.mxu0 %v5106
    %5259 = vmatpush.msra.mxu0 %v5105
    %5260 = vmatpush.msra.mxu0 %v5104
    %5261 = vmatpush.msra.mxu0 %v5103
    %5262 = vmatpush.msra.mxu0 %v5102
    %5263 = vmatpush.msra.mxu0 %v5101
    %5264 = vmatpush.msra.mxu0 %v5100
    %5265 = vmatmul.f32.gmra.mxu0 %v5069
    %v5266 = vpop.f32.mrf.mxu0
    %v5267 = vadd.f32 %v5247, %v5266
    %5268 = vdwg.mxu0
    %5269 = vmatpush.msra.mxu0 %v5131
    %5270 = vmatpush.msra.mxu0 %v5130
    %5271 = vmatpush.msra.mxu0 %v5129
    %5272 = vmatpush.msra.mxu0 %v5128
    %5273 = vmatpush.msra.mxu0 %v5127
    %5274 = vmatpush.msra.mxu0 %v5126
    %5275 = vmatpush.msra.mxu0 %v5125
    %5276 = vmatpush.msra.mxu0 %v5124
    %5277 = vmatpush.msra.mxu0 %v5123
    %5278 = vmatpush.msra.mxu0 %v5122
    %5279 = vmatpush.msra.mxu0 %v5121
    %5280 = vmatpush.msra.mxu0 %v5120
    %5281 = vmatpush.msra.mxu0 %v5119
    %5282 = vmatpush.msra.mxu0 %v5118
    %5283 = vmatpush.msra.mxu0 %v5117
    %5284 = vmatpush.msra.mxu0 %v5116
    %5285 = vmatmul.f32.gmra.mxu0 %v5076
    %v5286 = vpop.f32.mrf.mxu0
    %v5287 = vadd.f32 %v5267, %v5286
    %5288 = vdwg.mxu0
    %5289 = vmatpush.msra.mxu0 %v5147
    %5290 = vmatpush.msra.mxu0 %v5146
    %5291 = vmatpush.msra.mxu0 %v5145
    %5292 = vmatpush.msra.mxu0 %v5144
    %5293 = vmatpush.msra.mxu0 %v5143
    %5294 = vmatpush.msra.mxu0 %v5142
    %5295 = vmatpush.msra.mxu0 %v5141
    %5296 = vmatpush.msra.mxu0 %v5140
    %5297 = vmatpush.msra.mxu0 %v5139
    %5298 = vmatpush.msra.mxu0 %v5138
    %5299 = vmatpush.msra.mxu0 %v5137
    %5300 = vmatpush.msra.mxu0 %v5136
    %5301 = vmatpush.msra.mxu0 %v5135
    %5302 = vmatpush.msra.mxu0 %v5134
    %5303 = vmatpush.msra.mxu0 %v5133
    %5304 = vmatpush.msra.mxu0 %v5132
    %5305 = vmatmul.f32.gmra.mxu0 %v5083
    %v5306 = vpop.f32.mrf.mxu0
    %v5307 = vadd.f32 %v5287, %v5306
    %5308 = vdwg.mxu0
    %v5309 = vmul.f32 %v5307, 0.03125
    %v5310 = vmul.f32 %v5228, %v5228
    %v5311 = vsub.f32 %v5309, %v5310
    %v5312 = vld [vmem:[#allocation16] sm:$0x1]
    %v5313 = vadd.f32 %v5311, 1e-05
    %v5314 = vrsqrt.pop %v5313
    %v5315 = vmul.f32 %v5314, %v5313
    %v5316 = vmul.f32 %v5315, %v5314
    %v5317 = vmul.f32 0.5, %v5316
    %v5318 = vsub.f32 1.5, %v5317
    %v5319 = vmul.f32 %v5314, %v5318
    %vm5320 = vweird.f32 %v5313
    %vm5321 = vweird.f32 %v5314
    %vm5322 = vmor %vm5320, %vm5321
    %v5323 = vsel %vm5322, %v5314, %v5319
    %v5324 = vmul.f32 %v5312, %v5323
    %v5325 = vld [vmem:[#allocation17] sm:$0x1]
    %v5326 = vmul.f32 %v5228, %v5324
    %v5327 = vsub.f32 %v5325, %v5326
    %v5328 = vld [vmem:[#allocation14] sm:$0xff]
    %v5329 = vld [vmem:[#allocation14 + $0x8] sm:$0xff]
    %v5330 = vld [vmem:[#allocation14 + $0x10] sm:$0xff]
    %v5331 = vld [vmem:[#allocation14 + $0x18] sm:$0xff]
    %v5332 = vld [vmem:[#allocation14 + $0x20] sm:$0xff]
    %v5333 = vld [vmem:[#allocation14 + $0x28] sm:$0xff]
    %v5334 = vld [vmem:[#allocation14 + $0x30] sm:$0xff]
    %v5335 = vld [vmem:[#allocation14 + $0x38] sm:$0xff]
    %v5336 = vld [vmem:[#allocation14 + $0x40] sm:$0xff]
    %v5337 = vld [vmem:[#allocation14 + $0x48] sm:$0xff]
    %v5338 = vld [vmem:[#allocation14 + $0x50] sm:$0xff]
    %v5339 = vld [vmem:[#allocation14 + $0x58] sm:$0xff]
    %v5340 = vld [vmem:[#allocation14 + $0x60] sm:$0xff]
    %v5341 = vld [vmem:[#allocation14 + $0x68] sm:$0xff]
    %v5342 = vld [vmem:[#allocation14 + $0x70] sm:$0xff]
    %v5343 = vld [vmem:[#allocation14 + $0x78] sm:$0xff]
    %vm5344 = vcmask 261120
    %v5346 = vsel %vm5344, %v5324, 0
    %5348 = vmatpush.msra.mxu0 0.0
    %5349 = vmatpush.msra.mxu0 0.0
    %5350 = vmatpush.msra.mxu0 0.0
    %5351 = vmatpush.msra.mxu0 0.0
    %5352 = vmatpush.msra.mxu0 0.0
    %5353 = vmatpush.msra.mxu0 0.0
    %5354 = vmatpush.msra.mxu0 0.0
    %5355 = vmatpush.msra.mxu0 0.0
    %5356 = vmatpush.msra.mxu0 0.0
    %5357 = vmatpush.msra.mxu0 0.0
    %5358 = vmatpush.msra.mxu0 0.0
    %5359 = vmatpush.msra.mxu0 0.0
    %5360 = vmatpush.msra.mxu0 %v5340
    %5361 = vmatpush.msra.mxu0 %v5336
    %5362 = vmatpush.msra.mxu0 %v5332
    %5363 = vmatpush.msra.mxu0 %v5328
    %5364 = vmatmul.f32.gmra.mxu0 %v5346
    %v5365 = vpop.f32.mrf.mxu0
    %v5366 = vadd.f32 0.0, %v5365
    %5367 = vdwg.mxu0
    %5368 = vmatpush.msra.mxu0 0.0
    %5369 = vmatpush.msra.mxu0 0.0
    %5370 = vmatpush.msra.mxu0 0.0
    %5371 = vmatpush.msra.mxu0 0.0
    %5372 = vmatpush.msra.mxu0 0.0
    %5373 = vmatpush.msra.mxu0 0.0
    %5374 = vmatpush.msra.mxu0 0.0
    %5375 = vmatpush.msra.mxu0 0.0
    %5376 = vmatpush.msra.mxu0 0.0
    %5377 = vmatpush.msra.mxu0 0.0
    %5378 = vmatpush.msra.mxu0 0.0
    %5379 = vmatpush.msra.mxu0 0.0
    %5380 = vmatpush.msra.mxu0 %v5341
    %5381 = vmatpush.msra.mxu0 %v5337
    %5382 = vmatpush.msra.mxu0 %v5333
    %5383 = vmatpush.msra.mxu0 %v5329
    %5384 = vmatmul.f32.gmra.mxu0 %v5346
    %v5385 = vpop.f32.mrf.mxu0
    %v5386 = vadd.f32 0.0, %v5385
    %5387 = vdwg.mxu0
    %5388 = vmatpush.msra.mxu0 0.0
    %5389 = vmatpush.msra.mxu0 0.0
    %5390 = vmatpush.msra.mxu0 0.0
    %5391 = vmatpush.msra.mxu0 0.0
    %5392 = vmatpush.msra.mxu0 0.0
    %5393 = vmatpush.msra.mxu0 0.0
    %5394 = vmatpush.msra.mxu0 0.0
    %5395 = vmatpush.msra.mxu0 0.0
    %5396 = vmatpush.msra.mxu0 0.0
    %5397 = vmatpush.msra.mxu0 0.0
    %5398 = vmatpush.msra.mxu0 0.0
    %5399 = vmatpush.msra.mxu0 0.0
    %5400 = vmatpush.msra.mxu0 %v5342
    %5401 = vmatpush.msra.mxu0 %v5338
    %5402 = vmatpush.msra.mxu0 %v5334
    %5403 = vmatpush.msra.mxu0 %v5330
    %5404 = vmatmul.f32.gmra.mxu0 %v5346
    %v5405 = vpop.f32.mrf.mxu0
    %v5406 = vadd.f32 0.0, %v5405
    %5407 = vdwg.mxu0
    %5408 = vmatpush.msra.mxu0 0.0
    %5409 = vmatpush.msra.mxu0 0.0
    %5410 = vmatpush.msra.mxu0 0.0
    %5411 = vmatpush.msra.mxu0 0.0
    %5412 = vmatpush.msra.mxu0 0.0
    %5413 = vmatpush.msra.mxu0 0.0
    %5414 = vmatpush.msra.mxu0 0.0
    %5415 = vmatpush.msra.mxu0 0.0
    %5416 = vmatpush.msra.mxu0 0.0
    %5417 = vmatpush.msra.mxu0 0.0
    %5418 = vmatpush.msra.mxu0 0.0
    %5419 = vmatpush.msra.mxu0 0.0
    %5420 = vmatpush.msra.mxu0 %v5343
    %5421 = vmatpush.msra.mxu0 %v5339
    %5422 = vmatpush.msra.mxu0 %v5335
    %5423 = vmatpush.msra.mxu0 %v5331
    %5424 = vmatmul.f32.gmra.mxu0 %v5346
    %v5425 = vpop.f32.mrf.mxu0
    %v5426 = vadd.f32 0.0, %v5425
    %5427 = vdwg.mxu0
    %v5428 = vperm.slane %v5366, 0
    %v5429 = vperm.slane %v5386, 0
    %v5430 = vperm.slane %v5406, 0
    %v5431 = vperm.slane %v5426, 0
    %v5432 = vmul.f32 %v5020, %v5428
    %v5433 = vmul.f32 %v5021, %v5429
    %v5434 = vmul.f32 %v5022, %v5430
    %v5435 = vmul.f32 %v5023, %v5431
    %v5437 = vsel %vm5344, %v5327, 0
    %5439 = vmatpush.msra.mxu0 0.0
    %5440 = vmatpush.msra.mxu0 0.0
    %5441 = vmatpush.msra.mxu0 0.0
    %5442 = vmatpush.msra.mxu0 0.0
    %5443 = vmatpush.msra.mxu0 0.0
    %5444 = vmatpush.msra.mxu0 0.0
    %5445 = vmatpush.msra.mxu0 0.0
    %5446 = vmatpush.msra.mxu0 0.0
    %5447 = vmatpush.msra.mxu0 0.0
    %5448 = vmatpush.msra.mxu0 0.0
    %5449 = vmatpush.msra.mxu0 0.0
    %5450 = vmatpush.msra.mxu0 0.0
    %5451 = vmatpush.msra.mxu0 %v5340
    %5452 = vmatpush.msra.mxu0 %v5336
    %5453 = vmatpush.msra.mxu0 %v5332
    %5454 = vmatpush.msra.mxu0 %v5328
    %5455 = vmatmul.f32.gmra.mxu0 %v5437
    %v5456 = vpop.f32.mrf.mxu0
    %v5457 = vadd.f32 0.0, %v5456
    %5458 = vdwg.mxu0
    %5459 = vmatpush.msra.mxu0 0.0
    %5460 = vmatpush.msra.mxu0 0.0
    %5461 = vmatpush.msra.mxu0 0.0
    %5462 = vmatpush.msra.mxu0 0.0
    %5463 = vmatpush.msra.mxu0 0.0
    %5464 = vmatpush.msra.mxu0 0.0
    %5465 = vmatpush.msra.mxu0 0.0
    %5466 = vmatpush.msra.mxu0 0.0
    %5467 = vmatpush.msra.mxu0 0.0
    %5468 = vmatpush.msra.mxu0 0.0
    %5469 = vmatpush.msra.mxu0 0.0
    %5470 = vmatpush.msra.mxu0 0.0
    %5471 = vmatpush.msra.mxu0 %v5341
    %5472 = vmatpush.msra.mxu0 %v5337
    %5473 = vmatpush.msra.mxu0 %v5333
    %5474 = vmatpush.msra.mxu0 %v5329
    %5475 = vmatmul.f32.gmra.mxu0 %v5437
    %v5476 = vpop.f32.mrf.mxu0
    %v5477 = vadd.f32 0.0, %v5476
    %5478 = vdwg.mxu0
    %5479 = vmatpush.msra.mxu0 0.0
    %5480 = vmatpush.msra.mxu0 0.0
    %5481 = vmatpush.msra.mxu0 0.0
    %5482 = vmatpush.msra.mxu0 0.0
    %5483 = vmatpush.msra.mxu0 0.0
    %5484 = vmatpush.msra.mxu0 0.0
    %5485 = vmatpush.msra.mxu0 0.0
    %5486 = vmatpush.msra.mxu0 0.0
    %5487 = vmatpush.msra.mxu0 0.0
    %5488 = vmatpush.msra.mxu0 0.0
    %5489 = vmatpush.msra.mxu0 0.0
    %5490 = vmatpush.msra.mxu0 0.0
    %5491 = vmatpush.msra.mxu0 %v5342
    %5492 = vmatpush.msra.mxu0 %v5338
    %5493 = vmatpush.msra.mxu0 %v5334
    %5494 = vmatpush.msra.mxu0 %v5330
    %5495 = vmatmul.f32.gmra.mxu0 %v5437
    %v5496 = vpop.f32.mrf.mxu0
    %v5497 = vadd.f32 0.0, %v5496
    %5498 = vdwg.mxu0
    %5499 = vmatpush.msra.mxu0 0.0
    %5500 = vmatpush.msra.mxu0 0.0
    %5501 = vmatpush.msra.mxu0 0.0
    %5502 = vmatpush.msra.mxu0 0.0
    %5503 = vmatpush.msra.mxu0 0.0
    %5504 = vmatpush.msra.mxu0 0.0
    %5505 = vmatpush.msra.mxu0 0.0
    %5506 = vmatpush.msra.mxu0 0.0
    %5507 = vmatpush.msra.mxu0 0.0
    %5508 = vmatpush.msra.mxu0 0.0
    %5509 = vmatpush.msra.mxu0 0.0
    %5510 = vmatpush.msra.mxu0 0.0
    %5511 = vmatpush.msra.mxu0 %v5343
    %5512 = vmatpush.msra.mxu0 %v5339
    %5513 = vmatpush.msra.mxu0 %v5335
    %5514 = vmatpush.msra.mxu0 %v5331
    %5515 = vmatmul.f32.gmra.mxu0 %v5437
    %v5516 = vpop.f32.mrf.mxu0
    %v5517 = vadd.f32 0.0, %v5516
    %5518 = vdwg.mxu0
    %v5519 = vperm.slane %v5457, 0
    %v5520 = vperm.slane %v5477, 0
    %v5521 = vperm.slane %v5497, 0
    %v5522 = vperm.slane %v5517, 0
    %v5523 = vadd.f32 %v5432, %v5519
    %v5524 = vadd.f32 %v5433, %v5520
    %v5525 = vadd.f32 %v5434, %v5521
    %v5526 = vadd.f32 %v5435, %v5522
    %v5527 = vmul.f32 %v5523, 0.01
    %v5528 = vmul.f32 %v5524, 0.01
    %v5529 = vmul.f32 %v5525, 0.01
    %v5530 = vmul.f32 %v5526, 0.01
    %v5531 = vmax.f32 %v5523, %v5527
    %v5532 = vmax.f32 %v5524, %v5528
    %v5533 = vmax.f32 %v5525, %v5529
    %v5534 = vmax.f32 %v5526, %v5530
    %v5535 = vld [vmem:[#allocation19] sm:$0xff]
    %v5536 = vld [vmem:[#allocation19 + $0x8] sm:$0xff]
    %v5537 = vld [vmem:[#allocation19 + $0x10] sm:$0xff]
    %v5538 = vld [vmem:[#allocation19 + $0x18] sm:$0xff]
    %v5539 = vld [vmem:[#allocation19 + $0x20] sm:$0xff]
    %v5540 = vld [vmem:[#allocation19 + $0x28] sm:$0xff]
    %v5541 = vld [vmem:[#allocation19 + $0x30] sm:$0xff]
    %v5542 = vld [vmem:[#allocation19 + $0x38] sm:$0xff]
    %v5543 = vld [vmem:[#allocation19 + $0x40] sm:$0xff]
    %v5544 = vld [vmem:[#allocation19 + $0x48] sm:$0xff]
    %v5545 = vld [vmem:[#allocation19 + $0x50] sm:$0xff]
    %v5546 = vld [vmem:[#allocation19 + $0x58] sm:$0xff]
    %v5547 = vld [vmem:[#allocation19 + $0x60] sm:$0xff]
    %v5548 = vld [vmem:[#allocation19 + $0x68] sm:$0xff]
    %v5549 = vld [vmem:[#allocation19 + $0x70] sm:$0xff]
    %v5550 = vld [vmem:[#allocation19 + $0x78] sm:$0xff]
    %v5551 = vld [vmem:[#allocation19 + $0x80] sm:$0xff]
    %v5552 = vld [vmem:[#allocation19 + $0x88] sm:$0xff]
    %v5553 = vld [vmem:[#allocation19 + $0x90] sm:$0xff]
    %v5554 = vld [vmem:[#allocation19 + $0x98] sm:$0xff]
    %v5555 = vld [vmem:[#allocation19 + $0xa0] sm:$0xff]
    %v5556 = vld [vmem:[#allocation19 + $0xa8] sm:$0xff]
    %v5557 = vld [vmem:[#allocation19 + $0xb0] sm:$0xff]
    %v5558 = vld [vmem:[#allocation19 + $0xb8] sm:$0xff]
    %v5559 = vld [vmem:[#allocation19 + $0xc0] sm:$0xff]
    %v5560 = vld [vmem:[#allocation19 + $0xc8] sm:$0xff]
    %v5561 = vld [vmem:[#allocation19 + $0xd0] sm:$0xff]
    %v5562 = vld [vmem:[#allocation19 + $0xd8] sm:$0xff]
    %v5563 = vld [vmem:[#allocation19 + $0xe0] sm:$0xff]
    %v5564 = vld [vmem:[#allocation19 + $0xe8] sm:$0xff]
    %v5565 = vld [vmem:[#allocation19 + $0xf0] sm:$0xff]
    %v5566 = vld [vmem:[#allocation19 + $0xf8] sm:$0xff]
    %v5567 = vld [vmem:[#allocation19 + $0x100] sm:$0xff]
    %v5568 = vld [vmem:[#allocation19 + $0x108] sm:$0xff]
    %v5569 = vld [vmem:[#allocation19 + $0x110] sm:$0xff]
    %v5570 = vld [vmem:[#allocation19 + $0x118] sm:$0xff]
    %v5571 = vld [vmem:[#allocation19 + $0x120] sm:$0xff]
    %v5572 = vld [vmem:[#allocation19 + $0x128] sm:$0xff]
    %v5573 = vld [vmem:[#allocation19 + $0x130] sm:$0xff]
    %v5574 = vld [vmem:[#allocation19 + $0x138] sm:$0xff]
    %v5575 = vld [vmem:[#allocation19 + $0x140] sm:$0xff]
    %v5576 = vld [vmem:[#allocation19 + $0x148] sm:$0xff]
    %v5577 = vld [vmem:[#allocation19 + $0x150] sm:$0xff]
    %v5578 = vld [vmem:[#allocation19 + $0x158] sm:$0xff]
    %v5579 = vld [vmem:[#allocation19 + $0x160] sm:$0xff]
    %v5580 = vld [vmem:[#allocation19 + $0x168] sm:$0xff]
    %v5581 = vld [vmem:[#allocation19 + $0x170] sm:$0xff]
    %v5582 = vld [vmem:[#allocation19 + $0x178] sm:$0xff]
    %v5583 = vld [vmem:[#allocation19 + $0x180] sm:$0xff]
    %v5584 = vld [vmem:[#allocation19 + $0x188] sm:$0xff]
    %v5585 = vld [vmem:[#allocation19 + $0x190] sm:$0xff]
    %v5586 = vld [vmem:[#allocation19 + $0x198] sm:$0xff]
    %v5587 = vld [vmem:[#allocation19 + $0x1a0] sm:$0xff]
    %v5588 = vld [vmem:[#allocation19 + $0x1a8] sm:$0xff]
    %v5589 = vld [vmem:[#allocation19 + $0x1b0] sm:$0xff]
    %v5590 = vld [vmem:[#allocation19 + $0x1b8] sm:$0xff]
    %v5591 = vld [vmem:[#allocation19 + $0x1c0] sm:$0xff]
    %v5592 = vld [vmem:[#allocation19 + $0x1c8] sm:$0xff]
    %v5593 = vld [vmem:[#allocation19 + $0x1d0] sm:$0xff]
    %v5594 = vld [vmem:[#allocation19 + $0x1d8] sm:$0xff]
    %v5595 = vld [vmem:[#allocation19 + $0x1e0] sm:$0xff]
    %v5596 = vld [vmem:[#allocation19 + $0x1e8] sm:$0xff]
    %v5597 = vld [vmem:[#allocation19 + $0x1f0] sm:$0xff]
    %v5598 = vld [vmem:[#allocation19 + $0x1f8] sm:$0xff]
    %v5599 = vld [vmem:[#allocation19 + $0x200] sm:$0xff]
    %v5600 = vld [vmem:[#allocation19 + $0x208] sm:$0xff]
    %v5601 = vld [vmem:[#allocation19 + $0x210] sm:$0xff]
    %v5602 = vld [vmem:[#allocation19 + $0x218] sm:$0xff]
    %v5603 = vld [vmem:[#allocation19 + $0x220] sm:$0xff]
    %v5604 = vld [vmem:[#allocation19 + $0x228] sm:$0xff]
    %v5605 = vld [vmem:[#allocation19 + $0x230] sm:$0xff]
    %v5606 = vld [vmem:[#allocation19 + $0x238] sm:$0xff]
    %v5607 = vld [vmem:[#allocation19 + $0x240] sm:$0xff]
    %v5608 = vld [vmem:[#allocation19 + $0x248] sm:$0xff]
    %v5609 = vld [vmem:[#allocation19 + $0x250] sm:$0xff]
    %v5610 = vld [vmem:[#allocation19 + $0x258] sm:$0xff]
    %v5611 = vld [vmem:[#allocation19 + $0x260] sm:$0xff]
    %v5612 = vld [vmem:[#allocation19 + $0x268] sm:$0xff]
    %v5613 = vld [vmem:[#allocation19 + $0x270] sm:$0xff]
    %v5614 = vld [vmem:[#allocation19 + $0x278] sm:$0xff]
    %v5615 = vld [vmem:[#allocation19 + $0x280] sm:$0xff]
    %v5616 = vld [vmem:[#allocation19 + $0x288] sm:$0xff]
    %v5617 = vld [vmem:[#allocation19 + $0x290] sm:$0xff]
    %v5618 = vld [vmem:[#allocation19 + $0x298] sm:$0xff]
    %v5619 = vld [vmem:[#allocation19 + $0x2a0] sm:$0xff]
    %v5620 = vld [vmem:[#allocation19 + $0x2a8] sm:$0xff]
    %v5621 = vld [vmem:[#allocation19 + $0x2b0] sm:$0xff]
    %v5622 = vld [vmem:[#allocation19 + $0x2b8] sm:$0xff]
    %v5623 = vld [vmem:[#allocation19 + $0x2c0] sm:$0xff]
    %v5624 = vld [vmem:[#allocation19 + $0x2c8] sm:$0xff]
    %v5625 = vld [vmem:[#allocation19 + $0x2d0] sm:$0xff]
    %v5626 = vld [vmem:[#allocation19 + $0x2d8] sm:$0xff]
    %v5627 = vld [vmem:[#allocation19 + $0x2e0] sm:$0xff]
    %v5628 = vld [vmem:[#allocation19 + $0x2e8] sm:$0xff]
    %v5629 = vld [vmem:[#allocation19 + $0x2f0] sm:$0xff]
    %v5630 = vld [vmem:[#allocation19 + $0x2f8] sm:$0xff]
    %v5631 = vld [vmem:[#allocation19 + $0x300] sm:$0xff]
    %v5632 = vld [vmem:[#allocation19 + $0x308] sm:$0xff]
    %v5633 = vld [vmem:[#allocation19 + $0x310] sm:$0xff]
    %v5634 = vld [vmem:[#allocation19 + $0x318] sm:$0xff]
    %v5635 = vld [vmem:[#allocation19 + $0x320] sm:$0xff]
    %v5636 = vld [vmem:[#allocation19 + $0x328] sm:$0xff]
    %v5637 = vld [vmem:[#allocation19 + $0x330] sm:$0xff]
    %v5638 = vld [vmem:[#allocation19 + $0x338] sm:$0xff]
    %v5639 = vld [vmem:[#allocation19 + $0x340] sm:$0xff]
    %v5640 = vld [vmem:[#allocation19 + $0x348] sm:$0xff]
    %v5641 = vld [vmem:[#allocation19 + $0x350] sm:$0xff]
    %v5642 = vld [vmem:[#allocation19 + $0x358] sm:$0xff]
    %v5643 = vld [vmem:[#allocation19 + $0x360] sm:$0xff]
    %v5644 = vld [vmem:[#allocation19 + $0x368] sm:$0xff]
    %v5645 = vld [vmem:[#allocation19 + $0x370] sm:$0xff]
    %v5646 = vld [vmem:[#allocation19 + $0x378] sm:$0xff]
    %v5647 = vld [vmem:[#allocation19 + $0x380] sm:$0xff]
    %v5648 = vld [vmem:[#allocation19 + $0x388] sm:$0xff]
    %v5649 = vld [vmem:[#allocation19 + $0x390] sm:$0xff]
    %v5650 = vld [vmem:[#allocation19 + $0x398] sm:$0xff]
    %v5651 = vld [vmem:[#allocation19 + $0x3a0] sm:$0xff]
    %v5652 = vld [vmem:[#allocation19 + $0x3a8] sm:$0xff]
    %v5653 = vld [vmem:[#allocation19 + $0x3b0] sm:$0xff]
    %v5654 = vld [vmem:[#allocation19 + $0x3b8] sm:$0xff]
    %v5655 = vld [vmem:[#allocation19 + $0x3c0] sm:$0xff]
    %v5656 = vld [vmem:[#allocation19 + $0x3c8] sm:$0xff]
    %v5657 = vld [vmem:[#allocation19 + $0x3d0] sm:$0xff]
    %v5658 = vld [vmem:[#allocation19 + $0x3d8] sm:$0xff]
    %v5659 = vld [vmem:[#allocation19 + $0x3e0] sm:$0xff]
    %v5660 = vld [vmem:[#allocation19 + $0x3e8] sm:$0xff]
    %v5661 = vld [vmem:[#allocation19 + $0x3f0] sm:$0xff]
    %v5662 = vld [vmem:[#allocation19 + $0x3f8] sm:$0xff]
    %v5663 = vld [vmem:[#allocation20] sm:$0x3]
    %v5665 = vperm.slane %v5663, 0
    %v5666 = vperm.slane %v5663, 1
    %5669 = vmatpush.msra.mxu0 %v5565
    %5670 = vmatpush.msra.mxu0 %v5563
    %5671 = vmatpush.msra.mxu0 %v5561
    %5672 = vmatpush.msra.mxu0 %v5559
    %5673 = vmatpush.msra.mxu0 %v5557
    %5674 = vmatpush.msra.mxu0 %v5555
    %5675 = vmatpush.msra.mxu0 %v5553
    %5676 = vmatpush.msra.mxu0 %v5551
    %5677 = vmatpush.msra.mxu0 %v5549
    %5678 = vmatpush.msra.mxu0 %v5547
    %5679 = vmatpush.msra.mxu0 %v5545
    %5680 = vmatpush.msra.mxu0 %v5543
    %5681 = vmatpush.msra.mxu0 %v5541
    %5682 = vmatpush.msra.mxu0 %v5539
    %5683 = vmatpush.msra.mxu0 %v5537
    %5684 = vmatpush.msra.mxu0 %v5535
    %5685 = vmatmul.f32.gmra.mxu0 %v5531
    %v5686 = vpop.f32.mrf.mxu0
    %v5687 = vadd.f32 %v5665, %v5686
    %5688 = vdwg.mxu0
    %5689 = vmatpush.msra.mxu0 %v5597
    %5690 = vmatpush.msra.mxu0 %v5595
    %5691 = vmatpush.msra.mxu0 %v5593
    %5692 = vmatpush.msra.mxu0 %v5591
    %5693 = vmatpush.msra.mxu0 %v5589
    %5694 = vmatpush.msra.mxu0 %v5587
    %5695 = vmatpush.msra.mxu0 %v5585
    %5696 = vmatpush.msra.mxu0 %v5583
    %5697 = vmatpush.msra.mxu0 %v5581
    %5698 = vmatpush.msra.mxu0 %v5579
    %5699 = vmatpush.msra.mxu0 %v5577
    %5700 = vmatpush.msra.mxu0 %v5575
    %5701 = vmatpush.msra.mxu0 %v5573
    %5702 = vmatpush.msra.mxu0 %v5571
    %5703 = vmatpush.msra.mxu0 %v5569
    %5704 = vmatpush.msra.mxu0 %v5567
    %5705 = vmatmul.f32.gmra.mxu0 %v5532
    %v5706 = vpop.f32.mrf.mxu0
    %v5707 = vadd.f32 %v5687, %v5706
    %5708 = vdwg.mxu0
    %5709 = vmatpush.msra.mxu0 %v5629
    %5710 = vmatpush.msra.mxu0 %v5627
    %5711 = vmatpush.msra.mxu0 %v5625
    %5712 = vmatpush.msra.mxu0 %v5623
    %5713 = vmatpush.msra.mxu0 %v5621
    %5714 = vmatpush.msra.mxu0 %v5619
    %5715 = vmatpush.msra.mxu0 %v5617
    %5716 = vmatpush.msra.mxu0 %v5615
    %5717 = vmatpush.msra.mxu0 %v5613
    %5718 = vmatpush.msra.mxu0 %v5611
    %5719 = vmatpush.msra.mxu0 %v5609
    %5720 = vmatpush.msra.mxu0 %v5607
    %5721 = vmatpush.msra.mxu0 %v5605
    %5722 = vmatpush.msra.mxu0 %v5603
    %5723 = vmatpush.msra.mxu0 %v5601
    %5724 = vmatpush.msra.mxu0 %v5599
    %5725 = vmatmul.f32.gmra.mxu0 %v5533
    %v5726 = vpop.f32.mrf.mxu0
    %v5727 = vadd.f32 %v5707, %v5726
    %5728 = vdwg.mxu0
    %5729 = vmatpush.msra.mxu0 %v5661
    %5730 = vmatpush.msra.mxu0 %v5659
    %5731 = vmatpush.msra.mxu0 %v5657
    %5732 = vmatpush.msra.mxu0 %v5655
    %5733 = vmatpush.msra.mxu0 %v5653
    %5734 = vmatpush.msra.mxu0 %v5651
    %5735 = vmatpush.msra.mxu0 %v5649
    %5736 = vmatpush.msra.mxu0 %v5647
    %5737 = vmatpush.msra.mxu0 %v5645
    %5738 = vmatpush.msra.mxu0 %v5643
    %5739 = vmatpush.msra.mxu0 %v5641
    %5740 = vmatpush.msra.mxu0 %v5639
    %5741 = vmatpush.msra.mxu0 %v5637
    %5742 = vmatpush.msra.mxu0 %v5635
    %5743 = vmatpush.msra.mxu0 %v5633
    %5744 = vmatpush.msra.mxu0 %v5631
    %5745 = vmatmul.f32.gmra.mxu0 %v5534
    %v5746 = vpop.f32.mrf.mxu0
    %v5747 = vadd.f32 %v5727, %v5746
    %5748 = vdwg.mxu0
    %5749 = vmatpush.msra.mxu0 %v5566
    %5750 = vmatpush.msra.mxu0 %v5564
    %5751 = vmatpush.msra.mxu0 %v5562
    %5752 = vmatpush.msra.mxu0 %v5560
    %5753 = vmatpush.msra.mxu0 %v5558
    %5754 = vmatpush.msra.mxu0 %v5556
    %5755 = vmatpush.msra.mxu0 %v5554
    %5756 = vmatpush.msra.mxu0 %v5552
    %5757 = vmatpush.msra.mxu0 %v5550
    %5758 = vmatpush.msra.mxu0 %v5548
    %5759 = vmatpush.msra.mxu0 %v5546
    %5760 = vmatpush.msra.mxu0 %v5544
    %5761 = vmatpush.msra.mxu0 %v5542
    %5762 = vmatpush.msra.mxu0 %v5540
    %5763 = vmatpush.msra.mxu0 %v5538
    %5764 = vmatpush.msra.mxu0 %v5536
    %5765 = vmatmul.f32.gmra.mxu0 %v5531
    %v5766 = vpop.f32.mrf.mxu0
    %v5767 = vadd.f32 %v5666, %v5766
    %5768 = vdwg.mxu0
    %5769 = vmatpush.msra.mxu0 %v5598
    %5770 = vmatpush.msra.mxu0 %v5596
    %5771 = vmatpush.msra.mxu0 %v5594
    %5772 = vmatpush.msra.mxu0 %v5592
    %5773 = vmatpush.msra.mxu0 %v5590
    %5774 = vmatpush.msra.mxu0 %v5588
    %5775 = vmatpush.msra.mxu0 %v5586
    %5776 = vmatpush.msra.mxu0 %v5584
    %5777 = vmatpush.msra.mxu0 %v5582
    %5778 = vmatpush.msra.mxu0 %v5580
    %5779 = vmatpush.msra.mxu0 %v5578
    %5780 = vmatpush.msra.mxu0 %v5576
    %5781 = vmatpush.msra.mxu0 %v5574
    %5782 = vmatpush.msra.mxu0 %v5572
    %5783 = vmatpush.msra.mxu0 %v5570
    %5784 = vmatpush.msra.mxu0 %v5568
    %5785 = vmatmul.f32.gmra.mxu0 %v5532
    %v5786 = vpop.f32.mrf.mxu0
    %v5787 = vadd.f32 %v5767, %v5786
    %5788 = vdwg.mxu0
    %5789 = vmatpush.msra.mxu0 %v5630
    %5790 = vmatpush.msra.mxu0 %v5628
    %5791 = vmatpush.msra.mxu0 %v5626
    %5792 = vmatpush.msra.mxu0 %v5624
    %5793 = vmatpush.msra.mxu0 %v5622
    %5794 = vmatpush.msra.mxu0 %v5620
    %5795 = vmatpush.msra.mxu0 %v5618
    %5796 = vmatpush.msra.mxu0 %v5616
    %5797 = vmatpush.msra.mxu0 %v5614
    %5798 = vmatpush.msra.mxu0 %v5612
    %5799 = vmatpush.msra.mxu0 %v5610
    %5800 = vmatpush.msra.mxu0 %v5608
    %5801 = vmatpush.msra.mxu0 %v5606
    %5802 = vmatpush.msra.mxu0 %v5604
    %5803 = vmatpush.msra.mxu0 %v5602
    %5804 = vmatpush.msra.mxu0 %v5600
    %5805 = vmatmul.f32.gmra.mxu0 %v5533
    %v5806 = vpop.f32.mrf.mxu0
    %v5807 = vadd.f32 %v5787, %v5806
    %5808 = vdwg.mxu0
    %5809 = vmatpush.msra.mxu0 %v5662
    %5810 = vmatpush.msra.mxu0 %v5660
    %5811 = vmatpush.msra.mxu0 %v5658
    %5812 = vmatpush.msra.mxu0 %v5656
    %5813 = vmatpush.msra.mxu0 %v5654
    %5814 = vmatpush.msra.mxu0 %v5652
    %5815 = vmatpush.msra.mxu0 %v5650
    %5816 = vmatpush.msra.mxu0 %v5648
    %5817 = vmatpush.msra.mxu0 %v5646
    %5818 = vmatpush.msra.mxu0 %v5644
    %5819 = vmatpush.msra.mxu0 %v5642
    %5820 = vmatpush.msra.mxu0 %v5640
    %5821 = vmatpush.msra.mxu0 %v5638
    %5822 = vmatpush.msra.mxu0 %v5636
    %5823 = vmatpush.msra.mxu0 %v5634
    %5824 = vmatpush.msra.mxu0 %v5632
    %5825 = vmatmul.f32.gmra.mxu0 %v5534
    %v5826 = vpop.f32.mrf.mxu0
    %v5827 = vadd.f32 %v5807, %v5826
    %5828 = vdwg.mxu0
    %v5829 = vsel %vm2878, %v5747, 0.0
    %v5830 = vrot.slane %v5829, 4
    %v5831 = vadd.f32 %v5829, %v5830
    %v5832 = vrot.slane %v5831, 2
    %v5833 = vadd.f32 %v5831, %v5832
    %v5834 = vrot.slane %v5833, 1
    %v5835 = vadd.f32 %v5833, %v5834
    %v5836 = vsel %vm2878, %v5827, 0.0
    %v5837 = vrot.slane %v5836, 4
    %v5838 = vadd.f32 %v5836, %v5837
    %v5839 = vrot.slane %v5838, 2
    %v5840 = vadd.f32 %v5838, %v5839
    %v5841 = vrot.slane %v5840, 1
    %v5842 = vadd.f32 %v5840, %v5841
    %v5843 = vmul.f32 %v5747, %v5747
    %v5844 = vmul.f32 %v5827, %v5827
    %v5845 = vsel %vm2878, %v5843, 0.0
    %v5846 = vrot.slane %v5845, 4
    %v5847 = vadd.f32 %v5845, %v5846
    %v5848 = vrot.slane %v5847, 2
    %v5849 = vadd.f32 %v5847, %v5848
    %v5850 = vrot.slane %v5849, 1
    %v5851 = vadd.f32 %v5849, %v5850
    %v5852 = vsel %vm2878, %v5844, 0.0
    %v5853 = vrot.slane %v5852, 4
    %v5854 = vadd.f32 %v5852, %v5853
    %v5855 = vrot.slane %v5854, 2
    %v5856 = vadd.f32 %v5854, %v5855
    %v5857 = vrot.slane %v5856, 1
    %v5858 = vadd.f32 %v5856, %v5857
    %v5859 = vld [vmem:[%s31] sm:$0xff]
    %v5860 = vld [vmem:[%s31 + $0x8] sm:$0xff]
    %v5861 = vld [vmem:[%s31 + $0x10] sm:$0xff]
    %v5862 = vld [vmem:[%s31 + $0x18] sm:$0xff]
    %v5863 = vld [vmem:[%s31 + $0x20] sm:$0xff]
    %v5864 = vld [vmem:[%s31 + $0x28] sm:$0xff]
    %v5865 = vld [vmem:[%s31 + $0x30] sm:$0xff]
    %v5866 = vld [vmem:[%s31 + $0x38] sm:$0xff]
    %v5867 = vld [vmem:[%s31 + $0x40] sm:$0xff]
    %v5868 = vld [vmem:[%s31 + $0x48] sm:$0xff]
    %v5869 = vld [vmem:[%s31 + $0x50] sm:$0xff]
    %v5870 = vld [vmem:[%s31 + $0x58] sm:$0xff]
    %v5871 = vld [vmem:[%s31 + $0x60] sm:$0xff]
    %v5872 = vld [vmem:[%s31 + $0x68] sm:$0xff]
    %v5873 = vld [vmem:[%s31 + $0x70] sm:$0xff]
    %v5874 = vld [vmem:[%s31 + $0x78] sm:$0xff]
    %v5875 = vld [vmem:[%s31 + $0x80] sm:$0xff]
    %v5876 = vld [vmem:[%s31 + $0x88] sm:$0xff]
    %v5877 = vld [vmem:[%s31 + $0x90] sm:$0xff]
    %v5878 = vld [vmem:[%s31 + $0x98] sm:$0xff]
    %v5879 = vld [vmem:[%s31 + $0xa0] sm:$0xff]
    %v5880 = vld [vmem:[%s31 + $0xa8] sm:$0xff]
    %v5881 = vld [vmem:[%s31 + $0xb0] sm:$0xff]
    %v5882 = vld [vmem:[%s31 + $0xb8] sm:$0xff]
    %v5883 = vld [vmem:[%s31 + $0xc0] sm:$0xff]
    %v5884 = vld [vmem:[%s31 + $0xc8] sm:$0xff]
    %v5885 = vld [vmem:[%s31 + $0xd0] sm:$0xff]
    %v5886 = vld [vmem:[%s31 + $0xd8] sm:$0xff]
    %v5887 = vld [vmem:[%s31 + $0xe0] sm:$0xff]
    %v5888 = vld [vmem:[%s31 + $0xe8] sm:$0xff]
    %v5889 = vld [vmem:[%s31 + $0xf0] sm:$0xff]
    %v5890 = vld [vmem:[%s31 + $0xf8] sm:$0xff]
    %5891 = vmatpush.msra.mxu0 %v5874
    %5892 = vmatpush.msra.mxu0 %v5873
    %5893 = vmatpush.msra.mxu0 %v5872
    %5894 = vmatpush.msra.mxu0 %v5871
    %5895 = vmatpush.msra.mxu0 %v5870
    %5896 = vmatpush.msra.mxu0 %v5869
    %5897 = vmatpush.msra.mxu0 %v5868
    %5898 = vmatpush.msra.mxu0 %v5867
    %5899 = vmatpush.msra.mxu0 %v5866
    %5900 = vmatpush.msra.mxu0 %v5865
    %5901 = vmatpush.msra.mxu0 %v5864
    %5902 = vmatpush.msra.mxu0 %v5863
    %5903 = vmatpush.msra.mxu0 %v5862
    %5904 = vmatpush.msra.mxu0 %v5861
    %5905 = vmatpush.msra.mxu0 %v5860
    %5906 = vmatpush.msra.mxu0 %v5859
    %5907 = vmatmul.f32.gmra.mxu0 %v5835
    %v5908 = vpop.f32.mrf.mxu0
    %v5909 = vadd.f32 0.0, %v5908
    %5910 = vdwg.mxu0
    %5911 = vmatpush.msra.mxu0 %v5890
    %5912 = vmatpush.msra.mxu0 %v5889
    %5913 = vmatpush.msra.mxu0 %v5888
    %5914 = vmatpush.msra.mxu0 %v5887
    %5915 = vmatpush.msra.mxu0 %v5886
    %5916 = vmatpush.msra.mxu0 %v5885
    %5917 = vmatpush.msra.mxu0 %v5884
    %5918 = vmatpush.msra.mxu0 %v5883
    %5919 = vmatpush.msra.mxu0 %v5882
    %5920 = vmatpush.msra.mxu0 %v5881
    %5921 = vmatpush.msra.mxu0 %v5880
    %5922 = vmatpush.msra.mxu0 %v5879
    %5923 = vmatpush.msra.mxu0 %v5878
    %5924 = vmatpush.msra.mxu0 %v5877
    %5925 = vmatpush.msra.mxu0 %v5876
    %5926 = vmatpush.msra.mxu0 %v5875
    %5927 = vmatmul.f32.gmra.mxu0 %v5842
    %v5928 = vpop.f32.mrf.mxu0
    %v5929 = vadd.f32 %v5909, %v5928
    %5930 = vdwg.mxu0
    %v5931 = vmul.f32 %v5929, 0.125
    %5932 = vmatpush.msra.mxu0 %v5874
    %5933 = vmatpush.msra.mxu0 %v5873
    %5934 = vmatpush.msra.mxu0 %v5872
    %5935 = vmatpush.msra.mxu0 %v5871
    %5936 = vmatpush.msra.mxu0 %v5870
    %5937 = vmatpush.msra.mxu0 %v5869
    %5938 = vmatpush.msra.mxu0 %v5868
    %5939 = vmatpush.msra.mxu0 %v5867
    %5940 = vmatpush.msra.mxu0 %v5866
    %5941 = vmatpush.msra.mxu0 %v5865
    %5942 = vmatpush.msra.mxu0 %v5864
    %5943 = vmatpush.msra.mxu0 %v5863
    %5944 = vmatpush.msra.mxu0 %v5862
    %5945 = vmatpush.msra.mxu0 %v5861
    %5946 = vmatpush.msra.mxu0 %v5860
    %5947 = vmatpush.msra.mxu0 %v5859
    %5948 = vmatmul.f32.gmra.mxu0 %v5851
    %v5949 = vpop.f32.mrf.mxu0
    %v5950 = vadd.f32 0.0, %v5949
    %5951 = vdwg.mxu0
    %5952 = vmatpush.msra.mxu0 %v5890
    %5953 = vmatpush.msra.mxu0 %v5889
    %5954 = vmatpush.msra.mxu0 %v5888
    %5955 = vmatpush.msra.mxu0 %v5887
    %5956 = vmatpush.msra.mxu0 %v5886
    %5957 = vmatpush.msra.mxu0 %v5885
    %5958 = vmatpush.msra.mxu0 %v5884
    %5959 = vmatpush.msra.mxu0 %v5883
    %5960 = vmatpush.msra.mxu0 %v5882
    %5961 = vmatpush.msra.mxu0 %v5881
    %5962 = vmatpush.msra.mxu0 %v5880
    %5963 = vmatpush.msra.mxu0 %v5879
    %5964 = vmatpush.msra.mxu0 %v5878
    %5965 = vmatpush.msra.mxu0 %v5877
    %5966 = vmatpush.msra.mxu0 %v5876
    %5967 = vmatpush.msra.mxu0 %v5875
    %5968 = vmatmul.f32.gmra.mxu0 %v5858
    %v5969 = vpop.f32.mrf.mxu0
    %v5970 = vadd.f32 %v5950, %v5969
    %5971 = vdwg.mxu0
    %v5972 = vmul.f32 %v5970, 0.125
    %v5973 = vmul.f32 %v5931, %v5931
    %v5974 = vsub.f32 %v5972, %v5973
    %v5975 = vld [vmem:[#allocation23] sm:$0x1]
    %v5976 = vadd.f32 %v5974, 1e-05
    %v5977 = vrsqrt.pop %v5976
    %v5978 = vmul.f32 %v5977, %v5976
    %v5979 = vmul.f32 %v5978, %v5977
    %v5980 = vmul.f32 0.5, %v5979
    %v5981 = vsub.f32 1.5, %v5980
    %v5982 = vmul.f32 %v5977, %v5981
    %vm5983 = vweird.f32 %v5976
    %vm5984 = vweird.f32 %v5977
    %vm5985 = vmor %vm5983, %vm5984
    %v5986 = vsel %vm5985, %v5977, %v5982
    %v5987 = vmul.f32 %v5975, %v5986
    %v5988 = vld [vmem:[#allocation25] sm:$0x1]
    %v5989 = vmul.f32 %v5931, %v5987
    %v5990 = vsub.f32 %v5988, %v5989
    %v5991 = vld [vmem:[#allocation22] sm:$0xff]
    %v5992 = vld [vmem:[#allocation22 + $0x8] sm:$0xff]
    %v5993 = vld [vmem:[#allocation22 + $0x10] sm:$0xff]
    %v5994 = vld [vmem:[#allocation22 + $0x18] sm:$0xff]
    %v5995 = vld [vmem:[#allocation22 + $0x20] sm:$0xff]
    %v5996 = vld [vmem:[#allocation22 + $0x28] sm:$0xff]
    %v5997 = vld [vmem:[#allocation22 + $0x30] sm:$0xff]
    %v5998 = vld [vmem:[#allocation22 + $0x38] sm:$0xff]
    %v5999 = vld [vmem:[#allocation22 + $0x40] sm:$0xff]
    %v6000 = vld [vmem:[#allocation22 + $0x48] sm:$0xff]
    %v6001 = vld [vmem:[#allocation22 + $0x50] sm:$0xff]
    %v6002 = vld [vmem:[#allocation22 + $0x58] sm:$0xff]
    %v6003 = vld [vmem:[#allocation22 + $0x60] sm:$0xff]
    %v6004 = vld [vmem:[#allocation22 + $0x68] sm:$0xff]
    %v6005 = vld [vmem:[#allocation22 + $0x70] sm:$0xff]
    %v6006 = vld [vmem:[#allocation22 + $0x78] sm:$0xff]
    %vm6007 = vcmask 523264
    %v6009 = vsel %vm6007, %v5987, 0
    %6011 = vmatpush.msra.mxu0 0.0
    %6012 = vmatpush.msra.mxu0 0.0
    %6013 = vmatpush.msra.mxu0 0.0
    %6014 = vmatpush.msra.mxu0 0.0
    %6015 = vmatpush.msra.mxu0 0.0
    %6016 = vmatpush.msra.mxu0 0.0
    %6017 = vmatpush.msra.mxu0 0.0
    %6018 = vmatpush.msra.mxu0 0.0
    %6019 = vmatpush.msra.mxu0 %v6005
    %6020 = vmatpush.msra.mxu0 %v6003
    %6021 = vmatpush.msra.mxu0 %v6001
    %6022 = vmatpush.msra.mxu0 %v5999
    %6023 = vmatpush.msra.mxu0 %v5997
    %6024 = vmatpush.msra.mxu0 %v5995
    %6025 = vmatpush.msra.mxu0 %v5993
    %6026 = vmatpush.msra.mxu0 %v5991
    %6027 = vmatmul.f32.gmra.mxu0 %v6009
    %v6028 = vpop.f32.mrf.mxu0
    %v6029 = vadd.f32 0.0, %v6028
    %6030 = vdwg.mxu0
    %6031 = vmatpush.msra.mxu0 0.0
    %6032 = vmatpush.msra.mxu0 0.0
    %6033 = vmatpush.msra.mxu0 0.0
    %6034 = vmatpush.msra.mxu0 0.0
    %6035 = vmatpush.msra.mxu0 0.0
    %6036 = vmatpush.msra.mxu0 0.0
    %6037 = vmatpush.msra.mxu0 0.0
    %6038 = vmatpush.msra.mxu0 0.0
    %6039 = vmatpush.msra.mxu0 %v6006
    %6040 = vmatpush.msra.mxu0 %v6004
    %6041 = vmatpush.msra.mxu0 %v6002
    %6042 = vmatpush.msra.mxu0 %v6000
    %6043 = vmatpush.msra.mxu0 %v5998
    %6044 = vmatpush.msra.mxu0 %v5996
    %6045 = vmatpush.msra.mxu0 %v5994
    %6046 = vmatpush.msra.mxu0 %v5992
    %6047 = vmatmul.f32.gmra.mxu0 %v6009
    %v6048 = vpop.f32.mrf.mxu0
    %v6049 = vadd.f32 0.0, %v6048
    %6050 = vdwg.mxu0
    %v6051 = vperm.slane %v6029, 0
    %v6052 = vperm.slane %v6049, 0
    %v6053 = vmul.f32 %v5747, %v6051
    %v6054 = vmul.f32 %v5827, %v6052
    %v6056 = vsel %vm6007, %v5990, 0
    %6058 = vmatpush.msra.mxu0 0.0
    %6059 = vmatpush.msra.mxu0 0.0
    %6060 = vmatpush.msra.mxu0 0.0
    %6061 = vmatpush.msra.mxu0 0.0
    %6062 = vmatpush.msra.mxu0 0.0
    %6063 = vmatpush.msra.mxu0 0.0
    %6064 = vmatpush.msra.mxu0 0.0
    %6065 = vmatpush.msra.mxu0 0.0
    %6066 = vmatpush.msra.mxu0 %v6005
    %6067 = vmatpush.msra.mxu0 %v6003
    %6068 = vmatpush.msra.mxu0 %v6001
    %6069 = vmatpush.msra.mxu0 %v5999
    %6070 = vmatpush.msra.mxu0 %v5997
    %6071 = vmatpush.msra.mxu0 %v5995
    %6072 = vmatpush.msra.mxu0 %v5993
    %6073 = vmatpush.msra.mxu0 %v5991
    %6074 = vmatmul.f32.gmra.mxu0 %v6056
    %v6075 = vpop.f32.mrf.mxu0
    %v6076 = vadd.f32 0.0, %v6075
    %6077 = vdwg.mxu0
    %6078 = vmatpush.msra.mxu0 0.0
    %6079 = vmatpush.msra.mxu0 0.0
    %6080 = vmatpush.msra.mxu0 0.0
    %6081 = vmatpush.msra.mxu0 0.0
    %6082 = vmatpush.msra.mxu0 0.0
    %6083 = vmatpush.msra.mxu0 0.0
    %6084 = vmatpush.msra.mxu0 0.0
    %6085 = vmatpush.msra.mxu0 0.0
    %6086 = vmatpush.msra.mxu0 %v6006
    %6087 = vmatpush.msra.mxu0 %v6004
    %6088 = vmatpush.msra.mxu0 %v6002
    %6089 = vmatpush.msra.mxu0 %v6000
    %6090 = vmatpush.msra.mxu0 %v5998
    %6091 = vmatpush.msra.mxu0 %v5996
    %6092 = vmatpush.msra.mxu0 %v5994
    %6093 = vmatpush.msra.mxu0 %v5992
    %6094 = vmatmul.f32.gmra.mxu0 %v6056
    %v6095 = vpop.f32.mrf.mxu0
    %v6096 = vadd.f32 0.0, %v6095
    %6097 = vdwg.mxu0
    %v6098 = vperm.slane %v6076, 0
    %v6099 = vperm.slane %v6096, 0
    %v6100 = vadd.f32 %v6053, %v6098
    %v6101 = vadd.f32 %v6054, %v6099
    %v6102 = vmul.f32 %v6100, 0.01
    %v6103 = vmul.f32 %v6101, 0.01
    %v6104 = vmax.f32 %v6100, %v6102
    %v6105 = vmax.f32 %v6101, %v6103
    %v6106 = vld [vmem:[#allocation26] sm:$0xff]
    %v6107 = vld [vmem:[#allocation26 + $0x8] sm:$0xff]
    %v6108 = vld [vmem:[#allocation26 + $0x10] sm:$0xff]
    %v6109 = vld [vmem:[#allocation26 + $0x18] sm:$0xff]
    %v6110 = vld [vmem:[#allocation26 + $0x20] sm:$0xff]
    %v6111 = vld [vmem:[#allocation26 + $0x28] sm:$0xff]
    %v6112 = vld [vmem:[#allocation26 + $0x30] sm:$0xff]
    %v6113 = vld [vmem:[#allocation26 + $0x38] sm:$0xff]
    %v6114 = vld [vmem:[#allocation26 + $0x40] sm:$0xff]
    %v6115 = vld [vmem:[#allocation26 + $0x48] sm:$0xff]
    %v6116 = vld [vmem:[#allocation26 + $0x50] sm:$0xff]
    %v6117 = vld [vmem:[#allocation26 + $0x58] sm:$0xff]
    %v6118 = vld [vmem:[#allocation26 + $0x60] sm:$0xff]
    %v6119 = vld [vmem:[#allocation26 + $0x68] sm:$0xff]
    %v6120 = vld [vmem:[#allocation26 + $0x70] sm:$0xff]
    %v6121 = vld [vmem:[#allocation26 + $0x78] sm:$0xff]
    %v6122 = vld [vmem:[#allocation26 + $0x80] sm:$0xff]
    %v6123 = vld [vmem:[#allocation26 + $0x88] sm:$0xff]
    %v6124 = vld [vmem:[#allocation26 + $0x90] sm:$0xff]
    %v6125 = vld [vmem:[#allocation26 + $0x98] sm:$0xff]
    %v6126 = vld [vmem:[#allocation26 + $0xa0] sm:$0xff]
    %v6127 = vld [vmem:[#allocation26 + $0xa8] sm:$0xff]
    %v6128 = vld [vmem:[#allocation26 + $0xb0] sm:$0xff]
    %v6129 = vld [vmem:[#allocation26 + $0xb8] sm:$0xff]
    %v6130 = vld [vmem:[#allocation26 + $0xc0] sm:$0xff]
    %v6131 = vld [vmem:[#allocation26 + $0xc8] sm:$0xff]
    %v6132 = vld [vmem:[#allocation26 + $0xd0] sm:$0xff]
    %v6133 = vld [vmem:[#allocation26 + $0xd8] sm:$0xff]
    %v6134 = vld [vmem:[#allocation26 + $0xe0] sm:$0xff]
    %v6135 = vld [vmem:[#allocation26 + $0xe8] sm:$0xff]
    %v6136 = vld [vmem:[#allocation26 + $0xf0] sm:$0xff]
    %v6137 = vld [vmem:[#allocation26 + $0xf8] sm:$0xff]
    %v6138 = vld [vmem:[#allocation28] sm:$0x1]
    %v6140 = vperm.slane %v6138, 0
    %6142 = vmatpush.msra.mxu0 %v6121
    %6143 = vmatpush.msra.mxu0 %v6120
    %6144 = vmatpush.msra.mxu0 %v6119
    %6145 = vmatpush.msra.mxu0 %v6118
    %6146 = vmatpush.msra.mxu0 %v6117
    %6147 = vmatpush.msra.mxu0 %v6116
    %6148 = vmatpush.msra.mxu0 %v6115
    %6149 = vmatpush.msra.mxu0 %v6114
    %6150 = vmatpush.msra.mxu0 %v6113
    %6151 = vmatpush.msra.mxu0 %v6112
    %6152 = vmatpush.msra.mxu0 %v6111
    %6153 = vmatpush.msra.mxu0 %v6110
    %6154 = vmatpush.msra.mxu0 %v6109
    %6155 = vmatpush.msra.mxu0 %v6108
    %6156 = vmatpush.msra.mxu0 %v6107
    %6157 = vmatpush.msra.mxu0 %v6106
    %6158 = vmatmul.f32.gmra.mxu0 %v6104
    %v6159 = vpop.f32.mrf.mxu0
    %v6160 = vadd.f32 %v6140, %v6159
    %6161 = vdwg.mxu0
    %6162 = vmatpush.msra.mxu0 %v6137
    %6163 = vmatpush.msra.mxu0 %v6136
    %6164 = vmatpush.msra.mxu0 %v6135
    %6165 = vmatpush.msra.mxu0 %v6134
    %6166 = vmatpush.msra.mxu0 %v6133
    %6167 = vmatpush.msra.mxu0 %v6132
    %6168 = vmatpush.msra.mxu0 %v6131
    %6169 = vmatpush.msra.mxu0 %v6130
    %6170 = vmatpush.msra.mxu0 %v6129
    %6171 = vmatpush.msra.mxu0 %v6128
    %6172 = vmatpush.msra.mxu0 %v6127
    %6173 = vmatpush.msra.mxu0 %v6126
    %6174 = vmatpush.msra.mxu0 %v6125
    %6175 = vmatpush.msra.mxu0 %v6124
    %6176 = vmatpush.msra.mxu0 %v6123
    %6177 = vmatpush.msra.mxu0 %v6122
    %6178 = vmatmul.f32.gmra.mxu0 %v6105
    %v6179 = vpop.f32.mrf.mxu0
    %v6180 = vadd.f32 %v6160, %v6179
    %6181 = vdwg.mxu0
    %v6182 = vsel %vm2878, %v6180, 0.0
    %v6183 = vrot.slane %v6182, 4
    %v6184 = vadd.f32 %v6182, %v6183
    %v6185 = vrot.slane %v6184, 2
    %v6186 = vadd.f32 %v6184, %v6185
    %v6187 = vrot.slane %v6186, 1
    %v6188 = vadd.f32 %v6186, %v6187
    %v6189 = vmul.f32 %v6180, %v6180
    %v6190 = vsel %vm2878, %v6189, 0.0
    %v6191 = vrot.slane %v6190, 4
    %v6192 = vadd.f32 %v6190, %v6191
    %v6193 = vrot.slane %v6192, 2
    %v6194 = vadd.f32 %v6192, %v6193
    %v6195 = vrot.slane %v6194, 1
    %v6196 = vadd.f32 %v6194, %v6195
    %v6197 = vld [vmem:[#allocation29] sm:$0xff]
    %v6198 = vld [vmem:[#allocation29 + $0x8] sm:$0xff]
    %v6199 = vld [vmem:[#allocation29 + $0x10] sm:$0xff]
    %v6200 = vld [vmem:[#allocation29 + $0x18] sm:$0xff]
    %v6201 = vld [vmem:[#allocation29 + $0x20] sm:$0xff]
    %v6202 = vld [vmem:[#allocation29 + $0x28] sm:$0xff]
    %v6203 = vld [vmem:[#allocation29 + $0x30] sm:$0xff]
    %v6204 = vld [vmem:[#allocation29 + $0x38] sm:$0xff]
    %v6205 = vld [vmem:[#allocation29 + $0x40] sm:$0xff]
    %v6206 = vld [vmem:[#allocation29 + $0x48] sm:$0xff]
    %v6207 = vld [vmem:[#allocation29 + $0x50] sm:$0xff]
    %v6208 = vld [vmem:[#allocation29 + $0x58] sm:$0xff]
    %v6209 = vld [vmem:[#allocation29 + $0x60] sm:$0xff]
    %v6210 = vld [vmem:[#allocation29 + $0x68] sm:$0xff]
    %v6211 = vld [vmem:[#allocation29 + $0x70] sm:$0xff]
    %v6212 = vld [vmem:[#allocation29 + $0x78] sm:$0xff]
    %6213 = vmatpush.msra.mxu0 %v6212
    %6214 = vmatpush.msra.mxu0 %v6211
    %6215 = vmatpush.msra.mxu0 %v6210
    %6216 = vmatpush.msra.mxu0 %v6209
    %6217 = vmatpush.msra.mxu0 %v6208
    %6218 = vmatpush.msra.mxu0 %v6207
    %6219 = vmatpush.msra.mxu0 %v6206
    %6220 = vmatpush.msra.mxu0 %v6205
    %6221 = vmatpush.msra.mxu0 %v6204
    %6222 = vmatpush.msra.mxu0 %v6203
    %6223 = vmatpush.msra.mxu0 %v6202
    %6224 = vmatpush.msra.mxu0 %v6201
    %6225 = vmatpush.msra.mxu0 %v6200
    %6226 = vmatpush.msra.mxu0 %v6199
    %6227 = vmatpush.msra.mxu0 %v6198
    %6228 = vmatpush.msra.mxu0 %v6197
    %6229 = vmatmul.f32.gmra.mxu0 %v6188
    %v6230 = vpop.f32.mrf.mxu0
    %v6231 = vadd.f32 0.0, %v6230
    %6232 = vdwg.mxu0
    %v6233 = vmul.f32 %v6231, 0.5
    %6234 = vmatpush.msra.mxu0 %v6212
    %6235 = vmatpush.msra.mxu0 %v6211
    %6236 = vmatpush.msra.mxu0 %v6210
    %6237 = vmatpush.msra.mxu0 %v6209
    %6238 = vmatpush.msra.mxu0 %v6208
    %6239 = vmatpush.msra.mxu0 %v6207
    %6240 = vmatpush.msra.mxu0 %v6206
    %6241 = vmatpush.msra.mxu0 %v6205
    %6242 = vmatpush.msra.mxu0 %v6204
    %6243 = vmatpush.msra.mxu0 %v6203
    %6244 = vmatpush.msra.mxu0 %v6202
    %6245 = vmatpush.msra.mxu0 %v6201
    %6246 = vmatpush.msra.mxu0 %v6200
    %6247 = vmatpush.msra.mxu0 %v6199
    %6248 = vmatpush.msra.mxu0 %v6198
    %6249 = vmatpush.msra.mxu0 %v6197
    %6250 = vmatmul.f32.gmra.mxu0 %v6196
    %v6251 = vpop.f32.mrf.mxu0
    %v6252 = vadd.f32 0.0, %v6251
    %6253 = vdwg.mxu0
    %v6254 = vmul.f32 %v6252, 0.5
    %v6255 = vmul.f32 %v6233, %v6233
    %v6256 = vsub.f32 %v6254, %v6255
    %v6257 = vld [vmem:[#allocation32] sm:$0x1]
    %v6258 = vadd.f32 %v6256, 1e-05
    %v6259 = vrsqrt.pop %v6258
    %v6260 = vmul.f32 %v6259, %v6258
    %v6261 = vmul.f32 %v6260, %v6259
    %v6262 = vmul.f32 0.5, %v6261
    %v6263 = vsub.f32 1.5, %v6262
    %v6264 = vmul.f32 %v6259, %v6263
    %vm6265 = vweird.f32 %v6258
    %vm6266 = vweird.f32 %v6259
    %vm6267 = vmor %vm6265, %vm6266
    %v6268 = vsel %vm6267, %v6259, %v6264
    %v6269 = vmul.f32 %v6257, %v6268
    %v6270 = vld [vmem:[#allocation34] sm:$0x1]
    %v6271 = vmul.f32 %v6233, %v6269
    %v6272 = vsub.f32 %v6270, %v6271
    %v6273 = vld [vmem:[#allocation31] sm:$0xff]
    %v6274 = vld [vmem:[#allocation31 + $0x8] sm:$0xff]
    %v6275 = vld [vmem:[#allocation31 + $0x10] sm:$0xff]
    %v6276 = vld [vmem:[#allocation31 + $0x18] sm:$0xff]
    %v6277 = vld [vmem:[#allocation31 + $0x20] sm:$0xff]
    %v6278 = vld [vmem:[#allocation31 + $0x28] sm:$0xff]
    %v6279 = vld [vmem:[#allocation31 + $0x30] sm:$0xff]
    %v6280 = vld [vmem:[#allocation31 + $0x38] sm:$0xff]
    %v6281 = vld [vmem:[#allocation31 + $0x40] sm:$0xff]
    %v6282 = vld [vmem:[#allocation31 + $0x48] sm:$0xff]
    %v6283 = vld [vmem:[#allocation31 + $0x50] sm:$0xff]
    %v6284 = vld [vmem:[#allocation31 + $0x58] sm:$0xff]
    %v6285 = vld [vmem:[#allocation31 + $0x60] sm:$0xff]
    %v6286 = vld [vmem:[#allocation31 + $0x68] sm:$0xff]
    %v6287 = vld [vmem:[#allocation31 + $0x70] sm:$0xff]
    %v6288 = vld [vmem:[#allocation31 + $0x78] sm:$0xff]
    %6289 = vmatpush.msra.mxu0 %v6288
    %6290 = vmatpush.msra.mxu0 %v6287
    %6291 = vmatpush.msra.mxu0 %v6286
    %6292 = vmatpush.msra.mxu0 %v6285
    %6293 = vmatpush.msra.mxu0 %v6284
    %6294 = vmatpush.msra.mxu0 %v6283
    %6295 = vmatpush.msra.mxu0 %v6282
    %6296 = vmatpush.msra.mxu0 %v6281
    %6297 = vmatpush.msra.mxu0 %v6280
    %6298 = vmatpush.msra.mxu0 %v6279
    %6299 = vmatpush.msra.mxu0 %v6278
    %6300 = vmatpush.msra.mxu0 %v6277
    %6301 = vmatpush.msra.mxu0 %v6276
    %6302 = vmatpush.msra.mxu0 %v6275
    %6303 = vmatpush.msra.mxu0 %v6274
    %6304 = vmatpush.msra.mxu0 %v6273
    %6305 = vmatmul.f32.gmra.mxu0 %v6269
    %v6306 = vpop.f32.mrf.mxu0
    %v6307 = vadd.f32 0.0, %v6306
    %6308 = vdwg.mxu0
    %v6309 = vperm.slane %v6307, 0
    %v6310 = vmul.f32 %v6180, %v6309
    %6311 = vmatpush.msra.mxu0 %v6288
    %6312 = vmatpush.msra.mxu0 %v6287
    %6313 = vmatpush.msra.mxu0 %v6286
    %6314 = vmatpush.msra.mxu0 %v6285
    %6315 = vmatpush.msra.mxu0 %v6284
    %6316 = vmatpush.msra.mxu0 %v6283
    %6317 = vmatpush.msra.mxu0 %v6282
    %6318 = vmatpush.msra.mxu0 %v6281
    %6319 = vmatpush.msra.mxu0 %v6280
    %6320 = vmatpush.msra.mxu0 %v6279
    %6321 = vmatpush.msra.mxu0 %v6278
    %6322 = vmatpush.msra.mxu0 %v6277
    %6323 = vmatpush.msra.mxu0 %v6276
    %6324 = vmatpush.msra.mxu0 %v6275
    %6325 = vmatpush.msra.mxu0 %v6274
    %6326 = vmatpush.msra.mxu0 %v6273
    %6327 = vmatmul.f32.gmra.mxu0 %v6272
    %v6328 = vpop.f32.mrf.mxu0
    %v6329 = vadd.f32 0.0, %v6328
    %6330 = vdwg.mxu0
    %v6331 = vperm.slane %v6329, 0
    %v6332 = vadd.f32 %v6310, %v6331
    %v6333 = vmul.f32 %v6332, 0.01
    %v6334 = vmax.f32 %v6332, %v6333
    %v6335 = vld [vmem:[#allocation35] sm:$0xff]
    %v6336 = vld [vmem:[#allocation35 + $0x8] sm:$0xff]
    %v6337 = vld [vmem:[#allocation35 + $0x10] sm:$0xff]
    %v6338 = vld [vmem:[#allocation35 + $0x18] sm:$0xff]
    %v6339 = vld [vmem:[#allocation35 + $0x20] sm:$0xff]
    %v6340 = vld [vmem:[#allocation35 + $0x28] sm:$0xff]
    %v6341 = vld [vmem:[#allocation35 + $0x30] sm:$0xff]
    %v6342 = vld [vmem:[#allocation35 + $0x38] sm:$0xff]
    %v6343 = vld [vmem:[#allocation35 + $0x40] sm:$0xff]
    %v6344 = vld [vmem:[#allocation35 + $0x48] sm:$0xff]
    %v6345 = vld [vmem:[#allocation35 + $0x50] sm:$0xff]
    %v6346 = vld [vmem:[#allocation35 + $0x58] sm:$0xff]
    %v6347 = vld [vmem:[#allocation35 + $0x60] sm:$0xff]
    %v6348 = vld [vmem:[#allocation35 + $0x68] sm:$0xff]
    %v6349 = vld [vmem:[#allocation35 + $0x70] sm:$0xff]
    %v6350 = vld [vmem:[#allocation35 + $0x78] sm:$0xff]
    %v6351 = vld [vmem:[#allocation37] sm:$0x1]
    %v6353 = vperm.slane %v6351, 0
    %6355 = vmatpush.msra.mxu0 %v6350
    %6356 = vmatpush.msra.mxu0 %v6349
    %6357 = vmatpush.msra.mxu0 %v6348
    %6358 = vmatpush.msra.mxu0 %v6347
    %6359 = vmatpush.msra.mxu0 %v6346
    %6360 = vmatpush.msra.mxu0 %v6345
    %6361 = vmatpush.msra.mxu0 %v6344
    %6362 = vmatpush.msra.mxu0 %v6343
    %6363 = vmatpush.msra.mxu0 %v6342
    %6364 = vmatpush.msra.mxu0 %v6341
    %6365 = vmatpush.msra.mxu0 %v6340
    %6366 = vmatpush.msra.mxu0 %v6339
    %6367 = vmatpush.msra.mxu0 %v6338
    %6368 = vmatpush.msra.mxu0 %v6337
    %6369 = vmatpush.msra.mxu0 %v6336
    %6370 = vmatpush.msra.mxu0 %v6335
    %6371 = vmatmul.f32.gmra.mxu0 %v6334
    %v6372 = vpop.f32.mrf.mxu0
    %v6373 = vadd.f32 %v6353, %v6372
    %6374 = vdwg.mxu0
    %v6375 = vmul.f32 %v6373, 0.01
    %v6376 = vmax.f32 %v6373, %v6375
    %v6377 = vld [vmem:[%s55] sm:$0xff]
    %v6378 = vld [vmem:[%s55 + $0x8] sm:$0xff]
    %v6379 = vld [vmem:[%s55 + $0x10] sm:$0xff]
    %v6380 = vld [vmem:[%s55 + $0x18] sm:$0xff]
    %v6381 = vld [vmem:[%s55 + $0x20] sm:$0xff]
    %v6382 = vld [vmem:[%s55 + $0x28] sm:$0xff]
    %v6383 = vld [vmem:[%s55 + $0x30] sm:$0xff]
    %v6384 = vld [vmem:[%s55 + $0x38] sm:$0xff]
    %v6385 = vld [vmem:[%s55 + $0x40] sm:$0xff]
    %v6386 = vld [vmem:[%s55 + $0x48] sm:$0xff]
    %v6387 = vld [vmem:[%s55 + $0x50] sm:$0xff]
    %v6388 = vld [vmem:[%s55 + $0x58] sm:$0xff]
    %v6389 = vld [vmem:[%s55 + $0x60] sm:$0xff]
    %v6390 = vld [vmem:[%s55 + $0x68] sm:$0xff]
    %v6391 = vld [vmem:[%s55 + $0x70] sm:$0xff]
    %v6392 = vld [vmem:[%s55 + $0x78] sm:$0xff]
    %v6393 = vld [vmem:[#allocation38] sm:$0x1]
    %v6395 = vperm.slane %v6393, 0
    %6397 = vmatpush.msra.mxu0 %v6392
    %6398 = vmatpush.msra.mxu0 %v6391
    %6399 = vmatpush.msra.mxu0 %v6390
    %6400 = vmatpush.msra.mxu0 %v6389
    %6401 = vmatpush.msra.mxu0 %v6388
    %6402 = vmatpush.msra.mxu0 %v6387
    %6403 = vmatpush.msra.mxu0 %v6386
    %6404 = vmatpush.msra.mxu0 %v6385
    %6405 = vmatpush.msra.mxu0 %v6384
    %6406 = vmatpush.msra.mxu0 %v6383
    %6407 = vmatpush.msra.mxu0 %v6382
    %6408 = vmatpush.msra.mxu0 %v6381
    %6409 = vmatpush.msra.mxu0 %v6380
    %6410 = vmatpush.msra.mxu0 %v6379
    %6411 = vmatpush.msra.mxu0 %v6378
    %6412 = vmatpush.msra.mxu0 %v6377
    %6413 = vmatmul.f32.gmra.mxu0 %v6376
    %v6414 = vpop.f32.mrf.mxu0
    %v6415 = vadd.f32 %v6395, %v6414
    %6416 = vdwg.mxu0
    %v6417 = vmul.f32 %v6415, 0.01
    %v6418 = vmax.f32 %v6415, %v6417
    %v6419 = vld [vmem:[%s59] sm:$0xff]
    %v6420 = vld [vmem:[%s59 + $0x8] sm:$0xff]
    %v6421 = vld [vmem:[%s59 + $0x10] sm:$0xff]
    %v6422 = vld [vmem:[%s59 + $0x18] sm:$0xff]
    %v6423 = vld [vmem:[%s59 + $0x20] sm:$0xff]
    %v6424 = vld [vmem:[%s59 + $0x28] sm:$0xff]
    %v6425 = vld [vmem:[%s59 + $0x30] sm:$0xff]
    %v6426 = vld [vmem:[%s59 + $0x38] sm:$0xff]
    %v6427 = vld [vmem:[#allocation40] sm:$0x1]
    %v6429 = vperm.slane %v6427, 0
    %v6432 = vsel %vm6007, %v6418, 0
    %6434 = vmatpush.msra.mxu0 0.0
    %6435 = vmatpush.msra.mxu0 0.0
    %6436 = vmatpush.msra.mxu0 0.0
    %6437 = vmatpush.msra.mxu0 0.0
    %6438 = vmatpush.msra.mxu0 0.0
    %6439 = vmatpush.msra.mxu0 0.0
    %6440 = vmatpush.msra.mxu0 0.0
    %6441 = vmatpush.msra.mxu0 0.0
    %6442 = vmatpush.msra.mxu0 %v6426
    %6443 = vmatpush.msra.mxu0 %v6425
    %6444 = vmatpush.msra.mxu0 %v6424
    %6445 = vmatpush.msra.mxu0 %v6423
    %6446 = vmatpush.msra.mxu0 %v6422
    %6447 = vmatpush.msra.mxu0 %v6421
    %6448 = vmatpush.msra.mxu0 %v6420
    %6449 = vmatpush.msra.mxu0 %v6419
    %6450 = vmatmul.f32.gmra.mxu0 %v6432
    %v6451 = vpop.f32.mrf.mxu0
    %v6452 = vadd.f32 %v6429, %v6451
    %6453 = vdwg.mxu0
    %v6454 = vmul.f32 %v6452, 0.01
    %v6455 = vmax.f32 %v6452, %v6454
    %v6456 = vld [vmem:[#allocation41] sm:$0xff]
    %v6457 = vld [vmem:[#allocation41 + $0x8] sm:$0xff]
    %v6458 = vld [vmem:[#allocation41 + $0x10] sm:$0xff]
    %v6459 = vld [vmem:[#allocation41 + $0x18] sm:$0xff]
    %v6460 = vld [vmem:[#allocation43] sm:$0x1]
    %v6462 = vperm.slane %v6460, 0
    %v6465 = vsel %vm5344, %v6455, 0
    %6467 = vmatpush.msra.mxu0 0.0
    %6468 = vmatpush.msra.mxu0 0.0
    %6469 = vmatpush.msra.mxu0 0.0
    %6470 = vmatpush.msra.mxu0 0.0
    %6471 = vmatpush.msra.mxu0 0.0
    %6472 = vmatpush.msra.mxu0 0.0
    %6473 = vmatpush.msra.mxu0 0.0
    %6474 = vmatpush.msra.mxu0 0.0
    %6475 = vmatpush.msra.mxu0 0.0
    %6476 = vmatpush.msra.mxu0 0.0
    %6477 = vmatpush.msra.mxu0 0.0
    %6478 = vmatpush.msra.mxu0 0.0
    %6479 = vmatpush.msra.mxu0 %v6459
    %6480 = vmatpush.msra.mxu0 %v6458
    %6481 = vmatpush.msra.mxu0 %v6457
    %6482 = vmatpush.msra.mxu0 %v6456
    %6483 = vmatmul.f32.gmra.mxu0 %v6465
    %v6484 = vpop.f32.mrf.mxu0
    %v6485 = vadd.f32 %v6462, %v6484
    %6486 = vdwg.mxu0
    %v6487 = vmul.f32 %v6485, 0.01
    %v6488 = vmax.f32 %v6485, %v6487
    %6489 = vst [vmem:[#allocation44] sm:$0x3] %v6488
    // Predicated region
    $region242: #{cnn_mlp_forward.1} parent=1 // pred_check
      _
    $region243: #{cnn_mlp_forward.1} parent=1 // pred_check_branch
      %6491 = sbr.rel (0) target = $region245
    $region244: #{cnn_mlp_forward.1} parent=1 // pred_region
      %6493 = vsyncadd [#allocation4], 0
      %s6495 = sshll.u32 [#allocation44], 4
      %s6496 = int_to_ptr.vmem [resolvable:$true] %s6495
      %s6497 = sshll.u32 %s67, 4
      %s6498 = int_to_ptr.hbm [resolvable:$true] %s6497
      %6500 = dma.vmem_to_hbm [thread:$0]  %s6496, 32, %s6498, [#allocation4]
    $region245: #{cnn_mlp_forward.1} parent=1 // pred_fallthru
      _
    // Predicated region
    $region246: #{cnn_mlp_forward.1} parent=1 // pred_check
      _
    $region247: #{cnn_mlp_forward.1} parent=1 // pred_check_branch
      %6502 = sbr.rel (0) target = $region249
    $region248: #{cnn_mlp_forward.1} parent=1 // pred_region
      %6504 = dma.done [#allocation4], 32
    $region249: #{cnn_mlp_forward.1} parent=1 // pred_fallthru
      _
    %6505 = vsyncpa [#allocation3], 1
    %6506 = vsyncpa [#allocation6], 1
    %6507 = vsyncpa [#allocation9], 1
    %6508 = vsyncpa [#allocation12], 1
    %6509 = vsyncpa [#allocation15], 1
    %6510 = vsyncpa [#allocation18], 1
    %6511 = vsyncpa [#allocation21], 1
    %6512 = vsyncpa [#allocation24], 1
    %6513 = vsyncpa [#allocation27], 1
    %6514 = vsyncpa [#allocation30], 1
    %6515 = vsyncpa [#allocation33], 1
    %6516 = vsyncpa [#allocation36], 1
    %6517 = vsyncpa [#allocation39], 1
    %6518 = vsyncpa [#allocation42], 1
    %6519 = vsyncpa [#allocation4], 1

</llo_original>
